<compile_context>
chip_gen: v6e
topology: v6e:2x2x1
jax: 0.10.0
libtpu: 0.0.40
codegen_flags: <defaults>
</compile_context>

<pallas_src>
import functools

import jax
import jax.numpy as jnp
from jax.experimental import pallas as pl
from jax.experimental.pallas import tpu as pltpu


def _corr_encoder_kernel(x_ref, w1_ref, b1_ref, w2_ref, b2_ref, o_ref,
                         *, W, TH, Cpad):
    # x_ref : (1, 1, (TH+2)*W, Cin)  f32  one row-tile, with 1 halo row above/below
    #                                     (out-of-image halo rows are zero-filled).
    # w1_ref: (Cin, Chid)            f32  b1_ref: (1, Chid) f32
    # w2_ref: (Chid, 9*Cpad)         bf16 tap-major (t = ky*3+kx), Cout zero-padded to Cpad
    # b2_ref: (1, Cpad)              f32
    # o_ref : (1, 1, TH*W, Cpad)     f32
    halo_hw = (TH + 2) * W
    tile_hw = TH * W
    Cin = x_ref.shape[-1]

    x = x_ref[0, 0]                                              # (halo_hw, Cin) f32

    # ---------------- conv1 (1x1) + bias + ReLU ----------------
    if Cin <= 8:
        # Tiny contraction: keep it off the MXU.  Cin broadcast FMAs on the VPU
        # co-issue with the conv2 MXU matmul, making conv1 essentially free.
        h = x[:, 0:1] * w1_ref[0:1, :]
        for c in range(1, Cin):
            h = h + x[:, c:c + 1] * w1_ref[c:c + 1, :]
    else:
        # Production-sized Cin: use the MXU (bf16 operands, f32 accumulation).
        h = jnp.dot(x.astype(jnp.bfloat16), w1_ref[...].astype(jnp.bfloat16),
                    preferred_element_type=jnp.float32)
    h = jnp.maximum(h + b1_ref[...], 0.0)                        # (halo_hw, Chid) f32

    # conv2's SAME padding pads the conv1 *output* with zeros, so halo rows that lie
    # outside the image must be exactly 0 (not ReLU(b1)).  Only the first tile's top
    # halo row and the last tile's bottom halo row are outside the image.
    t_id = pl.program_id(1)
    idx = jax.lax.broadcasted_iota(jnp.int32, (halo_hw, 1), 0)
    pad_top = jnp.logical_and(t_id == 0, idx < W)
    pad_bot = jnp.logical_and(t_id == pl.num_programs(1) - 1, idx >= (TH + 1) * W)
    h = jnp.where(jnp.logical_or(pad_top, pad_bot), 0.0, h)

    # -------- conv2 (3x3, SAME): one tap-concatenated MXU matmul --------
    # y[:, t*Cpad:(t+1)*Cpad] == h @ W2[ky, kx]  for tap t = ky*3 + kx
    y = jnp.dot(h.astype(jnp.bfloat16), w2_ref[...],
                preferred_element_type=jnp.float32)              # (halo_hw, 9*Cpad) f32

    # In-kernel column-border masks (no mask operand / HBM traffic).  Flat index ->
    # column via an f32 floor-divide to avoid integer vector div/rem lowering.
    q = jax.lax.broadcasted_iota(jnp.int32, (tile_hw, 1), 0).astype(jnp.float32)
    col = q - jnp.floor((q + 0.5) / float(W)) * float(W)
    ok_left = col >= 0.5                    # source column c-1 is in-image
    ok_right = col <= float(W) - 1.5        # source column c+1 is in-image

    # Combine the 9 taps.  Vertical (dy) offsets are 8-aligned row slices of y
    # (offsets 0, W, 2W; W % 8 == 0), horizontal (dx) offsets are a +-1 sublane roll
    # (XLU) plus a border select (VPU).  All cyclic wraps land on masked positions.
    parts = []
    for ky in range(3):
        row_off = ky * W                    # == (1 + dy) * W with dy = ky - 1
        for kx in range(3):
            dx = kx - 1
            t = ky * 3 + kx
            tap = y[row_off:row_off + tile_hw, t * Cpad:(t + 1) * Cpad]
            if dx == 0:
                parts.append(tap)
            else:
                rolled = pltpu.roll(tap, (-dx) % tile_hw, axis=0)
                mask = ok_left if dx == -1 else ok_right
                parts.append(jnp.where(mask, rolled, 0.0))

    # Balanced tree-sum: independent partial accumulators expose VALU ILP instead of
    # one serial 9-add chain; parts[4] is the (unmasked, unshifted) centre tap.
    s0 = parts[0] + parts[1]
    s1 = parts[2] + parts[3]
    s2 = parts[5] + parts[6]
    s3 = parts[7] + parts[8]
    acc = ((s0 + s1) + (s2 + s3)) + parts[4]                     # (tile_hw, Cpad)

    out = jnp.maximum(acc + b2_ref[...], 0.0)
    o_ref[0, 0] = out.astype(o_ref.dtype)


def _pick_tile_h(H, W, Chid, Cpad, budget_bytes=6 * 2**20):
    """Largest row-tile whose dominant f32 intermediates (h and the 9-tap y) fit a
    modest VMEM budget; prefer >= 2 tiles so both v7x TensorCores get work."""
    def live(th):
        return (th + 2) * W * (Chid + 9 * Cpad) * 4
    divs = [d for d in range(1, H + 1) if H % d == 0]
    fitting = [d for d in divs if live(d) <= budget_bytes]
    if not fitting:
        return 1
    multi = [d for d in fitting if H // d >= 2]
    return max(multi) if multi else max(fitting)


def corr_encoder(x_nchw, w1_t, b1_t, w2_t, b2_t, *, tile_h=None):
    """Fused CorrEncoder forward.

    x_nchw: (N, Cin, H, W) f32.  Weights in PyTorch layouts:
    w1_t: (Chid, Cin, 1, 1), b1_t: (Chid,), w2_t: (Cout, Chid, 3, 3), b2_t: (Cout,).
    Returns (N, Cout, H, W) f32.
    """
    N, Cin, H, W = x_nchw.shape
    Chid = w1_t.shape[0]
    Cout = w2_t.shape[0]
    # TODO(synk): pad W up to a multiple of 8 in the wrapper for odd image widths.
    assert W % 8 == 0, "image width must be a multiple of 8 (sublane alignment)"

    Cpad = ((Cout + 127) // 128) * 128        # 128-lane-aligned tap / output width
    TH = tile_h if tile_h is not None else _pick_tile_h(H, W, Chid, Cpad)
    assert H % TH == 0
    n_tiles = H // TH
    halo_hw = (TH + 2) * W

    # ---- operand packing (wrapper-side XLA glue, done once) ----
    x_nhwc = jnp.transpose(x_nchw, (0, 2, 3, 1)).astype(jnp.float32)   # (N,H,W,Cin)
    x_pad = jnp.pad(x_nhwc, ((0, 0), (1, 1), (0, 0), (0, 0)))          # zero halo rows
    row_idx = jnp.arange(n_tiles)[:, None] * TH + jnp.arange(TH + 2)[None, :]
    x_halo = x_pad[:, row_idx].reshape(N, n_tiles, halo_hw, Cin)

    w1 = w1_t.reshape(Chid, Cin).T.astype(jnp.float32)                 # (Cin, Chid)
    b1 = b1_t.reshape(1, Chid).astype(jnp.float32)
    # Tap-major, channel-padded conv2 weights: w2c[ci, t*Cpad+co] = w2_t[co, ci, ky, kx].
    w2c = jnp.transpose(w2_t, (1, 2, 3, 0))                            # (Chid,3,3,Cout)
    w2c = jnp.pad(w2c, ((0, 0), (0, 0), (0, 0), (0, Cpad - Cout)))
    w2c = w2c.reshape(Chid, 9 * Cpad).astype(jnp.bfloat16)
    b2 = jnp.pad(b2_t, (0, Cpad - Cout)).reshape(1, Cpad).astype(jnp.float32)

    kernel = functools.partial(_corr_encoder_kernel, W=W, TH=TH, Cpad=Cpad)

    # ---- scheduling hints ----
    weight_bytes = (Cin * Chid + Chid + Cpad) * 4 + Chid * 9 * Cpad * 2
    vmem_need = (2 * halo_hw * Cin * 4 + 2 * TH * W * Cpad * 4 + 2 * weight_bytes
                 + halo_hw * (Chid + 9 * Cpad) * 4 + 12 * TH * W * Cpad * 4)
    vmem_limit = int(min(48 * 2**20, max(32 * 2**20, 2 * vmem_need)))
    cost = pl.CostEstimate(
        flops=int(2 * N * H * W * Cin * Chid
                  + 2 * N * n_tiles * halo_hw * Chid * 9 * Cpad),
        transcendentals=0,
        bytes_accessed=int(x_halo.size * 4 + weight_bytes
                           + N * n_tiles * TH * W * Cpad * 4))

    def build(single_buffer_consts):
        def const_spec(shape):
            kwargs = {}
            if single_buffer_consts:
                # Grid-invariant operands are fetched once: no need to double-buffer.
                kwargs["pipeline_mode"] = pl.Buffered(1)
            return pl.BlockSpec(shape, lambda n, t: (0,) * len(shape), **kwargs)

        return pl.pallas_call(
            kernel,
            out_shape=jax.ShapeDtypeStruct((N, n_tiles, TH * W, Cpad), jnp.float32),
            grid_spec=pltpu.PrefetchScalarGridSpec(
                num_scalar_prefetch=0,
                grid=(N, n_tiles),
                in_specs=[
                    pl.BlockSpec((1, 1, halo_hw, Cin), lambda n, t: (n, t, 0, 0)),
                    const_spec((Cin, Chid)),
                    const_spec((1, Chid)),
                    const_spec((Chid, 9 * Cpad)),
                    const_spec((1, Cpad)),
                ],
                out_specs=pl.BlockSpec((1, 1, TH * W, Cpad),
                                       lambda n, t: (n, t, 0, 0)),
            ),
            compiler_params=pltpu.CompilerParams(
                dimension_semantics=("parallel", "parallel"),
                vmem_limit_bytes=vmem_limit),
            cost_estimate=cost,
        )

    try:
        out_tiles = build(True)(x_halo, w1, b1, w2c, b2)
    except Exception:
        # This JAX/Mosaic build does not accept the single-buffering hint; the default
        # double-buffered pipeline is still correct (just uses a bit more VMEM).
        out_tiles = build(False)(x_halo, w1, b1, w2c, b2)

    out_nhwc = out_tiles.reshape(N, H, W, Cpad)[..., :Cout]
    return jnp.transpose(out_nhwc, (0, 3, 1, 2))                       # NCHW


if __name__ == "__main__":
    # Small deterministic example consistent with CorrEncoder(dim_in=4, dim_out=32).
    N, Cin, H, W = 2, 4, 16, 16
    Chid, Cout = 256, 32

    key = jax.random.PRNGKey(0)
    k = jax.random.split(key, 5)
    x_nchw = jax.random.normal(k[0], (N, Cin, H, W), jnp.float32)
    # PyTorch conv weight layouts: (out_ch, in_ch, kh, kw).
    w1_t = jax.random.normal(k[1], (Chid, Cin, 1, 1), jnp.float32) * 0.1
    b1_t = jax.random.normal(k[2], (Chid,), jnp.float32) * 0.1
    w2_t = jax.random.normal(k[3], (Cout, Chid, 3, 3), jnp.float32) * 0.05
    b2_t = jax.random.normal(k[4], (Cout,), jnp.float32) * 0.1

    out = jax.block_until_ready(corr_encoder(x_nchw, w1_t, b1_t, w2_t, b2_t))

    # Reference: XLA convs in NCHW (matches the PyTorch forward semantics).
    ref1 = jax.nn.relu(
        jax.lax.conv_general_dilated(
            x_nchw, w1_t, (1, 1), "SAME",
            dimension_numbers=("NCHW", "OIHW", "NCHW"))
        + b1_t[None, :, None, None])
    ref2 = jax.nn.relu(
        jax.lax.conv_general_dilated(
            ref1, w2_t, (1, 1), "SAME",
            dimension_numbers=("NCHW", "OIHW", "NCHW"))
        + b2_t[None, :, None, None])

    assert out.shape == (N, Cout, H, W)
    max_err = float(jnp.max(jnp.abs(out - ref2)))
    assert jnp.allclose(out, ref2, rtol=2e-2, atol=2e-2), max_err
    print("KERNEL_OK")
</pallas_src>

<mosaic_0001>
module attributes {stable_mosaic.version = 11 : i64} {
  func.func @_corr_encoder_kernel(%arg0: i32, %arg1: i32, %arg2: memref<1x1x160x4xf32, #tpu.memory_space<vmem>>, %arg3: memref<4x256xf32, #tpu.memory_space<vmem>>, %arg4: memref<1x256xf32, #tpu.memory_space<vmem>>, %arg5: memref<256x1152xbf16, #tpu.memory_space<vmem>>, %arg6: memref<1x128xf32, #tpu.memory_space<vmem>>, %arg7: memref<1x1x128x128xf32, #tpu.memory_space<vmem>>) attributes {dimension_semantics = [#tpu.dimension_semantics<parallel>, #tpu.dimension_semantics<parallel>], iteration_bounds = array<i64: 2, 2>, scalar_prefetch = 0 : i64, scratch_operands = 0 : i64, tpu.core_type = #tpu.core_type<tc>, window_params = [{transform_indices = @transform_0, window_bounds = array<i64: 1, 1, 160, 4>}, {pipeline_mode = #tpu.pipeline_mode<synchronous>, transform_indices = @transform_1, window_bounds = array<i64: 4, 256>}, {pipeline_mode = #tpu.pipeline_mode<synchronous>, transform_indices = @transform_2, window_bounds = array<i64: 1, 256>}, {pipeline_mode = #tpu.pipeline_mode<synchronous>, transform_indices = @transform_3, window_bounds = array<i64: 256, 1152>}, {pipeline_mode = #tpu.pipeline_mode<synchronous>, transform_indices = @transform_4, window_bounds = array<i64: 1, 128>}, {transform_indices = @transform_5, window_bounds = array<i64: 1, 1, 128, 128>}]} {
    %c0 = arith.constant 0 : index
    %c0_0 = arith.constant 0 : index
    %c0_1 = arith.constant 0 : index
    %c0_2 = arith.constant 0 : index
    %0 = vector.load %arg2[%c0, %c0_0, %c0_1, %c0_2] : memref<1x1x160x4xf32, #tpu.memory_space<vmem>>, vector<1x1x160x4xf32>
    %1 = vector.shape_cast %0 : vector<1x1x160x4xf32> to vector<160x4xf32>
    %2 = vector.extract_strided_slice %1 {offsets = [0, 0], sizes = [160, 1], strides = [1, 1]} : vector<160x4xf32> to vector<160x1xf32>
    %c0_3 = arith.constant 0 : index
    %c0_4 = arith.constant 0 : index
    %3 = vector.load %arg3[%c0_3, %c0_4] : memref<4x256xf32, #tpu.memory_space<vmem>>, vector<1x256xf32>
    %4 = vector.broadcast %2 : vector<160x1xf32> to vector<160x256xf32>
    %5 = vector.broadcast %3 : vector<1x256xf32> to vector<160x256xf32>
    %6 = arith.mulf %4, %5 : vector<160x256xf32>
    %7 = vector.extract_strided_slice %1 {offsets = [0, 1], sizes = [160, 1], strides = [1, 1]} : vector<160x4xf32> to vector<160x1xf32>
    %c1 = arith.constant 1 : index
    %c0_5 = arith.constant 0 : index
    %8 = vector.load %arg3[%c1, %c0_5] : memref<4x256xf32, #tpu.memory_space<vmem>>, vector<1x256xf32>
    %9 = vector.broadcast %7 : vector<160x1xf32> to vector<160x256xf32>
    %10 = vector.broadcast %8 : vector<1x256xf32> to vector<160x256xf32>
    %11 = arith.mulf %9, %10 : vector<160x256xf32>
    %12 = arith.addf %6, %11 : vector<160x256xf32>
    %13 = vector.extract_strided_slice %1 {offsets = [0, 2], sizes = [160, 1], strides = [1, 1]} : vector<160x4xf32> to vector<160x1xf32>
    %c2 = arith.constant 2 : index
    %c0_6 = arith.constant 0 : index
    %14 = vector.load %arg3[%c2, %c0_6] : memref<4x256xf32, #tpu.memory_space<vmem>>, vector<1x256xf32>
    %15 = vector.broadcast %13 : vector<160x1xf32> to vector<160x256xf32>
    %16 = vector.broadcast %14 : vector<1x256xf32> to vector<160x256xf32>
    %17 = arith.mulf %15, %16 : vector<160x256xf32>
    %18 = arith.addf %12, %17 : vector<160x256xf32>
    %19 = vector.extract_strided_slice %1 {offsets = [0, 3], sizes = [160, 1], strides = [1, 1]} : vector<160x4xf32> to vector<160x1xf32>
    %c3 = arith.constant 3 : index
    %c0_7 = arith.constant 0 : index
    %20 = vector.load %arg3[%c3, %c0_7] : memref<4x256xf32, #tpu.memory_space<vmem>>, vector<1x256xf32>
    %21 = vector.broadcast %19 : vector<160x1xf32> to vector<160x256xf32>
    %22 = vector.broadcast %20 : vector<1x256xf32> to vector<160x256xf32>
    %23 = arith.mulf %21, %22 : vector<160x256xf32>
    %24 = arith.addf %18, %23 : vector<160x256xf32>
    %c0_8 = arith.constant 0 : index
    %c0_9 = arith.constant 0 : index
    %25 = vector.load %arg4[%c0_8, %c0_9] : memref<1x256xf32, #tpu.memory_space<vmem>>, vector<1x256xf32>
    %26 = vector.broadcast %25 : vector<1x256xf32> to vector<160x256xf32>
    %27 = arith.addf %24, %26 : vector<160x256xf32>
    %cst = arith.constant 0.000000e+00 : f32
    %28 = vector.broadcast %cst : f32 to vector<160x256xf32>
    %29 = arith.maximumf %27, %28 : vector<160x256xf32>
    %30 = tpu.iota {dimensions = array<i32: 0>} : vector<160x1xi32>
    %c0_i32 = arith.constant 0 : i32
    %31 = arith.cmpi eq, %arg1, %c0_i32 : i32
    %c16_i32 = arith.constant 16 : i32
    %32 = vector.broadcast %c16_i32 : i32 to vector<160x1xi32>
    %33 = arith.cmpi slt, %30, %32 : vector<160x1xi32>
    %34 = vector.broadcast %31 : i1 to vector<160x1xi1>
    %35 = arith.andi %34, %33 : vector<160x1xi1>
    %c1_i32 = arith.constant 1 : i32
    %36 = arith.cmpi eq, %arg1, %c1_i32 : i32
    %c144_i32 = arith.constant 144 : i32
    %37 = vector.broadcast %c144_i32 : i32 to vector<160x1xi32>
    %38 = arith.cmpi sge, %30, %37 : vector<160x1xi32>
    %39 = vector.broadcast %36 : i1 to vector<160x1xi1>
    %40 = arith.andi %39, %38 : vector<160x1xi1>
    %41 = arith.ori %35, %40 : vector<160x1xi1>
    %cst_10 = arith.constant 0.000000e+00 : f32
    %42 = vector.shape_cast %41 : vector<160x1xi1> to vector<160x1xi1>
    %43 = vector.broadcast %42 : vector<160x1xi1> to vector<160x256xi1>
    %44 = vector.broadcast %cst_10 : f32 to vector<160x256xf32>
    %45 = arith.select %43, %44, %29 : vector<160x256xi1>, vector<160x256xf32>
    %46 = arith.truncf %45 : vector<160x256xf32> to vector<160x256xbf16>
    %c0_11 = arith.constant 0 : index
    %c0_12 = arith.constant 0 : index
    %47 = vector.load %arg5[%c0_11, %c0_12] : memref<256x1152xbf16, #tpu.memory_space<vmem>>, vector<256x1152xbf16>
    %cst_13 = arith.constant dense<0.000000e+00> : vector<160x1152xf32>
    %48 = tpu.matmul %46, %47, %cst_13 {dimension_numbers = #tpu.dot_dimension_numbers<[1], [0], [0], [1], [0, 0, 1, 1], [], []>} : vector<160x256xbf16>, vector<256x1152xbf16>, vector<160x1152xf32> -> vector<160x1152xf32>
    %49 = tpu.iota {dimensions = array<i32: 0>} : vector<128x1xi32>
    %50 = arith.sitofp %49 : vector<128x1xi32> to vector<128x1xf32>
    %cst_14 = arith.constant 5.000000e-01 : f32
    %51 = vector.broadcast %cst_14 : f32 to vector<128x1xf32>
    %52 = arith.addf %50, %51 : vector<128x1xf32>
    %cst_15 = arith.constant 1.600000e+01 : f32
    %53 = vector.broadcast %cst_15 : f32 to vector<128x1xf32>
    %54 = arith.divf %52, %53 : vector<128x1xf32>
    %55 = math.floor %54 : vector<128x1xf32>
    %cst_16 = arith.constant 1.600000e+01 : f32
    %56 = vector.broadcast %cst_16 : f32 to vector<128x1xf32>
    %57 = arith.mulf %55, %56 : vector<128x1xf32>
    %58 = arith.subf %50, %57 : vector<128x1xf32>
    %cst_17 = arith.constant 5.000000e-01 : f32
    %59 = vector.broadcast %cst_17 : f32 to vector<128x1xf32>
    %60 = arith.cmpf oge, %58, %59 : vector<128x1xf32>
    %cst_18 = arith.constant 1.450000e+01 : f32
    %61 = vector.broadcast %cst_18 : f32 to vector<128x1xf32>
    %62 = arith.cmpf ole, %58, %61 : vector<128x1xf32>
    %63 = vector.extract_strided_slice %48 {offsets = [0, 0], sizes = [128, 128], strides = [1, 1]} : vector<160x1152xf32> to vector<128x128xf32>
    %c1_i32_19 = arith.constant 1 : i32
    %64 = tpu.dynamic_rotate %63 by %c1_i32_19 dim 0 : vector<128x128xf32>, i32 -> vector<128x128xf32>
    %cst_20 = arith.constant 0.000000e+00 : f32
    %65 = vector.shape_cast %60 : vector<128x1xi1> to vector<128x1xi1>
    %66 = vector.broadcast %65 : vector<128x1xi1> to vector<128x128xi1>
    %67 = vector.broadcast %cst_20 : f32 to vector<128x128xf32>
    %68 = arith.select %66, %64, %67 : vector<128x128xi1>, vector<128x128xf32>
    %69 = vector.extract_strided_slice %48 {offsets = [0, 128], sizes = [128, 128], strides = [1, 1]} : vector<160x1152xf32> to vector<128x128xf32>
    %70 = vector.extract_strided_slice %48 {offsets = [0, 256], sizes = [128, 128], strides = [1, 1]} : vector<160x1152xf32> to vector<128x128xf32>
    %c127_i32 = arith.constant 127 : i32
    %71 = tpu.dynamic_rotate %70 by %c127_i32 dim 0 : vector<128x128xf32>, i32 -> vector<128x128xf32>
    %cst_21 = arith.constant 0.000000e+00 : f32
    %72 = vector.shape_cast %62 : vector<128x1xi1> to vector<128x1xi1>
    %73 = vector.broadcast %72 : vector<128x1xi1> to vector<128x128xi1>
    %74 = vector.broadcast %cst_21 : f32 to vector<128x128xf32>
    %75 = arith.select %73, %71, %74 : vector<128x128xi1>, vector<128x128xf32>
    %76 = vector.extract_strided_slice %48 {offsets = [16, 384], sizes = [128, 128], strides = [1, 1]} : vector<160x1152xf32> to vector<128x128xf32>
    %c1_i32_22 = arith.constant 1 : i32
    %77 = tpu.dynamic_rotate %76 by %c1_i32_22 dim 0 : vector<128x128xf32>, i32 -> vector<128x128xf32>
    %cst_23 = arith.constant 0.000000e+00 : f32
    %78 = vector.shape_cast %60 : vector<128x1xi1> to vector<128x1xi1>
    %79 = vector.broadcast %78 : vector<128x1xi1> to vector<128x128xi1>
    %80 = vector.broadcast %cst_23 : f32 to vector<128x128xf32>
    %81 = arith.select %79, %77, %80 : vector<128x128xi1>, vector<128x128xf32>
    %82 = vector.extract_strided_slice %48 {offsets = [16, 512], sizes = [128, 128], strides = [1, 1]} : vector<160x1152xf32> to vector<128x128xf32>
    %83 = vector.extract_strided_slice %48 {offsets = [16, 640], sizes = [128, 128], strides = [1, 1]} : vector<160x1152xf32> to vector<128x128xf32>
    %c127_i32_24 = arith.constant 127 : i32
    %84 = tpu.dynamic_rotate %83 by %c127_i32_24 dim 0 : vector<128x128xf32>, i32 -> vector<128x128xf32>
    %cst_25 = arith.constant 0.000000e+00 : f32
    %85 = vector.shape_cast %62 : vector<128x1xi1> to vector<128x1xi1>
    %86 = vector.broadcast %85 : vector<128x1xi1> to vector<128x128xi1>
    %87 = vector.broadcast %cst_25 : f32 to vector<128x128xf32>
    %88 = arith.select %86, %84, %87 : vector<128x128xi1>, vector<128x128xf32>
    %89 = vector.extract_strided_slice %48 {offsets = [32, 768], sizes = [128, 128], strides = [1, 1]} : vector<160x1152xf32> to vector<128x128xf32>
    %c1_i32_26 = arith.constant 1 : i32
    %90 = tpu.dynamic_rotate %89 by %c1_i32_26 dim 0 : vector<128x128xf32>, i32 -> vector<128x128xf32>
    %cst_27 = arith.constant 0.000000e+00 : f32
    %91 = vector.shape_cast %60 : vector<128x1xi1> to vector<128x1xi1>
    %92 = vector.broadcast %91 : vector<128x1xi1> to vector<128x128xi1>
    %93 = vector.broadcast %cst_27 : f32 to vector<128x128xf32>
    %94 = arith.select %92, %90, %93 : vector<128x128xi1>, vector<128x128xf32>
    %95 = vector.extract_strided_slice %48 {offsets = [32, 896], sizes = [128, 128], strides = [1, 1]} : vector<160x1152xf32> to vector<128x128xf32>
    %96 = vector.extract_strided_slice %48 {offsets = [32, 1024], sizes = [128, 128], strides = [1, 1]} : vector<160x1152xf32> to vector<128x128xf32>
    %c127_i32_28 = arith.constant 127 : i32
    %97 = tpu.dynamic_rotate %96 by %c127_i32_28 dim 0 : vector<128x128xf32>, i32 -> vector<128x128xf32>
    %cst_29 = arith.constant 0.000000e+00 : f32
    %98 = vector.shape_cast %62 : vector<128x1xi1> to vector<128x1xi1>
    %99 = vector.broadcast %98 : vector<128x1xi1> to vector<128x128xi1>
    %100 = vector.broadcast %cst_29 : f32 to vector<128x128xf32>
    %101 = arith.select %99, %97, %100 : vector<128x128xi1>, vector<128x128xf32>
    %102 = arith.addf %68, %69 : vector<128x128xf32>
    %103 = arith.addf %75, %81 : vector<128x128xf32>
    %104 = arith.addf %88, %94 : vector<128x128xf32>
    %105 = arith.addf %95, %101 : vector<128x128xf32>
    %106 = arith.addf %102, %103 : vector<128x128xf32>
    %107 = arith.addf %104, %105 : vector<128x128xf32>
    %108 = arith.addf %106, %107 : vector<128x128xf32>
    %109 = arith.addf %108, %82 : vector<128x128xf32>
    %c0_30 = arith.constant 0 : index
    %c0_31 = arith.constant 0 : index
    %110 = vector.load %arg6[%c0_30, %c0_31] : memref<1x128xf32, #tpu.memory_space<vmem>>, vector<1x128xf32>
    %111 = vector.broadcast %110 : vector<1x128xf32> to vector<128x128xf32>
    %112 = arith.addf %109, %111 : vector<128x128xf32>
    %cst_32 = arith.constant 0.000000e+00 : f32
    %113 = vector.broadcast %cst_32 : f32 to vector<128x128xf32>
    %114 = arith.maximumf %112, %113 : vector<128x128xf32>
    %c0_33 = arith.constant 0 : index
    %c0_34 = arith.constant 0 : index
    %c0_35 = arith.constant 0 : index
    %c0_36 = arith.constant 0 : index
    %115 = vector.load %arg7[%c0_33, %c0_34, %c0_35, %c0_36] : memref<1x1x128x128xf32, #tpu.memory_space<vmem>>, vector<1x1x128x128xf32>
    %116 = vector.shape_cast %115 : vector<1x1x128x128xf32> to vector<128x128xf32>
    %117 = vector.shape_cast %114 : vector<128x128xf32> to vector<1x1x128x128xf32>
    tpu.vector_store %arg7[%c0_33, %c0_34, %c0_35, %c0_36], %117 {strides = array<i32>} : memref<1x1x128x128xf32, #tpu.memory_space<vmem>>, vector<1x1x128x128xf32>,
    return
  }
  func.func @transform_0(%arg0: i32, %arg1: i32) -> (i32, i32, i32, i32) {
    %c0_i32 = arith.constant 0 : i32
    %c0_i32_0 = arith.constant 0 : i32
    %c0_i32_1 = arith.constant 0 : i32
    return %arg0, %arg1, %c0_i32, %c0_i32_0 : i32, i32, i32, i32
  }
  func.func @transform_1(%arg0: i32, %arg1: i32) -> (i32, i32) {
    %c0_i32 = arith.constant 0 : i32
    %c0_i32_0 = arith.constant 0 : i32
    %c0_i32_1 = arith.constant 0 : i32
    return %c0_i32, %c0_i32_0 : i32, i32
  }
  func.func @transform_2(%arg0: i32, %arg1: i32) -> (i32, i32) {
    %c0_i32 = arith.constant 0 : i32
    %c0_i32_0 = arith.constant 0 : i32
    %c0_i32_1 = arith.constant 0 : i32
    return %c0_i32, %c0_i32_0 : i32, i32
  }
  func.func @transform_3(%arg0: i32, %arg1: i32) -> (i32, i32) {
    %c0_i32 = arith.constant 0 : i32
    %c0_i32_0 = arith.constant 0 : i32
    %c0_i32_1 = arith.constant 0 : i32
    return %c0_i32, %c0_i32_0 : i32, i32
  }
  func.func @transform_4(%arg0: i32, %arg1: i32) -> (i32, i32) {
    %c0_i32 = arith.constant 0 : i32
    %c0_i32_0 = arith.constant 0 : i32
    %c0_i32_1 = arith.constant 0 : i32
    return %c0_i32, %c0_i32_0 : i32, i32
  }
  func.func @transform_5(%arg0: i32, %arg1: i32) -> (i32, i32, i32, i32) {
    %c0_i32 = arith.constant 0 : i32
    %c0_i32_0 = arith.constant 0 : i32
    %c0_i32_1 = arith.constant 0 : i32
    return %arg0, %arg1, %c0_i32, %c0_i32_0 : i32, i32, i32, i32
  }
}

module attributes {stable_mosaic.version = 11 : i64} {
  func.func @_corr_encoder_kernel(%arg0: i32, %arg1: i32, %arg2: memref<1x1x160x4xf32, #tpu.memory_space<vmem>>, %arg3: memref<4x256xf32, #tpu.memory_space<vmem>>, %arg4: memref<1x256xf32, #tpu.memory_space<vmem>>, %arg5: memref<256x1152xbf16, #tpu.memory_space<vmem>>, %arg6: memref<1x128xf32, #tpu.memory_space<vmem>>, %arg7: memref<1x1x128x128xf32, #tpu.memory_space<vmem>>) attributes {dimension_semantics = [#tpu.dimension_semantics<parallel>, #tpu.dimension_semantics<parallel>], iteration_bounds = array<i64: 2, 2>, scalar_prefetch = 0 : i64, scratch_operands = 0 : i64, tpu.core_type = #tpu.core_type<tc>, window_params = [{transform_indices = @transform_0, window_bounds = array<i64: 1, 1, 160, 4>}, {pipeline_mode = #tpu.pipeline_mode<synchronous>, transform_indices = @transform_1, window_bounds = array<i64: 4, 256>}, {pipeline_mode = #tpu.pipeline_mode<synchronous>, transform_indices = @transform_2, window_bounds = array<i64: 1, 256>}, {pipeline_mode = #tpu.pipeline_mode<synchronous>, transform_indices = @transform_3, window_bounds = array<i64: 256, 1152>}, {pipeline_mode = #tpu.pipeline_mode<synchronous>, transform_indices = @transform_4, window_bounds = array<i64: 1, 128>}, {transform_indices = @transform_5, window_bounds = array<i64: 1, 1, 128, 128>}]} {
    %c0 = arith.constant 0 : index
    %c0_0 = arith.constant 0 : index
    %c0_1 = arith.constant 0 : index
    %c0_2 = arith.constant 0 : index
    %0 = vector.load %arg2[%c0, %c0_0, %c0_1, %c0_2] : memref<1x1x160x4xf32, #tpu.memory_space<vmem>>, vector<1x1x160x4xf32>
    %1 = vector.shape_cast %0 : vector<1x1x160x4xf32> to vector<160x4xf32>
    %2 = vector.extract_strided_slice %1 {offsets = [0, 0], sizes = [160, 1], strides = [1, 1]} : vector<160x4xf32> to vector<160x1xf32>
    %c0_3 = arith.constant 0 : index
    %c0_4 = arith.constant 0 : index
    %3 = vector.load %arg3[%c0_3, %c0_4] : memref<4x256xf32, #tpu.memory_space<vmem>>, vector<1x256xf32>
    %4 = vector.broadcast %2 : vector<160x1xf32> to vector<160x256xf32>
    %5 = vector.broadcast %3 : vector<1x256xf32> to vector<160x256xf32>
    %6 = arith.mulf %4, %5 : vector<160x256xf32>
    %7 = vector.extract_strided_slice %1 {offsets = [0, 1], sizes = [160, 1], strides = [1, 1]} : vector<160x4xf32> to vector<160x1xf32>
    %c1 = arith.constant 1 : index
    %c0_5 = arith.constant 0 : index
    %8 = vector.load %arg3[%c1, %c0_5] : memref<4x256xf32, #tpu.memory_space<vmem>>, vector<1x256xf32>
    %9 = vector.broadcast %7 : vector<160x1xf32> to vector<160x256xf32>
    %10 = vector.broadcast %8 : vector<1x256xf32> to vector<160x256xf32>
    %11 = arith.mulf %9, %10 : vector<160x256xf32>
    %12 = arith.addf %6, %11 : vector<160x256xf32>
    %13 = vector.extract_strided_slice %1 {offsets = [0, 2], sizes = [160, 1], strides = [1, 1]} : vector<160x4xf32> to vector<160x1xf32>
    %c2 = arith.constant 2 : index
    %c0_6 = arith.constant 0 : index
    %14 = vector.load %arg3[%c2, %c0_6] : memref<4x256xf32, #tpu.memory_space<vmem>>, vector<1x256xf32>
    %15 = vector.broadcast %13 : vector<160x1xf32> to vector<160x256xf32>
    %16 = vector.broadcast %14 : vector<1x256xf32> to vector<160x256xf32>
    %17 = arith.mulf %15, %16 : vector<160x256xf32>
    %18 = arith.addf %12, %17 : vector<160x256xf32>
    %19 = vector.extract_strided_slice %1 {offsets = [0, 3], sizes = [160, 1], strides = [1, 1]} : vector<160x4xf32> to vector<160x1xf32>
    %c3 = arith.constant 3 : index
    %c0_7 = arith.constant 0 : index
    %20 = vector.load %arg3[%c3, %c0_7] : memref<4x256xf32, #tpu.memory_space<vmem>>, vector<1x256xf32>
    %21 = vector.broadcast %19 : vector<160x1xf32> to vector<160x256xf32>
    %22 = vector.broadcast %20 : vector<1x256xf32> to vector<160x256xf32>
    %23 = arith.mulf %21, %22 : vector<160x256xf32>
    %24 = arith.addf %18, %23 : vector<160x256xf32>
    %c0_8 = arith.constant 0 : index
    %c0_9 = arith.constant 0 : index
    %25 = vector.load %arg4[%c0_8, %c0_9] : memref<1x256xf32, #tpu.memory_space<vmem>>, vector<1x256xf32>
    %26 = vector.broadcast %25 : vector<1x256xf32> to vector<160x256xf32>
    %27 = arith.addf %24, %26 : vector<160x256xf32>
    %cst = arith.constant 0.000000e+00 : f32
    %28 = vector.broadcast %cst : f32 to vector<160x256xf32>
    %29 = arith.maximumf %27, %28 : vector<160x256xf32>
    %30 = tpu.iota {dimensions = array<i32: 0>} : vector<160x1xi32>
    %c0_i32 = arith.constant 0 : i32
    %31 = arith.cmpi eq, %arg1, %c0_i32 : i32
    %c16_i32 = arith.constant 16 : i32
    %32 = vector.broadcast %c16_i32 : i32 to vector<160x1xi32>
    %33 = arith.cmpi slt, %30, %32 : vector<160x1xi32>
    %34 = vector.broadcast %31 : i1 to vector<160x1xi1>
    %35 = arith.andi %34, %33 : vector<160x1xi1>
    %c1_i32 = arith.constant 1 : i32
    %36 = arith.cmpi eq, %arg1, %c1_i32 : i32
    %c144_i32 = arith.constant 144 : i32
    %37 = vector.broadcast %c144_i32 : i32 to vector<160x1xi32>
    %38 = arith.cmpi sge, %30, %37 : vector<160x1xi32>
    %39 = vector.broadcast %36 : i1 to vector<160x1xi1>
    %40 = arith.andi %39, %38 : vector<160x1xi1>
    %41 = arith.ori %35, %40 : vector<160x1xi1>
    %cst_10 = arith.constant 0.000000e+00 : f32
    %42 = vector.shape_cast %41 : vector<160x1xi1> to vector<160x1xi1>
    %43 = vector.broadcast %42 : vector<160x1xi1> to vector<160x256xi1>
    %44 = vector.broadcast %cst_10 : f32 to vector<160x256xf32>
    %45 = arith.select %43, %44, %29 : vector<160x256xi1>, vector<160x256xf32>
    %46 = arith.truncf %45 : vector<160x256xf32> to vector<160x256xbf16>
    %c0_11 = arith.constant 0 : index
    %c0_12 = arith.constant 0 : index
    %47 = vector.load %arg5[%c0_11, %c0_12] : memref<256x1152xbf16, #tpu.memory_space<vmem>>, vector<256x1152xbf16>
    %cst_13 = arith.constant dense<0.000000e+00> : vector<160x1152xf32>
    %48 = tpu.matmul %46, %47, %cst_13 {dimension_numbers = #tpu.dot_dimension_numbers<[1], [0], [0], [1], [0, 0, 1, 1], [], []>} : vector<160x256xbf16>, vector<256x1152xbf16>, vector<160x1152xf32> -> vector<160x1152xf32>
    %49 = tpu.iota {dimensions = array<i32: 0>} : vector<128x1xi32>
    %50 = arith.sitofp %49 : vector<128x1xi32> to vector<128x1xf32>
    %cst_14 = arith.constant 5.000000e-01 : f32
    %51 = vector.broadcast %cst_14 : f32 to vector<128x1xf32>
    %52 = arith.addf %50, %51 : vector<128x1xf32>
    %cst_15 = arith.constant 1.600000e+01 : f32
    %53 = vector.broadcast %cst_15 : f32 to vector<128x1xf32>
    %54 = arith.divf %52, %53 : vector<128x1xf32>
    %55 = math.floor %54 : vector<128x1xf32>
    %cst_16 = arith.constant 1.600000e+01 : f32
    %56 = vector.broadcast %cst_16 : f32 to vector<128x1xf32>
    %57 = arith.mulf %55, %56 : vector<128x1xf32>
    %58 = arith.subf %50, %57 : vector<128x1xf32>
    %cst_17 = arith.constant 5.000000e-01 : f32
    %59 = vector.broadcast %cst_17 : f32 to vector<128x1xf32>
    %60 = arith.cmpf oge, %58, %59 : vector<128x1xf32>
    %cst_18 = arith.constant 1.450000e+01 : f32
    %61 = vector.broadcast %cst_18 : f32 to vector<128x1xf32>
    %62 = arith.cmpf ole, %58, %61 : vector<128x1xf32>
    %63 = vector.extract_strided_slice %48 {offsets = [0, 0], sizes = [128, 128], strides = [1, 1]} : vector<160x1152xf32> to vector<128x128xf32>
    %c1_i32_19 = arith.constant 1 : i32
    %64 = tpu.dynamic_rotate %63 by %c1_i32_19 dim 0 : vector<128x128xf32>, i32 -> vector<128x128xf32>
    %cst_20 = arith.constant 0.000000e+00 : f32
    %65 = vector.shape_cast %60 : vector<128x1xi1> to vector<128x1xi1>
    %66 = vector.broadcast %65 : vector<128x1xi1> to vector<128x128xi1>
    %67 = vector.broadcast %cst_20 : f32 to vector<128x128xf32>
    %68 = arith.select %66, %64, %67 : vector<128x128xi1>, vector<128x128xf32>
    %69 = vector.extract_strided_slice %48 {offsets = [0, 128], sizes = [128, 128], strides = [1, 1]} : vector<160x1152xf32> to vector<128x128xf32>
    %70 = vector.extract_strided_slice %48 {offsets = [0, 256], sizes = [128, 128], strides = [1, 1]} : vector<160x1152xf32> to vector<128x128xf32>
    %c127_i32 = arith.constant 127 : i32
    %71 = tpu.dynamic_rotate %70 by %c127_i32 dim 0 : vector<128x128xf32>, i32 -> vector<128x128xf32>
    %cst_21 = arith.constant 0.000000e+00 : f32
    %72 = vector.shape_cast %62 : vector<128x1xi1> to vector<128x1xi1>
    %73 = vector.broadcast %72 : vector<128x1xi1> to vector<128x128xi1>
    %74 = vector.broadcast %cst_21 : f32 to vector<128x128xf32>
    %75 = arith.select %73, %71, %74 : vector<128x128xi1>, vector<128x128xf32>
    %76 = vector.extract_strided_slice %48 {offsets = [16, 384], sizes = [128, 128], strides = [1, 1]} : vector<160x1152xf32> to vector<128x128xf32>
    %c1_i32_22 = arith.constant 1 : i32
    %77 = tpu.dynamic_rotate %76 by %c1_i32_22 dim 0 : vector<128x128xf32>, i32 -> vector<128x128xf32>
    %cst_23 = arith.constant 0.000000e+00 : f32
    %78 = vector.shape_cast %60 : vector<128x1xi1> to vector<128x1xi1>
    %79 = vector.broadcast %78 : vector<128x1xi1> to vector<128x128xi1>
    %80 = vector.broadcast %cst_23 : f32 to vector<128x128xf32>
    %81 = arith.select %79, %77, %80 : vector<128x128xi1>, vector<128x128xf32>
    %82 = vector.extract_strided_slice %48 {offsets = [16, 512], sizes = [128, 128], strides = [1, 1]} : vector<160x1152xf32> to vector<128x128xf32>
    %83 = vector.extract_strided_slice %48 {offsets = [16, 640], sizes = [128, 128], strides = [1, 1]} : vector<160x1152xf32> to vector<128x128xf32>
    %c127_i32_24 = arith.constant 127 : i32
    %84 = tpu.dynamic_rotate %83 by %c127_i32_24 dim 0 : vector<128x128xf32>, i32 -> vector<128x128xf32>
    %cst_25 = arith.constant 0.000000e+00 : f32
    %85 = vector.shape_cast %62 : vector<128x1xi1> to vector<128x1xi1>
    %86 = vector.broadcast %85 : vector<128x1xi1> to vector<128x128xi1>
    %87 = vector.broadcast %cst_25 : f32 to vector<128x128xf32>
    %88 = arith.select %86, %84, %87 : vector<128x128xi1>, vector<128x128xf32>
    %89 = vector.extract_strided_slice %48 {offsets = [32, 768], sizes = [128, 128], strides = [1, 1]} : vector<160x1152xf32> to vector<128x128xf32>
    %c1_i32_26 = arith.constant 1 : i32
    %90 = tpu.dynamic_rotate %89 by %c1_i32_26 dim 0 : vector<128x128xf32>, i32 -> vector<128x128xf32>
    %cst_27 = arith.constant 0.000000e+00 : f32
    %91 = vector.shape_cast %60 : vector<128x1xi1> to vector<128x1xi1>
    %92 = vector.broadcast %91 : vector<128x1xi1> to vector<128x128xi1>
    %93 = vector.broadcast %cst_27 : f32 to vector<128x128xf32>
    %94 = arith.select %92, %90, %93 : vector<128x128xi1>, vector<128x128xf32>
    %95 = vector.extract_strided_slice %48 {offsets = [32, 896], sizes = [128, 128], strides = [1, 1]} : vector<160x1152xf32> to vector<128x128xf32>
    %96 = vector.extract_strided_slice %48 {offsets = [32, 1024], sizes = [128, 128], strides = [1, 1]} : vector<160x1152xf32> to vector<128x128xf32>
    %c127_i32_28 = arith.constant 127 : i32
    %97 = tpu.dynamic_rotate %96 by %c127_i32_28 dim 0 : vector<128x128xf32>, i32 -> vector<128x128xf32>
    %cst_29 = arith.constant 0.000000e+00 : f32
    %98 = vector.shape_cast %62 : vector<128x1xi1> to vector<128x1xi1>
    %99 = vector.broadcast %98 : vector<128x1xi1> to vector<128x128xi1>
    %100 = vector.broadcast %cst_29 : f32 to vector<128x128xf32>
    %101 = arith.select %99, %97, %100 : vector<128x128xi1>, vector<128x128xf32>
    %102 = arith.addf %68, %69 : vector<128x128xf32>
    %103 = arith.addf %75, %81 : vector<128x128xf32>
    %104 = arith.addf %88, %94 : vector<128x128xf32>
    %105 = arith.addf %95, %101 : vector<128x128xf32>
    %106 = arith.addf %102, %103 : vector<128x128xf32>
    %107 = arith.addf %104, %105 : vector<128x128xf32>
    %108 = arith.addf %106, %107 : vector<128x128xf32>
    %109 = arith.addf %108, %82 : vector<128x128xf32>
    %c0_30 = arith.constant 0 : index
    %c0_31 = arith.constant 0 : index
    %110 = vector.load %arg6[%c0_30, %c0_31] : memref<1x128xf32, #tpu.memory_space<vmem>>, vector<1x128xf32>
    %111 = vector.broadcast %110 : vector<1x128xf32> to vector<128x128xf32>
    %112 = arith.addf %109, %111 : vector<128x128xf32>
    %cst_32 = arith.constant 0.000000e+00 : f32
    %113 = vector.broadcast %cst_32 : f32 to vector<128x128xf32>
    %114 = arith.maximumf %112, %113 : vector<128x128xf32>
    %c0_33 = arith.constant 0 : index
    %c0_34 = arith.constant 0 : index
    %c0_35 = arith.constant 0 : index
    %c0_36 = arith.constant 0 : index
    %115 = vector.load %arg7[%c0_33, %c0_34, %c0_35, %c0_36] : memref<1x1x128x128xf32, #tpu.memory_space<vmem>>, vector<1x1x128x128xf32>
    %116 = vector.shape_cast %115 : vector<1x1x128x128xf32> to vector<128x128xf32>
    %117 = vector.shape_cast %114 : vector<128x128xf32> to vector<1x1x128x128xf32>
    tpu.vector_store %arg7[%c0_33, %c0_34, %c0_35, %c0_36], %117 {strides = array<i32>} : memref<1x1x128x128xf32, #tpu.memory_space<vmem>>, vector<1x1x128x128xf32>,
    return
  }
  func.func @transform_0(%arg0: i32, %arg1: i32) -> (i32, i32, i32, i32) {
    %c0_i32 = arith.constant 0 : i32
    %c0_i32_0 = arith.constant 0 : i32
    %c0_i32_1 = arith.constant 0 : i32
    return %arg0, %arg1, %c0_i32, %c0_i32_0 : i32, i32, i32, i32
  }
  func.func @transform_1(%arg0: i32, %arg1: i32) -> (i32, i32) {
    %c0_i32 = arith.constant 0 : i32
    %c0_i32_0 = arith.constant 0 : i32
    %c0_i32_1 = arith.constant 0 : i32
    return %c0_i32, %c0_i32_0 : i32, i32
  }
  func.func @transform_2(%arg0: i32, %arg1: i32) -> (i32, i32) {
    %c0_i32 = arith.constant 0 : i32
    %c0_i32_0 = arith.constant 0 : i32
    %c0_i32_1 = arith.constant 0 : i32
    return %c0_i32, %c0_i32_0 : i32, i32
  }
  func.func @transform_3(%arg0: i32, %arg1: i32) -> (i32, i32) {
    %c0_i32 = arith.constant 0 : i32
    %c0_i32_0 = arith.constant 0 : i32
    %c0_i32_1 = arith.constant 0 : i32
    return %c0_i32, %c0_i32_0 : i32, i32
  }
  func.func @transform_4(%arg0: i32, %arg1: i32) -> (i32, i32) {
    %c0_i32 = arith.constant 0 : i32
    %c0_i32_0 = arith.constant 0 : i32
    %c0_i32_1 = arith.constant 0 : i32
    return %c0_i32, %c0_i32_0 : i32, i32
  }
  func.func @transform_5(%arg0: i32, %arg1: i32) -> (i32, i32, i32, i32) {
    %c0_i32 = arith.constant 0 : i32
    %c0_i32_0 = arith.constant 0 : i32
    %c0_i32_1 = arith.constant 0 : i32
    return %arg0, %arg1, %c0_i32, %c0_i32_0 : i32, i32, i32, i32
  }
}

</mosaic_0001>

<llo_original>
// kernel: tpu_custom_call.1
$region0: #{tpu_custom_call.1}
  #allocation0 [shape = 'u32[]', space=smem, size = 0x4, offset = 0x4, fixed_abs, tag = 'smem constant byte address 0x4 - core index']
  #allocation1 [shape = 'u32[144,128]{1,0:T(1,128)}', space=vmem, size = 0x12000, scoped, tag = 'internal scratch']
  %s0 = inlined_call_operand.vmem [shape: f32[2,2,160,4], index: 0, kind: input, shape index: {}]
  %s1 = inlined_call_operand.vmem [shape: f32[4,256], index: 1, kind: input, shape index: {}]
  %s2 = inlined_call_operand.vmem [shape: f32[1,256], index: 2, kind: input, shape index: {}]
  %s3 = inlined_call_operand.hbm [shape: bf16[256,1152], index: 3, kind: input, shape index: {}]
  %s4 = inlined_call_operand.vmem [shape: f32[1,128], index: 4, kind: input, shape index: {}]
  %s5 = inlined_call_operand.hbm [shape: f32[2,2,128,128], index: 5, kind: output, shape index: {}]
  %s6 = sld [smem:[#allocation0]]
  $region57: #{tpu_custom_call.1} parent=0
    _
  %s8 = ssub.s32 1, %s6
  %s9 = scalar_select 0, %s8, %s6
  $region1: #{tpu_custom_call.1} parent=0
    #allocation2 [shape = 'u8[589824]{0}', space=vmem, size = 0x90000, scoped, tag = 'input window, operand 3, single buffered']
    #allocation3 [shape = 's32[2]{0}', space=sflag, size = 0x8, scoped, tag = 'scoped memory for tpu_custom_call.1']
    #allocation4 [shape = 's32[2]{0}', space=sflag, size = 0x8, scoped, tag = 'scoped memory for tpu_custom_call.1']
    #allocation5 [shape = 'u8[131072]{0}', space=vmem, size = 0x20000, scoped, tag = 'output window, operand 0']
    %10 = vsyncpa [#allocation3], 0
    %11 = vsyncpa [#allocation4], 0
    %s12 = scalar_lea.sflag [#allocation4], 1
    %13 = vsyncpa %s12, 0
    loop: start=0, step=1, limit=6
    $region2: #{tpu_custom_call.1} parent=1 // loop_pre_header
      _
    $region3: #{tpu_custom_call.1} parent=1 // loop_header
      %s15 = sphi 0, %s19
      %p16 = scmp.ge.s32.totalorder %s15, 6
      %s22 = sphi 0, %s34
      %s23 = sphi 0, %s30
      %s24 = sphi 0, %s22
      %s25 = sphi 0, %s23
      %s26 = sphi 0, %s24
      %s27 = sphi 0, %s25
      %s39 = sphi 0, %s41
      %s42 = sphi 0, %s39
      %s43 = sphi 0, %s42
      %s59 = sphi 0, %s43
      %s63 = sphi 0, %s63
      %s65 = sphi 0, %s63
      %s66 = sphi 0, %s65
      %s80 = sphi 0, %s66
      %s84 = sphi 0, %s84
      %s86 = sphi 0, %s84
      %s87 = sphi 0, %s86
      %s101 = sphi 0, %s87
      %s105 = sphi 0, %s105
      %s107 = sphi 0, %s105
      %s108 = sphi 0, %s107
      %s122 = sphi 0, %s108
      %s126 = sphi 0, %s126
      %s128 = sphi 0, %s126
      %s129 = sphi 0, %s128
      %s143 = sphi 0, %s129
      %s151 = sphi 0, %s153
      %s154 = sphi 0, %s151
      %s155 = sphi 0, %s154
      %s171 = sphi 0, %s155
    $region4: #{tpu_custom_call.1} parent=1 // loop_header_branch
      %18 = sbr.rel (%p16) target = $region8
    $region5: #{tpu_custom_call.1} parent=1 // loop_body
      %s20 = ssub.s32 %s15, 1
      %s21 = ssub.s32 %s15, 2
      %s28 = sadd.s32 1, %s23
      %p29 = scmp.ge.s32.totalorder %s28, 2
      %s30 = scalar_select %p29, 0, %s28
      %s31 = sadd.s32 1, %s22
      %s32 = scalar_select %p29, %s31, %s22
      %p33 = scmp.ge.s32.totalorder %s32, 2
      %s34 = scalar_select %p33, 0, %s32
      %s35 = ssub.s32 %s22, %s34
      %s36 = ssub.s32 %s23, %s30
      %s37 = sor.u32 %s35, %s36
      %p38 = scmp.eq.s32.totalorder %s37, 0
      %s40 = sadd.s32 %s39, 1
      %s41 = scalar_select %p38, %s39, %s40
      %p44 = pneg %p38
      %p45 = scmp.eq.s32.totalorder %s15, 3
      %p46 = por %p44, %p45
      %p47 = scmp.ne.s32.totalorder %s39, %s42
      %p48 = scmp.eq.s32.totalorder %s15, 0
      %p49 = por %p47, %p48
      %p50 = scmp.ne.s32.totalorder %s39, %s42
      %p51 = scmp.eq.s32.totalorder %s20, 3
      %p52 = por %p50, %p51
      %p53 = scmp.ne.s32.totalorder %s42, %s43
      %p54 = scmp.eq.s32.totalorder %s20, 0
      %p55 = por %p53, %p54
      %p56 = scmp.ne.s32.totalorder %s42, %s43
      %p57 = scmp.eq.s32.totalorder %s21, 3
      %p58 = por %p56, %p57
      %p60 = scmp.ne.s32.totalorder %s43, %s59
      %p61 = scmp.eq.s32.totalorder %s21, 0
      %p62 = por %p60, %p61
      %s64 = sadd.s32 %s63, 1
      %p67 = scmp.eq.s32.totalorder %s15, 3
      %p68 = scmp.ne.s32.totalorder %s63, %s65
      %p69 = scmp.eq.s32.totalorder %s15, 0
      %p70 = por %p68, %p69
      %p71 = scmp.ne.s32.totalorder %s63, %s65
      %p72 = scmp.eq.s32.totalorder %s20, 3
      %p73 = por %p71, %p72
      %p74 = scmp.ne.s32.totalorder %s65, %s66
      %p75 = scmp.eq.s32.totalorder %s20, 0
      %p76 = por %p74, %p75
      %p77 = scmp.ne.s32.totalorder %s65, %s66
      %p78 = scmp.eq.s32.totalorder %s21, 3
      %p79 = por %p77, %p78
      %p81 = scmp.ne.s32.totalorder %s66, %s80
      %p82 = scmp.eq.s32.totalorder %s21, 0
      %p83 = por %p81, %p82
      %s85 = sadd.s32 %s84, 1
      %p88 = scmp.eq.s32.totalorder %s15, 3
      %p89 = scmp.ne.s32.totalorder %s84, %s86
      %p90 = scmp.eq.s32.totalorder %s15, 0
      %p91 = por %p89, %p90
      %p92 = scmp.ne.s32.totalorder %s84, %s86
      %p93 = scmp.eq.s32.totalorder %s20, 3
      %p94 = por %p92, %p93
      %p95 = scmp.ne.s32.totalorder %s86, %s87
      %p96 = scmp.eq.s32.totalorder %s20, 0
      %p97 = por %p95, %p96
      %p98 = scmp.ne.s32.totalorder %s86, %s87
      %p99 = scmp.eq.s32.totalorder %s21, 3
      %p100 = por %p98, %p99
      %p102 = scmp.ne.s32.totalorder %s87, %s101
      %p103 = scmp.eq.s32.totalorder %s21, 0
      %p104 = por %p102, %p103
      %s106 = sadd.s32 %s105, 1
      %p109 = scmp.eq.s32.totalorder %s15, 3
      %p110 = scmp.ne.s32.totalorder %s105, %s107
      %p111 = scmp.eq.s32.totalorder %s15, 0
      %p112 = por %p110, %p111
      %p113 = scmp.ne.s32.totalorder %s105, %s107
      %p114 = scmp.eq.s32.totalorder %s20, 3
      %p115 = por %p113, %p114
      %p116 = scmp.ne.s32.totalorder %s107, %s108
      %p117 = scmp.eq.s32.totalorder %s20, 0
      %p118 = por %p116, %p117
      %p119 = scmp.ne.s32.totalorder %s107, %s108
      %p120 = scmp.eq.s32.totalorder %s21, 3
      %p121 = por %p119, %p120
      %p123 = scmp.ne.s32.totalorder %s108, %s122
      %p124 = scmp.eq.s32.totalorder %s21, 0
      %p125 = por %p123, %p124
      %s127 = sadd.s32 %s126, 1
      %p130 = scmp.eq.s32.totalorder %s15, 3
      %p131 = scmp.ne.s32.totalorder %s126, %s128
      %p132 = scmp.eq.s32.totalorder %s15, 0
      %p133 = por %p131, %p132
      %p134 = scmp.ne.s32.totalorder %s126, %s128
      %p135 = scmp.eq.s32.totalorder %s20, 3
      %p136 = por %p134, %p135
      %p137 = scmp.ne.s32.totalorder %s128, %s129
      %p138 = scmp.eq.s32.totalorder %s20, 0
      %p139 = por %p137, %p138
      %p140 = scmp.ne.s32.totalorder %s128, %s129
      %p141 = scmp.eq.s32.totalorder %s21, 3
      %p142 = por %p140, %p141
      %p144 = scmp.ne.s32.totalorder %s129, %s143
      %p145 = scmp.eq.s32.totalorder %s21, 0
      %p146 = por %p144, %p145
      %s147 = ssub.s32 %s22, %s34
      %s148 = ssub.s32 %s23, %s30
      %s149 = sor.u32 %s147, %s148
      %p150 = scmp.eq.s32.totalorder %s149, 0
      %s152 = sadd.s32 %s151, 1
      %s153 = scalar_select %p150, %s151, %s152
      %p156 = pneg %p150
      %p157 = scmp.eq.s32.totalorder %s15, 3
      %p158 = por %p156, %p157
      %p159 = scmp.ne.s32.totalorder %s151, %s154
      %p160 = scmp.eq.s32.totalorder %s15, 0
      %p161 = por %p159, %p160
      %p162 = scmp.ne.s32.totalorder %s151, %s154
      %p163 = scmp.eq.s32.totalorder %s20, 3
      %p164 = por %p162, %p163
      %p165 = scmp.ne.s32.totalorder %s154, %s155
      %p166 = scmp.eq.s32.totalorder %s20, 0
      %p167 = por %p165, %p166
      %p168 = scmp.ne.s32.totalorder %s154, %s155
      %p169 = scmp.eq.s32.totalorder %s21, 3
      %p170 = por %p168, %p169
      %p172 = scmp.ne.s32.totalorder %s155, %s171
      %p173 = scmp.eq.s32.totalorder %s21, 0
      %p174 = por %p172, %p173
      %p175 = scmp.le.s32.totalorder 1, %s15
      %p176 = scmp.lt.s32.totalorder %s15, 5
      %p177 = pnand %p175, %p176
      %p178 = pneg %p177
      // Predicated region
      $region9: #{tpu_custom_call.1} parent=5 // pred_check
        _
      $region10: #{tpu_custom_call.1} parent=5 // pred_check_branch
        %180 = sbr.rel (%p177) target = $region12
      $region11: #{tpu_custom_call.1} parent=5 // pred_region
        %s181 = ssub.s32 %s15, 1
        // Predicated region
        $region13: #{tpu_custom_call.1} parent=11 // pred_check
          %p182 = pneg %p76
        $region14: #{tpu_custom_call.1} parent=11 // pred_check_branch
          %184 = sbr.rel (%p182) target = $region16
        $region15: #{tpu_custom_call.1} parent=11 // pred_region
          _
        $region16: #{tpu_custom_call.1} parent=11 // pred_fallthru
          _
        // Predicated region
        $region17: #{tpu_custom_call.1} parent=11 // pred_check
          %p185 = pneg %p97
        $region18: #{tpu_custom_call.1} parent=11 // pred_check_branch
          %187 = sbr.rel (%p185) target = $region20
        $region19: #{tpu_custom_call.1} parent=11 // pred_region
          _
        $region20: #{tpu_custom_call.1} parent=11 // pred_fallthru
          _
        // Predicated region
        $region21: #{tpu_custom_call.1} parent=11 // pred_check
          %p188 = pneg %p118
        $region22: #{tpu_custom_call.1} parent=11 // pred_check_branch
          %190 = sbr.rel (%p188) target = $region24
        $region23: #{tpu_custom_call.1} parent=11 // pred_region
          %s192 = ssub.s32 18432, 18432
          %193 = vsyncadd [#allocation3], %s192
          %s194 = sshll.u32 [#allocation2], 4
          %s195 = int_to_ptr.vmem [resolvable:$true] %s194
          %200 = dma.hbm_to_vmem [thread:$0]  %s3, 18432, %s195, [#allocation3], 576, 576, 36
        $region24: #{tpu_custom_call.1} parent=11 // pred_fallthru
          _
        // Predicated region
        $region25: #{tpu_custom_call.1} parent=11 // pred_check
          %p201 = pneg %p139
        $region26: #{tpu_custom_call.1} parent=11 // pred_check_branch
          %203 = sbr.rel (%p201) target = $region28
        $region27: #{tpu_custom_call.1} parent=11 // pred_region
          _
        $region28: #{tpu_custom_call.1} parent=11 // pred_fallthru
          _
      $region12: #{tpu_custom_call.1} parent=5 // pred_fallthru
        _
      %p204 = scmp.lt.s32.totalorder %s15, 4
      // Predicated region
      $region29: #{tpu_custom_call.1} parent=5 // pred_check
        %p205 = pneg %p204
      $region30: #{tpu_custom_call.1} parent=5 // pred_check_branch
        %207 = sbr.rel (%p205) target = $region32
      $region31: #{tpu_custom_call.1} parent=5 // pred_region
        // Predicated region
        $region33: #{tpu_custom_call.1} parent=31 // pred_check
          %p208 = pneg %p49
        $region34: #{tpu_custom_call.1} parent=31 // pred_check_branch
          %210 = sbr.rel (%p208) target = $region36
        $region35: #{tpu_custom_call.1} parent=31 // pred_region
          %p211 = scmp.lt.s32.totalorder %s22, 1
          %s212 = scalar_select %p211, %s22, 1
          %p213 = scmp.lt.s32.totalorder %s23, 1
          %s214 = scalar_select %p213, %s23, 1
          %s215 = smul.addr %s214, 20
          %s216 = smul.addr %s212, 40
          %s217 = sadd.s32 %s215, %s216
          %s218 = smul.addr %s217, 8
          %s219 = scalar_lea.vmem %s0, %s218
        $region36: #{tpu_custom_call.1} parent=31 // pred_fallthru
          _
      $region32: #{tpu_custom_call.1} parent=5 // pred_fallthru
        _
      %p220 = scmp.le.s32.totalorder 1, %s15
      %p221 = scmp.lt.s32.totalorder %s15, 5
      %p222 = pnand %p220, %p221
      %p223 = pneg %p222
      // Predicated region
      $region37: #{tpu_custom_call.1} parent=5 // pred_check
        _
      $region38: #{tpu_custom_call.1} parent=5 // pred_check_branch
        %225 = sbr.rel (%p222) target = $region40
      $region39: #{tpu_custom_call.1} parent=5 // pred_region
        %s226 = ssub.s32 %s15, 1
        // Predicated region
        $region41: #{tpu_custom_call.1} parent=39 // pred_check
          %p227 = pneg %p118
        $region42: #{tpu_custom_call.1} parent=39 // pred_check_branch
          %229 = sbr.rel (%p227) target = $region44
        $region43: #{tpu_custom_call.1} parent=39 // pred_region
          %230 = dma.done [#allocation3], 18432
        $region44: #{tpu_custom_call.1} parent=39 // pred_fallthru
          _
        %p231 = scmp.lt.s32.totalorder %s24, 1
        %s232 = scalar_select %p231, %s24, 1
        %p233 = scmp.lt.s32.totalorder %s25, 1
        %s234 = scalar_select %p233, %s25, 1
        %s235 = smul.addr %s234, 20
        %s236 = smul.addr %s232, 40
        %s237 = sadd.s32 %s235, %s236
        %s238 = smul.addr %s237, 8
        %s239 = scalar_lea.vmem %s0, %s238
        %p240 = pneg %p55
        %p241 = pneg %p52
        %p242 = pneg %p76
        %p243 = pneg %p73
        %p244 = pneg %p97
        %p245 = pneg %p94
        %p246 = pneg %p118
        %p247 = pneg %p115
        %p248 = pneg %p139
        %p249 = pneg %p136
        %p250 = pneg %p167
        %p251 = pneg %p164
        %s252 = sand.u32 %s154, 1
        %s253 = scalar_lea.sflag [#allocation4], %s252
        %s254 = sand.u32 %s154, 1
        %s255 = smul.addr %s254, 128
        %s256 = scalar_lea.vmem [#allocation5], %s255
        %p257 = scmp.lt.s32.totalorder %s24, 1
        %s258 = scalar_select %p257, %s24, 1
        %p259 = scmp.lt.s32.totalorder %s25, 1
        %s260 = scalar_select %p259, %s25, 1
        %s261 = smul.addr %s260, 20
        %s262 = smul.addr %s258, 40
        %s263 = sadd.s32 %s261, %s262
        %s264 = smul.addr %s263, 8
        %s265 = scalar_lea.vmem %s0, %s264
        %v267 = vld [vmem:[%s265] sm:$0xff]
        %v268 = vld [vmem:[%s265 + $0x8] sm:$0xff]
        %v269 = vld [vmem:[%s265 + $0x10] sm:$0xff]
        %v270 = vld [vmem:[%s265 + $0x18] sm:$0xff]
        %v271 = vld [vmem:[%s265 + $0x20] sm:$0xff]
        %v272 = vld [vmem:[%s265 + $0x28] sm:$0xff]
        %v273 = vld [vmem:[%s265 + $0x30] sm:$0xff]
        %v274 = vld [vmem:[%s265 + $0x38] sm:$0xff]
        %v275 = vld [vmem:[%s265 + $0x40] sm:$0xff]
        %v276 = vld [vmem:[%s265 + $0x48] sm:$0xff]
        %v277 = vld [vmem:[%s265 + $0x50] sm:$0xff]
        %v278 = vld [vmem:[%s265 + $0x58] sm:$0xff]
        %v279 = vld [vmem:[%s265 + $0x60] sm:$0xff]
        %v280 = vld [vmem:[%s265 + $0x68] sm:$0xff]
        %v281 = vld [vmem:[%s265 + $0x70] sm:$0xff]
        %v282 = vld [vmem:[%s265 + $0x78] sm:$0xff]
        %v283 = vld [vmem:[%s265 + $0x80] sm:$0xff]
        %v284 = vld [vmem:[%s265 + $0x88] sm:$0xff]
        %v285 = vld [vmem:[%s265 + $0x90] sm:$0xff]
        %v286 = vld [vmem:[%s265 + $0x98] sm:$0xff]
        %v287 = vld [vmem:[%s1] ss:$4 sm:$0x3]
        %289 = vset.pattern.permute.xlu0 0
        %290 = vperm.xlu0 %289, %v267
        %v291 = vpop.permute.xlu0 %290
        %294 = vset.pattern.permute.xlu0 0
        %295 = vperm.xlu0 %294, %v268
        %v296 = vpop.permute.xlu0 %295
        %299 = vset.pattern.permute.xlu0 0
        %300 = vperm.xlu0 %299, %v269
        %v301 = vpop.permute.xlu0 %300
        %304 = vset.pattern.permute.xlu0 0
        %305 = vperm.xlu0 %304, %v270
        %v306 = vpop.permute.xlu0 %305
        %309 = vset.pattern.permute.xlu0 0
        %310 = vperm.xlu0 %309, %v271
        %v311 = vpop.permute.xlu0 %310
        %314 = vset.pattern.permute.xlu0 0
        %315 = vperm.xlu0 %314, %v272
        %v316 = vpop.permute.xlu0 %315
        %319 = vset.pattern.permute.xlu0 0
        %320 = vperm.xlu0 %319, %v273
        %v321 = vpop.permute.xlu0 %320
        %324 = vset.pattern.permute.xlu0 0
        %325 = vperm.xlu0 %324, %v274
        %v326 = vpop.permute.xlu0 %325
        %329 = vset.pattern.permute.xlu0 0
        %330 = vperm.xlu0 %329, %v275
        %v331 = vpop.permute.xlu0 %330
        %334 = vset.pattern.permute.xlu0 0
        %335 = vperm.xlu0 %334, %v276
        %v336 = vpop.permute.xlu0 %335
        %339 = vset.pattern.permute.xlu0 0
        %340 = vperm.xlu0 %339, %v277
        %v341 = vpop.permute.xlu0 %340
        %344 = vset.pattern.permute.xlu0 0
        %345 = vperm.xlu0 %344, %v278
        %v346 = vpop.permute.xlu0 %345
        %349 = vset.pattern.permute.xlu0 0
        %350 = vperm.xlu0 %349, %v279
        %v351 = vpop.permute.xlu0 %350
        %354 = vset.pattern.permute.xlu0 0
        %355 = vperm.xlu0 %354, %v280
        %v356 = vpop.permute.xlu0 %355
        %359 = vset.pattern.permute.xlu0 0
        %360 = vperm.xlu0 %359, %v281
        %v361 = vpop.permute.xlu0 %360
        %364 = vset.pattern.permute.xlu0 0
        %365 = vperm.xlu0 %364, %v282
        %v366 = vpop.permute.xlu0 %365
        %369 = vset.pattern.permute.xlu0 0
        %370 = vperm.xlu0 %369, %v283
        %v371 = vpop.permute.xlu0 %370
        %374 = vset.pattern.permute.xlu0 0
        %375 = vperm.xlu0 %374, %v284
        %v376 = vpop.permute.xlu0 %375
        %379 = vset.pattern.permute.xlu0 0
        %380 = vperm.xlu0 %379, %v285
        %v381 = vpop.permute.xlu0 %380
        %384 = vset.pattern.permute.xlu0 0
        %385 = vperm.xlu0 %384, %v286
        %v386 = vpop.permute.xlu0 %385
        %v389 = vlaneseq
        %v390 = vshrl.u32 %v389, 7
        %v391 = vsub.s32 0, %v390
        %v392 = vrot.slane %v287, %v391
        %v393 = vlaneseq
        %v394 = vshrl.u32 %v393, 7
        %v395 = vsub.s32 1, %v394
        %v396 = vrot.slane %v287, %v395
        %v399 = vmul.f32 %v291, %v392
        %v400 = vmul.f32 %v291, %v396
        %v401 = vmul.f32 %v296, %v392
        %v402 = vmul.f32 %v296, %v396
        %v403 = vmul.f32 %v301, %v392
        %v404 = vmul.f32 %v301, %v396
        %v405 = vmul.f32 %v306, %v392
        %v406 = vmul.f32 %v306, %v396
        %v407 = vmul.f32 %v311, %v392
        %v408 = vmul.f32 %v311, %v396
        %v409 = vmul.f32 %v316, %v392
        %v410 = vmul.f32 %v316, %v396
        %v411 = vmul.f32 %v321, %v392
        %v412 = vmul.f32 %v321, %v396
        %v413 = vmul.f32 %v326, %v392
        %v414 = vmul.f32 %v326, %v396
        %v415 = vmul.f32 %v331, %v392
        %v416 = vmul.f32 %v331, %v396
        %v417 = vmul.f32 %v336, %v392
        %v418 = vmul.f32 %v336, %v396
        %v419 = vmul.f32 %v341, %v392
        %v420 = vmul.f32 %v341, %v396
        %v421 = vmul.f32 %v346, %v392
        %v422 = vmul.f32 %v346, %v396
        %v423 = vmul.f32 %v351, %v392
        %v424 = vmul.f32 %v351, %v396
        %v425 = vmul.f32 %v356, %v392
        %v426 = vmul.f32 %v356, %v396
        %v427 = vmul.f32 %v361, %v392
        %v428 = vmul.f32 %v361, %v396
        %v429 = vmul.f32 %v366, %v392
        %v430 = vmul.f32 %v366, %v396
        %v431 = vmul.f32 %v371, %v392
        %v432 = vmul.f32 %v371, %v396
        %v433 = vmul.f32 %v376, %v392
        %v434 = vmul.f32 %v376, %v396
        %v435 = vmul.f32 %v381, %v392
        %v436 = vmul.f32 %v381, %v396
        %v437 = vmul.f32 %v386, %v392
        %v438 = vmul.f32 %v386, %v396
        %s439 = scalar_lea.vmem %s1, 1
        %v440 = vld [vmem:[%s439] ss:$4 sm:$0x3]
        %441 = vset.pattern.permute.xlu0 1
        %442 = vperm.xlu0 %441, %v267
        %v443 = vpop.permute.xlu0 %442
        %445 = vset.pattern.permute.xlu0 1
        %446 = vperm.xlu0 %445, %v268
        %v447 = vpop.permute.xlu0 %446
        %449 = vset.pattern.permute.xlu0 1
        %450 = vperm.xlu0 %449, %v269
        %v451 = vpop.permute.xlu0 %450
        %453 = vset.pattern.permute.xlu0 1
        %454 = vperm.xlu0 %453, %v270
        %v455 = vpop.permute.xlu0 %454
        %457 = vset.pattern.permute.xlu0 1
        %458 = vperm.xlu0 %457, %v271
        %v459 = vpop.permute.xlu0 %458
        %461 = vset.pattern.permute.xlu0 1
        %462 = vperm.xlu0 %461, %v272
        %v463 = vpop.permute.xlu0 %462
        %465 = vset.pattern.permute.xlu0 1
        %466 = vperm.xlu0 %465, %v273
        %v467 = vpop.permute.xlu0 %466
        %469 = vset.pattern.permute.xlu0 1
        %470 = vperm.xlu0 %469, %v274
        %v471 = vpop.permute.xlu0 %470
        %473 = vset.pattern.permute.xlu0 1
        %474 = vperm.xlu0 %473, %v275
        %v475 = vpop.permute.xlu0 %474
        %477 = vset.pattern.permute.xlu0 1
        %478 = vperm.xlu0 %477, %v276
        %v479 = vpop.permute.xlu0 %478
        %481 = vset.pattern.permute.xlu0 1
        %482 = vperm.xlu0 %481, %v277
        %v483 = vpop.permute.xlu0 %482
        %485 = vset.pattern.permute.xlu0 1
        %486 = vperm.xlu0 %485, %v278
        %v487 = vpop.permute.xlu0 %486
        %489 = vset.pattern.permute.xlu0 1
        %490 = vperm.xlu0 %489, %v279
        %v491 = vpop.permute.xlu0 %490
        %493 = vset.pattern.permute.xlu0 1
        %494 = vperm.xlu0 %493, %v280
        %v495 = vpop.permute.xlu0 %494
        %497 = vset.pattern.permute.xlu0 1
        %498 = vperm.xlu0 %497, %v281
        %v499 = vpop.permute.xlu0 %498
        %501 = vset.pattern.permute.xlu0 1
        %502 = vperm.xlu0 %501, %v282
        %v503 = vpop.permute.xlu0 %502
        %505 = vset.pattern.permute.xlu0 1
        %506 = vperm.xlu0 %505, %v283
        %v507 = vpop.permute.xlu0 %506
        %509 = vset.pattern.permute.xlu0 1
        %510 = vperm.xlu0 %509, %v284
        %v511 = vpop.permute.xlu0 %510
        %513 = vset.pattern.permute.xlu0 1
        %514 = vperm.xlu0 %513, %v285
        %v515 = vpop.permute.xlu0 %514
        %517 = vset.pattern.permute.xlu0 1
        %518 = vperm.xlu0 %517, %v286
        %v519 = vpop.permute.xlu0 %518
        %v522 = vlaneseq
        %v523 = vshrl.u32 %v522, 7
        %v524 = vsub.s32 0, %v523
        %v525 = vrot.slane %v440, %v524
        %v526 = vlaneseq
        %v527 = vshrl.u32 %v526, 7
        %v528 = vsub.s32 1, %v527
        %v529 = vrot.slane %v440, %v528
        %v532 = vmul.f32 %v443, %v525
        %v533 = vmul.f32 %v443, %v529
        %v534 = vmul.f32 %v447, %v525
        %v535 = vmul.f32 %v447, %v529
        %v536 = vmul.f32 %v451, %v525
        %v537 = vmul.f32 %v451, %v529
        %v538 = vmul.f32 %v455, %v525
        %v539 = vmul.f32 %v455, %v529
        %v540 = vmul.f32 %v459, %v525
        %v541 = vmul.f32 %v459, %v529
        %v542 = vmul.f32 %v463, %v525
        %v543 = vmul.f32 %v463, %v529
        %v544 = vmul.f32 %v467, %v525
        %v545 = vmul.f32 %v467, %v529
        %v546 = vmul.f32 %v471, %v525
        %v547 = vmul.f32 %v471, %v529
        %v548 = vmul.f32 %v475, %v525
        %v549 = vmul.f32 %v475, %v529
        %v550 = vmul.f32 %v479, %v525
        %v551 = vmul.f32 %v479, %v529
        %v552 = vmul.f32 %v483, %v525
        %v553 = vmul.f32 %v483, %v529
        %v554 = vmul.f32 %v487, %v525
        %v555 = vmul.f32 %v487, %v529
        %v556 = vmul.f32 %v491, %v525
        %v557 = vmul.f32 %v491, %v529
        %v558 = vmul.f32 %v495, %v525
        %v559 = vmul.f32 %v495, %v529
        %v560 = vmul.f32 %v499, %v525
        %v561 = vmul.f32 %v499, %v529
        %v562 = vmul.f32 %v503, %v525
        %v563 = vmul.f32 %v503, %v529
        %v564 = vmul.f32 %v507, %v525
        %v565 = vmul.f32 %v507, %v529
        %v566 = vmul.f32 %v511, %v525
        %v567 = vmul.f32 %v511, %v529
        %v568 = vmul.f32 %v515, %v525
        %v569 = vmul.f32 %v515, %v529
        %v570 = vmul.f32 %v519, %v525
        %v571 = vmul.f32 %v519, %v529
        %v572 = vadd.f32 %v399, %v532
        %v573 = vadd.f32 %v400, %v533
        %v574 = vadd.f32 %v401, %v534
        %v575 = vadd.f32 %v402, %v535
        %v576 = vadd.f32 %v403, %v536
        %v577 = vadd.f32 %v404, %v537
        %v578 = vadd.f32 %v405, %v538
        %v579 = vadd.f32 %v406, %v539
        %v580 = vadd.f32 %v407, %v540
        %v581 = vadd.f32 %v408, %v541
        %v582 = vadd.f32 %v409, %v542
        %v583 = vadd.f32 %v410, %v543
        %v584 = vadd.f32 %v411, %v544
        %v585 = vadd.f32 %v412, %v545
        %v586 = vadd.f32 %v413, %v546
        %v587 = vadd.f32 %v414, %v547
        %v588 = vadd.f32 %v415, %v548
        %v589 = vadd.f32 %v416, %v549
        %v590 = vadd.f32 %v417, %v550
        %v591 = vadd.f32 %v418, %v551
        %v592 = vadd.f32 %v419, %v552
        %v593 = vadd.f32 %v420, %v553
        %v594 = vadd.f32 %v421, %v554
        %v595 = vadd.f32 %v422, %v555
        %v596 = vadd.f32 %v423, %v556
        %v597 = vadd.f32 %v424, %v557
        %v598 = vadd.f32 %v425, %v558
        %v599 = vadd.f32 %v426, %v559
        %v600 = vadd.f32 %v427, %v560
        %v601 = vadd.f32 %v428, %v561
        %v602 = vadd.f32 %v429, %v562
        %v603 = vadd.f32 %v430, %v563
        %v604 = vadd.f32 %v431, %v564
        %v605 = vadd.f32 %v432, %v565
        %v606 = vadd.f32 %v433, %v566
        %v607 = vadd.f32 %v434, %v567
        %v608 = vadd.f32 %v435, %v568
        %v609 = vadd.f32 %v436, %v569
        %v610 = vadd.f32 %v437, %v570
        %v611 = vadd.f32 %v438, %v571
        %s612 = scalar_lea.vmem %s1, 2
        %v613 = vld [vmem:[%s612] ss:$4 sm:$0x3]
        %614 = vset.pattern.permute.xlu0 2
        %615 = vperm.xlu0 %614, %v267
        %v616 = vpop.permute.xlu0 %615
        %618 = vset.pattern.permute.xlu0 2
        %619 = vperm.xlu0 %618, %v268
        %v620 = vpop.permute.xlu0 %619
        %622 = vset.pattern.permute.xlu0 2
        %623 = vperm.xlu0 %622, %v269
        %v624 = vpop.permute.xlu0 %623
        %626 = vset.pattern.permute.xlu0 2
        %627 = vperm.xlu0 %626, %v270
        %v628 = vpop.permute.xlu0 %627
        %630 = vset.pattern.permute.xlu0 2
        %631 = vperm.xlu0 %630, %v271
        %v632 = vpop.permute.xlu0 %631
        %634 = vset.pattern.permute.xlu0 2
        %635 = vperm.xlu0 %634, %v272
        %v636 = vpop.permute.xlu0 %635
        %638 = vset.pattern.permute.xlu0 2
        %639 = vperm.xlu0 %638, %v273
        %v640 = vpop.permute.xlu0 %639
        %642 = vset.pattern.permute.xlu0 2
        %643 = vperm.xlu0 %642, %v274
        %v644 = vpop.permute.xlu0 %643
        %646 = vset.pattern.permute.xlu0 2
        %647 = vperm.xlu0 %646, %v275
        %v648 = vpop.permute.xlu0 %647
        %650 = vset.pattern.permute.xlu0 2
        %651 = vperm.xlu0 %650, %v276
        %v652 = vpop.permute.xlu0 %651
        %654 = vset.pattern.permute.xlu0 2
        %655 = vperm.xlu0 %654, %v277
        %v656 = vpop.permute.xlu0 %655
        %658 = vset.pattern.permute.xlu0 2
        %659 = vperm.xlu0 %658, %v278
        %v660 = vpop.permute.xlu0 %659
        %662 = vset.pattern.permute.xlu0 2
        %663 = vperm.xlu0 %662, %v279
        %v664 = vpop.permute.xlu0 %663
        %666 = vset.pattern.permute.xlu0 2
        %667 = vperm.xlu0 %666, %v280
        %v668 = vpop.permute.xlu0 %667
        %670 = vset.pattern.permute.xlu0 2
        %671 = vperm.xlu0 %670, %v281
        %v672 = vpop.permute.xlu0 %671
        %674 = vset.pattern.permute.xlu0 2
        %675 = vperm.xlu0 %674, %v282
        %v676 = vpop.permute.xlu0 %675
        %678 = vset.pattern.permute.xlu0 2
        %679 = vperm.xlu0 %678, %v283
        %v680 = vpop.permute.xlu0 %679
        %682 = vset.pattern.permute.xlu0 2
        %683 = vperm.xlu0 %682, %v284
        %v684 = vpop.permute.xlu0 %683
        %686 = vset.pattern.permute.xlu0 2
        %687 = vperm.xlu0 %686, %v285
        %v688 = vpop.permute.xlu0 %687
        %690 = vset.pattern.permute.xlu0 2
        %691 = vperm.xlu0 %690, %v286
        %v692 = vpop.permute.xlu0 %691
        %v695 = vlaneseq
        %v696 = vshrl.u32 %v695, 7
        %v697 = vsub.s32 0, %v696
        %v698 = vrot.slane %v613, %v697
        %v699 = vlaneseq
        %v700 = vshrl.u32 %v699, 7
        %v701 = vsub.s32 1, %v700
        %v702 = vrot.slane %v613, %v701
        %v705 = vmul.f32 %v616, %v698
        %v706 = vmul.f32 %v616, %v702
        %v707 = vmul.f32 %v620, %v698
        %v708 = vmul.f32 %v620, %v702
        %v709 = vmul.f32 %v624, %v698
        %v710 = vmul.f32 %v624, %v702
        %v711 = vmul.f32 %v628, %v698
        %v712 = vmul.f32 %v628, %v702
        %v713 = vmul.f32 %v632, %v698
        %v714 = vmul.f32 %v632, %v702
        %v715 = vmul.f32 %v636, %v698
        %v716 = vmul.f32 %v636, %v702
        %v717 = vmul.f32 %v640, %v698
        %v718 = vmul.f32 %v640, %v702
        %v719 = vmul.f32 %v644, %v698
        %v720 = vmul.f32 %v644, %v702
        %v721 = vmul.f32 %v648, %v698
        %v722 = vmul.f32 %v648, %v702
        %v723 = vmul.f32 %v652, %v698
        %v724 = vmul.f32 %v652, %v702
        %v725 = vmul.f32 %v656, %v698
        %v726 = vmul.f32 %v656, %v702
        %v727 = vmul.f32 %v660, %v698
        %v728 = vmul.f32 %v660, %v702
        %v729 = vmul.f32 %v664, %v698
        %v730 = vmul.f32 %v664, %v702
        %v731 = vmul.f32 %v668, %v698
        %v732 = vmul.f32 %v668, %v702
        %v733 = vmul.f32 %v672, %v698
        %v734 = vmul.f32 %v672, %v702
        %v735 = vmul.f32 %v676, %v698
        %v736 = vmul.f32 %v676, %v702
        %v737 = vmul.f32 %v680, %v698
        %v738 = vmul.f32 %v680, %v702
        %v739 = vmul.f32 %v684, %v698
        %v740 = vmul.f32 %v684, %v702
        %v741 = vmul.f32 %v688, %v698
        %v742 = vmul.f32 %v688, %v702
        %v743 = vmul.f32 %v692, %v698
        %v744 = vmul.f32 %v692, %v702
        %v745 = vadd.f32 %v572, %v705
        %v746 = vadd.f32 %v573, %v706
        %v747 = vadd.f32 %v574, %v707
        %v748 = vadd.f32 %v575, %v708
        %v749 = vadd.f32 %v576, %v709
        %v750 = vadd.f32 %v577, %v710
        %v751 = vadd.f32 %v578, %v711
        %v752 = vadd.f32 %v579, %v712
        %v753 = vadd.f32 %v580, %v713
        %v754 = vadd.f32 %v581, %v714
        %v755 = vadd.f32 %v582, %v715
        %v756 = vadd.f32 %v583, %v716
        %v757 = vadd.f32 %v584, %v717
        %v758 = vadd.f32 %v585, %v718
        %v759 = vadd.f32 %v586, %v719
        %v760 = vadd.f32 %v587, %v720
        %v761 = vadd.f32 %v588, %v721
        %v762 = vadd.f32 %v589, %v722
        %v763 = vadd.f32 %v590, %v723
        %v764 = vadd.f32 %v591, %v724
        %v765 = vadd.f32 %v592, %v725
        %v766 = vadd.f32 %v593, %v726
        %v767 = vadd.f32 %v594, %v727
        %v768 = vadd.f32 %v595, %v728
        %v769 = vadd.f32 %v596, %v729
        %v770 = vadd.f32 %v597, %v730
        %v771 = vadd.f32 %v598, %v731
        %v772 = vadd.f32 %v599, %v732
        %v773 = vadd.f32 %v600, %v733
        %v774 = vadd.f32 %v601, %v734
        %v775 = vadd.f32 %v602, %v735
        %v776 = vadd.f32 %v603, %v736
        %v777 = vadd.f32 %v604, %v737
        %v778 = vadd.f32 %v605, %v738
        %v779 = vadd.f32 %v606, %v739
        %v780 = vadd.f32 %v607, %v740
        %v781 = vadd.f32 %v608, %v741
        %v782 = vadd.f32 %v609, %v742
        %v783 = vadd.f32 %v610, %v743
        %v784 = vadd.f32 %v611, %v744
        %s785 = scalar_lea.vmem %s1, 3
        %v786 = vld [vmem:[%s785] ss:$4 sm:$0x3]
        %787 = vset.pattern.permute.xlu0 3
        %788 = vperm.xlu0 %787, %v267
        %v789 = vpop.permute.xlu0 %788
        %791 = vset.pattern.permute.xlu0 3
        %792 = vperm.xlu0 %791, %v268
        %v793 = vpop.permute.xlu0 %792
        %795 = vset.pattern.permute.xlu0 3
        %796 = vperm.xlu0 %795, %v269
        %v797 = vpop.permute.xlu0 %796
        %799 = vset.pattern.permute.xlu0 3
        %800 = vperm.xlu0 %799, %v270
        %v801 = vpop.permute.xlu0 %800
        %803 = vset.pattern.permute.xlu0 3
        %804 = vperm.xlu0 %803, %v271
        %v805 = vpop.permute.xlu0 %804
        %807 = vset.pattern.permute.xlu0 3
        %808 = vperm.xlu0 %807, %v272
        %v809 = vpop.permute.xlu0 %808
        %811 = vset.pattern.permute.xlu0 3
        %812 = vperm.xlu0 %811, %v273
        %v813 = vpop.permute.xlu0 %812
        %815 = vset.pattern.permute.xlu0 3
        %816 = vperm.xlu0 %815, %v274
        %v817 = vpop.permute.xlu0 %816
        %819 = vset.pattern.permute.xlu0 3
        %820 = vperm.xlu0 %819, %v275
        %v821 = vpop.permute.xlu0 %820
        %823 = vset.pattern.permute.xlu0 3
        %824 = vperm.xlu0 %823, %v276
        %v825 = vpop.permute.xlu0 %824
        %827 = vset.pattern.permute.xlu0 3
        %828 = vperm.xlu0 %827, %v277
        %v829 = vpop.permute.xlu0 %828
        %831 = vset.pattern.permute.xlu0 3
        %832 = vperm.xlu0 %831, %v278
        %v833 = vpop.permute.xlu0 %832
        %835 = vset.pattern.permute.xlu0 3
        %836 = vperm.xlu0 %835, %v279
        %v837 = vpop.permute.xlu0 %836
        %839 = vset.pattern.permute.xlu0 3
        %840 = vperm.xlu0 %839, %v280
        %v841 = vpop.permute.xlu0 %840
        %843 = vset.pattern.permute.xlu0 3
        %844 = vperm.xlu0 %843, %v281
        %v845 = vpop.permute.xlu0 %844
        %847 = vset.pattern.permute.xlu0 3
        %848 = vperm.xlu0 %847, %v282
        %v849 = vpop.permute.xlu0 %848
        %851 = vset.pattern.permute.xlu0 3
        %852 = vperm.xlu0 %851, %v283
        %v853 = vpop.permute.xlu0 %852
        %855 = vset.pattern.permute.xlu0 3
        %856 = vperm.xlu0 %855, %v284
        %v857 = vpop.permute.xlu0 %856
        %859 = vset.pattern.permute.xlu0 3
        %860 = vperm.xlu0 %859, %v285
        %v861 = vpop.permute.xlu0 %860
        %863 = vset.pattern.permute.xlu0 3
        %864 = vperm.xlu0 %863, %v286
        %v865 = vpop.permute.xlu0 %864
        %v868 = vlaneseq
        %v869 = vshrl.u32 %v868, 7
        %v870 = vsub.s32 0, %v869
        %v871 = vrot.slane %v786, %v870
        %v872 = vlaneseq
        %v873 = vshrl.u32 %v872, 7
        %v874 = vsub.s32 1, %v873
        %v875 = vrot.slane %v786, %v874
        %v878 = vmul.f32 %v789, %v871
        %v879 = vmul.f32 %v789, %v875
        %v880 = vmul.f32 %v793, %v871
        %v881 = vmul.f32 %v793, %v875
        %v882 = vmul.f32 %v797, %v871
        %v883 = vmul.f32 %v797, %v875
        %v884 = vmul.f32 %v801, %v871
        %v885 = vmul.f32 %v801, %v875
        %v886 = vmul.f32 %v805, %v871
        %v887 = vmul.f32 %v805, %v875
        %v888 = vmul.f32 %v809, %v871
        %v889 = vmul.f32 %v809, %v875
        %v890 = vmul.f32 %v813, %v871
        %v891 = vmul.f32 %v813, %v875
        %v892 = vmul.f32 %v817, %v871
        %v893 = vmul.f32 %v817, %v875
        %v894 = vmul.f32 %v821, %v871
        %v895 = vmul.f32 %v821, %v875
        %v896 = vmul.f32 %v825, %v871
        %v897 = vmul.f32 %v825, %v875
        %v898 = vmul.f32 %v829, %v871
        %v899 = vmul.f32 %v829, %v875
        %v900 = vmul.f32 %v833, %v871
        %v901 = vmul.f32 %v833, %v875
        %v902 = vmul.f32 %v837, %v871
        %v903 = vmul.f32 %v837, %v875
        %v904 = vmul.f32 %v841, %v871
        %v905 = vmul.f32 %v841, %v875
        %v906 = vmul.f32 %v845, %v871
        %v907 = vmul.f32 %v845, %v875
        %v908 = vmul.f32 %v849, %v871
        %v909 = vmul.f32 %v849, %v875
        %v910 = vmul.f32 %v853, %v871
        %v911 = vmul.f32 %v853, %v875
        %v912 = vmul.f32 %v857, %v871
        %v913 = vmul.f32 %v857, %v875
        %v914 = vmul.f32 %v861, %v871
        %v915 = vmul.f32 %v861, %v875
        %v916 = vmul.f32 %v865, %v871
        %v917 = vmul.f32 %v865, %v875
        %v918 = vadd.f32 %v745, %v878
        %v919 = vadd.f32 %v746, %v879
        %v920 = vadd.f32 %v747, %v880
        %v921 = vadd.f32 %v748, %v881
        %v922 = vadd.f32 %v749, %v882
        %v923 = vadd.f32 %v750, %v883
        %v924 = vadd.f32 %v751, %v884
        %v925 = vadd.f32 %v752, %v885
        %v926 = vadd.f32 %v753, %v886
        %v927 = vadd.f32 %v754, %v887
        %v928 = vadd.f32 %v755, %v888
        %v929 = vadd.f32 %v756, %v889
        %v930 = vadd.f32 %v757, %v890
        %v931 = vadd.f32 %v758, %v891
        %v932 = vadd.f32 %v759, %v892
        %v933 = vadd.f32 %v760, %v893
        %v934 = vadd.f32 %v761, %v894
        %v935 = vadd.f32 %v762, %v895
        %v936 = vadd.f32 %v763, %v896
        %v937 = vadd.f32 %v764, %v897
        %v938 = vadd.f32 %v765, %v898
        %v939 = vadd.f32 %v766, %v899
        %v940 = vadd.f32 %v767, %v900
        %v941 = vadd.f32 %v768, %v901
        %v942 = vadd.f32 %v769, %v902
        %v943 = vadd.f32 %v770, %v903
        %v944 = vadd.f32 %v771, %v904
        %v945 = vadd.f32 %v772, %v905
        %v946 = vadd.f32 %v773, %v906
        %v947 = vadd.f32 %v774, %v907
        %v948 = vadd.f32 %v775, %v908
        %v949 = vadd.f32 %v776, %v909
        %v950 = vadd.f32 %v777, %v910
        %v951 = vadd.f32 %v778, %v911
        %v952 = vadd.f32 %v779, %v912
        %v953 = vadd.f32 %v780, %v913
        %v954 = vadd.f32 %v781, %v914
        %v955 = vadd.f32 %v782, %v915
        %v956 = vadd.f32 %v783, %v916
        %v957 = vadd.f32 %v784, %v917
        %v958 = vld [vmem:[%s2] sm:$0x3]
        %v960 = vlaneseq
        %v961 = vshrl.u32 %v960, 7
        %v962 = vsub.s32 0, %v961
        %v963 = vrot.slane %v958, %v962
        %v964 = vlaneseq
        %v965 = vshrl.u32 %v964, 7
        %v966 = vsub.s32 1, %v965
        %v967 = vrot.slane %v958, %v966
        %v970 = vadd.f32 %v918, %v963
        %v971 = vadd.f32 %v919, %v967
        %v972 = vadd.f32 %v920, %v963
        %v973 = vadd.f32 %v921, %v967
        %v974 = vadd.f32 %v922, %v963
        %v975 = vadd.f32 %v923, %v967
        %v976 = vadd.f32 %v924, %v963
        %v977 = vadd.f32 %v925, %v967
        %v978 = vadd.f32 %v926, %v963
        %v979 = vadd.f32 %v927, %v967
        %v980 = vadd.f32 %v928, %v963
        %v981 = vadd.f32 %v929, %v967
        %v982 = vadd.f32 %v930, %v963
        %v983 = vadd.f32 %v931, %v967
        %v984 = vadd.f32 %v932, %v963
        %v985 = vadd.f32 %v933, %v967
        %v986 = vadd.f32 %v934, %v963
        %v987 = vadd.f32 %v935, %v967
        %v988 = vadd.f32 %v936, %v963
        %v989 = vadd.f32 %v937, %v967
        %v990 = vadd.f32 %v938, %v963
        %v991 = vadd.f32 %v939, %v967
        %v992 = vadd.f32 %v940, %v963
        %v993 = vadd.f32 %v941, %v967
        %v994 = vadd.f32 %v942, %v963
        %v995 = vadd.f32 %v943, %v967
        %v996 = vadd.f32 %v944, %v963
        %v997 = vadd.f32 %v945, %v967
        %v998 = vadd.f32 %v946, %v963
        %v999 = vadd.f32 %v947, %v967
        %v1000 = vadd.f32 %v948, %v963
        %v1001 = vadd.f32 %v949, %v967
        %v1002 = vadd.f32 %v950, %v963
        %v1003 = vadd.f32 %v951, %v967
        %v1004 = vadd.f32 %v952, %v963
        %v1005 = vadd.f32 %v953, %v967
        %v1006 = vadd.f32 %v954, %v963
        %v1007 = vadd.f32 %v955, %v967
        %v1008 = vadd.f32 %v956, %v963
        %v1009 = vadd.f32 %v957, %v967
        %v1010 = vmax.f32 %v970, 0.0
        %v1011 = vmax.f32 %v971, 0.0
        %v1012 = vmax.f32 %v972, 0.0
        %v1013 = vmax.f32 %v973, 0.0
        %v1014 = vmax.f32 %v974, 0.0
        %v1015 = vmax.f32 %v975, 0.0
        %v1016 = vmax.f32 %v976, 0.0
        %v1017 = vmax.f32 %v977, 0.0
        %v1018 = vmax.f32 %v978, 0.0
        %v1019 = vmax.f32 %v979, 0.0
        %v1020 = vmax.f32 %v980, 0.0
        %v1021 = vmax.f32 %v981, 0.0
        %v1022 = vmax.f32 %v982, 0.0
        %v1023 = vmax.f32 %v983, 0.0
        %v1024 = vmax.f32 %v984, 0.0
        %v1025 = vmax.f32 %v985, 0.0
        %v1026 = vmax.f32 %v986, 0.0
        %v1027 = vmax.f32 %v987, 0.0
        %v1028 = vmax.f32 %v988, 0.0
        %v1029 = vmax.f32 %v989, 0.0
        %v1030 = vmax.f32 %v990, 0.0
        %v1031 = vmax.f32 %v991, 0.0
        %v1032 = vmax.f32 %v992, 0.0
        %v1033 = vmax.f32 %v993, 0.0
        %v1034 = vmax.f32 %v994, 0.0
        %v1035 = vmax.f32 %v995, 0.0
        %v1036 = vmax.f32 %v996, 0.0
        %v1037 = vmax.f32 %v997, 0.0
        %v1038 = vmax.f32 %v998, 0.0
        %v1039 = vmax.f32 %v999, 0.0
        %v1040 = vmax.f32 %v1000, 0.0
        %v1041 = vmax.f32 %v1001, 0.0
        %v1042 = vmax.f32 %v1002, 0.0
        %v1043 = vmax.f32 %v1003, 0.0
        %v1044 = vmax.f32 %v1004, 0.0
        %v1045 = vmax.f32 %v1005, 0.0
        %v1046 = vmax.f32 %v1006, 0.0
        %v1047 = vmax.f32 %v1007, 0.0
        %v1048 = vmax.f32 %v1008, 0.0
        %v1049 = vmax.f32 %v1009, 0.0
        %v1050 = vlaneseq
        %v1051 = vshrl.u32 %v1050, 7
        %v1052 = vadd.s32 %v1051, 8
        %v1053 = vadd.s32 %v1051, 16
        %v1054 = vadd.s32 %v1051, 24
        %v1055 = vadd.s32 %v1051, 32
        %v1056 = vadd.s32 %v1051, 40
        %v1057 = vadd.s32 %v1051, 48
        %v1058 = vadd.s32 %v1051, 56
        %v1059 = vadd.s32 %v1051, 64
        %v1060 = vadd.s32 %v1051, 72
        %v1061 = vadd.s32 %v1051, 80
        %v1062 = vadd.s32 %v1051, 88
        %v1063 = vadd.s32 %v1051, 96
        %v1064 = vadd.s32 %v1051, 104
        %v1065 = vadd.s32 %v1051, 112
        %v1066 = vadd.s32 %v1051, 120
        %v1067 = vadd.s32 %v1051, 128
        %v1068 = vadd.s32 %v1051, 136
        %v1069 = vadd.s32 %v1051, 144
        %v1070 = vadd.s32 %v1051, 152
        %p1071 = scmp.eq.s32.totalorder %s25, 0
        %vm1072 = vcmp.lt.s32.totalorder %v1051, 16
        %vm1073 = vcmp.lt.s32.totalorder %v1052, 16
        %vm1074 = vcmp.lt.s32.totalorder %v1053, 16
        %vm1075 = vcmp.lt.s32.totalorder %v1054, 16
        %vm1076 = vcmp.lt.s32.totalorder %v1055, 16
        %vm1077 = vcmp.lt.s32.totalorder %v1056, 16
        %vm1078 = vcmp.lt.s32.totalorder %v1057, 16
        %vm1079 = vcmp.lt.s32.totalorder %v1058, 16
        %vm1080 = vcmp.lt.s32.totalorder %v1059, 16
        %vm1081 = vcmp.lt.s32.totalorder %v1060, 16
        %vm1082 = vcmp.lt.s32.totalorder %v1061, 16
        %vm1083 = vcmp.lt.s32.totalorder %v1062, 16
        %vm1084 = vcmp.lt.s32.totalorder %v1063, 16
        %vm1085 = vcmp.lt.s32.totalorder %v1064, 16
        %vm1086 = vcmp.lt.s32.totalorder %v1065, 16
        %vm1087 = vcmp.lt.s32.totalorder %v1066, 16
        %vm1088 = vcmp.lt.s32.totalorder %v1067, 16
        %vm1089 = vcmp.lt.s32.totalorder %v1068, 16
        %vm1090 = vcmp.lt.s32.totalorder %v1069, 16
        %vm1091 = vcmp.lt.s32.totalorder %v1070, 16
        %s1092 = scalar_select %p1071, 1, 0
        %v1093 = vstv %s1092
        %vm1094 = vcmp.eq.s32.totalorder %v1093, 1
        %vm1095 = vmand %vm1094, %vm1072
        %vm1096 = vmand %vm1094, %vm1073
        %vm1097 = vmand %vm1094, %vm1074
        %vm1098 = vmand %vm1094, %vm1075
        %vm1099 = vmand %vm1094, %vm1076
        %vm1100 = vmand %vm1094, %vm1077
        %vm1101 = vmand %vm1094, %vm1078
        %vm1102 = vmand %vm1094, %vm1079
        %vm1103 = vmand %vm1094, %vm1080
        %vm1104 = vmand %vm1094, %vm1081
        %vm1105 = vmand %vm1094, %vm1082
        %vm1106 = vmand %vm1094, %vm1083
        %vm1107 = vmand %vm1094, %vm1084
        %vm1108 = vmand %vm1094, %vm1085
        %vm1109 = vmand %vm1094, %vm1086
        %vm1110 = vmand %vm1094, %vm1087
        %vm1111 = vmand %vm1094, %vm1088
        %vm1112 = vmand %vm1094, %vm1089
        %vm1113 = vmand %vm1094, %vm1090
        %vm1114 = vmand %vm1094, %vm1091
        %p1115 = scmp.eq.s32.totalorder %s25, 1
        %vm1116 = vcmp.ge.s32.totalorder %v1051, 144
        %vm1117 = vcmp.ge.s32.totalorder %v1052, 144
        %vm1118 = vcmp.ge.s32.totalorder %v1053, 144
        %vm1119 = vcmp.ge.s32.totalorder %v1054, 144
        %vm1120 = vcmp.ge.s32.totalorder %v1055, 144
        %vm1121 = vcmp.ge.s32.totalorder %v1056, 144
        %vm1122 = vcmp.ge.s32.totalorder %v1057, 144
        %vm1123 = vcmp.ge.s32.totalorder %v1058, 144
        %vm1124 = vcmp.ge.s32.totalorder %v1059, 144
        %vm1125 = vcmp.ge.s32.totalorder %v1060, 144
        %vm1126 = vcmp.ge.s32.totalorder %v1061, 144
        %vm1127 = vcmp.ge.s32.totalorder %v1062, 144
        %vm1128 = vcmp.ge.s32.totalorder %v1063, 144
        %vm1129 = vcmp.ge.s32.totalorder %v1064, 144
        %vm1130 = vcmp.ge.s32.totalorder %v1065, 144
        %vm1131 = vcmp.ge.s32.totalorder %v1066, 144
        %vm1132 = vcmp.ge.s32.totalorder %v1067, 144
        %vm1133 = vcmp.ge.s32.totalorder %v1068, 144
        %vm1134 = vcmp.ge.s32.totalorder %v1069, 144
        %vm1135 = vcmp.ge.s32.totalorder %v1070, 144
        %s1136 = scalar_select %p1115, 1, 0
        %v1137 = vstv %s1136
        %vm1138 = vcmp.eq.s32.totalorder %v1137, 1
        %vm1139 = vmand %vm1138, %vm1116
        %vm1140 = vmand %vm1138, %vm1117
        %vm1141 = vmand %vm1138, %vm1118
        %vm1142 = vmand %vm1138, %vm1119
        %vm1143 = vmand %vm1138, %vm1120
        %vm1144 = vmand %vm1138, %vm1121
        %vm1145 = vmand %vm1138, %vm1122
        %vm1146 = vmand %vm1138, %vm1123
        %vm1147 = vmand %vm1138, %vm1124
        %vm1148 = vmand %vm1138, %vm1125
        %vm1149 = vmand %vm1138, %vm1126
        %vm1150 = vmand %vm1138, %vm1127
        %vm1151 = vmand %vm1138, %vm1128
        %vm1152 = vmand %vm1138, %vm1129
        %vm1153 = vmand %vm1138, %vm1130
        %vm1154 = vmand %vm1138, %vm1131
        %vm1155 = vmand %vm1138, %vm1132
        %vm1156 = vmand %vm1138, %vm1133
        %vm1157 = vmand %vm1138, %vm1134
        %vm1158 = vmand %vm1138, %vm1135
        %vm1159 = vmor %vm1095, %vm1139
        %vm1160 = vmor %vm1096, %vm1140
        %vm1161 = vmor %vm1097, %vm1141
        %vm1162 = vmor %vm1098, %vm1142
        %vm1163 = vmor %vm1099, %vm1143
        %vm1164 = vmor %vm1100, %vm1144
        %vm1165 = vmor %vm1101, %vm1145
        %vm1166 = vmor %vm1102, %vm1146
        %vm1167 = vmor %vm1103, %vm1147
        %vm1168 = vmor %vm1104, %vm1148
        %vm1169 = vmor %vm1105, %vm1149
        %vm1170 = vmor %vm1106, %vm1150
        %vm1171 = vmor %vm1107, %vm1151
        %vm1172 = vmor %vm1108, %vm1152
        %vm1173 = vmor %vm1109, %vm1153
        %vm1174 = vmor %vm1110, %vm1154
        %vm1175 = vmor %vm1111, %vm1155
        %vm1176 = vmor %vm1112, %vm1156
        %vm1177 = vmor %vm1113, %vm1157
        %vm1178 = vmor %vm1114, %vm1158
        %v1179 = vsel %vm1159, 1, 0
        %v1180 = vsel %vm1160, 1, 0
        %v1181 = vsel %vm1161, 1, 0
        %v1182 = vsel %vm1162, 1, 0
        %v1183 = vsel %vm1163, 1, 0
        %v1184 = vsel %vm1164, 1, 0
        %v1185 = vsel %vm1165, 1, 0
        %v1186 = vsel %vm1166, 1, 0
        %v1187 = vsel %vm1167, 1, 0
        %v1188 = vsel %vm1168, 1, 0
        %v1189 = vsel %vm1169, 1, 0
        %v1190 = vsel %vm1170, 1, 0
        %v1191 = vsel %vm1171, 1, 0
        %v1192 = vsel %vm1172, 1, 0
        %v1193 = vsel %vm1173, 1, 0
        %v1194 = vsel %vm1174, 1, 0
        %v1195 = vsel %vm1175, 1, 0
        %v1196 = vsel %vm1176, 1, 0
        %v1197 = vsel %vm1177, 1, 0
        %v1198 = vsel %vm1178, 1, 0
        %vm1199 = vcmp.eq.s32.totalorder %v1179, 1
        %vm1200 = vcmp.eq.s32.totalorder %v1180, 1
        %vm1201 = vcmp.eq.s32.totalorder %v1181, 1
        %vm1202 = vcmp.eq.s32.totalorder %v1182, 1
        %vm1203 = vcmp.eq.s32.totalorder %v1183, 1
        %vm1204 = vcmp.eq.s32.totalorder %v1184, 1
        %vm1205 = vcmp.eq.s32.totalorder %v1185, 1
        %vm1206 = vcmp.eq.s32.totalorder %v1186, 1
        %vm1207 = vcmp.eq.s32.totalorder %v1187, 1
        %vm1208 = vcmp.eq.s32.totalorder %v1188, 1
        %vm1209 = vcmp.eq.s32.totalorder %v1189, 1
        %vm1210 = vcmp.eq.s32.totalorder %v1190, 1
        %vm1211 = vcmp.eq.s32.totalorder %v1191, 1
        %vm1212 = vcmp.eq.s32.totalorder %v1192, 1
        %vm1213 = vcmp.eq.s32.totalorder %v1193, 1
        %vm1214 = vcmp.eq.s32.totalorder %v1194, 1
        %vm1215 = vcmp.eq.s32.totalorder %v1195, 1
        %vm1216 = vcmp.eq.s32.totalorder %v1196, 1
        %vm1217 = vcmp.eq.s32.totalorder %v1197, 1
        %vm1218 = vcmp.eq.s32.totalorder %v1198, 1
        %v1219 = vsel %vm1199, 0.0, %v1010
        %v1220 = vsel %vm1199, 0.0, %v1011
        %v1221 = vsel %vm1200, 0.0, %v1012
        %v1222 = vsel %vm1200, 0.0, %v1013
        %v1223 = vsel %vm1201, 0.0, %v1014
        %v1224 = vsel %vm1201, 0.0, %v1015
        %v1225 = vsel %vm1202, 0.0, %v1016
        %v1226 = vsel %vm1202, 0.0, %v1017
        %v1227 = vsel %vm1203, 0.0, %v1018
        %v1228 = vsel %vm1203, 0.0, %v1019
        %v1229 = vsel %vm1204, 0.0, %v1020
        %v1230 = vsel %vm1204, 0.0, %v1021
        %v1231 = vsel %vm1205, 0.0, %v1022
        %v1232 = vsel %vm1205, 0.0, %v1023
        %v1233 = vsel %vm1206, 0.0, %v1024
        %v1234 = vsel %vm1206, 0.0, %v1025
        %v1235 = vsel %vm1207, 0.0, %v1026
        %v1236 = vsel %vm1207, 0.0, %v1027
        %v1237 = vsel %vm1208, 0.0, %v1028
        %v1238 = vsel %vm1208, 0.0, %v1029
        %v1239 = vsel %vm1209, 0.0, %v1030
        %v1240 = vsel %vm1209, 0.0, %v1031
        %v1241 = vsel %vm1210, 0.0, %v1032
        %v1242 = vsel %vm1210, 0.0, %v1033
        %v1243 = vsel %vm1211, 0.0, %v1034
        %v1244 = vsel %vm1211, 0.0, %v1035
        %v1245 = vsel %vm1212, 0.0, %v1036
        %v1246 = vsel %vm1212, 0.0, %v1037
        %v1247 = vsel %vm1213, 0.0, %v1038
        %v1248 = vsel %vm1213, 0.0, %v1039
        %v1249 = vsel %vm1214, 0.0, %v1040
        %v1250 = vsel %vm1214, 0.0, %v1041
        %v1251 = vsel %vm1215, 0.0, %v1042
        %v1252 = vsel %vm1215, 0.0, %v1043
        %v1253 = vsel %vm1216, 0.0, %v1044
        %v1254 = vsel %vm1216, 0.0, %v1045
        %v1255 = vsel %vm1217, 0.0, %v1046
        %v1256 = vsel %vm1217, 0.0, %v1047
        %v1257 = vsel %vm1218, 0.0, %v1048
        %v1258 = vsel %vm1218, 0.0, %v1049
        %v1259 = vpack.c.bf16 %v1221, %v1219
        %v1260 = vpack.c.bf16 %v1222, %v1220
        %v1261 = vpack.c.bf16 %v1225, %v1223
        %v1262 = vpack.c.bf16 %v1226, %v1224
        %v1263 = vpack.c.bf16 %v1229, %v1227
        %v1264 = vpack.c.bf16 %v1230, %v1228
        %v1265 = vpack.c.bf16 %v1233, %v1231
        %v1266 = vpack.c.bf16 %v1234, %v1232
        %v1267 = vpack.c.bf16 %v1237, %v1235
        %v1268 = vpack.c.bf16 %v1238, %v1236
        %v1269 = vpack.c.bf16 %v1241, %v1239
        %v1270 = vpack.c.bf16 %v1242, %v1240
        %v1271 = vpack.c.bf16 %v1245, %v1243
        %v1272 = vpack.c.bf16 %v1246, %v1244
        %v1273 = vpack.c.bf16 %v1249, %v1247
        %v1274 = vpack.c.bf16 %v1250, %v1248
        %v1275 = vpack.c.bf16 %v1253, %v1251
        %v1276 = vpack.c.bf16 %v1254, %v1252
        %v1277 = vpack.c.bf16 %v1257, %v1255
        %v1278 = vpack.c.bf16 %v1258, %v1256
        %v1279 = vld [vmem:[#allocation2] sm:$0xff]
        %v1280 = vld [vmem:[#allocation2 + $0x8] sm:$0xff]
        %v1281 = vld [vmem:[#allocation2 + $0x10] sm:$0xff]
        %v1282 = vld [vmem:[#allocation2 + $0x18] sm:$0xff]
        %v1283 = vld [vmem:[#allocation2 + $0x20] sm:$0xf]
        %v1284 = vld [vmem:[#allocation2 + $0x24] sm:$0xff]
        %v1285 = vld [vmem:[#allocation2 + $0x2c] sm:$0xff]
        %v1286 = vld [vmem:[#allocation2 + $0x34] sm:$0xff]
        %v1287 = vld [vmem:[#allocation2 + $0x3c] sm:$0xff]
        %v1288 = vld [vmem:[#allocation2 + $0x44] sm:$0xf]
        %v1289 = vld [vmem:[#allocation2 + $0x48] sm:$0xff]
        %v1290 = vld [vmem:[#allocation2 + $0x50] sm:$0xff]
        %v1291 = vld [vmem:[#allocation2 + $0x58] sm:$0xff]
        %v1292 = vld [vmem:[#allocation2 + $0x60] sm:$0xff]
        %v1293 = vld [vmem:[#allocation2 + $0x68] sm:$0xf]
        %v1294 = vld [vmem:[#allocation2 + $0x6c] sm:$0xff]
        %v1295 = vld [vmem:[#allocation2 + $0x74] sm:$0xff]
        %v1296 = vld [vmem:[#allocation2 + $0x7c] sm:$0xff]
        %v1297 = vld [vmem:[#allocation2 + $0x84] sm:$0xff]
        %v1298 = vld [vmem:[#allocation2 + $0x8c] sm:$0xf]
        %v1299 = vld [vmem:[#allocation2 + $0x90] sm:$0xff]
        %v1300 = vld [vmem:[#allocation2 + $0x98] sm:$0xff]
        %v1301 = vld [vmem:[#allocation2 + $0xa0] sm:$0xff]
        %v1302 = vld [vmem:[#allocation2 + $0xa8] sm:$0xff]
        %v1303 = vld [vmem:[#allocation2 + $0xb0] sm:$0xf]
        %v1304 = vld [vmem:[#allocation2 + $0xb4] sm:$0xff]
        %v1305 = vld [vmem:[#allocation2 + $0xbc] sm:$0xff]
        %v1306 = vld [vmem:[#allocation2 + $0xc4] sm:$0xff]
        %v1307 = vld [vmem:[#allocation2 + $0xcc] sm:$0xff]
        %v1308 = vld [vmem:[#allocation2 + $0xd4] sm:$0xf]
        %v1309 = vld [vmem:[#allocation2 + $0xd8] sm:$0xff]
        %v1310 = vld [vmem:[#allocation2 + $0xe0] sm:$0xff]
        %v1311 = vld [vmem:[#allocation2 + $0xe8] sm:$0xff]
        %v1312 = vld [vmem:[#allocation2 + $0xf0] sm:$0xff]
        %v1313 = vld [vmem:[#allocation2 + $0xf8] sm:$0xf]
        %v1314 = vld [vmem:[#allocation2 + $0xfc] sm:$0xff]
        %v1315 = vld [vmem:[#allocation2 + $0x104] sm:$0xff]
        %v1316 = vld [vmem:[#allocation2 + $0x10c] sm:$0xff]
        %v1317 = vld [vmem:[#allocation2 + $0x114] sm:$0xff]
        %v1318 = vld [vmem:[#allocation2 + $0x11c] sm:$0xf]
        %v1319 = vld [vmem:[#allocation2 + $0x120] sm:$0xff]
        %v1320 = vld [vmem:[#allocation2 + $0x128] sm:$0xff]
        %v1321 = vld [vmem:[#allocation2 + $0x130] sm:$0xff]
        %v1322 = vld [vmem:[#allocation2 + $0x138] sm:$0xff]
        %v1323 = vld [vmem:[#allocation2 + $0x140] sm:$0xf]
        %v1324 = vld [vmem:[#allocation2 + $0x144] sm:$0xff]
        %v1325 = vld [vmem:[#allocation2 + $0x14c] sm:$0xff]
        %v1326 = vld [vmem:[#allocation2 + $0x154] sm:$0xff]
        %v1327 = vld [vmem:[#allocation2 + $0x15c] sm:$0xff]
        %v1328 = vld [vmem:[#allocation2 + $0x164] sm:$0xf]
        %v1329 = vld [vmem:[#allocation2 + $0x168] sm:$0xff]
        %v1330 = vld [vmem:[#allocation2 + $0x170] sm:$0xff]
        %v1331 = vld [vmem:[#allocation2 + $0x178] sm:$0xff]
        %v1332 = vld [vmem:[#allocation2 + $0x180] sm:$0xff]
        %v1333 = vld [vmem:[#allocation2 + $0x188] sm:$0xf]
        %v1334 = vld [vmem:[#allocation2 + $0x18c] sm:$0xff]
        %v1335 = vld [vmem:[#allocation2 + $0x194] sm:$0xff]
        %v1336 = vld [vmem:[#allocation2 + $0x19c] sm:$0xff]
        %v1337 = vld [vmem:[#allocation2 + $0x1a4] sm:$0xff]
        %v1338 = vld [vmem:[#allocation2 + $0x1ac] sm:$0xf]
        %v1339 = vld [vmem:[#allocation2 + $0x1b0] sm:$0xff]
        %v1340 = vld [vmem:[#allocation2 + $0x1b8] sm:$0xff]
        %v1341 = vld [vmem:[#allocation2 + $0x1c0] sm:$0xff]
        %v1342 = vld [vmem:[#allocation2 + $0x1c8] sm:$0xff]
        %v1343 = vld [vmem:[#allocation2 + $0x1d0] sm:$0xf]
        %v1344 = vld [vmem:[#allocation2 + $0x1d4] sm:$0xff]
        %v1345 = vld [vmem:[#allocation2 + $0x1dc] sm:$0xff]
        %v1346 = vld [vmem:[#allocation2 + $0x1e4] sm:$0xff]
        %v1347 = vld [vmem:[#allocation2 + $0x1ec] sm:$0xff]
        %v1348 = vld [vmem:[#allocation2 + $0x1f4] sm:$0xf]
        %v1349 = vld [vmem:[#allocation2 + $0x1f8] sm:$0xff]
        %v1350 = vld [vmem:[#allocation2 + $0x200] sm:$0xff]
        %v1351 = vld [vmem:[#allocation2 + $0x208] sm:$0xff]
        %v1352 = vld [vmem:[#allocation2 + $0x210] sm:$0xff]
        %v1353 = vld [vmem:[#allocation2 + $0x218] sm:$0xf]
        %v1354 = vld [vmem:[#allocation2 + $0x21c] sm:$0xff]
        %v1355 = vld [vmem:[#allocation2 + $0x224] sm:$0xff]
        %v1356 = vld [vmem:[#allocation2 + $0x22c] sm:$0xff]
        %v1357 = vld [vmem:[#allocation2 + $0x234] sm:$0xff]
        %v1358 = vld [vmem:[#allocation2 + $0x23c] sm:$0xf]
        %v1359 = vld [vmem:[#allocation2 + $0x240] sm:$0xff]
        %v1360 = vld [vmem:[#allocation2 + $0x248] sm:$0xff]
        %v1361 = vld [vmem:[#allocation2 + $0x250] sm:$0xff]
        %v1362 = vld [vmem:[#allocation2 + $0x258] sm:$0xff]
        %v1363 = vld [vmem:[#allocation2 + $0x260] sm:$0xf]
        %v1364 = vld [vmem:[#allocation2 + $0x264] sm:$0xff]
        %v1365 = vld [vmem:[#allocation2 + $0x26c] sm:$0xff]
        %v1366 = vld [vmem:[#allocation2 + $0x274] sm:$0xff]
        %v1367 = vld [vmem:[#allocation2 + $0x27c] sm:$0xff]
        %v1368 = vld [vmem:[#allocation2 + $0x284] sm:$0xf]
        %v1369 = vld [vmem:[#allocation2 + $0x288] sm:$0xff]
        %v1370 = vld [vmem:[#allocation2 + $0x290] sm:$0xff]
        %v1371 = vld [vmem:[#allocation2 + $0x298] sm:$0xff]
        %v1372 = vld [vmem:[#allocation2 + $0x2a0] sm:$0xff]
        %v1373 = vld [vmem:[#allocation2 + $0x2a8] sm:$0xf]
        %v1374 = vld [vmem:[#allocation2 + $0x2ac] sm:$0xff]
        %v1375 = vld [vmem:[#allocation2 + $0x2b4] sm:$0xff]
        %v1376 = vld [vmem:[#allocation2 + $0x2bc] sm:$0xff]
        %v1377 = vld [vmem:[#allocation2 + $0x2c4] sm:$0xff]
        %v1378 = vld [vmem:[#allocation2 + $0x2cc] sm:$0xf]
        %v1379 = vld [vmem:[#allocation2 + $0x2d0] sm:$0xff]
        %v1380 = vld [vmem:[#allocation2 + $0x2d8] sm:$0xff]
        %v1381 = vld [vmem:[#allocation2 + $0x2e0] sm:$0xff]
        %v1382 = vld [vmem:[#allocation2 + $0x2e8] sm:$0xff]
        %v1383 = vld [vmem:[#allocation2 + $0x2f0] sm:$0xf]
        %v1384 = vld [vmem:[#allocation2 + $0x2f4] sm:$0xff]
        %v1385 = vld [vmem:[#allocation2 + $0x2fc] sm:$0xff]
        %v1386 = vld [vmem:[#allocation2 + $0x304] sm:$0xff]
        %v1387 = vld [vmem:[#allocation2 + $0x30c] sm:$0xff]
        %v1388 = vld [vmem:[#allocation2 + $0x314] sm:$0xf]
        %v1389 = vld [vmem:[#allocation2 + $0x318] sm:$0xff]
        %v1390 = vld [vmem:[#allocation2 + $0x320] sm:$0xff]
        %v1391 = vld [vmem:[#allocation2 + $0x328] sm:$0xff]
        %v1392 = vld [vmem:[#allocation2 + $0x330] sm:$0xff]
        %v1393 = vld [vmem:[#allocation2 + $0x338] sm:$0xf]
        %v1394 = vld [vmem:[#allocation2 + $0x33c] sm:$0xff]
        %v1395 = vld [vmem:[#allocation2 + $0x344] sm:$0xff]
        %v1396 = vld [vmem:[#allocation2 + $0x34c] sm:$0xff]
        %v1397 = vld [vmem:[#allocation2 + $0x354] sm:$0xff]
        %v1398 = vld [vmem:[#allocation2 + $0x35c] sm:$0xf]
        %v1399 = vld [vmem:[#allocation2 + $0x360] sm:$0xff]
        %v1400 = vld [vmem:[#allocation2 + $0x368] sm:$0xff]
        %v1401 = vld [vmem:[#allocation2 + $0x370] sm:$0xff]
        %v1402 = vld [vmem:[#allocation2 + $0x378] sm:$0xff]
        %v1403 = vld [vmem:[#allocation2 + $0x380] sm:$0xf]
        %v1404 = vld [vmem:[#allocation2 + $0x384] sm:$0xff]
        %v1405 = vld [vmem:[#allocation2 + $0x38c] sm:$0xff]
        %v1406 = vld [vmem:[#allocation2 + $0x394] sm:$0xff]
        %v1407 = vld [vmem:[#allocation2 + $0x39c] sm:$0xff]
        %v1408 = vld [vmem:[#allocation2 + $0x3a4] sm:$0xf]
        %v1409 = vld [vmem:[#allocation2 + $0x3a8] sm:$0xff]
        %v1410 = vld [vmem:[#allocation2 + $0x3b0] sm:$0xff]
        %v1411 = vld [vmem:[#allocation2 + $0x3b8] sm:$0xff]
        %v1412 = vld [vmem:[#allocation2 + $0x3c0] sm:$0xff]
        %v1413 = vld [vmem:[#allocation2 + $0x3c8] sm:$0xf]
        %v1414 = vld [vmem:[#allocation2 + $0x3cc] sm:$0xff]
        %v1415 = vld [vmem:[#allocation2 + $0x3d4] sm:$0xff]
        %v1416 = vld [vmem:[#allocation2 + $0x3dc] sm:$0xff]
        %v1417 = vld [vmem:[#allocation2 + $0x3e4] sm:$0xff]
        %v1418 = vld [vmem:[#allocation2 + $0x3ec] sm:$0xf]
        %v1419 = vld [vmem:[#allocation2 + $0x3f0] sm:$0xff]
        %v1420 = vld [vmem:[#allocation2 + $0x3f8] sm:$0xff]
        %v1421 = vld [vmem:[#allocation2 + $0x400] sm:$0xff]
        %v1422 = vld [vmem:[#allocation2 + $0x408] sm:$0xff]
        %v1423 = vld [vmem:[#allocation2 + $0x410] sm:$0xf]
        %v1424 = vld [vmem:[#allocation2 + $0x414] sm:$0xff]
        %v1425 = vld [vmem:[#allocation2 + $0x41c] sm:$0xff]
        %v1426 = vld [vmem:[#allocation2 + $0x424] sm:$0xff]
        %v1427 = vld [vmem:[#allocation2 + $0x42c] sm:$0xff]
        %v1428 = vld [vmem:[#allocation2 + $0x434] sm:$0xf]
        %v1429 = vld [vmem:[#allocation2 + $0x438] sm:$0xff]
        %v1430 = vld [vmem:[#allocation2 + $0x440] sm:$0xff]
        %v1431 = vld [vmem:[#allocation2 + $0x448] sm:$0xff]
        %v1432 = vld [vmem:[#allocation2 + $0x450] sm:$0xff]
        %v1433 = vld [vmem:[#allocation2 + $0x458] sm:$0xf]
        %v1434 = vld [vmem:[#allocation2 + $0x45c] sm:$0xff]
        %v1435 = vld [vmem:[#allocation2 + $0x464] sm:$0xff]
        %v1436 = vld [vmem:[#allocation2 + $0x46c] sm:$0xff]
        %v1437 = vld [vmem:[#allocation2 + $0x474] sm:$0xff]
        %v1438 = vld [vmem:[#allocation2 + $0x47c] sm:$0xf]
        %v1599 = vunpack.c.l.b16 %v1279
        %v1600 = vunpack.c.h.b16 %v1279
        %v1601 = vunpack.c.l.b16 %v1280
        %v1602 = vunpack.c.h.b16 %v1280
        %v1603 = vunpack.c.l.b16 %v1281
        %v1604 = vunpack.c.h.b16 %v1281
        %v1605 = vunpack.c.l.b16 %v1282
        %v1606 = vunpack.c.h.b16 %v1282
        %v1607 = vunpack.c.l.b16 %v1283
        %v1608 = vunpack.c.l.b16 %v1284
        %v1609 = vunpack.c.h.b16 %v1284
        %v1610 = vunpack.c.l.b16 %v1285
        %v1611 = vunpack.c.h.b16 %v1285
        %v1612 = vunpack.c.l.b16 %v1286
        %v1613 = vunpack.c.h.b16 %v1286
        %v1614 = vunpack.c.l.b16 %v1287
        %v1615 = vunpack.c.h.b16 %v1287
        %v1616 = vunpack.c.l.b16 %v1288
        %v1617 = vunpack.c.l.b16 %v1289
        %v1618 = vunpack.c.h.b16 %v1289
        %v1619 = vunpack.c.l.b16 %v1290
        %v1620 = vunpack.c.h.b16 %v1290
        %v1621 = vunpack.c.l.b16 %v1291
        %v1622 = vunpack.c.h.b16 %v1291
        %v1623 = vunpack.c.l.b16 %v1292
        %v1624 = vunpack.c.h.b16 %v1292
        %v1625 = vunpack.c.l.b16 %v1293
        %v1626 = vunpack.c.l.b16 %v1294
        %v1627 = vunpack.c.h.b16 %v1294
        %v1628 = vunpack.c.l.b16 %v1295
        %v1629 = vunpack.c.h.b16 %v1295
        %v1630 = vunpack.c.l.b16 %v1296
        %v1631 = vunpack.c.h.b16 %v1296
        %v1632 = vunpack.c.l.b16 %v1297
        %v1633 = vunpack.c.h.b16 %v1297
        %v1634 = vunpack.c.l.b16 %v1298
        %v1635 = vunpack.c.l.b16 %v1299
        %v1636 = vunpack.c.h.b16 %v1299
        %v1637 = vunpack.c.l.b16 %v1300
        %v1638 = vunpack.c.h.b16 %v1300
        %v1639 = vunpack.c.l.b16 %v1301
        %v1640 = vunpack.c.h.b16 %v1301
        %v1641 = vunpack.c.l.b16 %v1302
        %v1642 = vunpack.c.h.b16 %v1302
        %v1643 = vunpack.c.l.b16 %v1303
        %v1644 = vunpack.c.l.b16 %v1304
        %v1645 = vunpack.c.h.b16 %v1304
        %v1646 = vunpack.c.l.b16 %v1305
        %v1647 = vunpack.c.h.b16 %v1305
        %v1648 = vunpack.c.l.b16 %v1306
        %v1649 = vunpack.c.h.b16 %v1306
        %v1650 = vunpack.c.l.b16 %v1307
        %v1651 = vunpack.c.h.b16 %v1307
        %v1652 = vunpack.c.l.b16 %v1308
        %v1653 = vunpack.c.l.b16 %v1309
        %v1654 = vunpack.c.h.b16 %v1309
        %v1655 = vunpack.c.l.b16 %v1310
        %v1656 = vunpack.c.h.b16 %v1310
        %v1657 = vunpack.c.l.b16 %v1311
        %v1658 = vunpack.c.h.b16 %v1311
        %v1659 = vunpack.c.l.b16 %v1312
        %v1660 = vunpack.c.h.b16 %v1312
        %v1661 = vunpack.c.l.b16 %v1313
        %v1662 = vunpack.c.l.b16 %v1314
        %v1663 = vunpack.c.h.b16 %v1314
        %v1664 = vunpack.c.l.b16 %v1315
        %v1665 = vunpack.c.h.b16 %v1315
        %v1666 = vunpack.c.l.b16 %v1316
        %v1667 = vunpack.c.h.b16 %v1316
        %v1668 = vunpack.c.l.b16 %v1317
        %v1669 = vunpack.c.h.b16 %v1317
        %v1670 = vunpack.c.l.b16 %v1318
        %v1671 = vunpack.c.l.b16 %v1319
        %v1672 = vunpack.c.h.b16 %v1319
        %v1673 = vunpack.c.l.b16 %v1320
        %v1674 = vunpack.c.h.b16 %v1320
        %v1675 = vunpack.c.l.b16 %v1321
        %v1676 = vunpack.c.h.b16 %v1321
        %v1677 = vunpack.c.l.b16 %v1322
        %v1678 = vunpack.c.h.b16 %v1322
        %v1679 = vunpack.c.l.b16 %v1323
        %v1680 = vunpack.c.l.b16 %v1324
        %v1681 = vunpack.c.h.b16 %v1324
        %v1682 = vunpack.c.l.b16 %v1325
        %v1683 = vunpack.c.h.b16 %v1325
        %v1684 = vunpack.c.l.b16 %v1326
        %v1685 = vunpack.c.h.b16 %v1326
        %v1686 = vunpack.c.l.b16 %v1327
        %v1687 = vunpack.c.h.b16 %v1327
        %v1688 = vunpack.c.l.b16 %v1328
        %v1689 = vunpack.c.l.b16 %v1329
        %v1690 = vunpack.c.h.b16 %v1329
        %v1691 = vunpack.c.l.b16 %v1330
        %v1692 = vunpack.c.h.b16 %v1330
        %v1693 = vunpack.c.l.b16 %v1331
        %v1694 = vunpack.c.h.b16 %v1331
        %v1695 = vunpack.c.l.b16 %v1332
        %v1696 = vunpack.c.h.b16 %v1332
        %v1697 = vunpack.c.l.b16 %v1333
        %v1698 = vunpack.c.l.b16 %v1334
        %v1699 = vunpack.c.h.b16 %v1334
        %v1700 = vunpack.c.l.b16 %v1335
        %v1701 = vunpack.c.h.b16 %v1335
        %v1702 = vunpack.c.l.b16 %v1336
        %v1703 = vunpack.c.h.b16 %v1336
        %v1704 = vunpack.c.l.b16 %v1337
        %v1705 = vunpack.c.h.b16 %v1337
        %v1706 = vunpack.c.l.b16 %v1338
        %v1707 = vunpack.c.l.b16 %v1339
        %v1708 = vunpack.c.h.b16 %v1339
        %v1709 = vunpack.c.l.b16 %v1340
        %v1710 = vunpack.c.h.b16 %v1340
        %v1711 = vunpack.c.l.b16 %v1341
        %v1712 = vunpack.c.h.b16 %v1341
        %v1713 = vunpack.c.l.b16 %v1342
        %v1714 = vunpack.c.h.b16 %v1342
        %v1715 = vunpack.c.l.b16 %v1343
        %v1716 = vunpack.c.l.b16 %v1344
        %v1717 = vunpack.c.h.b16 %v1344
        %v1718 = vunpack.c.l.b16 %v1345
        %v1719 = vunpack.c.h.b16 %v1345
        %v1720 = vunpack.c.l.b16 %v1346
        %v1721 = vunpack.c.h.b16 %v1346
        %v1722 = vunpack.c.l.b16 %v1347
        %v1723 = vunpack.c.h.b16 %v1347
        %v1724 = vunpack.c.l.b16 %v1348
        %v1725 = vunpack.c.l.b16 %v1349
        %v1726 = vunpack.c.h.b16 %v1349
        %v1727 = vunpack.c.l.b16 %v1350
        %v1728 = vunpack.c.h.b16 %v1350
        %v1729 = vunpack.c.l.b16 %v1351
        %v1730 = vunpack.c.h.b16 %v1351
        %v1731 = vunpack.c.l.b16 %v1352
        %v1732 = vunpack.c.h.b16 %v1352
        %v1733 = vunpack.c.l.b16 %v1353
        %v1734 = vunpack.c.l.b16 %v1354
        %v1735 = vunpack.c.h.b16 %v1354
        %v1736 = vunpack.c.l.b16 %v1355
        %v1737 = vunpack.c.h.b16 %v1355
        %v1738 = vunpack.c.l.b16 %v1356
        %v1739 = vunpack.c.h.b16 %v1356
        %v1740 = vunpack.c.l.b16 %v1357
        %v1741 = vunpack.c.h.b16 %v1357
        %v1742 = vunpack.c.l.b16 %v1358
        %v1743 = vunpack.c.l.b16 %v1359
        %v1744 = vunpack.c.h.b16 %v1359
        %v1745 = vunpack.c.l.b16 %v1360
        %v1746 = vunpack.c.h.b16 %v1360
        %v1747 = vunpack.c.l.b16 %v1361
        %v1748 = vunpack.c.h.b16 %v1361
        %v1749 = vunpack.c.l.b16 %v1362
        %v1750 = vunpack.c.h.b16 %v1362
        %v1751 = vunpack.c.l.b16 %v1363
        %v1752 = vunpack.c.l.b16 %v1364
        %v1753 = vunpack.c.h.b16 %v1364
        %v1754 = vunpack.c.l.b16 %v1365
        %v1755 = vunpack.c.h.b16 %v1365
        %v1756 = vunpack.c.l.b16 %v1366
        %v1757 = vunpack.c.h.b16 %v1366
        %v1758 = vunpack.c.l.b16 %v1367
        %v1759 = vunpack.c.h.b16 %v1367
        %v1760 = vunpack.c.l.b16 %v1368
        %v1761 = vunpack.c.l.b16 %v1369
        %v1762 = vunpack.c.h.b16 %v1369
        %v1763 = vunpack.c.l.b16 %v1370
        %v1764 = vunpack.c.h.b16 %v1370
        %v1765 = vunpack.c.l.b16 %v1371
        %v1766 = vunpack.c.h.b16 %v1371
        %v1767 = vunpack.c.l.b16 %v1372
        %v1768 = vunpack.c.h.b16 %v1372
        %v1769 = vunpack.c.l.b16 %v1373
        %v1770 = vunpack.c.l.b16 %v1374
        %v1771 = vunpack.c.h.b16 %v1374
        %v1772 = vunpack.c.l.b16 %v1375
        %v1773 = vunpack.c.h.b16 %v1375
        %v1774 = vunpack.c.l.b16 %v1376
        %v1775 = vunpack.c.h.b16 %v1376
        %v1776 = vunpack.c.l.b16 %v1377
        %v1777 = vunpack.c.h.b16 %v1377
        %v1778 = vunpack.c.l.b16 %v1378
        %v1779 = vunpack.c.l.b16 %v1379
        %v1780 = vunpack.c.h.b16 %v1379
        %v1781 = vunpack.c.l.b16 %v1380
        %v1782 = vunpack.c.h.b16 %v1380
        %v1783 = vunpack.c.l.b16 %v1381
        %v1784 = vunpack.c.h.b16 %v1381
        %v1785 = vunpack.c.l.b16 %v1382
        %v1786 = vunpack.c.h.b16 %v1382
        %v1787 = vunpack.c.l.b16 %v1383
        %v1788 = vunpack.c.l.b16 %v1384
        %v1789 = vunpack.c.h.b16 %v1384
        %v1790 = vunpack.c.l.b16 %v1385
        %v1791 = vunpack.c.h.b16 %v1385
        %v1792 = vunpack.c.l.b16 %v1386
        %v1793 = vunpack.c.h.b16 %v1386
        %v1794 = vunpack.c.l.b16 %v1387
        %v1795 = vunpack.c.h.b16 %v1387
        %v1796 = vunpack.c.l.b16 %v1388
        %v1797 = vunpack.c.l.b16 %v1389
        %v1798 = vunpack.c.h.b16 %v1389
        %v1799 = vunpack.c.l.b16 %v1390
        %v1800 = vunpack.c.h.b16 %v1390
        %v1801 = vunpack.c.l.b16 %v1391
        %v1802 = vunpack.c.h.b16 %v1391
        %v1803 = vunpack.c.l.b16 %v1392
        %v1804 = vunpack.c.h.b16 %v1392
        %v1805 = vunpack.c.l.b16 %v1393
        %v1806 = vunpack.c.l.b16 %v1394
        %v1807 = vunpack.c.h.b16 %v1394
        %v1808 = vunpack.c.l.b16 %v1395
        %v1809 = vunpack.c.h.b16 %v1395
        %v1810 = vunpack.c.l.b16 %v1396
        %v1811 = vunpack.c.h.b16 %v1396
        %v1812 = vunpack.c.l.b16 %v1397
        %v1813 = vunpack.c.h.b16 %v1397
        %v1814 = vunpack.c.l.b16 %v1398
        %v1815 = vunpack.c.l.b16 %v1399
        %v1816 = vunpack.c.h.b16 %v1399
        %v1817 = vunpack.c.l.b16 %v1400
        %v1818 = vunpack.c.h.b16 %v1400
        %v1819 = vunpack.c.l.b16 %v1401
        %v1820 = vunpack.c.h.b16 %v1401
        %v1821 = vunpack.c.l.b16 %v1402
        %v1822 = vunpack.c.h.b16 %v1402
        %v1823 = vunpack.c.l.b16 %v1403
        %v1824 = vunpack.c.l.b16 %v1404
        %v1825 = vunpack.c.h.b16 %v1404
        %v1826 = vunpack.c.l.b16 %v1405
        %v1827 = vunpack.c.h.b16 %v1405
        %v1828 = vunpack.c.l.b16 %v1406
        %v1829 = vunpack.c.h.b16 %v1406
        %v1830 = vunpack.c.l.b16 %v1407
        %v1831 = vunpack.c.h.b16 %v1407
        %v1832 = vunpack.c.l.b16 %v1408
        %v1833 = vunpack.c.l.b16 %v1409
        %v1834 = vunpack.c.h.b16 %v1409
        %v1835 = vunpack.c.l.b16 %v1410
        %v1836 = vunpack.c.h.b16 %v1410
        %v1837 = vunpack.c.l.b16 %v1411
        %v1838 = vunpack.c.h.b16 %v1411
        %v1839 = vunpack.c.l.b16 %v1412
        %v1840 = vunpack.c.h.b16 %v1412
        %v1841 = vunpack.c.l.b16 %v1413
        %v1842 = vunpack.c.l.b16 %v1414
        %v1843 = vunpack.c.h.b16 %v1414
        %v1844 = vunpack.c.l.b16 %v1415
        %v1845 = vunpack.c.h.b16 %v1415
        %v1846 = vunpack.c.l.b16 %v1416
        %v1847 = vunpack.c.h.b16 %v1416
        %v1848 = vunpack.c.l.b16 %v1417
        %v1849 = vunpack.c.h.b16 %v1417
        %v1850 = vunpack.c.l.b16 %v1418
        %v1851 = vunpack.c.l.b16 %v1419
        %v1852 = vunpack.c.h.b16 %v1419
        %v1853 = vunpack.c.l.b16 %v1420
        %v1854 = vunpack.c.h.b16 %v1420
        %v1855 = vunpack.c.l.b16 %v1421
        %v1856 = vunpack.c.h.b16 %v1421
        %v1857 = vunpack.c.l.b16 %v1422
        %v1858 = vunpack.c.h.b16 %v1422
        %v1859 = vunpack.c.l.b16 %v1423
        %v1860 = vunpack.c.l.b16 %v1424
        %v1861 = vunpack.c.h.b16 %v1424
        %v1862 = vunpack.c.l.b16 %v1425
        %v1863 = vunpack.c.h.b16 %v1425
        %v1864 = vunpack.c.l.b16 %v1426
        %v1865 = vunpack.c.h.b16 %v1426
        %v1866 = vunpack.c.l.b16 %v1427
        %v1867 = vunpack.c.h.b16 %v1427
        %v1868 = vunpack.c.l.b16 %v1428
        %v1869 = vunpack.c.l.b16 %v1429
        %v1870 = vunpack.c.h.b16 %v1429
        %v1871 = vunpack.c.l.b16 %v1430
        %v1872 = vunpack.c.h.b16 %v1430
        %v1873 = vunpack.c.l.b16 %v1431
        %v1874 = vunpack.c.h.b16 %v1431
        %v1875 = vunpack.c.l.b16 %v1432
        %v1876 = vunpack.c.h.b16 %v1432
        %v1877 = vunpack.c.l.b16 %v1433
        %v1878 = vunpack.c.l.b16 %v1434
        %v1879 = vunpack.c.h.b16 %v1434
        %v1880 = vunpack.c.l.b16 %v1435
        %v1881 = vunpack.c.h.b16 %v1435
        %v1882 = vunpack.c.l.b16 %v1436
        %v1883 = vunpack.c.h.b16 %v1436
        %v1884 = vunpack.c.l.b16 %v1437
        %v1885 = vunpack.c.h.b16 %v1437
        %v1886 = vunpack.c.l.b16 %v1438
        %v1887 = vpack.c.b16 %v1608, %v1599
        %v1888 = vpack.c.b16 %v1609, %v1600
        %v1889 = vpack.c.b16 %v1610, %v1601
        %v1890 = vpack.c.b16 %v1611, %v1602
        %v1891 = vpack.c.b16 %v1612, %v1603
        %v1892 = vpack.c.b16 %v1613, %v1604
        %v1893 = vpack.c.b16 %v1614, %v1605
        %v1894 = vpack.c.b16 %v1615, %v1606
        %v1895 = vpack.c.b16 %v1616, %v1607
        %v1896 = vpack.c.b16 %v1626, %v1617
        %v1897 = vpack.c.b16 %v1627, %v1618
        %v1898 = vpack.c.b16 %v1628, %v1619
        %v1899 = vpack.c.b16 %v1629, %v1620
        %v1900 = vpack.c.b16 %v1630, %v1621
        %v1901 = vpack.c.b16 %v1631, %v1622
        %v1902 = vpack.c.b16 %v1632, %v1623
        %v1903 = vpack.c.b16 %v1633, %v1624
        %v1904 = vpack.c.b16 %v1634, %v1625
        %v1905 = vpack.c.b16 %v1644, %v1635
        %v1906 = vpack.c.b16 %v1645, %v1636
        %v1907 = vpack.c.b16 %v1646, %v1637
        %v1908 = vpack.c.b16 %v1647, %v1638
        %v1909 = vpack.c.b16 %v1648, %v1639
        %v1910 = vpack.c.b16 %v1649, %v1640
        %v1911 = vpack.c.b16 %v1650, %v1641
        %v1912 = vpack.c.b16 %v1651, %v1642
        %v1913 = vpack.c.b16 %v1652, %v1643
        %v1914 = vpack.c.b16 %v1662, %v1653
        %v1915 = vpack.c.b16 %v1663, %v1654
        %v1916 = vpack.c.b16 %v1664, %v1655
        %v1917 = vpack.c.b16 %v1665, %v1656
        %v1918 = vpack.c.b16 %v1666, %v1657
        %v1919 = vpack.c.b16 %v1667, %v1658
        %v1920 = vpack.c.b16 %v1668, %v1659
        %v1921 = vpack.c.b16 %v1669, %v1660
        %v1922 = vpack.c.b16 %v1670, %v1661
        %v1923 = vpack.c.b16 %v1680, %v1671
        %v1924 = vpack.c.b16 %v1681, %v1672
        %v1925 = vpack.c.b16 %v1682, %v1673
        %v1926 = vpack.c.b16 %v1683, %v1674
        %v1927 = vpack.c.b16 %v1684, %v1675
        %v1928 = vpack.c.b16 %v1685, %v1676
        %v1929 = vpack.c.b16 %v1686, %v1677
        %v1930 = vpack.c.b16 %v1687, %v1678
        %v1931 = vpack.c.b16 %v1688, %v1679
        %v1932 = vpack.c.b16 %v1698, %v1689
        %v1933 = vpack.c.b16 %v1699, %v1690
        %v1934 = vpack.c.b16 %v1700, %v1691
        %v1935 = vpack.c.b16 %v1701, %v1692
        %v1936 = vpack.c.b16 %v1702, %v1693
        %v1937 = vpack.c.b16 %v1703, %v1694
        %v1938 = vpack.c.b16 %v1704, %v1695
        %v1939 = vpack.c.b16 %v1705, %v1696
        %v1940 = vpack.c.b16 %v1706, %v1697
        %v1941 = vpack.c.b16 %v1716, %v1707
        %v1942 = vpack.c.b16 %v1717, %v1708
        %v1943 = vpack.c.b16 %v1718, %v1709
        %v1944 = vpack.c.b16 %v1719, %v1710
        %v1945 = vpack.c.b16 %v1720, %v1711
        %v1946 = vpack.c.b16 %v1721, %v1712
        %v1947 = vpack.c.b16 %v1722, %v1713
        %v1948 = vpack.c.b16 %v1723, %v1714
        %v1949 = vpack.c.b16 %v1724, %v1715
        %v1950 = vpack.c.b16 %v1734, %v1725
        %v1951 = vpack.c.b16 %v1735, %v1726
        %v1952 = vpack.c.b16 %v1736, %v1727
        %v1953 = vpack.c.b16 %v1737, %v1728
        %v1954 = vpack.c.b16 %v1738, %v1729
        %v1955 = vpack.c.b16 %v1739, %v1730
        %v1956 = vpack.c.b16 %v1740, %v1731
        %v1957 = vpack.c.b16 %v1741, %v1732
        %v1958 = vpack.c.b16 %v1742, %v1733
        %v1959 = vpack.c.b16 %v1752, %v1743
        %v1960 = vpack.c.b16 %v1753, %v1744
        %v1961 = vpack.c.b16 %v1754, %v1745
        %v1962 = vpack.c.b16 %v1755, %v1746
        %v1963 = vpack.c.b16 %v1756, %v1747
        %v1964 = vpack.c.b16 %v1757, %v1748
        %v1965 = vpack.c.b16 %v1758, %v1749
        %v1966 = vpack.c.b16 %v1759, %v1750
        %v1967 = vpack.c.b16 %v1760, %v1751
        %v1968 = vpack.c.b16 %v1770, %v1761
        %v1969 = vpack.c.b16 %v1771, %v1762
        %v1970 = vpack.c.b16 %v1772, %v1763
        %v1971 = vpack.c.b16 %v1773, %v1764
        %v1972 = vpack.c.b16 %v1774, %v1765
        %v1973 = vpack.c.b16 %v1775, %v1766
        %v1974 = vpack.c.b16 %v1776, %v1767
        %v1975 = vpack.c.b16 %v1777, %v1768
        %v1976 = vpack.c.b16 %v1778, %v1769
        %v1977 = vpack.c.b16 %v1788, %v1779
        %v1978 = vpack.c.b16 %v1789, %v1780
        %v1979 = vpack.c.b16 %v1790, %v1781
        %v1980 = vpack.c.b16 %v1791, %v1782
        %v1981 = vpack.c.b16 %v1792, %v1783
        %v1982 = vpack.c.b16 %v1793, %v1784
        %v1983 = vpack.c.b16 %v1794, %v1785
        %v1984 = vpack.c.b16 %v1795, %v1786
        %v1985 = vpack.c.b16 %v1796, %v1787
        %v1986 = vpack.c.b16 %v1806, %v1797
        %v1987 = vpack.c.b16 %v1807, %v1798
        %v1988 = vpack.c.b16 %v1808, %v1799
        %v1989 = vpack.c.b16 %v1809, %v1800
        %v1990 = vpack.c.b16 %v1810, %v1801
        %v1991 = vpack.c.b16 %v1811, %v1802
        %v1992 = vpack.c.b16 %v1812, %v1803
        %v1993 = vpack.c.b16 %v1813, %v1804
        %v1994 = vpack.c.b16 %v1814, %v1805
        %v1995 = vpack.c.b16 %v1824, %v1815
        %v1996 = vpack.c.b16 %v1825, %v1816
        %v1997 = vpack.c.b16 %v1826, %v1817
        %v1998 = vpack.c.b16 %v1827, %v1818
        %v1999 = vpack.c.b16 %v1828, %v1819
        %v2000 = vpack.c.b16 %v1829, %v1820
        %v2001 = vpack.c.b16 %v1830, %v1821
        %v2002 = vpack.c.b16 %v1831, %v1822
        %v2003 = vpack.c.b16 %v1832, %v1823
        %v2004 = vpack.c.b16 %v1842, %v1833
        %v2005 = vpack.c.b16 %v1843, %v1834
        %v2006 = vpack.c.b16 %v1844, %v1835
        %v2007 = vpack.c.b16 %v1845, %v1836
        %v2008 = vpack.c.b16 %v1846, %v1837
        %v2009 = vpack.c.b16 %v1847, %v1838
        %v2010 = vpack.c.b16 %v1848, %v1839
        %v2011 = vpack.c.b16 %v1849, %v1840
        %v2012 = vpack.c.b16 %v1850, %v1841
        %v2013 = vpack.c.b16 %v1860, %v1851
        %v2014 = vpack.c.b16 %v1861, %v1852
        %v2015 = vpack.c.b16 %v1862, %v1853
        %v2016 = vpack.c.b16 %v1863, %v1854
        %v2017 = vpack.c.b16 %v1864, %v1855
        %v2018 = vpack.c.b16 %v1865, %v1856
        %v2019 = vpack.c.b16 %v1866, %v1857
        %v2020 = vpack.c.b16 %v1867, %v1858
        %v2021 = vpack.c.b16 %v1868, %v1859
        %v2022 = vpack.c.b16 %v1878, %v1869
        %v2023 = vpack.c.b16 %v1879, %v1870
        %v2024 = vpack.c.b16 %v1880, %v1871
        %v2025 = vpack.c.b16 %v1881, %v1872
        %v2026 = vpack.c.b16 %v1882, %v1873
        %v2027 = vpack.c.b16 %v1883, %v1874
        %v2028 = vpack.c.b16 %v1884, %v1875
        %v2029 = vpack.c.b16 %v1885, %v1876
        %v2030 = vpack.c.b16 %v1886, %v1877
        %2175 = vmatprep.subr.bf16.mxu0 %v1951
        %2176 = vmatpush1.bf16.msra.mxu0 %v1950
        %2177 = vmatprep.subr.bf16.mxu0 %v1942
        %2178 = vmatpush1.bf16.msra.mxu0 %v1941
        %2179 = vmatprep.subr.bf16.mxu0 %v1933
        %2180 = vmatpush1.bf16.msra.mxu0 %v1932
        %2181 = vmatprep.subr.bf16.mxu0 %v1924
        %2182 = vmatpush1.bf16.msra.mxu0 %v1923
        %2183 = vmatprep.subr.bf16.mxu0 %v1915
        %2184 = vmatpush1.bf16.msra.mxu0 %v1914
        %2185 = vmatprep.subr.bf16.mxu0 %v1906
        %2186 = vmatpush1.bf16.msra.mxu0 %v1905
        %2187 = vmatprep.subr.bf16.mxu0 %v1897
        %2188 = vmatpush1.bf16.msra.mxu0 %v1896
        %2189 = vmatprep.subr.bf16.mxu0 %v1888
        %2190 = vmatpush1.bf16.msra.mxu0 %v1887
        %2191 = vmatprep.subr.bf16.mxu0 %v2023
        %2192 = vmatpush2.bf16.msra.mxu0 %v2022
        %2193 = vmatprep.subr.bf16.mxu0 %v2014
        %2194 = vmatpush2.bf16.msra.mxu0 %v2013
        %2195 = vmatprep.subr.bf16.mxu0 %v2005
        %2196 = vmatpush2.bf16.msra.mxu0 %v2004
        %2197 = vmatprep.subr.bf16.mxu0 %v1996
        %2198 = vmatpush2.bf16.msra.mxu0 %v1995
        %2199 = vmatprep.subr.bf16.mxu0 %v1987
        %2200 = vmatpush2.bf16.msra.mxu0 %v1986
        %2201 = vmatprep.subr.bf16.mxu0 %v1978
        %2202 = vmatpush2.bf16.msra.mxu0 %v1977
        %2203 = vmatprep.subr.bf16.mxu0 %v1969
        %2204 = vmatpush2.bf16.msra.mxu0 %v1968
        %2205 = vmatprep.subr.bf16.mxu0 %v1960
        %2206 = vmatpush2.bf16.msra.mxu0 %v1959
        %2207 = vmatprep.mubr.bf16.mxu0 %v1260
        %2208 = vmatmul.mubr.bf16.gmra.mxu0 %v1259
        %v2209 = vpop.f32.mrf.mxu0
        %v2210 = vadd.f32 0.0, %v2209
        %v2211 = vpop.f32.mrf.mxu0
        %v2212 = vadd.f32 0.0, %v2211
        %v2213 = vpop.f32.mrf.mxu0
        %v2214 = vadd.f32 0.0, %v2213
        %v2215 = vpop.f32.mrf.mxu0
        %v2216 = vadd.f32 0.0, %v2215
        %2217 = vmatprep.mubr.bf16.mxu0 %v1262
        %2218 = vmatmul.mubr.bf16.gmra.mxu0 %v1261
        %v2219 = vpop.f32.mrf.mxu0
        %v2220 = vadd.f32 0.0, %v2219
        %v2221 = vpop.f32.mrf.mxu0
        %v2222 = vadd.f32 0.0, %v2221
        %v2223 = vpop.f32.mrf.mxu0
        %v2224 = vadd.f32 0.0, %v2223
        %v2225 = vpop.f32.mrf.mxu0
        %v2226 = vadd.f32 0.0, %v2225
        %2227 = vmatprep.mubr.bf16.mxu0 %v1264
        %2228 = vmatmul.mubr.bf16.gmra.mxu0 %v1263
        %v2229 = vpop.f32.mrf.mxu0
        %v2230 = vadd.f32 0.0, %v2229
        %v2231 = vpop.f32.mrf.mxu0
        %v2232 = vadd.f32 0.0, %v2231
        %v2233 = vpop.f32.mrf.mxu0
        %v2234 = vadd.f32 0.0, %v2233
        %v2235 = vpop.f32.mrf.mxu0
        %v2236 = vadd.f32 0.0, %v2235
        %2237 = vmatprep.mubr.bf16.mxu0 %v1266
        %2238 = vmatmul.mubr.bf16.gmra.mxu0 %v1265
        %v2239 = vpop.f32.mrf.mxu0
        %v2240 = vadd.f32 0.0, %v2239
        %v2241 = vpop.f32.mrf.mxu0
        %v2242 = vadd.f32 0.0, %v2241
        %v2243 = vpop.f32.mrf.mxu0
        %v2244 = vadd.f32 0.0, %v2243
        %v2245 = vpop.f32.mrf.mxu0
        %v2246 = vadd.f32 0.0, %v2245
        %2247 = vmatprep.mubr.bf16.mxu0 %v1268
        %2248 = vmatmul.mubr.bf16.gmra.mxu0 %v1267
        %v2249 = vpop.f32.mrf.mxu0
        %v2250 = vadd.f32 0.0, %v2249
        %v2251 = vpop.f32.mrf.mxu0
        %v2252 = vadd.f32 0.0, %v2251
        %v2253 = vpop.f32.mrf.mxu0
        %v2254 = vadd.f32 0.0, %v2253
        %v2255 = vpop.f32.mrf.mxu0
        %v2256 = vadd.f32 0.0, %v2255
        %2257 = vmatprep.mubr.bf16.mxu0 %v1270
        %2258 = vmatmul.mubr.bf16.gmra.mxu0 %v1269
        %v2259 = vpop.f32.mrf.mxu0
        %v2260 = vadd.f32 0.0, %v2259
        %v2261 = vpop.f32.mrf.mxu0
        %v2262 = vadd.f32 0.0, %v2261
        %v2263 = vpop.f32.mrf.mxu0
        %v2264 = vadd.f32 0.0, %v2263
        %v2265 = vpop.f32.mrf.mxu0
        %v2266 = vadd.f32 0.0, %v2265
        %2267 = vmatprep.mubr.bf16.mxu0 %v1272
        %2268 = vmatmul.mubr.bf16.gmra.mxu0 %v1271
        %v2269 = vpop.f32.mrf.mxu0
        %v2270 = vadd.f32 0.0, %v2269
        %v2271 = vpop.f32.mrf.mxu0
        %v2272 = vadd.f32 0.0, %v2271
        %v2273 = vpop.f32.mrf.mxu0
        %v2274 = vadd.f32 0.0, %v2273
        %v2275 = vpop.f32.mrf.mxu0
        %v2276 = vadd.f32 0.0, %v2275
        %2277 = vmatprep.mubr.bf16.mxu0 %v1274
        %2278 = vmatmul.mubr.bf16.gmra.mxu0 %v1273
        %v2279 = vpop.f32.mrf.mxu0
        %v2280 = vadd.f32 0.0, %v2279
        %v2281 = vpop.f32.mrf.mxu0
        %v2282 = vadd.f32 0.0, %v2281
        %v2283 = vpop.f32.mrf.mxu0
        %v2284 = vadd.f32 0.0, %v2283
        %v2285 = vpop.f32.mrf.mxu0
        %v2286 = vadd.f32 0.0, %v2285
        %2287 = vmatprep.mubr.bf16.mxu0 %v1276
        %2288 = vmatmul.mubr.bf16.gmra.mxu0 %v1275
        %v2289 = vpop.f32.mrf.mxu0
        %v2290 = vpop.f32.mrf.mxu0
        %v2291 = vpop.f32.mrf.mxu0
        %v2292 = vpop.f32.mrf.mxu0
        %2293 = vmatprep.mubr.bf16.mxu0 %v1278
        %2294 = vmatmul.mubr.bf16.gmra.mxu0 %v1277
        %v2295 = vpop.f32.mrf.mxu0
        %v2296 = vpop.f32.mrf.mxu0
        %v2297 = vpop.f32.mrf.mxu0
        %v2298 = vpop.f32.mrf.mxu0
        %2299 = vdwg.mxu0
        %2300 = vmatprep.subr.bf16.mxu0 %v1953
        %2301 = vmatpush1.bf16.msra.mxu0 %v1952
        %2302 = vmatprep.subr.bf16.mxu0 %v1944
        %2303 = vmatpush1.bf16.msra.mxu0 %v1943
        %2304 = vmatprep.subr.bf16.mxu0 %v1935
        %2305 = vmatpush1.bf16.msra.mxu0 %v1934
        %2306 = vmatprep.subr.bf16.mxu0 %v1926
        %2307 = vmatpush1.bf16.msra.mxu0 %v1925
        %2308 = vmatprep.subr.bf16.mxu0 %v1917
        %2309 = vmatpush1.bf16.msra.mxu0 %v1916
        %2310 = vmatprep.subr.bf16.mxu0 %v1908
        %2311 = vmatpush1.bf16.msra.mxu0 %v1907
        %2312 = vmatprep.subr.bf16.mxu0 %v1899
        %2313 = vmatpush1.bf16.msra.mxu0 %v1898
        %2314 = vmatprep.subr.bf16.mxu0 %v1890
        %2315 = vmatpush1.bf16.msra.mxu0 %v1889
        %2316 = vmatprep.subr.bf16.mxu0 %v2025
        %2317 = vmatpush2.bf16.msra.mxu0 %v2024
        %2318 = vmatprep.subr.bf16.mxu0 %v2016
        %2319 = vmatpush2.bf16.msra.mxu0 %v2015
        %2320 = vmatprep.subr.bf16.mxu0 %v2007
        %2321 = vmatpush2.bf16.msra.mxu0 %v2006
        %2322 = vmatprep.subr.bf16.mxu0 %v1998
        %2323 = vmatpush2.bf16.msra.mxu0 %v1997
        %2324 = vmatprep.subr.bf16.mxu0 %v1989
        %2325 = vmatpush2.bf16.msra.mxu0 %v1988
        %2326 = vmatprep.subr.bf16.mxu0 %v1980
        %2327 = vmatpush2.bf16.msra.mxu0 %v1979
        %2328 = vmatprep.subr.bf16.mxu0 %v1971
        %2329 = vmatpush2.bf16.msra.mxu0 %v1970
        %2330 = vmatprep.subr.bf16.mxu0 %v1962
        %2331 = vmatpush2.bf16.msra.mxu0 %v1961
        %2332 = vmatprep.mubr.bf16.mxu0 %v1260
        %2333 = vmatmul.mubr.bf16.gmra.mxu0 %v1259
        %v2334 = vpop.f32.mrf.mxu0
        %v2335 = vadd.f32 0.0, %v2334
        %v2336 = vpop.f32.mrf.mxu0
        %v2337 = vpop.f32.mrf.mxu0
        %v2338 = vadd.f32 0.0, %v2337
        %v2339 = vpop.f32.mrf.mxu0
        %2340 = vmatprep.mubr.bf16.mxu0 %v1262
        %2341 = vmatmul.mubr.bf16.gmra.mxu0 %v1261
        %v2342 = vpop.f32.mrf.mxu0
        %v2343 = vadd.f32 0.0, %v2342
        %v2344 = vpop.f32.mrf.mxu0
        %v2345 = vadd.f32 0.0, %v2344
        %v2346 = vpop.f32.mrf.mxu0
        %v2347 = vadd.f32 0.0, %v2346
        %v2348 = vpop.f32.mrf.mxu0
        %v2349 = vadd.f32 0.0, %v2348
        %2350 = vmatprep.mubr.bf16.mxu0 %v1264
        %2351 = vmatmul.mubr.bf16.gmra.mxu0 %v1263
        %v2352 = vpop.f32.mrf.mxu0
        %v2353 = vadd.f32 0.0, %v2352
        %v2354 = vpop.f32.mrf.mxu0
        %v2355 = vadd.f32 0.0, %v2354
        %v2356 = vpop.f32.mrf.mxu0
        %v2357 = vadd.f32 0.0, %v2356
        %v2358 = vpop.f32.mrf.mxu0
        %v2359 = vadd.f32 0.0, %v2358
        %2360 = vmatprep.mubr.bf16.mxu0 %v1266
        %2361 = vmatmul.mubr.bf16.gmra.mxu0 %v1265
        %v2362 = vpop.f32.mrf.mxu0
        %v2363 = vadd.f32 0.0, %v2362
        %v2364 = vpop.f32.mrf.mxu0
        %v2365 = vadd.f32 0.0, %v2364
        %v2366 = vpop.f32.mrf.mxu0
        %v2367 = vadd.f32 0.0, %v2366
        %v2368 = vpop.f32.mrf.mxu0
        %v2369 = vadd.f32 0.0, %v2368
        %2370 = vmatprep.mubr.bf16.mxu0 %v1268
        %2371 = vmatmul.mubr.bf16.gmra.mxu0 %v1267
        %v2372 = vpop.f32.mrf.mxu0
        %v2373 = vadd.f32 0.0, %v2372
        %v2374 = vpop.f32.mrf.mxu0
        %v2375 = vadd.f32 0.0, %v2374
        %v2376 = vpop.f32.mrf.mxu0
        %v2377 = vadd.f32 0.0, %v2376
        %v2378 = vpop.f32.mrf.mxu0
        %v2379 = vadd.f32 0.0, %v2378
        %2380 = vmatprep.mubr.bf16.mxu0 %v1270
        %2381 = vmatmul.mubr.bf16.gmra.mxu0 %v1269
        %v2382 = vpop.f32.mrf.mxu0
        %v2383 = vadd.f32 0.0, %v2382
        %v2384 = vpop.f32.mrf.mxu0
        %v2385 = vadd.f32 0.0, %v2384
        %v2386 = vpop.f32.mrf.mxu0
        %v2387 = vadd.f32 0.0, %v2386
        %v2388 = vpop.f32.mrf.mxu0
        %v2389 = vadd.f32 0.0, %v2388
        %2390 = vmatprep.mubr.bf16.mxu0 %v1272
        %2391 = vmatmul.mubr.bf16.gmra.mxu0 %v1271
        %v2392 = vpop.f32.mrf.mxu0
        %v2393 = vadd.f32 0.0, %v2392
        %v2394 = vpop.f32.mrf.mxu0
        %v2395 = vadd.f32 0.0, %v2394
        %v2396 = vpop.f32.mrf.mxu0
        %v2397 = vadd.f32 0.0, %v2396
        %v2398 = vpop.f32.mrf.mxu0
        %v2399 = vadd.f32 0.0, %v2398
        %2400 = vmatprep.mubr.bf16.mxu0 %v1274
        %2401 = vmatmul.mubr.bf16.gmra.mxu0 %v1273
        %v2402 = vpop.f32.mrf.mxu0
        %v2403 = vadd.f32 0.0, %v2402
        %v2404 = vpop.f32.mrf.mxu0
        %v2405 = vadd.f32 0.0, %v2404
        %v2406 = vpop.f32.mrf.mxu0
        %v2407 = vadd.f32 0.0, %v2406
        %v2408 = vpop.f32.mrf.mxu0
        %v2409 = vadd.f32 0.0, %v2408
        %2410 = vmatprep.mubr.bf16.mxu0 %v1276
        %2411 = vmatmul.mubr.bf16.gmra.mxu0 %v1275
        %v2412 = vpop.f32.mrf.mxu0
        %v2413 = vpop.f32.mrf.mxu0
        %v2414 = vadd.f32 0.0, %v2413
        %v2415 = vpop.f32.mrf.mxu0
        %v2416 = vpop.f32.mrf.mxu0
        %v2417 = vadd.f32 0.0, %v2416
        %2418 = vmatprep.mubr.bf16.mxu0 %v1278
        %2419 = vmatmul.mubr.bf16.gmra.mxu0 %v1277
        %v2420 = vpop.f32.mrf.mxu0
        %v2421 = vpop.f32.mrf.mxu0
        %v2422 = vpop.f32.mrf.mxu0
        %v2423 = vpop.f32.mrf.mxu0
        %2424 = vdwg.mxu0
        %2425 = vmatprep.subr.bf16.mxu0 %v1955
        %2426 = vmatpush1.bf16.msra.mxu0 %v1954
        %2427 = vmatprep.subr.bf16.mxu0 %v1946
        %2428 = vmatpush1.bf16.msra.mxu0 %v1945
        %2429 = vmatprep.subr.bf16.mxu0 %v1937
        %2430 = vmatpush1.bf16.msra.mxu0 %v1936
        %2431 = vmatprep.subr.bf16.mxu0 %v1928
        %2432 = vmatpush1.bf16.msra.mxu0 %v1927
        %2433 = vmatprep.subr.bf16.mxu0 %v1919
        %2434 = vmatpush1.bf16.msra.mxu0 %v1918
        %2435 = vmatprep.subr.bf16.mxu0 %v1910
        %2436 = vmatpush1.bf16.msra.mxu0 %v1909
        %2437 = vmatprep.subr.bf16.mxu0 %v1901
        %2438 = vmatpush1.bf16.msra.mxu0 %v1900
        %2439 = vmatprep.subr.bf16.mxu0 %v1892
        %2440 = vmatpush1.bf16.msra.mxu0 %v1891
        %2441 = vmatprep.subr.bf16.mxu0 %v2027
        %2442 = vmatpush2.bf16.msra.mxu0 %v2026
        %2443 = vmatprep.subr.bf16.mxu0 %v2018
        %2444 = vmatpush2.bf16.msra.mxu0 %v2017
        %2445 = vmatprep.subr.bf16.mxu0 %v2009
        %2446 = vmatpush2.bf16.msra.mxu0 %v2008
        %2447 = vmatprep.subr.bf16.mxu0 %v2000
        %2448 = vmatpush2.bf16.msra.mxu0 %v1999
        %2449 = vmatprep.subr.bf16.mxu0 %v1991
        %2450 = vmatpush2.bf16.msra.mxu0 %v1990
        %2451 = vmatprep.subr.bf16.mxu0 %v1982
        %2452 = vmatpush2.bf16.msra.mxu0 %v1981
        %2453 = vmatprep.subr.bf16.mxu0 %v1973
        %2454 = vmatpush2.bf16.msra.mxu0 %v1972
        %2455 = vmatprep.subr.bf16.mxu0 %v1964
        %2456 = vmatpush2.bf16.msra.mxu0 %v1963
        %2457 = vmatprep.mubr.bf16.mxu0 %v1260
        %2458 = vmatmul.mubr.bf16.gmra.mxu0 %v1259
        %v2459 = vpop.f32.mrf.mxu0
        %v2460 = vpop.f32.mrf.mxu0
        %v2461 = vpop.f32.mrf.mxu0
        %v2462 = vpop.f32.mrf.mxu0
        %2463 = vmatprep.mubr.bf16.mxu0 %v1262
        %2464 = vmatmul.mubr.bf16.gmra.mxu0 %v1261
        %v2465 = vpop.f32.mrf.mxu0
        %v2466 = vadd.f32 0.0, %v2465
        %v2467 = vpop.f32.mrf.mxu0
        %v2468 = vadd.f32 0.0, %v2467
        %v2469 = vpop.f32.mrf.mxu0
        %v2470 = vadd.f32 0.0, %v2469
        %v2471 = vpop.f32.mrf.mxu0
        %v2472 = vadd.f32 0.0, %v2471
        %2473 = vmatprep.mubr.bf16.mxu0 %v1264
        %2474 = vmatmul.mubr.bf16.gmra.mxu0 %v1263
        %v2475 = vpop.f32.mrf.mxu0
        %v2476 = vadd.f32 0.0, %v2475
        %v2477 = vpop.f32.mrf.mxu0
        %v2478 = vadd.f32 0.0, %v2477
        %v2479 = vpop.f32.mrf.mxu0
        %v2480 = vadd.f32 0.0, %v2479
        %v2481 = vpop.f32.mrf.mxu0
        %v2482 = vadd.f32 0.0, %v2481
        %2483 = vmatprep.mubr.bf16.mxu0 %v1266
        %2484 = vmatmul.mubr.bf16.gmra.mxu0 %v1265
        %v2485 = vpop.f32.mrf.mxu0
        %v2486 = vadd.f32 0.0, %v2485
        %v2487 = vpop.f32.mrf.mxu0
        %v2488 = vadd.f32 0.0, %v2487
        %v2489 = vpop.f32.mrf.mxu0
        %v2490 = vadd.f32 0.0, %v2489
        %v2491 = vpop.f32.mrf.mxu0
        %v2492 = vadd.f32 0.0, %v2491
        %2493 = vmatprep.mubr.bf16.mxu0 %v1268
        %2494 = vmatmul.mubr.bf16.gmra.mxu0 %v1267
        %v2495 = vpop.f32.mrf.mxu0
        %v2496 = vadd.f32 0.0, %v2495
        %v2497 = vpop.f32.mrf.mxu0
        %v2498 = vadd.f32 0.0, %v2497
        %v2499 = vpop.f32.mrf.mxu0
        %v2500 = vadd.f32 0.0, %v2499
        %v2501 = vpop.f32.mrf.mxu0
        %v2502 = vadd.f32 0.0, %v2501
        %2503 = vmatprep.mubr.bf16.mxu0 %v1270
        %2504 = vmatmul.mubr.bf16.gmra.mxu0 %v1269
        %v2505 = vpop.f32.mrf.mxu0
        %v2506 = vadd.f32 0.0, %v2505
        %v2507 = vpop.f32.mrf.mxu0
        %v2508 = vadd.f32 0.0, %v2507
        %v2509 = vpop.f32.mrf.mxu0
        %v2510 = vadd.f32 0.0, %v2509
        %v2511 = vpop.f32.mrf.mxu0
        %v2512 = vadd.f32 0.0, %v2511
        %2513 = vmatprep.mubr.bf16.mxu0 %v1272
        %2514 = vmatmul.mubr.bf16.gmra.mxu0 %v1271
        %v2515 = vpop.f32.mrf.mxu0
        %v2516 = vadd.f32 0.0, %v2515
        %v2517 = vpop.f32.mrf.mxu0
        %v2518 = vadd.f32 0.0, %v2517
        %v2519 = vpop.f32.mrf.mxu0
        %v2520 = vadd.f32 0.0, %v2519
        %v2521 = vpop.f32.mrf.mxu0
        %v2522 = vadd.f32 0.0, %v2521
        %2523 = vmatprep.mubr.bf16.mxu0 %v1274
        %2524 = vmatmul.mubr.bf16.gmra.mxu0 %v1273
        %v2525 = vpop.f32.mrf.mxu0
        %v2526 = vadd.f32 0.0, %v2525
        %v2527 = vpop.f32.mrf.mxu0
        %v2528 = vadd.f32 0.0, %v2527
        %v2529 = vpop.f32.mrf.mxu0
        %v2530 = vadd.f32 0.0, %v2529
        %v2531 = vpop.f32.mrf.mxu0
        %v2532 = vadd.f32 0.0, %v2531
        %2533 = vmatprep.mubr.bf16.mxu0 %v1276
        %2534 = vmatmul.mubr.bf16.gmra.mxu0 %v1275
        %v2535 = vpop.f32.mrf.mxu0
        %v2536 = vadd.f32 0.0, %v2535
        %v2537 = vpop.f32.mrf.mxu0
        %v2538 = vadd.f32 0.0, %v2537
        %v2539 = vpop.f32.mrf.mxu0
        %v2540 = vadd.f32 0.0, %v2539
        %v2541 = vpop.f32.mrf.mxu0
        %v2542 = vadd.f32 0.0, %v2541
        %2543 = vmatprep.mubr.bf16.mxu0 %v1278
        %2544 = vmatmul.mubr.bf16.gmra.mxu0 %v1277
        %v2545 = vpop.f32.mrf.mxu0
        %v2546 = vpop.f32.mrf.mxu0
        %v2547 = vpop.f32.mrf.mxu0
        %v2548 = vpop.f32.mrf.mxu0
        %2549 = vdwg.mxu0
        %2550 = vmatprep.subr.bf16.mxu0 %v1957
        %2551 = vmatpush1.bf16.msra.mxu0 %v1956
        %2552 = vmatprep.subr.bf16.mxu0 %v1948
        %2553 = vmatpush1.bf16.msra.mxu0 %v1947
        %2554 = vmatprep.subr.bf16.mxu0 %v1939
        %2555 = vmatpush1.bf16.msra.mxu0 %v1938
        %2556 = vmatprep.subr.bf16.mxu0 %v1930
        %2557 = vmatpush1.bf16.msra.mxu0 %v1929
        %2558 = vmatprep.subr.bf16.mxu0 %v1921
        %2559 = vmatpush1.bf16.msra.mxu0 %v1920
        %2560 = vmatprep.subr.bf16.mxu0 %v1912
        %2561 = vmatpush1.bf16.msra.mxu0 %v1911
        %2562 = vmatprep.subr.bf16.mxu0 %v1903
        %2563 = vmatpush1.bf16.msra.mxu0 %v1902
        %2564 = vmatprep.subr.bf16.mxu0 %v1894
        %2565 = vmatpush1.bf16.msra.mxu0 %v1893
        %2566 = vmatprep.subr.bf16.mxu0 %v2029
        %2567 = vmatpush2.bf16.msra.mxu0 %v2028
        %2568 = vmatprep.subr.bf16.mxu0 %v2020
        %2569 = vmatpush2.bf16.msra.mxu0 %v2019
        %2570 = vmatprep.subr.bf16.mxu0 %v2011
        %2571 = vmatpush2.bf16.msra.mxu0 %v2010
        %2572 = vmatprep.subr.bf16.mxu0 %v2002
        %2573 = vmatpush2.bf16.msra.mxu0 %v2001
        %2574 = vmatprep.subr.bf16.mxu0 %v1993
        %2575 = vmatpush2.bf16.msra.mxu0 %v1992
        %2576 = vmatprep.subr.bf16.mxu0 %v1984
        %2577 = vmatpush2.bf16.msra.mxu0 %v1983
        %2578 = vmatprep.subr.bf16.mxu0 %v1975
        %2579 = vmatpush2.bf16.msra.mxu0 %v1974
        %2580 = vmatprep.subr.bf16.mxu0 %v1966
        %2581 = vmatpush2.bf16.msra.mxu0 %v1965
        %2582 = vmatprep.mubr.bf16.mxu0 %v1260
        %2583 = vmatmul.mubr.bf16.gmra.mxu0 %v1259
        %v2584 = vpop.f32.mrf.mxu0
        %v2585 = vpop.f32.mrf.mxu0
        %v2586 = vpop.f32.mrf.mxu0
        %v2587 = vpop.f32.mrf.mxu0
        %2588 = vmatprep.mubr.bf16.mxu0 %v1262
        %2589 = vmatmul.mubr.bf16.gmra.mxu0 %v1261
        %v2590 = vpop.f32.mrf.mxu0
        %v2591 = vpop.f32.mrf.mxu0
        %v2592 = vpop.f32.mrf.mxu0
        %v2593 = vpop.f32.mrf.mxu0
        %2594 = vmatprep.mubr.bf16.mxu0 %v1264
        %2595 = vmatmul.mubr.bf16.gmra.mxu0 %v1263
        %v2596 = vpop.f32.mrf.mxu0
        %v2597 = vadd.f32 0.0, %v2596
        %v2598 = vpop.f32.mrf.mxu0
        %v2599 = vadd.f32 0.0, %v2598
        %v2600 = vpop.f32.mrf.mxu0
        %v2601 = vadd.f32 0.0, %v2600
        %v2602 = vpop.f32.mrf.mxu0
        %v2603 = vadd.f32 0.0, %v2602
        %2604 = vmatprep.mubr.bf16.mxu0 %v1266
        %2605 = vmatmul.mubr.bf16.gmra.mxu0 %v1265
        %v2606 = vpop.f32.mrf.mxu0
        %v2607 = vadd.f32 0.0, %v2606
        %v2608 = vpop.f32.mrf.mxu0
        %v2609 = vadd.f32 0.0, %v2608
        %v2610 = vpop.f32.mrf.mxu0
        %v2611 = vadd.f32 0.0, %v2610
        %v2612 = vpop.f32.mrf.mxu0
        %v2613 = vadd.f32 0.0, %v2612
        %2614 = vmatprep.mubr.bf16.mxu0 %v1268
        %2615 = vmatmul.mubr.bf16.gmra.mxu0 %v1267
        %v2616 = vpop.f32.mrf.mxu0
        %v2617 = vadd.f32 0.0, %v2616
        %v2618 = vpop.f32.mrf.mxu0
        %v2619 = vadd.f32 0.0, %v2618
        %v2620 = vpop.f32.mrf.mxu0
        %v2621 = vadd.f32 0.0, %v2620
        %v2622 = vpop.f32.mrf.mxu0
        %v2623 = vadd.f32 0.0, %v2622
        %2624 = vmatprep.mubr.bf16.mxu0 %v1270
        %2625 = vmatmul.mubr.bf16.gmra.mxu0 %v1269
        %v2626 = vpop.f32.mrf.mxu0
        %v2627 = vadd.f32 0.0, %v2626
        %v2628 = vpop.f32.mrf.mxu0
        %v2629 = vadd.f32 0.0, %v2628
        %v2630 = vpop.f32.mrf.mxu0
        %v2631 = vadd.f32 0.0, %v2630
        %v2632 = vpop.f32.mrf.mxu0
        %v2633 = vadd.f32 0.0, %v2632
        %2634 = vmatprep.mubr.bf16.mxu0 %v1272
        %2635 = vmatmul.mubr.bf16.gmra.mxu0 %v1271
        %v2636 = vpop.f32.mrf.mxu0
        %v2637 = vadd.f32 0.0, %v2636
        %v2638 = vpop.f32.mrf.mxu0
        %v2639 = vadd.f32 0.0, %v2638
        %v2640 = vpop.f32.mrf.mxu0
        %v2641 = vadd.f32 0.0, %v2640
        %v2642 = vpop.f32.mrf.mxu0
        %v2643 = vadd.f32 0.0, %v2642
        %2644 = vmatprep.mubr.bf16.mxu0 %v1274
        %2645 = vmatmul.mubr.bf16.gmra.mxu0 %v1273
        %v2646 = vpop.f32.mrf.mxu0
        %v2647 = vadd.f32 0.0, %v2646
        %v2648 = vpop.f32.mrf.mxu0
        %v2649 = vadd.f32 0.0, %v2648
        %v2650 = vpop.f32.mrf.mxu0
        %v2651 = vadd.f32 0.0, %v2650
        %v2652 = vpop.f32.mrf.mxu0
        %v2653 = vadd.f32 0.0, %v2652
        %2654 = vmatprep.mubr.bf16.mxu0 %v1276
        %2655 = vmatmul.mubr.bf16.gmra.mxu0 %v1275
        %v2656 = vpop.f32.mrf.mxu0
        %v2657 = vadd.f32 0.0, %v2656
        %v2658 = vpop.f32.mrf.mxu0
        %v2659 = vadd.f32 0.0, %v2658
        %v2660 = vpop.f32.mrf.mxu0
        %v2661 = vadd.f32 0.0, %v2660
        %v2662 = vpop.f32.mrf.mxu0
        %v2663 = vadd.f32 0.0, %v2662
        %2664 = vmatprep.mubr.bf16.mxu0 %v1278
        %2665 = vmatmul.mubr.bf16.gmra.mxu0 %v1277
        %v2666 = vpop.f32.mrf.mxu0
        %v2667 = vadd.f32 0.0, %v2666
        %v2668 = vpop.f32.mrf.mxu0
        %v2669 = vadd.f32 0.0, %v2668
        %v2670 = vpop.f32.mrf.mxu0
        %v2671 = vadd.f32 0.0, %v2670
        %v2672 = vpop.f32.mrf.mxu0
        %v2673 = vadd.f32 0.0, %v2672
        %2674 = vdwg.mxu0
        %2675 = vmatprep.subr.bf16.mxu0 0
        %2676 = vmatpush1.bf16.msra.mxu0 %v1958
        %2677 = vmatprep.subr.bf16.mxu0 0
        %2678 = vmatpush1.bf16.msra.mxu0 %v1949
        %2679 = vmatprep.subr.bf16.mxu0 0
        %2680 = vmatpush1.bf16.msra.mxu0 %v1940
        %2681 = vmatprep.subr.bf16.mxu0 0
        %2682 = vmatpush1.bf16.msra.mxu0 %v1931
        %2683 = vmatprep.subr.bf16.mxu0 0
        %2684 = vmatpush1.bf16.msra.mxu0 %v1922
        %2685 = vmatprep.subr.bf16.mxu0 0
        %2686 = vmatpush1.bf16.msra.mxu0 %v1913
        %2687 = vmatprep.subr.bf16.mxu0 0
        %2688 = vmatpush1.bf16.msra.mxu0 %v1904
        %2689 = vmatprep.subr.bf16.mxu0 0
        %2690 = vmatpush1.bf16.msra.mxu0 %v1895
        %2691 = vmatprep.subr.bf16.mxu0 0
        %2692 = vmatpush2.bf16.msra.mxu0 %v2030
        %2693 = vmatprep.subr.bf16.mxu0 0
        %2694 = vmatpush2.bf16.msra.mxu0 %v2021
        %2695 = vmatprep.subr.bf16.mxu0 0
        %2696 = vmatpush2.bf16.msra.mxu0 %v2012
        %2697 = vmatprep.subr.bf16.mxu0 0
        %2698 = vmatpush2.bf16.msra.mxu0 %v2003
        %2699 = vmatprep.subr.bf16.mxu0 0
        %2700 = vmatpush2.bf16.msra.mxu0 %v1994
        %2701 = vmatprep.subr.bf16.mxu0 0
        %2702 = vmatpush2.bf16.msra.mxu0 %v1985
        %2703 = vmatprep.subr.bf16.mxu0 0
        %2704 = vmatpush2.bf16.msra.mxu0 %v1976
        %2705 = vmatprep.subr.bf16.mxu0 0
        %2706 = vmatpush2.bf16.msra.mxu0 %v1967
        %2707 = vmatprep.mubr.bf16.mxu0 %v1260
        %2708 = vmatmul.mubr.bf16.gmra.mxu0 %v1259
        %v2709 = vpop.f32.mrf.mxu0
        %v2710 = vpop.f32.mrf.mxu0
        %v2711 = vpop.f32.mrf.mxu0
        %v2712 = vpop.f32.mrf.mxu0
        %2713 = vmatprep.mubr.bf16.mxu0 %v1262
        %2714 = vmatmul.mubr.bf16.gmra.mxu0 %v1261
        %v2715 = vpop.f32.mrf.mxu0
        %v2716 = vpop.f32.mrf.mxu0
        %v2717 = vpop.f32.mrf.mxu0
        %v2718 = vpop.f32.mrf.mxu0
        %2719 = vmatprep.mubr.bf16.mxu0 %v1264
        %2720 = vmatmul.mubr.bf16.gmra.mxu0 %v1263
        %v2721 = vpop.f32.mrf.mxu0
        %v2722 = vadd.f32 0.0, %v2721
        %v2723 = vpop.f32.mrf.mxu0
        %v2724 = vpop.f32.mrf.mxu0
        %v2725 = vadd.f32 0.0, %v2724
        %v2726 = vpop.f32.mrf.mxu0
        %2727 = vmatprep.mubr.bf16.mxu0 %v1266
        %2728 = vmatmul.mubr.bf16.gmra.mxu0 %v1265
        %v2729 = vpop.f32.mrf.mxu0
        %v2730 = vadd.f32 0.0, %v2729
        %v2731 = vpop.f32.mrf.mxu0
        %v2732 = vpop.f32.mrf.mxu0
        %v2733 = vadd.f32 0.0, %v2732
        %v2734 = vpop.f32.mrf.mxu0
        %2735 = vmatprep.mubr.bf16.mxu0 %v1268
        %2736 = vmatmul.mubr.bf16.gmra.mxu0 %v1267
        %v2737 = vpop.f32.mrf.mxu0
        %v2738 = vadd.f32 0.0, %v2737
        %v2739 = vpop.f32.mrf.mxu0
        %v2740 = vpop.f32.mrf.mxu0
        %v2741 = vadd.f32 0.0, %v2740
        %v2742 = vpop.f32.mrf.mxu0
        %2743 = vmatprep.mubr.bf16.mxu0 %v1270
        %2744 = vmatmul.mubr.bf16.gmra.mxu0 %v1269
        %v2745 = vpop.f32.mrf.mxu0
        %v2746 = vadd.f32 0.0, %v2745
        %v2747 = vpop.f32.mrf.mxu0
        %v2748 = vpop.f32.mrf.mxu0
        %v2749 = vadd.f32 0.0, %v2748
        %v2750 = vpop.f32.mrf.mxu0
        %2751 = vmatprep.mubr.bf16.mxu0 %v1272
        %2752 = vmatmul.mubr.bf16.gmra.mxu0 %v1271
        %v2753 = vpop.f32.mrf.mxu0
        %v2754 = vadd.f32 0.0, %v2753
        %v2755 = vpop.f32.mrf.mxu0
        %v2756 = vpop.f32.mrf.mxu0
        %v2757 = vadd.f32 0.0, %v2756
        %v2758 = vpop.f32.mrf.mxu0
        %2759 = vmatprep.mubr.bf16.mxu0 %v1274
        %2760 = vmatmul.mubr.bf16.gmra.mxu0 %v1273
        %v2761 = vpop.f32.mrf.mxu0
        %v2762 = vadd.f32 0.0, %v2761
        %v2763 = vpop.f32.mrf.mxu0
        %v2764 = vpop.f32.mrf.mxu0
        %v2765 = vadd.f32 0.0, %v2764
        %v2766 = vpop.f32.mrf.mxu0
        %2767 = vmatprep.mubr.bf16.mxu0 %v1276
        %2768 = vmatmul.mubr.bf16.gmra.mxu0 %v1275
        %v2769 = vpop.f32.mrf.mxu0
        %v2770 = vadd.f32 0.0, %v2769
        %v2771 = vpop.f32.mrf.mxu0
        %v2772 = vpop.f32.mrf.mxu0
        %v2773 = vadd.f32 0.0, %v2772
        %v2774 = vpop.f32.mrf.mxu0
        %2775 = vmatprep.mubr.bf16.mxu0 %v1278
        %2776 = vmatmul.mubr.bf16.gmra.mxu0 %v1277
        %v2777 = vpop.f32.mrf.mxu0
        %v2778 = vadd.f32 0.0, %v2777
        %v2779 = vpop.f32.mrf.mxu0
        %v2780 = vpop.f32.mrf.mxu0
        %v2781 = vadd.f32 0.0, %v2780
        %v2782 = vpop.f32.mrf.mxu0
        %2783 = vdwg.mxu0
        %v2784 = vcvt.s32.f32 %v1051
        %v2785 = vcvt.s32.f32 %v1052
        %v2786 = vcvt.s32.f32 %v1053
        %v2787 = vcvt.s32.f32 %v1054
        %v2788 = vcvt.s32.f32 %v1055
        %v2789 = vcvt.s32.f32 %v1056
        %v2790 = vcvt.s32.f32 %v1057
        %v2791 = vcvt.s32.f32 %v1058
        %v2792 = vcvt.s32.f32 %v1059
        %v2793 = vcvt.s32.f32 %v1060
        %v2794 = vcvt.s32.f32 %v1061
        %v2795 = vcvt.s32.f32 %v1062
        %v2796 = vcvt.s32.f32 %v1063
        %v2797 = vcvt.s32.f32 %v1064
        %v2798 = vcvt.s32.f32 %v1065
        %v2799 = vcvt.s32.f32 %v1066
        %v2800 = vadd.f32 %v2784, 0.5
        %v2801 = vadd.f32 %v2785, 0.5
        %v2802 = vadd.f32 %v2786, 0.5
        %v2803 = vadd.f32 %v2787, 0.5
        %v2804 = vadd.f32 %v2788, 0.5
        %v2805 = vadd.f32 %v2789, 0.5
        %v2806 = vadd.f32 %v2790, 0.5
        %v2807 = vadd.f32 %v2791, 0.5
        %v2808 = vadd.f32 %v2792, 0.5
        %v2809 = vadd.f32 %v2793, 0.5
        %v2810 = vadd.f32 %v2794, 0.5
        %v2811 = vadd.f32 %v2795, 0.5
        %v2812 = vadd.f32 %v2796, 0.5
        %v2813 = vadd.f32 %v2797, 0.5
        %v2814 = vadd.f32 %v2798, 0.5
        %v2815 = vadd.f32 %v2799, 0.5
        %v2816 = vrcp.pop 16.0
        %v2817 = vmul.f32 %v2800, %v2816
        %v2818 = vmul.f32 %v2801, %v2816
        %v2819 = vmul.f32 %v2802, %v2816
        %v2820 = vmul.f32 %v2803, %v2816
        %v2821 = vmul.f32 %v2804, %v2816
        %v2822 = vmul.f32 %v2805, %v2816
        %v2823 = vmul.f32 %v2806, %v2816
        %v2824 = vmul.f32 %v2807, %v2816
        %v2825 = vmul.f32 %v2808, %v2816
        %v2826 = vmul.f32 %v2809, %v2816
        %v2827 = vmul.f32 %v2810, %v2816
        %v2828 = vmul.f32 %v2811, %v2816
        %v2829 = vmul.f32 %v2812, %v2816
        %v2830 = vmul.f32 %v2813, %v2816
        %v2831 = vmul.f32 %v2814, %v2816
        %v2832 = vmul.f32 %v2815, %v2816
        %v2833 = vfloor.f32 %v2817
        %v2834 = vfloor.f32 %v2818
        %v2835 = vfloor.f32 %v2819
        %v2836 = vfloor.f32 %v2820
        %v2837 = vfloor.f32 %v2821
        %v2838 = vfloor.f32 %v2822
        %v2839 = vfloor.f32 %v2823
        %v2840 = vfloor.f32 %v2824
        %v2841 = vfloor.f32 %v2825
        %v2842 = vfloor.f32 %v2826
        %v2843 = vfloor.f32 %v2827
        %v2844 = vfloor.f32 %v2828
        %v2845 = vfloor.f32 %v2829
        %v2846 = vfloor.f32 %v2830
        %v2847 = vfloor.f32 %v2831
        %v2848 = vfloor.f32 %v2832
        %v2849 = vmul.f32 %v2833, 16.0
        %v2850 = vmul.f32 %v2834, 16.0
        %v2851 = vmul.f32 %v2835, 16.0
        %v2852 = vmul.f32 %v2836, 16.0
        %v2853 = vmul.f32 %v2837, 16.0
        %v2854 = vmul.f32 %v2838, 16.0
        %v2855 = vmul.f32 %v2839, 16.0
        %v2856 = vmul.f32 %v2840, 16.0
        %v2857 = vmul.f32 %v2841, 16.0
        %v2858 = vmul.f32 %v2842, 16.0
        %v2859 = vmul.f32 %v2843, 16.0
        %v2860 = vmul.f32 %v2844, 16.0
        %v2861 = vmul.f32 %v2845, 16.0
        %v2862 = vmul.f32 %v2846, 16.0
        %v2863 = vmul.f32 %v2847, 16.0
        %v2864 = vmul.f32 %v2848, 16.0
        %v2865 = vsub.f32 %v2784, %v2849
        %v2866 = vsub.f32 %v2785, %v2850
        %v2867 = vsub.f32 %v2786, %v2851
        %v2868 = vsub.f32 %v2787, %v2852
        %v2869 = vsub.f32 %v2788, %v2853
        %v2870 = vsub.f32 %v2789, %v2854
        %v2871 = vsub.f32 %v2790, %v2855
        %v2872 = vsub.f32 %v2791, %v2856
        %v2873 = vsub.f32 %v2792, %v2857
        %v2874 = vsub.f32 %v2793, %v2858
        %v2875 = vsub.f32 %v2794, %v2859
        %v2876 = vsub.f32 %v2795, %v2860
        %v2877 = vsub.f32 %v2796, %v2861
        %v2878 = vsub.f32 %v2797, %v2862
        %v2879 = vsub.f32 %v2798, %v2863
        %v2880 = vsub.f32 %v2799, %v2864
        %vm2881 = vcmp.ge.f32.partialorder %v2865, 0.5
        %vm2882 = vcmp.ge.f32.partialorder %v2866, 0.5
        %vm2883 = vcmp.ge.f32.partialorder %v2867, 0.5
        %vm2884 = vcmp.ge.f32.partialorder %v2868, 0.5
        %vm2885 = vcmp.ge.f32.partialorder %v2869, 0.5
        %vm2886 = vcmp.ge.f32.partialorder %v2870, 0.5
        %vm2887 = vcmp.ge.f32.partialorder %v2871, 0.5
        %vm2888 = vcmp.ge.f32.partialorder %v2872, 0.5
        %vm2889 = vcmp.ge.f32.partialorder %v2873, 0.5
        %vm2890 = vcmp.ge.f32.partialorder %v2874, 0.5
        %vm2891 = vcmp.ge.f32.partialorder %v2875, 0.5
        %vm2892 = vcmp.ge.f32.partialorder %v2876, 0.5
        %vm2893 = vcmp.ge.f32.partialorder %v2877, 0.5
        %vm2894 = vcmp.ge.f32.partialorder %v2878, 0.5
        %vm2895 = vcmp.ge.f32.partialorder %v2879, 0.5
        %vm2896 = vcmp.ge.f32.partialorder %v2880, 0.5
        %vm2897 = vcmp.le.f32.partialorder %v2865, 14.5
        %vm2898 = vcmp.le.f32.partialorder %v2866, 14.5
        %vm2899 = vcmp.le.f32.partialorder %v2867, 14.5
        %vm2900 = vcmp.le.f32.partialorder %v2868, 14.5
        %vm2901 = vcmp.le.f32.partialorder %v2869, 14.5
        %vm2902 = vcmp.le.f32.partialorder %v2870, 14.5
        %vm2903 = vcmp.le.f32.partialorder %v2871, 14.5
        %vm2904 = vcmp.le.f32.partialorder %v2872, 14.5
        %vm2905 = vcmp.le.f32.partialorder %v2873, 14.5
        %vm2906 = vcmp.le.f32.partialorder %v2874, 14.5
        %vm2907 = vcmp.le.f32.partialorder %v2875, 14.5
        %vm2908 = vcmp.le.f32.partialorder %v2876, 14.5
        %vm2909 = vcmp.le.f32.partialorder %v2877, 14.5
        %vm2910 = vcmp.le.f32.partialorder %v2878, 14.5
        %vm2911 = vcmp.le.f32.partialorder %v2879, 14.5
        %vm2912 = vcmp.le.f32.partialorder %v2880, 14.5
        %v2913 = vrot.slane %v2210, 7
        %v2914 = vrot.slane %v2214, 7
        %v2915 = vrot.slane %v2220, 7
        %v2916 = vrot.slane %v2224, 7
        %v2917 = vrot.slane %v2230, 7
        %v2918 = vrot.slane %v2234, 7
        %v2919 = vrot.slane %v2240, 7
        %v2920 = vrot.slane %v2244, 7
        %v2921 = vrot.slane %v2250, 7
        %v2922 = vrot.slane %v2254, 7
        %v2923 = vrot.slane %v2260, 7
        %v2924 = vrot.slane %v2264, 7
        %v2925 = vrot.slane %v2270, 7
        %v2926 = vrot.slane %v2274, 7
        %v2927 = vrot.slane %v2280, 7
        %v2928 = vrot.slane %v2284, 7
        %vm2929 = vcmp.lt.s32.totalorder %v1051, 1
        %v2930 = vsel %vm2929, %v2927, %v2928
        %v2931 = vsel %vm2929, %v2926, %v2927
        %v2932 = vsel %vm2929, %v2925, %v2926
        %v2933 = vsel %vm2929, %v2924, %v2925
        %v2934 = vsel %vm2929, %v2923, %v2924
        %v2935 = vsel %vm2929, %v2922, %v2923
        %v2936 = vsel %vm2929, %v2921, %v2922
        %v2937 = vsel %vm2929, %v2920, %v2921
        %v2938 = vsel %vm2929, %v2919, %v2920
        %v2939 = vsel %vm2929, %v2918, %v2919
        %v2940 = vsel %vm2929, %v2917, %v2918
        %v2941 = vsel %vm2929, %v2916, %v2917
        %v2942 = vsel %vm2929, %v2915, %v2916
        %v2943 = vsel %vm2929, %v2914, %v2915
        %v2944 = vsel %vm2929, %v2913, %v2914
        %v2945 = vsel %vm2929, %v2928, %v2913
        %v2946 = vsel %vm2881, 1, 0
        %v2947 = vsel %vm2882, 1, 0
        %v2948 = vsel %vm2883, 1, 0
        %v2949 = vsel %vm2884, 1, 0
        %v2950 = vsel %vm2885, 1, 0
        %v2951 = vsel %vm2886, 1, 0
        %v2952 = vsel %vm2887, 1, 0
        %v2953 = vsel %vm2888, 1, 0
        %v2954 = vsel %vm2889, 1, 0
        %v2955 = vsel %vm2890, 1, 0
        %v2956 = vsel %vm2891, 1, 0
        %v2957 = vsel %vm2892, 1, 0
        %v2958 = vsel %vm2893, 1, 0
        %v2959 = vsel %vm2894, 1, 0
        %v2960 = vsel %vm2895, 1, 0
        %v2961 = vsel %vm2896, 1, 0
        %vm2962 = vcmp.eq.s32.totalorder %v2946, 1
        %vm2963 = vcmp.eq.s32.totalorder %v2947, 1
        %vm2964 = vcmp.eq.s32.totalorder %v2948, 1
        %vm2965 = vcmp.eq.s32.totalorder %v2949, 1
        %vm2966 = vcmp.eq.s32.totalorder %v2950, 1
        %vm2967 = vcmp.eq.s32.totalorder %v2951, 1
        %vm2968 = vcmp.eq.s32.totalorder %v2952, 1
        %vm2969 = vcmp.eq.s32.totalorder %v2953, 1
        %vm2970 = vcmp.eq.s32.totalorder %v2954, 1
        %vm2971 = vcmp.eq.s32.totalorder %v2955, 1
        %vm2972 = vcmp.eq.s32.totalorder %v2956, 1
        %vm2973 = vcmp.eq.s32.totalorder %v2957, 1
        %vm2974 = vcmp.eq.s32.totalorder %v2958, 1
        %vm2975 = vcmp.eq.s32.totalorder %v2959, 1
        %vm2976 = vcmp.eq.s32.totalorder %v2960, 1
        %vm2977 = vcmp.eq.s32.totalorder %v2961, 1
        %v2978 = vsel %vm2962, %v2945, 0.0
        %v2979 = vsel %vm2963, %v2944, 0.0
        %v2980 = vsel %vm2964, %v2943, 0.0
        %v2981 = vsel %vm2965, %v2942, 0.0
        %v2982 = vsel %vm2966, %v2941, 0.0
        %v2983 = vsel %vm2967, %v2940, 0.0
        %v2984 = vsel %vm2968, %v2939, 0.0
        %v2985 = vsel %vm2969, %v2938, 0.0
        %v2986 = vsel %vm2970, %v2937, 0.0
        %v2987 = vsel %vm2971, %v2936, 0.0
        %v2988 = vsel %vm2972, %v2935, 0.0
        %v2989 = vsel %vm2973, %v2934, 0.0
        %v2990 = vsel %vm2974, %v2933, 0.0
        %v2991 = vsel %vm2975, %v2932, 0.0
        %v2992 = vsel %vm2976, %v2931, 0.0
        %v2993 = vsel %vm2977, %v2930, 0.0
        %v2994 = vrot.slane %v2335, 1
        %v2995 = vrot.slane %v2338, 1
        %v2996 = vrot.slane %v2343, 1
        %v2997 = vrot.slane %v2347, 1
        %v2998 = vrot.slane %v2353, 1
        %v2999 = vrot.slane %v2357, 1
        %v3000 = vrot.slane %v2363, 1
        %v3001 = vrot.slane %v2367, 1
        %v3002 = vrot.slane %v2373, 1
        %v3003 = vrot.slane %v2377, 1
        %v3004 = vrot.slane %v2383, 1
        %v3005 = vrot.slane %v2387, 1
        %v3006 = vrot.slane %v2393, 1
        %v3007 = vrot.slane %v2397, 1
        %v3008 = vrot.slane %v2403, 1
        %v3009 = vrot.slane %v2407, 1
        %vm3010 = vcmp.lt.s32.totalorder %v1051, 7
        %v3011 = vsel %vm3010, %v3008, %v3009
        %v3012 = vsel %vm3010, %v3007, %v3008
        %v3013 = vsel %vm3010, %v3006, %v3007
        %v3014 = vsel %vm3010, %v3005, %v3006
        %v3015 = vsel %vm3010, %v3004, %v3005
        %v3016 = vsel %vm3010, %v3003, %v3004
        %v3017 = vsel %vm3010, %v3002, %v3003
        %v3018 = vsel %vm3010, %v3001, %v3002
        %v3019 = vsel %vm3010, %v3000, %v3001
        %v3020 = vsel %vm3010, %v2999, %v3000
        %v3021 = vsel %vm3010, %v2998, %v2999
        %v3022 = vsel %vm3010, %v2997, %v2998
        %v3023 = vsel %vm3010, %v2996, %v2997
        %v3024 = vsel %vm3010, %v2995, %v2996
        %v3025 = vsel %vm3010, %v2994, %v2995
        %v3026 = vsel %vm3010, %v3009, %v2994
        %v3027 = vsel %vm2897, 1, 0
        %v3028 = vsel %vm2898, 1, 0
        %v3029 = vsel %vm2899, 1, 0
        %v3030 = vsel %vm2900, 1, 0
        %v3031 = vsel %vm2901, 1, 0
        %v3032 = vsel %vm2902, 1, 0
        %v3033 = vsel %vm2903, 1, 0
        %v3034 = vsel %vm2904, 1, 0
        %v3035 = vsel %vm2905, 1, 0
        %v3036 = vsel %vm2906, 1, 0
        %v3037 = vsel %vm2907, 1, 0
        %v3038 = vsel %vm2908, 1, 0
        %v3039 = vsel %vm2909, 1, 0
        %v3040 = vsel %vm2910, 1, 0
        %v3041 = vsel %vm2911, 1, 0
        %v3042 = vsel %vm2912, 1, 0
        %vm3043 = vcmp.eq.s32.totalorder %v3027, 1
        %vm3044 = vcmp.eq.s32.totalorder %v3028, 1
        %vm3045 = vcmp.eq.s32.totalorder %v3029, 1
        %vm3046 = vcmp.eq.s32.totalorder %v3030, 1
        %vm3047 = vcmp.eq.s32.totalorder %v3031, 1
        %vm3048 = vcmp.eq.s32.totalorder %v3032, 1
        %vm3049 = vcmp.eq.s32.totalorder %v3033, 1
        %vm3050 = vcmp.eq.s32.totalorder %v3034, 1
        %vm3051 = vcmp.eq.s32.totalorder %v3035, 1
        %vm3052 = vcmp.eq.s32.totalorder %v3036, 1
        %vm3053 = vcmp.eq.s32.totalorder %v3037, 1
        %vm3054 = vcmp.eq.s32.totalorder %v3038, 1
        %vm3055 = vcmp.eq.s32.totalorder %v3039, 1
        %vm3056 = vcmp.eq.s32.totalorder %v3040, 1
        %vm3057 = vcmp.eq.s32.totalorder %v3041, 1
        %vm3058 = vcmp.eq.s32.totalorder %v3042, 1
        %v3059 = vsel %vm3043, %v3025, 0.0
        %v3060 = vsel %vm3044, %v3024, 0.0
        %v3061 = vsel %vm3045, %v3023, 0.0
        %v3062 = vsel %vm3046, %v3022, 0.0
        %v3063 = vsel %vm3047, %v3021, 0.0
        %v3064 = vsel %vm3048, %v3020, 0.0
        %v3065 = vsel %vm3049, %v3019, 0.0
        %v3066 = vsel %vm3050, %v3018, 0.0
        %v3067 = vsel %vm3051, %v3017, 0.0
        %v3068 = vsel %vm3052, %v3016, 0.0
        %v3069 = vsel %vm3053, %v3015, 0.0
        %v3070 = vsel %vm3054, %v3014, 0.0
        %v3071 = vsel %vm3055, %v3013, 0.0
        %v3072 = vsel %vm3056, %v3012, 0.0
        %v3073 = vsel %vm3057, %v3011, 0.0
        %v3074 = vsel %vm3058, %v3026, 0.0
        %v3075 = vrot.slane %v2345, 7
        %v3076 = vrot.slane %v2349, 7
        %v3077 = vrot.slane %v2355, 7
        %v3078 = vrot.slane %v2359, 7
        %v3079 = vrot.slane %v2365, 7
        %v3080 = vrot.slane %v2369, 7
        %v3081 = vrot.slane %v2375, 7
        %v3082 = vrot.slane %v2379, 7
        %v3083 = vrot.slane %v2385, 7
        %v3084 = vrot.slane %v2389, 7
        %v3085 = vrot.slane %v2395, 7
        %v3086 = vrot.slane %v2399, 7
        %v3087 = vrot.slane %v2405, 7
        %v3088 = vrot.slane %v2409, 7
        %v3089 = vrot.slane %v2414, 7
        %v3090 = vrot.slane %v2417, 7
        %v3091 = vsel %vm2929, %v3089, %v3090
        %v3092 = vsel %vm2929, %v3088, %v3089
        %v3093 = vsel %vm2929, %v3087, %v3088
        %v3094 = vsel %vm2929, %v3086, %v3087
        %v3095 = vsel %vm2929, %v3085, %v3086
        %v3096 = vsel %vm2929, %v3084, %v3085
        %v3097 = vsel %vm2929, %v3083, %v3084
        %v3098 = vsel %vm2929, %v3082, %v3083
        %v3099 = vsel %vm2929, %v3081, %v3082
        %v3100 = vsel %vm2929, %v3080, %v3081
        %v3101 = vsel %vm2929, %v3079, %v3080
        %v3102 = vsel %vm2929, %v3078, %v3079
        %v3103 = vsel %vm2929, %v3077, %v3078
        %v3104 = vsel %vm2929, %v3076, %v3077
        %v3105 = vsel %vm2929, %v3075, %v3076
        %v3106 = vsel %vm2929, %v3090, %v3075
        %v3107 = vsel %vm2962, %v3106, 0.0
        %v3108 = vsel %vm2963, %v3105, 0.0
        %v3109 = vsel %vm2964, %v3104, 0.0
        %v3110 = vsel %vm2965, %v3103, 0.0
        %v3111 = vsel %vm2966, %v3102, 0.0
        %v3112 = vsel %vm2967, %v3101, 0.0
        %v3113 = vsel %vm2968, %v3100, 0.0
        %v3114 = vsel %vm2969, %v3099, 0.0
        %v3115 = vsel %vm2970, %v3098, 0.0
        %v3116 = vsel %vm2971, %v3097, 0.0
        %v3117 = vsel %vm2972, %v3096, 0.0
        %v3118 = vsel %vm2973, %v3095, 0.0
        %v3119 = vsel %vm2974, %v3094, 0.0
        %v3120 = vsel %vm2975, %v3093, 0.0
        %v3121 = vsel %vm2976, %v3092, 0.0
        %v3122 = vsel %vm2977, %v3091, 0.0
        %v3123 = vrot.slane %v2468, 1
        %v3124 = vrot.slane %v2472, 1
        %v3125 = vrot.slane %v2478, 1
        %v3126 = vrot.slane %v2482, 1
        %v3127 = vrot.slane %v2488, 1
        %v3128 = vrot.slane %v2492, 1
        %v3129 = vrot.slane %v2498, 1
        %v3130 = vrot.slane %v2502, 1
        %v3131 = vrot.slane %v2508, 1
        %v3132 = vrot.slane %v2512, 1
        %v3133 = vrot.slane %v2518, 1
        %v3134 = vrot.slane %v2522, 1
        %v3135 = vrot.slane %v2528, 1
        %v3136 = vrot.slane %v2532, 1
        %v3137 = vrot.slane %v2538, 1
        %v3138 = vrot.slane %v2542, 1
        %v3139 = vsel %vm3010, %v3137, %v3138
        %v3140 = vsel %vm3010, %v3136, %v3137
        %v3141 = vsel %vm3010, %v3135, %v3136
        %v3142 = vsel %vm3010, %v3134, %v3135
        %v3143 = vsel %vm3010, %v3133, %v3134
        %v3144 = vsel %vm3010, %v3132, %v3133
        %v3145 = vsel %vm3010, %v3131, %v3132
        %v3146 = vsel %vm3010, %v3130, %v3131
        %v3147 = vsel %vm3010, %v3129, %v3130
        %v3148 = vsel %vm3010, %v3128, %v3129
        %v3149 = vsel %vm3010, %v3127, %v3128
        %v3150 = vsel %vm3010, %v3126, %v3127
        %v3151 = vsel %vm3010, %v3125, %v3126
        %v3152 = vsel %vm3010, %v3124, %v3125
        %v3153 = vsel %vm3010, %v3123, %v3124
        %v3154 = vsel %vm3010, %v3138, %v3123
        %v3155 = vsel %vm3043, %v3153, 0.0
        %v3156 = vsel %vm3044, %v3152, 0.0
        %v3157 = vsel %vm3045, %v3151, 0.0
        %v3158 = vsel %vm3046, %v3150, 0.0
        %v3159 = vsel %vm3047, %v3149, 0.0
        %v3160 = vsel %vm3048, %v3148, 0.0
        %v3161 = vsel %vm3049, %v3147, 0.0
        %v3162 = vsel %vm3050, %v3146, 0.0
        %v3163 = vsel %vm3051, %v3145, 0.0
        %v3164 = vsel %vm3052, %v3144, 0.0
        %v3165 = vsel %vm3053, %v3143, 0.0
        %v3166 = vsel %vm3054, %v3142, 0.0
        %v3167 = vsel %vm3055, %v3141, 0.0
        %v3168 = vsel %vm3056, %v3140, 0.0
        %v3169 = vsel %vm3057, %v3139, 0.0
        %v3170 = vsel %vm3058, %v3154, 0.0
        %v3171 = vrot.slane %v2597, 7
        %v3172 = vrot.slane %v2601, 7
        %v3173 = vrot.slane %v2607, 7
        %v3174 = vrot.slane %v2611, 7
        %v3175 = vrot.slane %v2617, 7
        %v3176 = vrot.slane %v2621, 7
        %v3177 = vrot.slane %v2627, 7
        %v3178 = vrot.slane %v2631, 7
        %v3179 = vrot.slane %v2637, 7
        %v3180 = vrot.slane %v2641, 7
        %v3181 = vrot.slane %v2647, 7
        %v3182 = vrot.slane %v2651, 7
        %v3183 = vrot.slane %v2657, 7
        %v3184 = vrot.slane %v2661, 7
        %v3185 = vrot.slane %v2667, 7
        %v3186 = vrot.slane %v2671, 7
        %v3187 = vsel %vm2929, %v3185, %v3186
        %v3188 = vsel %vm2929, %v3184, %v3185
        %v3189 = vsel %vm2929, %v3183, %v3184
        %v3190 = vsel %vm2929, %v3182, %v3183
        %v3191 = vsel %vm2929, %v3181, %v3182
        %v3192 = vsel %vm2929, %v3180, %v3181
        %v3193 = vsel %vm2929, %v3179, %v3180
        %v3194 = vsel %vm2929, %v3178, %v3179
        %v3195 = vsel %vm2929, %v3177, %v3178
        %v3196 = vsel %vm2929, %v3176, %v3177
        %v3197 = vsel %vm2929, %v3175, %v3176
        %v3198 = vsel %vm2929, %v3174, %v3175
        %v3199 = vsel %vm2929, %v3173, %v3174
        %v3200 = vsel %vm2929, %v3172, %v3173
        %v3201 = vsel %vm2929, %v3171, %v3172
        %v3202 = vsel %vm2929, %v3186, %v3171
        %v3203 = vsel %vm2962, %v3202, 0.0
        %v3204 = vsel %vm2963, %v3201, 0.0
        %v3205 = vsel %vm2964, %v3200, 0.0
        %v3206 = vsel %vm2965, %v3199, 0.0
        %v3207 = vsel %vm2966, %v3198, 0.0
        %v3208 = vsel %vm2967, %v3197, 0.0
        %v3209 = vsel %vm2968, %v3196, 0.0
        %v3210 = vsel %vm2969, %v3195, 0.0
        %v3211 = vsel %vm2970, %v3194, 0.0
        %v3212 = vsel %vm2971, %v3193, 0.0
        %v3213 = vsel %vm2972, %v3192, 0.0
        %v3214 = vsel %vm2973, %v3191, 0.0
        %v3215 = vsel %vm2974, %v3190, 0.0
        %v3216 = vsel %vm2975, %v3189, 0.0
        %v3217 = vsel %vm2976, %v3188, 0.0
        %v3218 = vsel %vm2977, %v3187, 0.0
        %v3219 = vrot.slane %v2722, 1
        %v3220 = vrot.slane %v2725, 1
        %v3221 = vrot.slane %v2730, 1
        %v3222 = vrot.slane %v2733, 1
        %v3223 = vrot.slane %v2738, 1
        %v3224 = vrot.slane %v2741, 1
        %v3225 = vrot.slane %v2746, 1
        %v3226 = vrot.slane %v2749, 1
        %v3227 = vrot.slane %v2754, 1
        %v3228 = vrot.slane %v2757, 1
        %v3229 = vrot.slane %v2762, 1
        %v3230 = vrot.slane %v2765, 1
        %v3231 = vrot.slane %v2770, 1
        %v3232 = vrot.slane %v2773, 1
        %v3233 = vrot.slane %v2778, 1
        %v3234 = vrot.slane %v2781, 1
        %v3235 = vsel %vm3010, %v3233, %v3234
        %v3236 = vsel %vm3010, %v3232, %v3233
        %v3237 = vsel %vm3010, %v3231, %v3232
        %v3238 = vsel %vm3010, %v3230, %v3231
        %v3239 = vsel %vm3010, %v3229, %v3230
        %v3240 = vsel %vm3010, %v3228, %v3229
        %v3241 = vsel %vm3010, %v3227, %v3228
        %v3242 = vsel %vm3010, %v3226, %v3227
        %v3243 = vsel %vm3010, %v3225, %v3226
        %v3244 = vsel %vm3010, %v3224, %v3225
        %v3245 = vsel %vm3010, %v3223, %v3224
        %v3246 = vsel %vm3010, %v3222, %v3223
        %v3247 = vsel %vm3010, %v3221, %v3222
        %v3248 = vsel %vm3010, %v3220, %v3221
        %v3249 = vsel %vm3010, %v3219, %v3220
        %v3250 = vsel %vm3010, %v3234, %v3219
        %v3251 = vsel %vm3043, %v3249, 0.0
        %v3252 = vsel %vm3044, %v3248, 0.0
        %v3253 = vsel %vm3045, %v3247, 0.0
        %v3254 = vsel %vm3046, %v3246, 0.0
        %v3255 = vsel %vm3047, %v3245, 0.0
        %v3256 = vsel %vm3048, %v3244, 0.0
        %v3257 = vsel %vm3049, %v3243, 0.0
        %v3258 = vsel %vm3050, %v3242, 0.0
        %v3259 = vsel %vm3051, %v3241, 0.0
        %v3260 = vsel %vm3052, %v3240, 0.0
        %v3261 = vsel %vm3053, %v3239, 0.0
        %v3262 = vsel %vm3054, %v3238, 0.0
        %v3263 = vsel %vm3055, %v3237, 0.0
        %v3264 = vsel %vm3056, %v3236, 0.0
        %v3265 = vsel %vm3057, %v3235, 0.0
        %v3266 = vsel %vm3058, %v3250, 0.0
        %v3267 = vadd.f32 %v2978, %v2212
        %v3268 = vadd.f32 %v2979, %v2216
        %v3269 = vadd.f32 %v2980, %v2222
        %v3270 = vadd.f32 %v2981, %v2226
        %v3271 = vadd.f32 %v2982, %v2232
        %v3272 = vadd.f32 %v2983, %v2236
        %v3273 = vadd.f32 %v2984, %v2242
        %v3274 = vadd.f32 %v2985, %v2246
        %v3275 = vadd.f32 %v2986, %v2252
        %v3276 = vadd.f32 %v2987, %v2256
        %v3277 = vadd.f32 %v2988, %v2262
        %v3278 = vadd.f32 %v2989, %v2266
        %v3279 = vadd.f32 %v2990, %v2272
        %v3280 = vadd.f32 %v2991, %v2276
        %v3281 = vadd.f32 %v2992, %v2282
        %v3282 = vadd.f32 %v2993, %v2286
        %v3283 = vadd.f32 %v3059, %v3107
        %v3284 = vadd.f32 %v3060, %v3108
        %v3285 = vadd.f32 %v3061, %v3109
        %v3286 = vadd.f32 %v3062, %v3110
        %v3287 = vadd.f32 %v3063, %v3111
        %v3288 = vadd.f32 %v3064, %v3112
        %v3289 = vadd.f32 %v3065, %v3113
        %v3290 = vadd.f32 %v3066, %v3114
        %v3291 = vadd.f32 %v3067, %v3115
        %v3292 = vadd.f32 %v3068, %v3116
        %v3293 = vadd.f32 %v3069, %v3117
        %v3294 = vadd.f32 %v3070, %v3118
        %v3295 = vadd.f32 %v3071, %v3119
        %v3296 = vadd.f32 %v3072, %v3120
        %v3297 = vadd.f32 %v3073, %v3121
        %v3298 = vadd.f32 %v3074, %v3122
        %v3299 = vadd.f32 %v3155, %v3203
        %v3300 = vadd.f32 %v3156, %v3204
        %v3301 = vadd.f32 %v3157, %v3205
        %v3302 = vadd.f32 %v3158, %v3206
        %v3303 = vadd.f32 %v3159, %v3207
        %v3304 = vadd.f32 %v3160, %v3208
        %v3305 = vadd.f32 %v3161, %v3209
        %v3306 = vadd.f32 %v3162, %v3210
        %v3307 = vadd.f32 %v3163, %v3211
        %v3308 = vadd.f32 %v3164, %v3212
        %v3309 = vadd.f32 %v3165, %v3213
        %v3310 = vadd.f32 %v3166, %v3214
        %v3311 = vadd.f32 %v3167, %v3215
        %v3312 = vadd.f32 %v3168, %v3216
        %v3313 = vadd.f32 %v3169, %v3217
        %v3314 = vadd.f32 %v3170, %v3218
        %v3315 = vadd.f32 %v2599, %v3251
        %v3316 = vadd.f32 %v2603, %v3252
        %v3317 = vadd.f32 %v2609, %v3253
        %v3318 = vadd.f32 %v2613, %v3254
        %v3319 = vadd.f32 %v2619, %v3255
        %v3320 = vadd.f32 %v2623, %v3256
        %v3321 = vadd.f32 %v2629, %v3257
        %v3322 = vadd.f32 %v2633, %v3258
        %v3323 = vadd.f32 %v2639, %v3259
        %v3324 = vadd.f32 %v2643, %v3260
        %v3325 = vadd.f32 %v2649, %v3261
        %v3326 = vadd.f32 %v2653, %v3262
        %v3327 = vadd.f32 %v2659, %v3263
        %v3328 = vadd.f32 %v2663, %v3264
        %v3329 = vadd.f32 %v2669, %v3265
        %v3330 = vadd.f32 %v2673, %v3266
        %v3331 = vadd.f32 %v3267, %v3283
        %v3332 = vadd.f32 %v3268, %v3284
        %v3333 = vadd.f32 %v3269, %v3285
        %v3334 = vadd.f32 %v3270, %v3286
        %v3335 = vadd.f32 %v3271, %v3287
        %v3336 = vadd.f32 %v3272, %v3288
        %v3337 = vadd.f32 %v3273, %v3289
        %v3338 = vadd.f32 %v3274, %v3290
        %v3339 = vadd.f32 %v3275, %v3291
        %v3340 = vadd.f32 %v3276, %v3292
        %v3341 = vadd.f32 %v3277, %v3293
        %v3342 = vadd.f32 %v3278, %v3294
        %v3343 = vadd.f32 %v3279, %v3295
        %v3344 = vadd.f32 %v3280, %v3296
        %v3345 = vadd.f32 %v3281, %v3297
        %v3346 = vadd.f32 %v3282, %v3298
        %v3347 = vadd.f32 %v3299, %v3315
        %v3348 = vadd.f32 %v3300, %v3316
        %v3349 = vadd.f32 %v3301, %v3317
        %v3350 = vadd.f32 %v3302, %v3318
        %v3351 = vadd.f32 %v3303, %v3319
        %v3352 = vadd.f32 %v3304, %v3320
        %v3353 = vadd.f32 %v3305, %v3321
        %v3354 = vadd.f32 %v3306, %v3322
        %v3355 = vadd.f32 %v3307, %v3323
        %v3356 = vadd.f32 %v3308, %v3324
        %v3357 = vadd.f32 %v3309, %v3325
        %v3358 = vadd.f32 %v3310, %v3326
        %v3359 = vadd.f32 %v3311, %v3327
        %v3360 = vadd.f32 %v3312, %v3328
        %v3361 = vadd.f32 %v3313, %v3329
        %v3362 = vadd.f32 %v3314, %v3330
        %v3363 = vadd.f32 %v3331, %v3347
        %v3364 = vadd.f32 %v3332, %v3348
        %v3365 = vadd.f32 %v3333, %v3349
        %v3366 = vadd.f32 %v3334, %v3350
        %v3367 = vadd.f32 %v3335, %v3351
        %v3368 = vadd.f32 %v3336, %v3352
        %v3369 = vadd.f32 %v3337, %v3353
        %v3370 = vadd.f32 %v3338, %v3354
        %v3371 = vadd.f32 %v3339, %v3355
        %v3372 = vadd.f32 %v3340, %v3356
        %v3373 = vadd.f32 %v3341, %v3357
        %v3374 = vadd.f32 %v3342, %v3358
        %v3375 = vadd.f32 %v3343, %v3359
        %v3376 = vadd.f32 %v3344, %v3360
        %v3377 = vadd.f32 %v3345, %v3361
        %v3378 = vadd.f32 %v3346, %v3362
        %v3379 = vadd.f32 %v3363, %v2466
        %v3380 = vadd.f32 %v3364, %v2470
        %v3381 = vadd.f32 %v3365, %v2476
        %v3382 = vadd.f32 %v3366, %v2480
        %v3383 = vadd.f32 %v3367, %v2486
        %v3384 = vadd.f32 %v3368, %v2490
        %v3385 = vadd.f32 %v3369, %v2496
        %v3386 = vadd.f32 %v3370, %v2500
        %v3387 = vadd.f32 %v3371, %v2506
        %v3388 = vadd.f32 %v3372, %v2510
        %v3389 = vadd.f32 %v3373, %v2516
        %v3390 = vadd.f32 %v3374, %v2520
        %v3391 = vadd.f32 %v3375, %v2526
        %v3392 = vadd.f32 %v3376, %v2530
        %v3393 = vadd.f32 %v3377, %v2536
        %v3394 = vadd.f32 %v3378, %v2540
        %v3395 = vld [vmem:[%s4] sm:$0x1]
        %v3397 = vlaneseq
        %v3398 = vshrl.u32 %v3397, 7
        %v3399 = vsub.s32 0, %v3398
        %v3400 = vrot.slane %v3395, %v3399
        %v3402 = vadd.f32 %v3379, %v3400
        %v3403 = vadd.f32 %v3380, %v3400
        %v3404 = vadd.f32 %v3381, %v3400
        %v3405 = vadd.f32 %v3382, %v3400
        %v3406 = vadd.f32 %v3383, %v3400
        %v3407 = vadd.f32 %v3384, %v3400
        %v3408 = vadd.f32 %v3385, %v3400
        %v3409 = vadd.f32 %v3386, %v3400
        %v3410 = vadd.f32 %v3387, %v3400
        %v3411 = vadd.f32 %v3388, %v3400
        %v3412 = vadd.f32 %v3389, %v3400
        %v3413 = vadd.f32 %v3390, %v3400
        %v3414 = vadd.f32 %v3391, %v3400
        %v3415 = vadd.f32 %v3392, %v3400
        %v3416 = vadd.f32 %v3393, %v3400
        %v3417 = vadd.f32 %v3394, %v3400
        %v3418 = vmax.f32 %v3402, 0.0
        %v3419 = vmax.f32 %v3403, 0.0
        %v3420 = vmax.f32 %v3404, 0.0
        %v3421 = vmax.f32 %v3405, 0.0
        %v3422 = vmax.f32 %v3406, 0.0
        %v3423 = vmax.f32 %v3407, 0.0
        %v3424 = vmax.f32 %v3408, 0.0
        %v3425 = vmax.f32 %v3409, 0.0
        %v3426 = vmax.f32 %v3410, 0.0
        %v3427 = vmax.f32 %v3411, 0.0
        %v3428 = vmax.f32 %v3412, 0.0
        %v3429 = vmax.f32 %v3413, 0.0
        %v3430 = vmax.f32 %v3414, 0.0
        %v3431 = vmax.f32 %v3415, 0.0
        %v3432 = vmax.f32 %v3416, 0.0
        %v3433 = vmax.f32 %v3417, 0.0
        %3434 = vst [vmem:[%s256] sm:$0xff] %v3418
        %3435 = vst [vmem:[%s256 + $0x8] sm:$0xff] %v3419
        %3436 = vst [vmem:[%s256 + $0x10] sm:$0xff] %v3420
        %3437 = vst [vmem:[%s256 + $0x18] sm:$0xff] %v3421
        %3438 = vst [vmem:[%s256 + $0x20] sm:$0xff] %v3422
        %3439 = vst [vmem:[%s256 + $0x28] sm:$0xff] %v3423
        %3440 = vst [vmem:[%s256 + $0x30] sm:$0xff] %v3424
        %3441 = vst [vmem:[%s256 + $0x38] sm:$0xff] %v3425
        %3442 = vst [vmem:[%s256 + $0x40] sm:$0xff] %v3426
        %3443 = vst [vmem:[%s256 + $0x48] sm:$0xff] %v3427
        %3444 = vst [vmem:[%s256 + $0x50] sm:$0xff] %v3428
        %3445 = vst [vmem:[%s256 + $0x58] sm:$0xff] %v3429
        %3446 = vst [vmem:[%s256 + $0x60] sm:$0xff] %v3430
        %3447 = vst [vmem:[%s256 + $0x68] sm:$0xff] %v3431
        %3448 = vst [vmem:[%s256 + $0x70] sm:$0xff] %v3432
        %3449 = vst [vmem:[%s256 + $0x78] sm:$0xff] %v3433
        %s3450 = sand.u32 %s154, 1
        %s3451 = scalar_lea.sflag [#allocation4], %s3450
        %s3452 = sand.u32 %s154, 1
        %s3453 = smul.addr %s3452, 128
        %s3454 = scalar_lea.vmem [#allocation5], %s3453
        // Predicated region
        $region45: #{tpu_custom_call.1} parent=39 // pred_check
          %p3455 = pneg %p164
        $region46: #{tpu_custom_call.1} parent=39 // pred_check_branch
          %3457 = sbr.rel (%p3455) target = $region48
        $region47: #{tpu_custom_call.1} parent=39 // pred_region
          %s3459 = ssub.s32 2048, 2048
          %3460 = vsyncadd %s3451, %s3459
          %s3461 = smul.addr %s25, 16
          %s3462 = smul.addr %s24, 32
          %s3463 = sadd.s32 %s3461, %s3462
          %s3464 = smul.addr %s3463, 128
          %s3465 = scalar_lea.hbm %s5, %s3464
          %s3466 = sshll.u32 %s3454, 4
          %s3467 = int_to_ptr.vmem [resolvable:$true] %s3466
          %3472 = dma.vmem_to_hbm [thread:$0]  %s3467, 2048, %s3465, %s3451, 128, 128, 8
        $region48: #{tpu_custom_call.1} parent=39 // pred_fallthru
          _
      $region40: #{tpu_custom_call.1} parent=5 // pred_fallthru
        _
      %p3473 = scmp.le.s32.totalorder 2, %s15
      // Predicated region
      $region49: #{tpu_custom_call.1} parent=5 // pred_check
        %p3474 = pneg %p3473
      $region50: #{tpu_custom_call.1} parent=5 // pred_check_branch
        %3476 = sbr.rel (%p3474) target = $region52
      $region51: #{tpu_custom_call.1} parent=5 // pred_region
        %s3477 = ssub.s32 %s15, 2
        // Predicated region
        $region53: #{tpu_custom_call.1} parent=51 // pred_check
          %p3478 = pneg %p170
        $region54: #{tpu_custom_call.1} parent=51 // pred_check_branch
          %3480 = sbr.rel (%p3478) target = $region56
        $region55: #{tpu_custom_call.1} parent=51 // pred_region
          %s3481 = sand.u32 %s155, 1
          %s3482 = scalar_lea.sflag [#allocation4], %s3481
          %s3483 = sand.u32 %s155, 1
          %s3484 = smul.addr %s3483, 128
          %s3485 = scalar_lea.vmem [#allocation5], %s3484
          %3486 = dma.done %s3482, 2048
        $region56: #{tpu_custom_call.1} parent=51 // pred_fallthru
          _
      $region52: #{tpu_custom_call.1} parent=5 // pred_fallthru
        _
    $region6: #{tpu_custom_call.1} parent=1 // loop_footer
      %s19 = sadd.s32 1, %s15
    $region7: #{tpu_custom_call.1} parent=1 // loop_footer_branch
      %14 = sbr.rel target = $region3
    $region8: #{tpu_custom_call.1} parent=1 // loop_exit
      _
    %3487 = vsyncpa [#allocation3], 1
    %s3488 = scalar_lea.sflag [#allocation3], 1
    %3489 = vsyncpa %s3488, 1
    %3490 = vsyncpa [#allocation4], 1
    %s3491 = scalar_lea.sflag [#allocation4], 1
    %3492 = vsyncpa %s3491, 1

// kernel: tpu_custom_call.1
$region0: #{tpu_custom_call.1}
  #allocation0 [shape = 'u32[]', space=smem, size = 0x4, offset = 0x4, fixed_abs, tag = 'smem constant byte address 0x4 - core index']
  #allocation1 [shape = 'u32[144,128]{1,0:T(1,128)}', space=vmem, size = 0x12000, scoped, tag = 'internal scratch']
  %s0 = inlined_call_operand.vmem [shape: f32[2,2,160,4], index: 0, kind: input, shape index: {}]
  %s1 = inlined_call_operand.vmem [shape: f32[4,256], index: 1, kind: input, shape index: {}]
  %s2 = inlined_call_operand.vmem [shape: f32[1,256], index: 2, kind: input, shape index: {}]
  %s3 = inlined_call_operand.hbm [shape: bf16[256,1152], index: 3, kind: input, shape index: {}]
  %s4 = inlined_call_operand.vmem [shape: f32[1,128], index: 4, kind: input, shape index: {}]
  %s5 = inlined_call_operand.hbm [shape: f32[2,2,128,128], index: 5, kind: output, shape index: {}]
  %s6 = sld [smem:[#allocation0]]
  $region57: #{tpu_custom_call.1} parent=0
    _
  %s8 = ssub.s32 1, %s6
  %s9 = scalar_select 0, %s8, %s6
  $region1: #{tpu_custom_call.1} parent=0
    #allocation2 [shape = 'u8[589824]{0}', space=vmem, size = 0x90000, scoped, tag = 'input window, operand 3, single buffered']
    #allocation3 [shape = 's32[2]{0}', space=sflag, size = 0x8, scoped, tag = 'scoped memory for tpu_custom_call.1']
    #allocation4 [shape = 's32[2]{0}', space=sflag, size = 0x8, scoped, tag = 'scoped memory for tpu_custom_call.1']
    #allocation5 [shape = 'u8[131072]{0}', space=vmem, size = 0x20000, scoped, tag = 'output window, operand 0']
    %10 = vsyncpa [#allocation3], 0
    %11 = vsyncpa [#allocation4], 0
    %s12 = scalar_lea.sflag [#allocation4], 1
    %13 = vsyncpa %s12, 0
    loop: start=0, step=1, limit=6
    $region2: #{tpu_custom_call.1} parent=1 // loop_pre_header
      _
    $region3: #{tpu_custom_call.1} parent=1 // loop_header
      %s15 = sphi 0, %s19
      %p16 = scmp.ge.s32.totalorder %s15, 6
      %s22 = sphi 0, %s34
      %s23 = sphi 0, %s30
      %s24 = sphi 0, %s22
      %s25 = sphi 0, %s23
      %s26 = sphi 0, %s24
      %s27 = sphi 0, %s25
      %s39 = sphi 0, %s41
      %s42 = sphi 0, %s39
      %s43 = sphi 0, %s42
      %s59 = sphi 0, %s43
      %s63 = sphi 0, %s63
      %s65 = sphi 0, %s63
      %s66 = sphi 0, %s65
      %s80 = sphi 0, %s66
      %s84 = sphi 0, %s84
      %s86 = sphi 0, %s84
      %s87 = sphi 0, %s86
      %s101 = sphi 0, %s87
      %s105 = sphi 0, %s105
      %s107 = sphi 0, %s105
      %s108 = sphi 0, %s107
      %s122 = sphi 0, %s108
      %s126 = sphi 0, %s126
      %s128 = sphi 0, %s126
      %s129 = sphi 0, %s128
      %s143 = sphi 0, %s129
      %s151 = sphi 0, %s153
      %s154 = sphi 0, %s151
      %s155 = sphi 0, %s154
      %s171 = sphi 0, %s155
    $region4: #{tpu_custom_call.1} parent=1 // loop_header_branch
      %18 = sbr.rel (%p16) target = $region8
    $region5: #{tpu_custom_call.1} parent=1 // loop_body
      %s20 = ssub.s32 %s15, 1
      %s21 = ssub.s32 %s15, 2
      %s28 = sadd.s32 1, %s23
      %p29 = scmp.ge.s32.totalorder %s28, 2
      %s30 = scalar_select %p29, 0, %s28
      %s31 = sadd.s32 1, %s22
      %s32 = scalar_select %p29, %s31, %s22
      %p33 = scmp.ge.s32.totalorder %s32, 2
      %s34 = scalar_select %p33, 0, %s32
      %s35 = ssub.s32 %s22, %s34
      %s36 = ssub.s32 %s23, %s30
      %s37 = sor.u32 %s35, %s36
      %p38 = scmp.eq.s32.totalorder %s37, 0
      %s40 = sadd.s32 %s39, 1
      %s41 = scalar_select %p38, %s39, %s40
      %p44 = pneg %p38
      %p45 = scmp.eq.s32.totalorder %s15, 3
      %p46 = por %p44, %p45
      %p47 = scmp.ne.s32.totalorder %s39, %s42
      %p48 = scmp.eq.s32.totalorder %s15, 0
      %p49 = por %p47, %p48
      %p50 = scmp.ne.s32.totalorder %s39, %s42
      %p51 = scmp.eq.s32.totalorder %s20, 3
      %p52 = por %p50, %p51
      %p53 = scmp.ne.s32.totalorder %s42, %s43
      %p54 = scmp.eq.s32.totalorder %s20, 0
      %p55 = por %p53, %p54
      %p56 = scmp.ne.s32.totalorder %s42, %s43
      %p57 = scmp.eq.s32.totalorder %s21, 3
      %p58 = por %p56, %p57
      %p60 = scmp.ne.s32.totalorder %s43, %s59
      %p61 = scmp.eq.s32.totalorder %s21, 0
      %p62 = por %p60, %p61
      %s64 = sadd.s32 %s63, 1
      %p67 = scmp.eq.s32.totalorder %s15, 3
      %p68 = scmp.ne.s32.totalorder %s63, %s65
      %p69 = scmp.eq.s32.totalorder %s15, 0
      %p70 = por %p68, %p69
      %p71 = scmp.ne.s32.totalorder %s63, %s65
      %p72 = scmp.eq.s32.totalorder %s20, 3
      %p73 = por %p71, %p72
      %p74 = scmp.ne.s32.totalorder %s65, %s66
      %p75 = scmp.eq.s32.totalorder %s20, 0
      %p76 = por %p74, %p75
      %p77 = scmp.ne.s32.totalorder %s65, %s66
      %p78 = scmp.eq.s32.totalorder %s21, 3
      %p79 = por %p77, %p78
      %p81 = scmp.ne.s32.totalorder %s66, %s80
      %p82 = scmp.eq.s32.totalorder %s21, 0
      %p83 = por %p81, %p82
      %s85 = sadd.s32 %s84, 1
      %p88 = scmp.eq.s32.totalorder %s15, 3
      %p89 = scmp.ne.s32.totalorder %s84, %s86
      %p90 = scmp.eq.s32.totalorder %s15, 0
      %p91 = por %p89, %p90
      %p92 = scmp.ne.s32.totalorder %s84, %s86
      %p93 = scmp.eq.s32.totalorder %s20, 3
      %p94 = por %p92, %p93
      %p95 = scmp.ne.s32.totalorder %s86, %s87
      %p96 = scmp.eq.s32.totalorder %s20, 0
      %p97 = por %p95, %p96
      %p98 = scmp.ne.s32.totalorder %s86, %s87
      %p99 = scmp.eq.s32.totalorder %s21, 3
      %p100 = por %p98, %p99
      %p102 = scmp.ne.s32.totalorder %s87, %s101
      %p103 = scmp.eq.s32.totalorder %s21, 0
      %p104 = por %p102, %p103
      %s106 = sadd.s32 %s105, 1
      %p109 = scmp.eq.s32.totalorder %s15, 3
      %p110 = scmp.ne.s32.totalorder %s105, %s107
      %p111 = scmp.eq.s32.totalorder %s15, 0
      %p112 = por %p110, %p111
      %p113 = scmp.ne.s32.totalorder %s105, %s107
      %p114 = scmp.eq.s32.totalorder %s20, 3
      %p115 = por %p113, %p114
      %p116 = scmp.ne.s32.totalorder %s107, %s108
      %p117 = scmp.eq.s32.totalorder %s20, 0
      %p118 = por %p116, %p117
      %p119 = scmp.ne.s32.totalorder %s107, %s108
      %p120 = scmp.eq.s32.totalorder %s21, 3
      %p121 = por %p119, %p120
      %p123 = scmp.ne.s32.totalorder %s108, %s122
      %p124 = scmp.eq.s32.totalorder %s21, 0
      %p125 = por %p123, %p124
      %s127 = sadd.s32 %s126, 1
      %p130 = scmp.eq.s32.totalorder %s15, 3
      %p131 = scmp.ne.s32.totalorder %s126, %s128
      %p132 = scmp.eq.s32.totalorder %s15, 0
      %p133 = por %p131, %p132
      %p134 = scmp.ne.s32.totalorder %s126, %s128
      %p135 = scmp.eq.s32.totalorder %s20, 3
      %p136 = por %p134, %p135
      %p137 = scmp.ne.s32.totalorder %s128, %s129
      %p138 = scmp.eq.s32.totalorder %s20, 0
      %p139 = por %p137, %p138
      %p140 = scmp.ne.s32.totalorder %s128, %s129
      %p141 = scmp.eq.s32.totalorder %s21, 3
      %p142 = por %p140, %p141
      %p144 = scmp.ne.s32.totalorder %s129, %s143
      %p145 = scmp.eq.s32.totalorder %s21, 0
      %p146 = por %p144, %p145
      %s147 = ssub.s32 %s22, %s34
      %s148 = ssub.s32 %s23, %s30
      %s149 = sor.u32 %s147, %s148
      %p150 = scmp.eq.s32.totalorder %s149, 0
      %s152 = sadd.s32 %s151, 1
      %s153 = scalar_select %p150, %s151, %s152
      %p156 = pneg %p150
      %p157 = scmp.eq.s32.totalorder %s15, 3
      %p158 = por %p156, %p157
      %p159 = scmp.ne.s32.totalorder %s151, %s154
      %p160 = scmp.eq.s32.totalorder %s15, 0
      %p161 = por %p159, %p160
      %p162 = scmp.ne.s32.totalorder %s151, %s154
      %p163 = scmp.eq.s32.totalorder %s20, 3
      %p164 = por %p162, %p163
      %p165 = scmp.ne.s32.totalorder %s154, %s155
      %p166 = scmp.eq.s32.totalorder %s20, 0
      %p167 = por %p165, %p166
      %p168 = scmp.ne.s32.totalorder %s154, %s155
      %p169 = scmp.eq.s32.totalorder %s21, 3
      %p170 = por %p168, %p169
      %p172 = scmp.ne.s32.totalorder %s155, %s171
      %p173 = scmp.eq.s32.totalorder %s21, 0
      %p174 = por %p172, %p173
      %p175 = scmp.le.s32.totalorder 1, %s15
      %p176 = scmp.lt.s32.totalorder %s15, 5
      %p177 = pnand %p175, %p176
      %p178 = pneg %p177
      // Predicated region
      $region9: #{tpu_custom_call.1} parent=5 // pred_check
        _
      $region10: #{tpu_custom_call.1} parent=5 // pred_check_branch
        %180 = sbr.rel (%p177) target = $region12
      $region11: #{tpu_custom_call.1} parent=5 // pred_region
        %s181 = ssub.s32 %s15, 1
        // Predicated region
        $region13: #{tpu_custom_call.1} parent=11 // pred_check
          %p182 = pneg %p76
        $region14: #{tpu_custom_call.1} parent=11 // pred_check_branch
          %184 = sbr.rel (%p182) target = $region16
        $region15: #{tpu_custom_call.1} parent=11 // pred_region
          _
        $region16: #{tpu_custom_call.1} parent=11 // pred_fallthru
          _
        // Predicated region
        $region17: #{tpu_custom_call.1} parent=11 // pred_check
          %p185 = pneg %p97
        $region18: #{tpu_custom_call.1} parent=11 // pred_check_branch
          %187 = sbr.rel (%p185) target = $region20
        $region19: #{tpu_custom_call.1} parent=11 // pred_region
          _
        $region20: #{tpu_custom_call.1} parent=11 // pred_fallthru
          _
        // Predicated region
        $region21: #{tpu_custom_call.1} parent=11 // pred_check
          %p188 = pneg %p118
        $region22: #{tpu_custom_call.1} parent=11 // pred_check_branch
          %190 = sbr.rel (%p188) target = $region24
        $region23: #{tpu_custom_call.1} parent=11 // pred_region
          %s192 = ssub.s32 18432, 18432
          %193 = vsyncadd [#allocation3], %s192
          %s194 = sshll.u32 [#allocation2], 4
          %s195 = int_to_ptr.vmem [resolvable:$true] %s194
          %200 = dma.hbm_to_vmem [thread:$0]  %s3, 18432, %s195, [#allocation3], 576, 576, 36
        $region24: #{tpu_custom_call.1} parent=11 // pred_fallthru
          _
        // Predicated region
        $region25: #{tpu_custom_call.1} parent=11 // pred_check
          %p201 = pneg %p139
        $region26: #{tpu_custom_call.1} parent=11 // pred_check_branch
          %203 = sbr.rel (%p201) target = $region28
        $region27: #{tpu_custom_call.1} parent=11 // pred_region
          _
        $region28: #{tpu_custom_call.1} parent=11 // pred_fallthru
          _
      $region12: #{tpu_custom_call.1} parent=5 // pred_fallthru
        _
      %p204 = scmp.lt.s32.totalorder %s15, 4
      // Predicated region
      $region29: #{tpu_custom_call.1} parent=5 // pred_check
        %p205 = pneg %p204
      $region30: #{tpu_custom_call.1} parent=5 // pred_check_branch
        %207 = sbr.rel (%p205) target = $region32
      $region31: #{tpu_custom_call.1} parent=5 // pred_region
        // Predicated region
        $region33: #{tpu_custom_call.1} parent=31 // pred_check
          %p208 = pneg %p49
        $region34: #{tpu_custom_call.1} parent=31 // pred_check_branch
          %210 = sbr.rel (%p208) target = $region36
        $region35: #{tpu_custom_call.1} parent=31 // pred_region
          %p211 = scmp.lt.s32.totalorder %s22, 1
          %s212 = scalar_select %p211, %s22, 1
          %p213 = scmp.lt.s32.totalorder %s23, 1
          %s214 = scalar_select %p213, %s23, 1
          %s215 = smul.addr %s214, 20
          %s216 = smul.addr %s212, 40
          %s217 = sadd.s32 %s215, %s216
          %s218 = smul.addr %s217, 8
          %s219 = scalar_lea.vmem %s0, %s218
        $region36: #{tpu_custom_call.1} parent=31 // pred_fallthru
          _
      $region32: #{tpu_custom_call.1} parent=5 // pred_fallthru
        _
      %p220 = scmp.le.s32.totalorder 1, %s15
      %p221 = scmp.lt.s32.totalorder %s15, 5
      %p222 = pnand %p220, %p221
      %p223 = pneg %p222
      // Predicated region
      $region37: #{tpu_custom_call.1} parent=5 // pred_check
        _
      $region38: #{tpu_custom_call.1} parent=5 // pred_check_branch
        %225 = sbr.rel (%p222) target = $region40
      $region39: #{tpu_custom_call.1} parent=5 // pred_region
        %s226 = ssub.s32 %s15, 1
        // Predicated region
        $region41: #{tpu_custom_call.1} parent=39 // pred_check
          %p227 = pneg %p118
        $region42: #{tpu_custom_call.1} parent=39 // pred_check_branch
          %229 = sbr.rel (%p227) target = $region44
        $region43: #{tpu_custom_call.1} parent=39 // pred_region
          %230 = dma.done [#allocation3], 18432
        $region44: #{tpu_custom_call.1} parent=39 // pred_fallthru
          _
        %p231 = scmp.lt.s32.totalorder %s24, 1
        %s232 = scalar_select %p231, %s24, 1
        %p233 = scmp.lt.s32.totalorder %s25, 1
        %s234 = scalar_select %p233, %s25, 1
        %s235 = smul.addr %s234, 20
        %s236 = smul.addr %s232, 40
        %s237 = sadd.s32 %s235, %s236
        %s238 = smul.addr %s237, 8
        %s239 = scalar_lea.vmem %s0, %s238
        %p240 = pneg %p55
        %p241 = pneg %p52
        %p242 = pneg %p76
        %p243 = pneg %p73
        %p244 = pneg %p97
        %p245 = pneg %p94
        %p246 = pneg %p118
        %p247 = pneg %p115
        %p248 = pneg %p139
        %p249 = pneg %p136
        %p250 = pneg %p167
        %p251 = pneg %p164
        %s252 = sand.u32 %s154, 1
        %s253 = scalar_lea.sflag [#allocation4], %s252
        %s254 = sand.u32 %s154, 1
        %s255 = smul.addr %s254, 128
        %s256 = scalar_lea.vmem [#allocation5], %s255
        %p257 = scmp.lt.s32.totalorder %s24, 1
        %s258 = scalar_select %p257, %s24, 1
        %p259 = scmp.lt.s32.totalorder %s25, 1
        %s260 = scalar_select %p259, %s25, 1
        %s261 = smul.addr %s260, 20
        %s262 = smul.addr %s258, 40
        %s263 = sadd.s32 %s261, %s262
        %s264 = smul.addr %s263, 8
        %s265 = scalar_lea.vmem %s0, %s264
        %v267 = vld [vmem:[%s265] sm:$0xff]
        %v268 = vld [vmem:[%s265 + $0x8] sm:$0xff]
        %v269 = vld [vmem:[%s265 + $0x10] sm:$0xff]
        %v270 = vld [vmem:[%s265 + $0x18] sm:$0xff]
        %v271 = vld [vmem:[%s265 + $0x20] sm:$0xff]
        %v272 = vld [vmem:[%s265 + $0x28] sm:$0xff]
        %v273 = vld [vmem:[%s265 + $0x30] sm:$0xff]
        %v274 = vld [vmem:[%s265 + $0x38] sm:$0xff]
        %v275 = vld [vmem:[%s265 + $0x40] sm:$0xff]
        %v276 = vld [vmem:[%s265 + $0x48] sm:$0xff]
        %v277 = vld [vmem:[%s265 + $0x50] sm:$0xff]
        %v278 = vld [vmem:[%s265 + $0x58] sm:$0xff]
        %v279 = vld [vmem:[%s265 + $0x60] sm:$0xff]
        %v280 = vld [vmem:[%s265 + $0x68] sm:$0xff]
        %v281 = vld [vmem:[%s265 + $0x70] sm:$0xff]
        %v282 = vld [vmem:[%s265 + $0x78] sm:$0xff]
        %v283 = vld [vmem:[%s265 + $0x80] sm:$0xff]
        %v284 = vld [vmem:[%s265 + $0x88] sm:$0xff]
        %v285 = vld [vmem:[%s265 + $0x90] sm:$0xff]
        %v286 = vld [vmem:[%s265 + $0x98] sm:$0xff]
        %v287 = vld [vmem:[%s1] ss:$4 sm:$0x3]
        %289 = vset.pattern.permute.xlu0 0
        %290 = vperm.xlu0 %289, %v267
        %v291 = vpop.permute.xlu0 %290
        %294 = vset.pattern.permute.xlu0 0
        %295 = vperm.xlu0 %294, %v268
        %v296 = vpop.permute.xlu0 %295
        %299 = vset.pattern.permute.xlu0 0
        %300 = vperm.xlu0 %299, %v269
        %v301 = vpop.permute.xlu0 %300
        %304 = vset.pattern.permute.xlu0 0
        %305 = vperm.xlu0 %304, %v270
        %v306 = vpop.permute.xlu0 %305
        %309 = vset.pattern.permute.xlu0 0
        %310 = vperm.xlu0 %309, %v271
        %v311 = vpop.permute.xlu0 %310
        %314 = vset.pattern.permute.xlu0 0
        %315 = vperm.xlu0 %314, %v272
        %v316 = vpop.permute.xlu0 %315
        %319 = vset.pattern.permute.xlu0 0
        %320 = vperm.xlu0 %319, %v273
        %v321 = vpop.permute.xlu0 %320
        %324 = vset.pattern.permute.xlu0 0
        %325 = vperm.xlu0 %324, %v274
        %v326 = vpop.permute.xlu0 %325
        %329 = vset.pattern.permute.xlu0 0
        %330 = vperm.xlu0 %329, %v275
        %v331 = vpop.permute.xlu0 %330
        %334 = vset.pattern.permute.xlu0 0
        %335 = vperm.xlu0 %334, %v276
        %v336 = vpop.permute.xlu0 %335
        %339 = vset.pattern.permute.xlu0 0
        %340 = vperm.xlu0 %339, %v277
        %v341 = vpop.permute.xlu0 %340
        %344 = vset.pattern.permute.xlu0 0
        %345 = vperm.xlu0 %344, %v278
        %v346 = vpop.permute.xlu0 %345
        %349 = vset.pattern.permute.xlu0 0
        %350 = vperm.xlu0 %349, %v279
        %v351 = vpop.permute.xlu0 %350
        %354 = vset.pattern.permute.xlu0 0
        %355 = vperm.xlu0 %354, %v280
        %v356 = vpop.permute.xlu0 %355
        %359 = vset.pattern.permute.xlu0 0
        %360 = vperm.xlu0 %359, %v281
        %v361 = vpop.permute.xlu0 %360
        %364 = vset.pattern.permute.xlu0 0
        %365 = vperm.xlu0 %364, %v282
        %v366 = vpop.permute.xlu0 %365
        %369 = vset.pattern.permute.xlu0 0
        %370 = vperm.xlu0 %369, %v283
        %v371 = vpop.permute.xlu0 %370
        %374 = vset.pattern.permute.xlu0 0
        %375 = vperm.xlu0 %374, %v284
        %v376 = vpop.permute.xlu0 %375
        %379 = vset.pattern.permute.xlu0 0
        %380 = vperm.xlu0 %379, %v285
        %v381 = vpop.permute.xlu0 %380
        %384 = vset.pattern.permute.xlu0 0
        %385 = vperm.xlu0 %384, %v286
        %v386 = vpop.permute.xlu0 %385
        %v389 = vlaneseq
        %v390 = vshrl.u32 %v389, 7
        %v391 = vsub.s32 0, %v390
        %v392 = vrot.slane %v287, %v391
        %v393 = vlaneseq
        %v394 = vshrl.u32 %v393, 7
        %v395 = vsub.s32 1, %v394
        %v396 = vrot.slane %v287, %v395
        %v399 = vmul.f32 %v291, %v392
        %v400 = vmul.f32 %v291, %v396
        %v401 = vmul.f32 %v296, %v392
        %v402 = vmul.f32 %v296, %v396
        %v403 = vmul.f32 %v301, %v392
        %v404 = vmul.f32 %v301, %v396
        %v405 = vmul.f32 %v306, %v392
        %v406 = vmul.f32 %v306, %v396
        %v407 = vmul.f32 %v311, %v392
        %v408 = vmul.f32 %v311, %v396
        %v409 = vmul.f32 %v316, %v392
        %v410 = vmul.f32 %v316, %v396
        %v411 = vmul.f32 %v321, %v392
        %v412 = vmul.f32 %v321, %v396
        %v413 = vmul.f32 %v326, %v392
        %v414 = vmul.f32 %v326, %v396
        %v415 = vmul.f32 %v331, %v392
        %v416 = vmul.f32 %v331, %v396
        %v417 = vmul.f32 %v336, %v392
        %v418 = vmul.f32 %v336, %v396
        %v419 = vmul.f32 %v341, %v392
        %v420 = vmul.f32 %v341, %v396
        %v421 = vmul.f32 %v346, %v392
        %v422 = vmul.f32 %v346, %v396
        %v423 = vmul.f32 %v351, %v392
        %v424 = vmul.f32 %v351, %v396
        %v425 = vmul.f32 %v356, %v392
        %v426 = vmul.f32 %v356, %v396
        %v427 = vmul.f32 %v361, %v392
        %v428 = vmul.f32 %v361, %v396
        %v429 = vmul.f32 %v366, %v392
        %v430 = vmul.f32 %v366, %v396
        %v431 = vmul.f32 %v371, %v392
        %v432 = vmul.f32 %v371, %v396
        %v433 = vmul.f32 %v376, %v392
        %v434 = vmul.f32 %v376, %v396
        %v435 = vmul.f32 %v381, %v392
        %v436 = vmul.f32 %v381, %v396
        %v437 = vmul.f32 %v386, %v392
        %v438 = vmul.f32 %v386, %v396
        %s439 = scalar_lea.vmem %s1, 1
        %v440 = vld [vmem:[%s439] ss:$4 sm:$0x3]
        %441 = vset.pattern.permute.xlu0 1
        %442 = vperm.xlu0 %441, %v267
        %v443 = vpop.permute.xlu0 %442
        %445 = vset.pattern.permute.xlu0 1
        %446 = vperm.xlu0 %445, %v268
        %v447 = vpop.permute.xlu0 %446
        %449 = vset.pattern.permute.xlu0 1
        %450 = vperm.xlu0 %449, %v269
        %v451 = vpop.permute.xlu0 %450
        %453 = vset.pattern.permute.xlu0 1
        %454 = vperm.xlu0 %453, %v270
        %v455 = vpop.permute.xlu0 %454
        %457 = vset.pattern.permute.xlu0 1
        %458 = vperm.xlu0 %457, %v271
        %v459 = vpop.permute.xlu0 %458
        %461 = vset.pattern.permute.xlu0 1
        %462 = vperm.xlu0 %461, %v272
        %v463 = vpop.permute.xlu0 %462
        %465 = vset.pattern.permute.xlu0 1
        %466 = vperm.xlu0 %465, %v273
        %v467 = vpop.permute.xlu0 %466
        %469 = vset.pattern.permute.xlu0 1
        %470 = vperm.xlu0 %469, %v274
        %v471 = vpop.permute.xlu0 %470
        %473 = vset.pattern.permute.xlu0 1
        %474 = vperm.xlu0 %473, %v275
        %v475 = vpop.permute.xlu0 %474
        %477 = vset.pattern.permute.xlu0 1
        %478 = vperm.xlu0 %477, %v276
        %v479 = vpop.permute.xlu0 %478
        %481 = vset.pattern.permute.xlu0 1
        %482 = vperm.xlu0 %481, %v277
        %v483 = vpop.permute.xlu0 %482
        %485 = vset.pattern.permute.xlu0 1
        %486 = vperm.xlu0 %485, %v278
        %v487 = vpop.permute.xlu0 %486
        %489 = vset.pattern.permute.xlu0 1
        %490 = vperm.xlu0 %489, %v279
        %v491 = vpop.permute.xlu0 %490
        %493 = vset.pattern.permute.xlu0 1
        %494 = vperm.xlu0 %493, %v280
        %v495 = vpop.permute.xlu0 %494
        %497 = vset.pattern.permute.xlu0 1
        %498 = vperm.xlu0 %497, %v281
        %v499 = vpop.permute.xlu0 %498
        %501 = vset.pattern.permute.xlu0 1
        %502 = vperm.xlu0 %501, %v282
        %v503 = vpop.permute.xlu0 %502
        %505 = vset.pattern.permute.xlu0 1
        %506 = vperm.xlu0 %505, %v283
        %v507 = vpop.permute.xlu0 %506
        %509 = vset.pattern.permute.xlu0 1
        %510 = vperm.xlu0 %509, %v284
        %v511 = vpop.permute.xlu0 %510
        %513 = vset.pattern.permute.xlu0 1
        %514 = vperm.xlu0 %513, %v285
        %v515 = vpop.permute.xlu0 %514
        %517 = vset.pattern.permute.xlu0 1
        %518 = vperm.xlu0 %517, %v286
        %v519 = vpop.permute.xlu0 %518
        %v522 = vlaneseq
        %v523 = vshrl.u32 %v522, 7
        %v524 = vsub.s32 0, %v523
        %v525 = vrot.slane %v440, %v524
        %v526 = vlaneseq
        %v527 = vshrl.u32 %v526, 7
        %v528 = vsub.s32 1, %v527
        %v529 = vrot.slane %v440, %v528
        %v532 = vmul.f32 %v443, %v525
        %v533 = vmul.f32 %v443, %v529
        %v534 = vmul.f32 %v447, %v525
        %v535 = vmul.f32 %v447, %v529
        %v536 = vmul.f32 %v451, %v525
        %v537 = vmul.f32 %v451, %v529
        %v538 = vmul.f32 %v455, %v525
        %v539 = vmul.f32 %v455, %v529
        %v540 = vmul.f32 %v459, %v525
        %v541 = vmul.f32 %v459, %v529
        %v542 = vmul.f32 %v463, %v525
        %v543 = vmul.f32 %v463, %v529
        %v544 = vmul.f32 %v467, %v525
        %v545 = vmul.f32 %v467, %v529
        %v546 = vmul.f32 %v471, %v525
        %v547 = vmul.f32 %v471, %v529
        %v548 = vmul.f32 %v475, %v525
        %v549 = vmul.f32 %v475, %v529
        %v550 = vmul.f32 %v479, %v525
        %v551 = vmul.f32 %v479, %v529
        %v552 = vmul.f32 %v483, %v525
        %v553 = vmul.f32 %v483, %v529
        %v554 = vmul.f32 %v487, %v525
        %v555 = vmul.f32 %v487, %v529
        %v556 = vmul.f32 %v491, %v525
        %v557 = vmul.f32 %v491, %v529
        %v558 = vmul.f32 %v495, %v525
        %v559 = vmul.f32 %v495, %v529
        %v560 = vmul.f32 %v499, %v525
        %v561 = vmul.f32 %v499, %v529
        %v562 = vmul.f32 %v503, %v525
        %v563 = vmul.f32 %v503, %v529
        %v564 = vmul.f32 %v507, %v525
        %v565 = vmul.f32 %v507, %v529
        %v566 = vmul.f32 %v511, %v525
        %v567 = vmul.f32 %v511, %v529
        %v568 = vmul.f32 %v515, %v525
        %v569 = vmul.f32 %v515, %v529
        %v570 = vmul.f32 %v519, %v525
        %v571 = vmul.f32 %v519, %v529
        %v572 = vadd.f32 %v399, %v532
        %v573 = vadd.f32 %v400, %v533
        %v574 = vadd.f32 %v401, %v534
        %v575 = vadd.f32 %v402, %v535
        %v576 = vadd.f32 %v403, %v536
        %v577 = vadd.f32 %v404, %v537
        %v578 = vadd.f32 %v405, %v538
        %v579 = vadd.f32 %v406, %v539
        %v580 = vadd.f32 %v407, %v540
        %v581 = vadd.f32 %v408, %v541
        %v582 = vadd.f32 %v409, %v542
        %v583 = vadd.f32 %v410, %v543
        %v584 = vadd.f32 %v411, %v544
        %v585 = vadd.f32 %v412, %v545
        %v586 = vadd.f32 %v413, %v546
        %v587 = vadd.f32 %v414, %v547
        %v588 = vadd.f32 %v415, %v548
        %v589 = vadd.f32 %v416, %v549
        %v590 = vadd.f32 %v417, %v550
        %v591 = vadd.f32 %v418, %v551
        %v592 = vadd.f32 %v419, %v552
        %v593 = vadd.f32 %v420, %v553
        %v594 = vadd.f32 %v421, %v554
        %v595 = vadd.f32 %v422, %v555
        %v596 = vadd.f32 %v423, %v556
        %v597 = vadd.f32 %v424, %v557
        %v598 = vadd.f32 %v425, %v558
        %v599 = vadd.f32 %v426, %v559
        %v600 = vadd.f32 %v427, %v560
        %v601 = vadd.f32 %v428, %v561
        %v602 = vadd.f32 %v429, %v562
        %v603 = vadd.f32 %v430, %v563
        %v604 = vadd.f32 %v431, %v564
        %v605 = vadd.f32 %v432, %v565
        %v606 = vadd.f32 %v433, %v566
        %v607 = vadd.f32 %v434, %v567
        %v608 = vadd.f32 %v435, %v568
        %v609 = vadd.f32 %v436, %v569
        %v610 = vadd.f32 %v437, %v570
        %v611 = vadd.f32 %v438, %v571
        %s612 = scalar_lea.vmem %s1, 2
        %v613 = vld [vmem:[%s612] ss:$4 sm:$0x3]
        %614 = vset.pattern.permute.xlu0 2
        %615 = vperm.xlu0 %614, %v267
        %v616 = vpop.permute.xlu0 %615
        %618 = vset.pattern.permute.xlu0 2
        %619 = vperm.xlu0 %618, %v268
        %v620 = vpop.permute.xlu0 %619
        %622 = vset.pattern.permute.xlu0 2
        %623 = vperm.xlu0 %622, %v269
        %v624 = vpop.permute.xlu0 %623
        %626 = vset.pattern.permute.xlu0 2
        %627 = vperm.xlu0 %626, %v270
        %v628 = vpop.permute.xlu0 %627
        %630 = vset.pattern.permute.xlu0 2
        %631 = vperm.xlu0 %630, %v271
        %v632 = vpop.permute.xlu0 %631
        %634 = vset.pattern.permute.xlu0 2
        %635 = vperm.xlu0 %634, %v272
        %v636 = vpop.permute.xlu0 %635
        %638 = vset.pattern.permute.xlu0 2
        %639 = vperm.xlu0 %638, %v273
        %v640 = vpop.permute.xlu0 %639
        %642 = vset.pattern.permute.xlu0 2
        %643 = vperm.xlu0 %642, %v274
        %v644 = vpop.permute.xlu0 %643
        %646 = vset.pattern.permute.xlu0 2
        %647 = vperm.xlu0 %646, %v275
        %v648 = vpop.permute.xlu0 %647
        %650 = vset.pattern.permute.xlu0 2
        %651 = vperm.xlu0 %650, %v276
        %v652 = vpop.permute.xlu0 %651
        %654 = vset.pattern.permute.xlu0 2
        %655 = vperm.xlu0 %654, %v277
        %v656 = vpop.permute.xlu0 %655
        %658 = vset.pattern.permute.xlu0 2
        %659 = vperm.xlu0 %658, %v278
        %v660 = vpop.permute.xlu0 %659
        %662 = vset.pattern.permute.xlu0 2
        %663 = vperm.xlu0 %662, %v279
        %v664 = vpop.permute.xlu0 %663
        %666 = vset.pattern.permute.xlu0 2
        %667 = vperm.xlu0 %666, %v280
        %v668 = vpop.permute.xlu0 %667
        %670 = vset.pattern.permute.xlu0 2
        %671 = vperm.xlu0 %670, %v281
        %v672 = vpop.permute.xlu0 %671
        %674 = vset.pattern.permute.xlu0 2
        %675 = vperm.xlu0 %674, %v282
        %v676 = vpop.permute.xlu0 %675
        %678 = vset.pattern.permute.xlu0 2
        %679 = vperm.xlu0 %678, %v283
        %v680 = vpop.permute.xlu0 %679
        %682 = vset.pattern.permute.xlu0 2
        %683 = vperm.xlu0 %682, %v284
        %v684 = vpop.permute.xlu0 %683
        %686 = vset.pattern.permute.xlu0 2
        %687 = vperm.xlu0 %686, %v285
        %v688 = vpop.permute.xlu0 %687
        %690 = vset.pattern.permute.xlu0 2
        %691 = vperm.xlu0 %690, %v286
        %v692 = vpop.permute.xlu0 %691
        %v695 = vlaneseq
        %v696 = vshrl.u32 %v695, 7
        %v697 = vsub.s32 0, %v696
        %v698 = vrot.slane %v613, %v697
        %v699 = vlaneseq
        %v700 = vshrl.u32 %v699, 7
        %v701 = vsub.s32 1, %v700
        %v702 = vrot.slane %v613, %v701
        %v705 = vmul.f32 %v616, %v698
        %v706 = vmul.f32 %v616, %v702
        %v707 = vmul.f32 %v620, %v698
        %v708 = vmul.f32 %v620, %v702
        %v709 = vmul.f32 %v624, %v698
        %v710 = vmul.f32 %v624, %v702
        %v711 = vmul.f32 %v628, %v698
        %v712 = vmul.f32 %v628, %v702
        %v713 = vmul.f32 %v632, %v698
        %v714 = vmul.f32 %v632, %v702
        %v715 = vmul.f32 %v636, %v698
        %v716 = vmul.f32 %v636, %v702
        %v717 = vmul.f32 %v640, %v698
        %v718 = vmul.f32 %v640, %v702
        %v719 = vmul.f32 %v644, %v698
        %v720 = vmul.f32 %v644, %v702
        %v721 = vmul.f32 %v648, %v698
        %v722 = vmul.f32 %v648, %v702
        %v723 = vmul.f32 %v652, %v698
        %v724 = vmul.f32 %v652, %v702
        %v725 = vmul.f32 %v656, %v698
        %v726 = vmul.f32 %v656, %v702
        %v727 = vmul.f32 %v660, %v698
        %v728 = vmul.f32 %v660, %v702
        %v729 = vmul.f32 %v664, %v698
        %v730 = vmul.f32 %v664, %v702
        %v731 = vmul.f32 %v668, %v698
        %v732 = vmul.f32 %v668, %v702
        %v733 = vmul.f32 %v672, %v698
        %v734 = vmul.f32 %v672, %v702
        %v735 = vmul.f32 %v676, %v698
        %v736 = vmul.f32 %v676, %v702
        %v737 = vmul.f32 %v680, %v698
        %v738 = vmul.f32 %v680, %v702
        %v739 = vmul.f32 %v684, %v698
        %v740 = vmul.f32 %v684, %v702
        %v741 = vmul.f32 %v688, %v698
        %v742 = vmul.f32 %v688, %v702
        %v743 = vmul.f32 %v692, %v698
        %v744 = vmul.f32 %v692, %v702
        %v745 = vadd.f32 %v572, %v705
        %v746 = vadd.f32 %v573, %v706
        %v747 = vadd.f32 %v574, %v707
        %v748 = vadd.f32 %v575, %v708
        %v749 = vadd.f32 %v576, %v709
        %v750 = vadd.f32 %v577, %v710
        %v751 = vadd.f32 %v578, %v711
        %v752 = vadd.f32 %v579, %v712
        %v753 = vadd.f32 %v580, %v713
        %v754 = vadd.f32 %v581, %v714
        %v755 = vadd.f32 %v582, %v715
        %v756 = vadd.f32 %v583, %v716
        %v757 = vadd.f32 %v584, %v717
        %v758 = vadd.f32 %v585, %v718
        %v759 = vadd.f32 %v586, %v719
        %v760 = vadd.f32 %v587, %v720
        %v761 = vadd.f32 %v588, %v721
        %v762 = vadd.f32 %v589, %v722
        %v763 = vadd.f32 %v590, %v723
        %v764 = vadd.f32 %v591, %v724
        %v765 = vadd.f32 %v592, %v725
        %v766 = vadd.f32 %v593, %v726
        %v767 = vadd.f32 %v594, %v727
        %v768 = vadd.f32 %v595, %v728
        %v769 = vadd.f32 %v596, %v729
        %v770 = vadd.f32 %v597, %v730
        %v771 = vadd.f32 %v598, %v731
        %v772 = vadd.f32 %v599, %v732
        %v773 = vadd.f32 %v600, %v733
        %v774 = vadd.f32 %v601, %v734
        %v775 = vadd.f32 %v602, %v735
        %v776 = vadd.f32 %v603, %v736
        %v777 = vadd.f32 %v604, %v737
        %v778 = vadd.f32 %v605, %v738
        %v779 = vadd.f32 %v606, %v739
        %v780 = vadd.f32 %v607, %v740
        %v781 = vadd.f32 %v608, %v741
        %v782 = vadd.f32 %v609, %v742
        %v783 = vadd.f32 %v610, %v743
        %v784 = vadd.f32 %v611, %v744
        %s785 = scalar_lea.vmem %s1, 3
        %v786 = vld [vmem:[%s785] ss:$4 sm:$0x3]
        %787 = vset.pattern.permute.xlu0 3
        %788 = vperm.xlu0 %787, %v267
        %v789 = vpop.permute.xlu0 %788
        %791 = vset.pattern.permute.xlu0 3
        %792 = vperm.xlu0 %791, %v268
        %v793 = vpop.permute.xlu0 %792
        %795 = vset.pattern.permute.xlu0 3
        %796 = vperm.xlu0 %795, %v269
        %v797 = vpop.permute.xlu0 %796
        %799 = vset.pattern.permute.xlu0 3
        %800 = vperm.xlu0 %799, %v270
        %v801 = vpop.permute.xlu0 %800
        %803 = vset.pattern.permute.xlu0 3
        %804 = vperm.xlu0 %803, %v271
        %v805 = vpop.permute.xlu0 %804
        %807 = vset.pattern.permute.xlu0 3
        %808 = vperm.xlu0 %807, %v272
        %v809 = vpop.permute.xlu0 %808
        %811 = vset.pattern.permute.xlu0 3
        %812 = vperm.xlu0 %811, %v273
        %v813 = vpop.permute.xlu0 %812
        %815 = vset.pattern.permute.xlu0 3
        %816 = vperm.xlu0 %815, %v274
        %v817 = vpop.permute.xlu0 %816
        %819 = vset.pattern.permute.xlu0 3
        %820 = vperm.xlu0 %819, %v275
        %v821 = vpop.permute.xlu0 %820
        %823 = vset.pattern.permute.xlu0 3
        %824 = vperm.xlu0 %823, %v276
        %v825 = vpop.permute.xlu0 %824
        %827 = vset.pattern.permute.xlu0 3
        %828 = vperm.xlu0 %827, %v277
        %v829 = vpop.permute.xlu0 %828
        %831 = vset.pattern.permute.xlu0 3
        %832 = vperm.xlu0 %831, %v278
        %v833 = vpop.permute.xlu0 %832
        %835 = vset.pattern.permute.xlu0 3
        %836 = vperm.xlu0 %835, %v279
        %v837 = vpop.permute.xlu0 %836
        %839 = vset.pattern.permute.xlu0 3
        %840 = vperm.xlu0 %839, %v280
        %v841 = vpop.permute.xlu0 %840
        %843 = vset.pattern.permute.xlu0 3
        %844 = vperm.xlu0 %843, %v281
        %v845 = vpop.permute.xlu0 %844
        %847 = vset.pattern.permute.xlu0 3
        %848 = vperm.xlu0 %847, %v282
        %v849 = vpop.permute.xlu0 %848
        %851 = vset.pattern.permute.xlu0 3
        %852 = vperm.xlu0 %851, %v283
        %v853 = vpop.permute.xlu0 %852
        %855 = vset.pattern.permute.xlu0 3
        %856 = vperm.xlu0 %855, %v284
        %v857 = vpop.permute.xlu0 %856
        %859 = vset.pattern.permute.xlu0 3
        %860 = vperm.xlu0 %859, %v285
        %v861 = vpop.permute.xlu0 %860
        %863 = vset.pattern.permute.xlu0 3
        %864 = vperm.xlu0 %863, %v286
        %v865 = vpop.permute.xlu0 %864
        %v868 = vlaneseq
        %v869 = vshrl.u32 %v868, 7
        %v870 = vsub.s32 0, %v869
        %v871 = vrot.slane %v786, %v870
        %v872 = vlaneseq
        %v873 = vshrl.u32 %v872, 7
        %v874 = vsub.s32 1, %v873
        %v875 = vrot.slane %v786, %v874
        %v878 = vmul.f32 %v789, %v871
        %v879 = vmul.f32 %v789, %v875
        %v880 = vmul.f32 %v793, %v871
        %v881 = vmul.f32 %v793, %v875
        %v882 = vmul.f32 %v797, %v871
        %v883 = vmul.f32 %v797, %v875
        %v884 = vmul.f32 %v801, %v871
        %v885 = vmul.f32 %v801, %v875
        %v886 = vmul.f32 %v805, %v871
        %v887 = vmul.f32 %v805, %v875
        %v888 = vmul.f32 %v809, %v871
        %v889 = vmul.f32 %v809, %v875
        %v890 = vmul.f32 %v813, %v871
        %v891 = vmul.f32 %v813, %v875
        %v892 = vmul.f32 %v817, %v871
        %v893 = vmul.f32 %v817, %v875
        %v894 = vmul.f32 %v821, %v871
        %v895 = vmul.f32 %v821, %v875
        %v896 = vmul.f32 %v825, %v871
        %v897 = vmul.f32 %v825, %v875
        %v898 = vmul.f32 %v829, %v871
        %v899 = vmul.f32 %v829, %v875
        %v900 = vmul.f32 %v833, %v871
        %v901 = vmul.f32 %v833, %v875
        %v902 = vmul.f32 %v837, %v871
        %v903 = vmul.f32 %v837, %v875
        %v904 = vmul.f32 %v841, %v871
        %v905 = vmul.f32 %v841, %v875
        %v906 = vmul.f32 %v845, %v871
        %v907 = vmul.f32 %v845, %v875
        %v908 = vmul.f32 %v849, %v871
        %v909 = vmul.f32 %v849, %v875
        %v910 = vmul.f32 %v853, %v871
        %v911 = vmul.f32 %v853, %v875
        %v912 = vmul.f32 %v857, %v871
        %v913 = vmul.f32 %v857, %v875
        %v914 = vmul.f32 %v861, %v871
        %v915 = vmul.f32 %v861, %v875
        %v916 = vmul.f32 %v865, %v871
        %v917 = vmul.f32 %v865, %v875
        %v918 = vadd.f32 %v745, %v878
        %v919 = vadd.f32 %v746, %v879
        %v920 = vadd.f32 %v747, %v880
        %v921 = vadd.f32 %v748, %v881
        %v922 = vadd.f32 %v749, %v882
        %v923 = vadd.f32 %v750, %v883
        %v924 = vadd.f32 %v751, %v884
        %v925 = vadd.f32 %v752, %v885
        %v926 = vadd.f32 %v753, %v886
        %v927 = vadd.f32 %v754, %v887
        %v928 = vadd.f32 %v755, %v888
        %v929 = vadd.f32 %v756, %v889
        %v930 = vadd.f32 %v757, %v890
        %v931 = vadd.f32 %v758, %v891
        %v932 = vadd.f32 %v759, %v892
        %v933 = vadd.f32 %v760, %v893
        %v934 = vadd.f32 %v761, %v894
        %v935 = vadd.f32 %v762, %v895
        %v936 = vadd.f32 %v763, %v896
        %v937 = vadd.f32 %v764, %v897
        %v938 = vadd.f32 %v765, %v898
        %v939 = vadd.f32 %v766, %v899
        %v940 = vadd.f32 %v767, %v900
        %v941 = vadd.f32 %v768, %v901
        %v942 = vadd.f32 %v769, %v902
        %v943 = vadd.f32 %v770, %v903
        %v944 = vadd.f32 %v771, %v904
        %v945 = vadd.f32 %v772, %v905
        %v946 = vadd.f32 %v773, %v906
        %v947 = vadd.f32 %v774, %v907
        %v948 = vadd.f32 %v775, %v908
        %v949 = vadd.f32 %v776, %v909
        %v950 = vadd.f32 %v777, %v910
        %v951 = vadd.f32 %v778, %v911
        %v952 = vadd.f32 %v779, %v912
        %v953 = vadd.f32 %v780, %v913
        %v954 = vadd.f32 %v781, %v914
        %v955 = vadd.f32 %v782, %v915
        %v956 = vadd.f32 %v783, %v916
        %v957 = vadd.f32 %v784, %v917
        %v958 = vld [vmem:[%s2] sm:$0x3]
        %v960 = vlaneseq
        %v961 = vshrl.u32 %v960, 7
        %v962 = vsub.s32 0, %v961
        %v963 = vrot.slane %v958, %v962
        %v964 = vlaneseq
        %v965 = vshrl.u32 %v964, 7
        %v966 = vsub.s32 1, %v965
        %v967 = vrot.slane %v958, %v966
        %v970 = vadd.f32 %v918, %v963
        %v971 = vadd.f32 %v919, %v967
        %v972 = vadd.f32 %v920, %v963
        %v973 = vadd.f32 %v921, %v967
        %v974 = vadd.f32 %v922, %v963
        %v975 = vadd.f32 %v923, %v967
        %v976 = vadd.f32 %v924, %v963
        %v977 = vadd.f32 %v925, %v967
        %v978 = vadd.f32 %v926, %v963
        %v979 = vadd.f32 %v927, %v967
        %v980 = vadd.f32 %v928, %v963
        %v981 = vadd.f32 %v929, %v967
        %v982 = vadd.f32 %v930, %v963
        %v983 = vadd.f32 %v931, %v967
        %v984 = vadd.f32 %v932, %v963
        %v985 = vadd.f32 %v933, %v967
        %v986 = vadd.f32 %v934, %v963
        %v987 = vadd.f32 %v935, %v967
        %v988 = vadd.f32 %v936, %v963
        %v989 = vadd.f32 %v937, %v967
        %v990 = vadd.f32 %v938, %v963
        %v991 = vadd.f32 %v939, %v967
        %v992 = vadd.f32 %v940, %v963
        %v993 = vadd.f32 %v941, %v967
        %v994 = vadd.f32 %v942, %v963
        %v995 = vadd.f32 %v943, %v967
        %v996 = vadd.f32 %v944, %v963
        %v997 = vadd.f32 %v945, %v967
        %v998 = vadd.f32 %v946, %v963
        %v999 = vadd.f32 %v947, %v967
        %v1000 = vadd.f32 %v948, %v963
        %v1001 = vadd.f32 %v949, %v967
        %v1002 = vadd.f32 %v950, %v963
        %v1003 = vadd.f32 %v951, %v967
        %v1004 = vadd.f32 %v952, %v963
        %v1005 = vadd.f32 %v953, %v967
        %v1006 = vadd.f32 %v954, %v963
        %v1007 = vadd.f32 %v955, %v967
        %v1008 = vadd.f32 %v956, %v963
        %v1009 = vadd.f32 %v957, %v967
        %v1010 = vmax.f32 %v970, 0.0
        %v1011 = vmax.f32 %v971, 0.0
        %v1012 = vmax.f32 %v972, 0.0
        %v1013 = vmax.f32 %v973, 0.0
        %v1014 = vmax.f32 %v974, 0.0
        %v1015 = vmax.f32 %v975, 0.0
        %v1016 = vmax.f32 %v976, 0.0
        %v1017 = vmax.f32 %v977, 0.0
        %v1018 = vmax.f32 %v978, 0.0
        %v1019 = vmax.f32 %v979, 0.0
        %v1020 = vmax.f32 %v980, 0.0
        %v1021 = vmax.f32 %v981, 0.0
        %v1022 = vmax.f32 %v982, 0.0
        %v1023 = vmax.f32 %v983, 0.0
        %v1024 = vmax.f32 %v984, 0.0
        %v1025 = vmax.f32 %v985, 0.0
        %v1026 = vmax.f32 %v986, 0.0
        %v1027 = vmax.f32 %v987, 0.0
        %v1028 = vmax.f32 %v988, 0.0
        %v1029 = vmax.f32 %v989, 0.0
        %v1030 = vmax.f32 %v990, 0.0
        %v1031 = vmax.f32 %v991, 0.0
        %v1032 = vmax.f32 %v992, 0.0
        %v1033 = vmax.f32 %v993, 0.0
        %v1034 = vmax.f32 %v994, 0.0
        %v1035 = vmax.f32 %v995, 0.0
        %v1036 = vmax.f32 %v996, 0.0
        %v1037 = vmax.f32 %v997, 0.0
        %v1038 = vmax.f32 %v998, 0.0
        %v1039 = vmax.f32 %v999, 0.0
        %v1040 = vmax.f32 %v1000, 0.0
        %v1041 = vmax.f32 %v1001, 0.0
        %v1042 = vmax.f32 %v1002, 0.0
        %v1043 = vmax.f32 %v1003, 0.0
        %v1044 = vmax.f32 %v1004, 0.0
        %v1045 = vmax.f32 %v1005, 0.0
        %v1046 = vmax.f32 %v1006, 0.0
        %v1047 = vmax.f32 %v1007, 0.0
        %v1048 = vmax.f32 %v1008, 0.0
        %v1049 = vmax.f32 %v1009, 0.0
        %v1050 = vlaneseq
        %v1051 = vshrl.u32 %v1050, 7
        %v1052 = vadd.s32 %v1051, 8
        %v1053 = vadd.s32 %v1051, 16
        %v1054 = vadd.s32 %v1051, 24
        %v1055 = vadd.s32 %v1051, 32
        %v1056 = vadd.s32 %v1051, 40
        %v1057 = vadd.s32 %v1051, 48
        %v1058 = vadd.s32 %v1051, 56
        %v1059 = vadd.s32 %v1051, 64
        %v1060 = vadd.s32 %v1051, 72
        %v1061 = vadd.s32 %v1051, 80
        %v1062 = vadd.s32 %v1051, 88
        %v1063 = vadd.s32 %v1051, 96
        %v1064 = vadd.s32 %v1051, 104
        %v1065 = vadd.s32 %v1051, 112
        %v1066 = vadd.s32 %v1051, 120
        %v1067 = vadd.s32 %v1051, 128
        %v1068 = vadd.s32 %v1051, 136
        %v1069 = vadd.s32 %v1051, 144
        %v1070 = vadd.s32 %v1051, 152
        %p1071 = scmp.eq.s32.totalorder %s25, 0
        %vm1072 = vcmp.lt.s32.totalorder %v1051, 16
        %vm1073 = vcmp.lt.s32.totalorder %v1052, 16
        %vm1074 = vcmp.lt.s32.totalorder %v1053, 16
        %vm1075 = vcmp.lt.s32.totalorder %v1054, 16
        %vm1076 = vcmp.lt.s32.totalorder %v1055, 16
        %vm1077 = vcmp.lt.s32.totalorder %v1056, 16
        %vm1078 = vcmp.lt.s32.totalorder %v1057, 16
        %vm1079 = vcmp.lt.s32.totalorder %v1058, 16
        %vm1080 = vcmp.lt.s32.totalorder %v1059, 16
        %vm1081 = vcmp.lt.s32.totalorder %v1060, 16
        %vm1082 = vcmp.lt.s32.totalorder %v1061, 16
        %vm1083 = vcmp.lt.s32.totalorder %v1062, 16
        %vm1084 = vcmp.lt.s32.totalorder %v1063, 16
        %vm1085 = vcmp.lt.s32.totalorder %v1064, 16
        %vm1086 = vcmp.lt.s32.totalorder %v1065, 16
        %vm1087 = vcmp.lt.s32.totalorder %v1066, 16
        %vm1088 = vcmp.lt.s32.totalorder %v1067, 16
        %vm1089 = vcmp.lt.s32.totalorder %v1068, 16
        %vm1090 = vcmp.lt.s32.totalorder %v1069, 16
        %vm1091 = vcmp.lt.s32.totalorder %v1070, 16
        %s1092 = scalar_select %p1071, 1, 0
        %v1093 = vstv %s1092
        %vm1094 = vcmp.eq.s32.totalorder %v1093, 1
        %vm1095 = vmand %vm1094, %vm1072
        %vm1096 = vmand %vm1094, %vm1073
        %vm1097 = vmand %vm1094, %vm1074
        %vm1098 = vmand %vm1094, %vm1075
        %vm1099 = vmand %vm1094, %vm1076
        %vm1100 = vmand %vm1094, %vm1077
        %vm1101 = vmand %vm1094, %vm1078
        %vm1102 = vmand %vm1094, %vm1079
        %vm1103 = vmand %vm1094, %vm1080
        %vm1104 = vmand %vm1094, %vm1081
        %vm1105 = vmand %vm1094, %vm1082
        %vm1106 = vmand %vm1094, %vm1083
        %vm1107 = vmand %vm1094, %vm1084
        %vm1108 = vmand %vm1094, %vm1085
        %vm1109 = vmand %vm1094, %vm1086
        %vm1110 = vmand %vm1094, %vm1087
        %vm1111 = vmand %vm1094, %vm1088
        %vm1112 = vmand %vm1094, %vm1089
        %vm1113 = vmand %vm1094, %vm1090
        %vm1114 = vmand %vm1094, %vm1091
        %p1115 = scmp.eq.s32.totalorder %s25, 1
        %vm1116 = vcmp.ge.s32.totalorder %v1051, 144
        %vm1117 = vcmp.ge.s32.totalorder %v1052, 144
        %vm1118 = vcmp.ge.s32.totalorder %v1053, 144
        %vm1119 = vcmp.ge.s32.totalorder %v1054, 144
        %vm1120 = vcmp.ge.s32.totalorder %v1055, 144
        %vm1121 = vcmp.ge.s32.totalorder %v1056, 144
        %vm1122 = vcmp.ge.s32.totalorder %v1057, 144
        %vm1123 = vcmp.ge.s32.totalorder %v1058, 144
        %vm1124 = vcmp.ge.s32.totalorder %v1059, 144
        %vm1125 = vcmp.ge.s32.totalorder %v1060, 144
        %vm1126 = vcmp.ge.s32.totalorder %v1061, 144
        %vm1127 = vcmp.ge.s32.totalorder %v1062, 144
        %vm1128 = vcmp.ge.s32.totalorder %v1063, 144
        %vm1129 = vcmp.ge.s32.totalorder %v1064, 144
        %vm1130 = vcmp.ge.s32.totalorder %v1065, 144
        %vm1131 = vcmp.ge.s32.totalorder %v1066, 144
        %vm1132 = vcmp.ge.s32.totalorder %v1067, 144
        %vm1133 = vcmp.ge.s32.totalorder %v1068, 144
        %vm1134 = vcmp.ge.s32.totalorder %v1069, 144
        %vm1135 = vcmp.ge.s32.totalorder %v1070, 144
        %s1136 = scalar_select %p1115, 1, 0
        %v1137 = vstv %s1136
        %vm1138 = vcmp.eq.s32.totalorder %v1137, 1
        %vm1139 = vmand %vm1138, %vm1116
        %vm1140 = vmand %vm1138, %vm1117
        %vm1141 = vmand %vm1138, %vm1118
        %vm1142 = vmand %vm1138, %vm1119
        %vm1143 = vmand %vm1138, %vm1120
        %vm1144 = vmand %vm1138, %vm1121
        %vm1145 = vmand %vm1138, %vm1122
        %vm1146 = vmand %vm1138, %vm1123
        %vm1147 = vmand %vm1138, %vm1124
        %vm1148 = vmand %vm1138, %vm1125
        %vm1149 = vmand %vm1138, %vm1126
        %vm1150 = vmand %vm1138, %vm1127
        %vm1151 = vmand %vm1138, %vm1128
        %vm1152 = vmand %vm1138, %vm1129
        %vm1153 = vmand %vm1138, %vm1130
        %vm1154 = vmand %vm1138, %vm1131
        %vm1155 = vmand %vm1138, %vm1132
        %vm1156 = vmand %vm1138, %vm1133
        %vm1157 = vmand %vm1138, %vm1134
        %vm1158 = vmand %vm1138, %vm1135
        %vm1159 = vmor %vm1095, %vm1139
        %vm1160 = vmor %vm1096, %vm1140
        %vm1161 = vmor %vm1097, %vm1141
        %vm1162 = vmor %vm1098, %vm1142
        %vm1163 = vmor %vm1099, %vm1143
        %vm1164 = vmor %vm1100, %vm1144
        %vm1165 = vmor %vm1101, %vm1145
        %vm1166 = vmor %vm1102, %vm1146
        %vm1167 = vmor %vm1103, %vm1147
        %vm1168 = vmor %vm1104, %vm1148
        %vm1169 = vmor %vm1105, %vm1149
        %vm1170 = vmor %vm1106, %vm1150
        %vm1171 = vmor %vm1107, %vm1151
        %vm1172 = vmor %vm1108, %vm1152
        %vm1173 = vmor %vm1109, %vm1153
        %vm1174 = vmor %vm1110, %vm1154
        %vm1175 = vmor %vm1111, %vm1155
        %vm1176 = vmor %vm1112, %vm1156
        %vm1177 = vmor %vm1113, %vm1157
        %vm1178 = vmor %vm1114, %vm1158
        %v1179 = vsel %vm1159, 1, 0
        %v1180 = vsel %vm1160, 1, 0
        %v1181 = vsel %vm1161, 1, 0
        %v1182 = vsel %vm1162, 1, 0
        %v1183 = vsel %vm1163, 1, 0
        %v1184 = vsel %vm1164, 1, 0
        %v1185 = vsel %vm1165, 1, 0
        %v1186 = vsel %vm1166, 1, 0
        %v1187 = vsel %vm1167, 1, 0
        %v1188 = vsel %vm1168, 1, 0
        %v1189 = vsel %vm1169, 1, 0
        %v1190 = vsel %vm1170, 1, 0
        %v1191 = vsel %vm1171, 1, 0
        %v1192 = vsel %vm1172, 1, 0
        %v1193 = vsel %vm1173, 1, 0
        %v1194 = vsel %vm1174, 1, 0
        %v1195 = vsel %vm1175, 1, 0
        %v1196 = vsel %vm1176, 1, 0
        %v1197 = vsel %vm1177, 1, 0
        %v1198 = vsel %vm1178, 1, 0
        %vm1199 = vcmp.eq.s32.totalorder %v1179, 1
        %vm1200 = vcmp.eq.s32.totalorder %v1180, 1
        %vm1201 = vcmp.eq.s32.totalorder %v1181, 1
        %vm1202 = vcmp.eq.s32.totalorder %v1182, 1
        %vm1203 = vcmp.eq.s32.totalorder %v1183, 1
        %vm1204 = vcmp.eq.s32.totalorder %v1184, 1
        %vm1205 = vcmp.eq.s32.totalorder %v1185, 1
        %vm1206 = vcmp.eq.s32.totalorder %v1186, 1
        %vm1207 = vcmp.eq.s32.totalorder %v1187, 1
        %vm1208 = vcmp.eq.s32.totalorder %v1188, 1
        %vm1209 = vcmp.eq.s32.totalorder %v1189, 1
        %vm1210 = vcmp.eq.s32.totalorder %v1190, 1
        %vm1211 = vcmp.eq.s32.totalorder %v1191, 1
        %vm1212 = vcmp.eq.s32.totalorder %v1192, 1
        %vm1213 = vcmp.eq.s32.totalorder %v1193, 1
        %vm1214 = vcmp.eq.s32.totalorder %v1194, 1
        %vm1215 = vcmp.eq.s32.totalorder %v1195, 1
        %vm1216 = vcmp.eq.s32.totalorder %v1196, 1
        %vm1217 = vcmp.eq.s32.totalorder %v1197, 1
        %vm1218 = vcmp.eq.s32.totalorder %v1198, 1
        %v1219 = vsel %vm1199, 0.0, %v1010
        %v1220 = vsel %vm1199, 0.0, %v1011
        %v1221 = vsel %vm1200, 0.0, %v1012
        %v1222 = vsel %vm1200, 0.0, %v1013
        %v1223 = vsel %vm1201, 0.0, %v1014
        %v1224 = vsel %vm1201, 0.0, %v1015
        %v1225 = vsel %vm1202, 0.0, %v1016
        %v1226 = vsel %vm1202, 0.0, %v1017
        %v1227 = vsel %vm1203, 0.0, %v1018
        %v1228 = vsel %vm1203, 0.0, %v1019
        %v1229 = vsel %vm1204, 0.0, %v1020
        %v1230 = vsel %vm1204, 0.0, %v1021
        %v1231 = vsel %vm1205, 0.0, %v1022
        %v1232 = vsel %vm1205, 0.0, %v1023
        %v1233 = vsel %vm1206, 0.0, %v1024
        %v1234 = vsel %vm1206, 0.0, %v1025
        %v1235 = vsel %vm1207, 0.0, %v1026
        %v1236 = vsel %vm1207, 0.0, %v1027
        %v1237 = vsel %vm1208, 0.0, %v1028
        %v1238 = vsel %vm1208, 0.0, %v1029
        %v1239 = vsel %vm1209, 0.0, %v1030
        %v1240 = vsel %vm1209, 0.0, %v1031
        %v1241 = vsel %vm1210, 0.0, %v1032
        %v1242 = vsel %vm1210, 0.0, %v1033
        %v1243 = vsel %vm1211, 0.0, %v1034
        %v1244 = vsel %vm1211, 0.0, %v1035
        %v1245 = vsel %vm1212, 0.0, %v1036
        %v1246 = vsel %vm1212, 0.0, %v1037
        %v1247 = vsel %vm1213, 0.0, %v1038
        %v1248 = vsel %vm1213, 0.0, %v1039
        %v1249 = vsel %vm1214, 0.0, %v1040
        %v1250 = vsel %vm1214, 0.0, %v1041
        %v1251 = vsel %vm1215, 0.0, %v1042
        %v1252 = vsel %vm1215, 0.0, %v1043
        %v1253 = vsel %vm1216, 0.0, %v1044
        %v1254 = vsel %vm1216, 0.0, %v1045
        %v1255 = vsel %vm1217, 0.0, %v1046
        %v1256 = vsel %vm1217, 0.0, %v1047
        %v1257 = vsel %vm1218, 0.0, %v1048
        %v1258 = vsel %vm1218, 0.0, %v1049
        %v1259 = vpack.c.bf16 %v1221, %v1219
        %v1260 = vpack.c.bf16 %v1222, %v1220
        %v1261 = vpack.c.bf16 %v1225, %v1223
        %v1262 = vpack.c.bf16 %v1226, %v1224
        %v1263 = vpack.c.bf16 %v1229, %v1227
        %v1264 = vpack.c.bf16 %v1230, %v1228
        %v1265 = vpack.c.bf16 %v1233, %v1231
        %v1266 = vpack.c.bf16 %v1234, %v1232
        %v1267 = vpack.c.bf16 %v1237, %v1235
        %v1268 = vpack.c.bf16 %v1238, %v1236
        %v1269 = vpack.c.bf16 %v1241, %v1239
        %v1270 = vpack.c.bf16 %v1242, %v1240
        %v1271 = vpack.c.bf16 %v1245, %v1243
        %v1272 = vpack.c.bf16 %v1246, %v1244
        %v1273 = vpack.c.bf16 %v1249, %v1247
        %v1274 = vpack.c.bf16 %v1250, %v1248
        %v1275 = vpack.c.bf16 %v1253, %v1251
        %v1276 = vpack.c.bf16 %v1254, %v1252
        %v1277 = vpack.c.bf16 %v1257, %v1255
        %v1278 = vpack.c.bf16 %v1258, %v1256
        %v1279 = vld [vmem:[#allocation2] sm:$0xff]
        %v1280 = vld [vmem:[#allocation2 + $0x8] sm:$0xff]
        %v1281 = vld [vmem:[#allocation2 + $0x10] sm:$0xff]
        %v1282 = vld [vmem:[#allocation2 + $0x18] sm:$0xff]
        %v1283 = vld [vmem:[#allocation2 + $0x20] sm:$0xf]
        %v1284 = vld [vmem:[#allocation2 + $0x24] sm:$0xff]
        %v1285 = vld [vmem:[#allocation2 + $0x2c] sm:$0xff]
        %v1286 = vld [vmem:[#allocation2 + $0x34] sm:$0xff]
        %v1287 = vld [vmem:[#allocation2 + $0x3c] sm:$0xff]
        %v1288 = vld [vmem:[#allocation2 + $0x44] sm:$0xf]
        %v1289 = vld [vmem:[#allocation2 + $0x48] sm:$0xff]
        %v1290 = vld [vmem:[#allocation2 + $0x50] sm:$0xff]
        %v1291 = vld [vmem:[#allocation2 + $0x58] sm:$0xff]
        %v1292 = vld [vmem:[#allocation2 + $0x60] sm:$0xff]
        %v1293 = vld [vmem:[#allocation2 + $0x68] sm:$0xf]
        %v1294 = vld [vmem:[#allocation2 + $0x6c] sm:$0xff]
        %v1295 = vld [vmem:[#allocation2 + $0x74] sm:$0xff]
        %v1296 = vld [vmem:[#allocation2 + $0x7c] sm:$0xff]
        %v1297 = vld [vmem:[#allocation2 + $0x84] sm:$0xff]
        %v1298 = vld [vmem:[#allocation2 + $0x8c] sm:$0xf]
        %v1299 = vld [vmem:[#allocation2 + $0x90] sm:$0xff]
        %v1300 = vld [vmem:[#allocation2 + $0x98] sm:$0xff]
        %v1301 = vld [vmem:[#allocation2 + $0xa0] sm:$0xff]
        %v1302 = vld [vmem:[#allocation2 + $0xa8] sm:$0xff]
        %v1303 = vld [vmem:[#allocation2 + $0xb0] sm:$0xf]
        %v1304 = vld [vmem:[#allocation2 + $0xb4] sm:$0xff]
        %v1305 = vld [vmem:[#allocation2 + $0xbc] sm:$0xff]
        %v1306 = vld [vmem:[#allocation2 + $0xc4] sm:$0xff]
        %v1307 = vld [vmem:[#allocation2 + $0xcc] sm:$0xff]
        %v1308 = vld [vmem:[#allocation2 + $0xd4] sm:$0xf]
        %v1309 = vld [vmem:[#allocation2 + $0xd8] sm:$0xff]
        %v1310 = vld [vmem:[#allocation2 + $0xe0] sm:$0xff]
        %v1311 = vld [vmem:[#allocation2 + $0xe8] sm:$0xff]
        %v1312 = vld [vmem:[#allocation2 + $0xf0] sm:$0xff]
        %v1313 = vld [vmem:[#allocation2 + $0xf8] sm:$0xf]
        %v1314 = vld [vmem:[#allocation2 + $0xfc] sm:$0xff]
        %v1315 = vld [vmem:[#allocation2 + $0x104] sm:$0xff]
        %v1316 = vld [vmem:[#allocation2 + $0x10c] sm:$0xff]
        %v1317 = vld [vmem:[#allocation2 + $0x114] sm:$0xff]
        %v1318 = vld [vmem:[#allocation2 + $0x11c] sm:$0xf]
        %v1319 = vld [vmem:[#allocation2 + $0x120] sm:$0xff]
        %v1320 = vld [vmem:[#allocation2 + $0x128] sm:$0xff]
        %v1321 = vld [vmem:[#allocation2 + $0x130] sm:$0xff]
        %v1322 = vld [vmem:[#allocation2 + $0x138] sm:$0xff]
        %v1323 = vld [vmem:[#allocation2 + $0x140] sm:$0xf]
        %v1324 = vld [vmem:[#allocation2 + $0x144] sm:$0xff]
        %v1325 = vld [vmem:[#allocation2 + $0x14c] sm:$0xff]
        %v1326 = vld [vmem:[#allocation2 + $0x154] sm:$0xff]
        %v1327 = vld [vmem:[#allocation2 + $0x15c] sm:$0xff]
        %v1328 = vld [vmem:[#allocation2 + $0x164] sm:$0xf]
        %v1329 = vld [vmem:[#allocation2 + $0x168] sm:$0xff]
        %v1330 = vld [vmem:[#allocation2 + $0x170] sm:$0xff]
        %v1331 = vld [vmem:[#allocation2 + $0x178] sm:$0xff]
        %v1332 = vld [vmem:[#allocation2 + $0x180] sm:$0xff]
        %v1333 = vld [vmem:[#allocation2 + $0x188] sm:$0xf]
        %v1334 = vld [vmem:[#allocation2 + $0x18c] sm:$0xff]
        %v1335 = vld [vmem:[#allocation2 + $0x194] sm:$0xff]
        %v1336 = vld [vmem:[#allocation2 + $0x19c] sm:$0xff]
        %v1337 = vld [vmem:[#allocation2 + $0x1a4] sm:$0xff]
        %v1338 = vld [vmem:[#allocation2 + $0x1ac] sm:$0xf]
        %v1339 = vld [vmem:[#allocation2 + $0x1b0] sm:$0xff]
        %v1340 = vld [vmem:[#allocation2 + $0x1b8] sm:$0xff]
        %v1341 = vld [vmem:[#allocation2 + $0x1c0] sm:$0xff]
        %v1342 = vld [vmem:[#allocation2 + $0x1c8] sm:$0xff]
        %v1343 = vld [vmem:[#allocation2 + $0x1d0] sm:$0xf]
        %v1344 = vld [vmem:[#allocation2 + $0x1d4] sm:$0xff]
        %v1345 = vld [vmem:[#allocation2 + $0x1dc] sm:$0xff]
        %v1346 = vld [vmem:[#allocation2 + $0x1e4] sm:$0xff]
        %v1347 = vld [vmem:[#allocation2 + $0x1ec] sm:$0xff]
        %v1348 = vld [vmem:[#allocation2 + $0x1f4] sm:$0xf]
        %v1349 = vld [vmem:[#allocation2 + $0x1f8] sm:$0xff]
        %v1350 = vld [vmem:[#allocation2 + $0x200] sm:$0xff]
        %v1351 = vld [vmem:[#allocation2 + $0x208] sm:$0xff]
        %v1352 = vld [vmem:[#allocation2 + $0x210] sm:$0xff]
        %v1353 = vld [vmem:[#allocation2 + $0x218] sm:$0xf]
        %v1354 = vld [vmem:[#allocation2 + $0x21c] sm:$0xff]
        %v1355 = vld [vmem:[#allocation2 + $0x224] sm:$0xff]
        %v1356 = vld [vmem:[#allocation2 + $0x22c] sm:$0xff]
        %v1357 = vld [vmem:[#allocation2 + $0x234] sm:$0xff]
        %v1358 = vld [vmem:[#allocation2 + $0x23c] sm:$0xf]
        %v1359 = vld [vmem:[#allocation2 + $0x240] sm:$0xff]
        %v1360 = vld [vmem:[#allocation2 + $0x248] sm:$0xff]
        %v1361 = vld [vmem:[#allocation2 + $0x250] sm:$0xff]
        %v1362 = vld [vmem:[#allocation2 + $0x258] sm:$0xff]
        %v1363 = vld [vmem:[#allocation2 + $0x260] sm:$0xf]
        %v1364 = vld [vmem:[#allocation2 + $0x264] sm:$0xff]
        %v1365 = vld [vmem:[#allocation2 + $0x26c] sm:$0xff]
        %v1366 = vld [vmem:[#allocation2 + $0x274] sm:$0xff]
        %v1367 = vld [vmem:[#allocation2 + $0x27c] sm:$0xff]
        %v1368 = vld [vmem:[#allocation2 + $0x284] sm:$0xf]
        %v1369 = vld [vmem:[#allocation2 + $0x288] sm:$0xff]
        %v1370 = vld [vmem:[#allocation2 + $0x290] sm:$0xff]
        %v1371 = vld [vmem:[#allocation2 + $0x298] sm:$0xff]
        %v1372 = vld [vmem:[#allocation2 + $0x2a0] sm:$0xff]
        %v1373 = vld [vmem:[#allocation2 + $0x2a8] sm:$0xf]
        %v1374 = vld [vmem:[#allocation2 + $0x2ac] sm:$0xff]
        %v1375 = vld [vmem:[#allocation2 + $0x2b4] sm:$0xff]
        %v1376 = vld [vmem:[#allocation2 + $0x2bc] sm:$0xff]
        %v1377 = vld [vmem:[#allocation2 + $0x2c4] sm:$0xff]
        %v1378 = vld [vmem:[#allocation2 + $0x2cc] sm:$0xf]
        %v1379 = vld [vmem:[#allocation2 + $0x2d0] sm:$0xff]
        %v1380 = vld [vmem:[#allocation2 + $0x2d8] sm:$0xff]
        %v1381 = vld [vmem:[#allocation2 + $0x2e0] sm:$0xff]
        %v1382 = vld [vmem:[#allocation2 + $0x2e8] sm:$0xff]
        %v1383 = vld [vmem:[#allocation2 + $0x2f0] sm:$0xf]
        %v1384 = vld [vmem:[#allocation2 + $0x2f4] sm:$0xff]
        %v1385 = vld [vmem:[#allocation2 + $0x2fc] sm:$0xff]
        %v1386 = vld [vmem:[#allocation2 + $0x304] sm:$0xff]
        %v1387 = vld [vmem:[#allocation2 + $0x30c] sm:$0xff]
        %v1388 = vld [vmem:[#allocation2 + $0x314] sm:$0xf]
        %v1389 = vld [vmem:[#allocation2 + $0x318] sm:$0xff]
        %v1390 = vld [vmem:[#allocation2 + $0x320] sm:$0xff]
        %v1391 = vld [vmem:[#allocation2 + $0x328] sm:$0xff]
        %v1392 = vld [vmem:[#allocation2 + $0x330] sm:$0xff]
        %v1393 = vld [vmem:[#allocation2 + $0x338] sm:$0xf]
        %v1394 = vld [vmem:[#allocation2 + $0x33c] sm:$0xff]
        %v1395 = vld [vmem:[#allocation2 + $0x344] sm:$0xff]
        %v1396 = vld [vmem:[#allocation2 + $0x34c] sm:$0xff]
        %v1397 = vld [vmem:[#allocation2 + $0x354] sm:$0xff]
        %v1398 = vld [vmem:[#allocation2 + $0x35c] sm:$0xf]
        %v1399 = vld [vmem:[#allocation2 + $0x360] sm:$0xff]
        %v1400 = vld [vmem:[#allocation2 + $0x368] sm:$0xff]
        %v1401 = vld [vmem:[#allocation2 + $0x370] sm:$0xff]
        %v1402 = vld [vmem:[#allocation2 + $0x378] sm:$0xff]
        %v1403 = vld [vmem:[#allocation2 + $0x380] sm:$0xf]
        %v1404 = vld [vmem:[#allocation2 + $0x384] sm:$0xff]
        %v1405 = vld [vmem:[#allocation2 + $0x38c] sm:$0xff]
        %v1406 = vld [vmem:[#allocation2 + $0x394] sm:$0xff]
        %v1407 = vld [vmem:[#allocation2 + $0x39c] sm:$0xff]
        %v1408 = vld [vmem:[#allocation2 + $0x3a4] sm:$0xf]
        %v1409 = vld [vmem:[#allocation2 + $0x3a8] sm:$0xff]
        %v1410 = vld [vmem:[#allocation2 + $0x3b0] sm:$0xff]
        %v1411 = vld [vmem:[#allocation2 + $0x3b8] sm:$0xff]
        %v1412 = vld [vmem:[#allocation2 + $0x3c0] sm:$0xff]
        %v1413 = vld [vmem:[#allocation2 + $0x3c8] sm:$0xf]
        %v1414 = vld [vmem:[#allocation2 + $0x3cc] sm:$0xff]
        %v1415 = vld [vmem:[#allocation2 + $0x3d4] sm:$0xff]
        %v1416 = vld [vmem:[#allocation2 + $0x3dc] sm:$0xff]
        %v1417 = vld [vmem:[#allocation2 + $0x3e4] sm:$0xff]
        %v1418 = vld [vmem:[#allocation2 + $0x3ec] sm:$0xf]
        %v1419 = vld [vmem:[#allocation2 + $0x3f0] sm:$0xff]
        %v1420 = vld [vmem:[#allocation2 + $0x3f8] sm:$0xff]
        %v1421 = vld [vmem:[#allocation2 + $0x400] sm:$0xff]
        %v1422 = vld [vmem:[#allocation2 + $0x408] sm:$0xff]
        %v1423 = vld [vmem:[#allocation2 + $0x410] sm:$0xf]
        %v1424 = vld [vmem:[#allocation2 + $0x414] sm:$0xff]
        %v1425 = vld [vmem:[#allocation2 + $0x41c] sm:$0xff]
        %v1426 = vld [vmem:[#allocation2 + $0x424] sm:$0xff]
        %v1427 = vld [vmem:[#allocation2 + $0x42c] sm:$0xff]
        %v1428 = vld [vmem:[#allocation2 + $0x434] sm:$0xf]
        %v1429 = vld [vmem:[#allocation2 + $0x438] sm:$0xff]
        %v1430 = vld [vmem:[#allocation2 + $0x440] sm:$0xff]
        %v1431 = vld [vmem:[#allocation2 + $0x448] sm:$0xff]
        %v1432 = vld [vmem:[#allocation2 + $0x450] sm:$0xff]
        %v1433 = vld [vmem:[#allocation2 + $0x458] sm:$0xf]
        %v1434 = vld [vmem:[#allocation2 + $0x45c] sm:$0xff]
        %v1435 = vld [vmem:[#allocation2 + $0x464] sm:$0xff]
        %v1436 = vld [vmem:[#allocation2 + $0x46c] sm:$0xff]
        %v1437 = vld [vmem:[#allocation2 + $0x474] sm:$0xff]
        %v1438 = vld [vmem:[#allocation2 + $0x47c] sm:$0xf]
        %v1599 = vunpack.c.l.b16 %v1279
        %v1600 = vunpack.c.h.b16 %v1279
        %v1601 = vunpack.c.l.b16 %v1280
        %v1602 = vunpack.c.h.b16 %v1280
        %v1603 = vunpack.c.l.b16 %v1281
        %v1604 = vunpack.c.h.b16 %v1281
        %v1605 = vunpack.c.l.b16 %v1282
        %v1606 = vunpack.c.h.b16 %v1282
        %v1607 = vunpack.c.l.b16 %v1283
        %v1608 = vunpack.c.l.b16 %v1284
        %v1609 = vunpack.c.h.b16 %v1284
        %v1610 = vunpack.c.l.b16 %v1285
        %v1611 = vunpack.c.h.b16 %v1285
        %v1612 = vunpack.c.l.b16 %v1286
        %v1613 = vunpack.c.h.b16 %v1286
        %v1614 = vunpack.c.l.b16 %v1287
        %v1615 = vunpack.c.h.b16 %v1287
        %v1616 = vunpack.c.l.b16 %v1288
        %v1617 = vunpack.c.l.b16 %v1289
        %v1618 = vunpack.c.h.b16 %v1289
        %v1619 = vunpack.c.l.b16 %v1290
        %v1620 = vunpack.c.h.b16 %v1290
        %v1621 = vunpack.c.l.b16 %v1291
        %v1622 = vunpack.c.h.b16 %v1291
        %v1623 = vunpack.c.l.b16 %v1292
        %v1624 = vunpack.c.h.b16 %v1292
        %v1625 = vunpack.c.l.b16 %v1293
        %v1626 = vunpack.c.l.b16 %v1294
        %v1627 = vunpack.c.h.b16 %v1294
        %v1628 = vunpack.c.l.b16 %v1295
        %v1629 = vunpack.c.h.b16 %v1295
        %v1630 = vunpack.c.l.b16 %v1296
        %v1631 = vunpack.c.h.b16 %v1296
        %v1632 = vunpack.c.l.b16 %v1297
        %v1633 = vunpack.c.h.b16 %v1297
        %v1634 = vunpack.c.l.b16 %v1298
        %v1635 = vunpack.c.l.b16 %v1299
        %v1636 = vunpack.c.h.b16 %v1299
        %v1637 = vunpack.c.l.b16 %v1300
        %v1638 = vunpack.c.h.b16 %v1300
        %v1639 = vunpack.c.l.b16 %v1301
        %v1640 = vunpack.c.h.b16 %v1301
        %v1641 = vunpack.c.l.b16 %v1302
        %v1642 = vunpack.c.h.b16 %v1302
        %v1643 = vunpack.c.l.b16 %v1303
        %v1644 = vunpack.c.l.b16 %v1304
        %v1645 = vunpack.c.h.b16 %v1304
        %v1646 = vunpack.c.l.b16 %v1305
        %v1647 = vunpack.c.h.b16 %v1305
        %v1648 = vunpack.c.l.b16 %v1306
        %v1649 = vunpack.c.h.b16 %v1306
        %v1650 = vunpack.c.l.b16 %v1307
        %v1651 = vunpack.c.h.b16 %v1307
        %v1652 = vunpack.c.l.b16 %v1308
        %v1653 = vunpack.c.l.b16 %v1309
        %v1654 = vunpack.c.h.b16 %v1309
        %v1655 = vunpack.c.l.b16 %v1310
        %v1656 = vunpack.c.h.b16 %v1310
        %v1657 = vunpack.c.l.b16 %v1311
        %v1658 = vunpack.c.h.b16 %v1311
        %v1659 = vunpack.c.l.b16 %v1312
        %v1660 = vunpack.c.h.b16 %v1312
        %v1661 = vunpack.c.l.b16 %v1313
        %v1662 = vunpack.c.l.b16 %v1314
        %v1663 = vunpack.c.h.b16 %v1314
        %v1664 = vunpack.c.l.b16 %v1315
        %v1665 = vunpack.c.h.b16 %v1315
        %v1666 = vunpack.c.l.b16 %v1316
        %v1667 = vunpack.c.h.b16 %v1316
        %v1668 = vunpack.c.l.b16 %v1317
        %v1669 = vunpack.c.h.b16 %v1317
        %v1670 = vunpack.c.l.b16 %v1318
        %v1671 = vunpack.c.l.b16 %v1319
        %v1672 = vunpack.c.h.b16 %v1319
        %v1673 = vunpack.c.l.b16 %v1320
        %v1674 = vunpack.c.h.b16 %v1320
        %v1675 = vunpack.c.l.b16 %v1321
        %v1676 = vunpack.c.h.b16 %v1321
        %v1677 = vunpack.c.l.b16 %v1322
        %v1678 = vunpack.c.h.b16 %v1322
        %v1679 = vunpack.c.l.b16 %v1323
        %v1680 = vunpack.c.l.b16 %v1324
        %v1681 = vunpack.c.h.b16 %v1324
        %v1682 = vunpack.c.l.b16 %v1325
        %v1683 = vunpack.c.h.b16 %v1325
        %v1684 = vunpack.c.l.b16 %v1326
        %v1685 = vunpack.c.h.b16 %v1326
        %v1686 = vunpack.c.l.b16 %v1327
        %v1687 = vunpack.c.h.b16 %v1327
        %v1688 = vunpack.c.l.b16 %v1328
        %v1689 = vunpack.c.l.b16 %v1329
        %v1690 = vunpack.c.h.b16 %v1329
        %v1691 = vunpack.c.l.b16 %v1330
        %v1692 = vunpack.c.h.b16 %v1330
        %v1693 = vunpack.c.l.b16 %v1331
        %v1694 = vunpack.c.h.b16 %v1331
        %v1695 = vunpack.c.l.b16 %v1332
        %v1696 = vunpack.c.h.b16 %v1332
        %v1697 = vunpack.c.l.b16 %v1333
        %v1698 = vunpack.c.l.b16 %v1334
        %v1699 = vunpack.c.h.b16 %v1334
        %v1700 = vunpack.c.l.b16 %v1335
        %v1701 = vunpack.c.h.b16 %v1335
        %v1702 = vunpack.c.l.b16 %v1336
        %v1703 = vunpack.c.h.b16 %v1336
        %v1704 = vunpack.c.l.b16 %v1337
        %v1705 = vunpack.c.h.b16 %v1337
        %v1706 = vunpack.c.l.b16 %v1338
        %v1707 = vunpack.c.l.b16 %v1339
        %v1708 = vunpack.c.h.b16 %v1339
        %v1709 = vunpack.c.l.b16 %v1340
        %v1710 = vunpack.c.h.b16 %v1340
        %v1711 = vunpack.c.l.b16 %v1341
        %v1712 = vunpack.c.h.b16 %v1341
        %v1713 = vunpack.c.l.b16 %v1342
        %v1714 = vunpack.c.h.b16 %v1342
        %v1715 = vunpack.c.l.b16 %v1343
        %v1716 = vunpack.c.l.b16 %v1344
        %v1717 = vunpack.c.h.b16 %v1344
        %v1718 = vunpack.c.l.b16 %v1345
        %v1719 = vunpack.c.h.b16 %v1345
        %v1720 = vunpack.c.l.b16 %v1346
        %v1721 = vunpack.c.h.b16 %v1346
        %v1722 = vunpack.c.l.b16 %v1347
        %v1723 = vunpack.c.h.b16 %v1347
        %v1724 = vunpack.c.l.b16 %v1348
        %v1725 = vunpack.c.l.b16 %v1349
        %v1726 = vunpack.c.h.b16 %v1349
        %v1727 = vunpack.c.l.b16 %v1350
        %v1728 = vunpack.c.h.b16 %v1350
        %v1729 = vunpack.c.l.b16 %v1351
        %v1730 = vunpack.c.h.b16 %v1351
        %v1731 = vunpack.c.l.b16 %v1352
        %v1732 = vunpack.c.h.b16 %v1352
        %v1733 = vunpack.c.l.b16 %v1353
        %v1734 = vunpack.c.l.b16 %v1354
        %v1735 = vunpack.c.h.b16 %v1354
        %v1736 = vunpack.c.l.b16 %v1355
        %v1737 = vunpack.c.h.b16 %v1355
        %v1738 = vunpack.c.l.b16 %v1356
        %v1739 = vunpack.c.h.b16 %v1356
        %v1740 = vunpack.c.l.b16 %v1357
        %v1741 = vunpack.c.h.b16 %v1357
        %v1742 = vunpack.c.l.b16 %v1358
        %v1743 = vunpack.c.l.b16 %v1359
        %v1744 = vunpack.c.h.b16 %v1359
        %v1745 = vunpack.c.l.b16 %v1360
        %v1746 = vunpack.c.h.b16 %v1360
        %v1747 = vunpack.c.l.b16 %v1361
        %v1748 = vunpack.c.h.b16 %v1361
        %v1749 = vunpack.c.l.b16 %v1362
        %v1750 = vunpack.c.h.b16 %v1362
        %v1751 = vunpack.c.l.b16 %v1363
        %v1752 = vunpack.c.l.b16 %v1364
        %v1753 = vunpack.c.h.b16 %v1364
        %v1754 = vunpack.c.l.b16 %v1365
        %v1755 = vunpack.c.h.b16 %v1365
        %v1756 = vunpack.c.l.b16 %v1366
        %v1757 = vunpack.c.h.b16 %v1366
        %v1758 = vunpack.c.l.b16 %v1367
        %v1759 = vunpack.c.h.b16 %v1367
        %v1760 = vunpack.c.l.b16 %v1368
        %v1761 = vunpack.c.l.b16 %v1369
        %v1762 = vunpack.c.h.b16 %v1369
        %v1763 = vunpack.c.l.b16 %v1370
        %v1764 = vunpack.c.h.b16 %v1370
        %v1765 = vunpack.c.l.b16 %v1371
        %v1766 = vunpack.c.h.b16 %v1371
        %v1767 = vunpack.c.l.b16 %v1372
        %v1768 = vunpack.c.h.b16 %v1372
        %v1769 = vunpack.c.l.b16 %v1373
        %v1770 = vunpack.c.l.b16 %v1374
        %v1771 = vunpack.c.h.b16 %v1374
        %v1772 = vunpack.c.l.b16 %v1375
        %v1773 = vunpack.c.h.b16 %v1375
        %v1774 = vunpack.c.l.b16 %v1376
        %v1775 = vunpack.c.h.b16 %v1376
        %v1776 = vunpack.c.l.b16 %v1377
        %v1777 = vunpack.c.h.b16 %v1377
        %v1778 = vunpack.c.l.b16 %v1378
        %v1779 = vunpack.c.l.b16 %v1379
        %v1780 = vunpack.c.h.b16 %v1379
        %v1781 = vunpack.c.l.b16 %v1380
        %v1782 = vunpack.c.h.b16 %v1380
        %v1783 = vunpack.c.l.b16 %v1381
        %v1784 = vunpack.c.h.b16 %v1381
        %v1785 = vunpack.c.l.b16 %v1382
        %v1786 = vunpack.c.h.b16 %v1382
        %v1787 = vunpack.c.l.b16 %v1383
        %v1788 = vunpack.c.l.b16 %v1384
        %v1789 = vunpack.c.h.b16 %v1384
        %v1790 = vunpack.c.l.b16 %v1385
        %v1791 = vunpack.c.h.b16 %v1385
        %v1792 = vunpack.c.l.b16 %v1386
        %v1793 = vunpack.c.h.b16 %v1386
        %v1794 = vunpack.c.l.b16 %v1387
        %v1795 = vunpack.c.h.b16 %v1387
        %v1796 = vunpack.c.l.b16 %v1388
        %v1797 = vunpack.c.l.b16 %v1389
        %v1798 = vunpack.c.h.b16 %v1389
        %v1799 = vunpack.c.l.b16 %v1390
        %v1800 = vunpack.c.h.b16 %v1390
        %v1801 = vunpack.c.l.b16 %v1391
        %v1802 = vunpack.c.h.b16 %v1391
        %v1803 = vunpack.c.l.b16 %v1392
        %v1804 = vunpack.c.h.b16 %v1392
        %v1805 = vunpack.c.l.b16 %v1393
        %v1806 = vunpack.c.l.b16 %v1394
        %v1807 = vunpack.c.h.b16 %v1394
        %v1808 = vunpack.c.l.b16 %v1395
        %v1809 = vunpack.c.h.b16 %v1395
        %v1810 = vunpack.c.l.b16 %v1396
        %v1811 = vunpack.c.h.b16 %v1396
        %v1812 = vunpack.c.l.b16 %v1397
        %v1813 = vunpack.c.h.b16 %v1397
        %v1814 = vunpack.c.l.b16 %v1398
        %v1815 = vunpack.c.l.b16 %v1399
        %v1816 = vunpack.c.h.b16 %v1399
        %v1817 = vunpack.c.l.b16 %v1400
        %v1818 = vunpack.c.h.b16 %v1400
        %v1819 = vunpack.c.l.b16 %v1401
        %v1820 = vunpack.c.h.b16 %v1401
        %v1821 = vunpack.c.l.b16 %v1402
        %v1822 = vunpack.c.h.b16 %v1402
        %v1823 = vunpack.c.l.b16 %v1403
        %v1824 = vunpack.c.l.b16 %v1404
        %v1825 = vunpack.c.h.b16 %v1404
        %v1826 = vunpack.c.l.b16 %v1405
        %v1827 = vunpack.c.h.b16 %v1405
        %v1828 = vunpack.c.l.b16 %v1406
        %v1829 = vunpack.c.h.b16 %v1406
        %v1830 = vunpack.c.l.b16 %v1407
        %v1831 = vunpack.c.h.b16 %v1407
        %v1832 = vunpack.c.l.b16 %v1408
        %v1833 = vunpack.c.l.b16 %v1409
        %v1834 = vunpack.c.h.b16 %v1409
        %v1835 = vunpack.c.l.b16 %v1410
        %v1836 = vunpack.c.h.b16 %v1410
        %v1837 = vunpack.c.l.b16 %v1411
        %v1838 = vunpack.c.h.b16 %v1411
        %v1839 = vunpack.c.l.b16 %v1412
        %v1840 = vunpack.c.h.b16 %v1412
        %v1841 = vunpack.c.l.b16 %v1413
        %v1842 = vunpack.c.l.b16 %v1414
        %v1843 = vunpack.c.h.b16 %v1414
        %v1844 = vunpack.c.l.b16 %v1415
        %v1845 = vunpack.c.h.b16 %v1415
        %v1846 = vunpack.c.l.b16 %v1416
        %v1847 = vunpack.c.h.b16 %v1416
        %v1848 = vunpack.c.l.b16 %v1417
        %v1849 = vunpack.c.h.b16 %v1417
        %v1850 = vunpack.c.l.b16 %v1418
        %v1851 = vunpack.c.l.b16 %v1419
        %v1852 = vunpack.c.h.b16 %v1419
        %v1853 = vunpack.c.l.b16 %v1420
        %v1854 = vunpack.c.h.b16 %v1420
        %v1855 = vunpack.c.l.b16 %v1421
        %v1856 = vunpack.c.h.b16 %v1421
        %v1857 = vunpack.c.l.b16 %v1422
        %v1858 = vunpack.c.h.b16 %v1422
        %v1859 = vunpack.c.l.b16 %v1423
        %v1860 = vunpack.c.l.b16 %v1424
        %v1861 = vunpack.c.h.b16 %v1424
        %v1862 = vunpack.c.l.b16 %v1425
        %v1863 = vunpack.c.h.b16 %v1425
        %v1864 = vunpack.c.l.b16 %v1426
        %v1865 = vunpack.c.h.b16 %v1426
        %v1866 = vunpack.c.l.b16 %v1427
        %v1867 = vunpack.c.h.b16 %v1427
        %v1868 = vunpack.c.l.b16 %v1428
        %v1869 = vunpack.c.l.b16 %v1429
        %v1870 = vunpack.c.h.b16 %v1429
        %v1871 = vunpack.c.l.b16 %v1430
        %v1872 = vunpack.c.h.b16 %v1430
        %v1873 = vunpack.c.l.b16 %v1431
        %v1874 = vunpack.c.h.b16 %v1431
        %v1875 = vunpack.c.l.b16 %v1432
        %v1876 = vunpack.c.h.b16 %v1432
        %v1877 = vunpack.c.l.b16 %v1433
        %v1878 = vunpack.c.l.b16 %v1434
        %v1879 = vunpack.c.h.b16 %v1434
        %v1880 = vunpack.c.l.b16 %v1435
        %v1881 = vunpack.c.h.b16 %v1435
        %v1882 = vunpack.c.l.b16 %v1436
        %v1883 = vunpack.c.h.b16 %v1436
        %v1884 = vunpack.c.l.b16 %v1437
        %v1885 = vunpack.c.h.b16 %v1437
        %v1886 = vunpack.c.l.b16 %v1438
        %v1887 = vpack.c.b16 %v1608, %v1599
        %v1888 = vpack.c.b16 %v1609, %v1600
        %v1889 = vpack.c.b16 %v1610, %v1601
        %v1890 = vpack.c.b16 %v1611, %v1602
        %v1891 = vpack.c.b16 %v1612, %v1603
        %v1892 = vpack.c.b16 %v1613, %v1604
        %v1893 = vpack.c.b16 %v1614, %v1605
        %v1894 = vpack.c.b16 %v1615, %v1606
        %v1895 = vpack.c.b16 %v1616, %v1607
        %v1896 = vpack.c.b16 %v1626, %v1617
        %v1897 = vpack.c.b16 %v1627, %v1618
        %v1898 = vpack.c.b16 %v1628, %v1619
        %v1899 = vpack.c.b16 %v1629, %v1620
        %v1900 = vpack.c.b16 %v1630, %v1621
        %v1901 = vpack.c.b16 %v1631, %v1622
        %v1902 = vpack.c.b16 %v1632, %v1623
        %v1903 = vpack.c.b16 %v1633, %v1624
        %v1904 = vpack.c.b16 %v1634, %v1625
        %v1905 = vpack.c.b16 %v1644, %v1635
        %v1906 = vpack.c.b16 %v1645, %v1636
        %v1907 = vpack.c.b16 %v1646, %v1637
        %v1908 = vpack.c.b16 %v1647, %v1638
        %v1909 = vpack.c.b16 %v1648, %v1639
        %v1910 = vpack.c.b16 %v1649, %v1640
        %v1911 = vpack.c.b16 %v1650, %v1641
        %v1912 = vpack.c.b16 %v1651, %v1642
        %v1913 = vpack.c.b16 %v1652, %v1643
        %v1914 = vpack.c.b16 %v1662, %v1653
        %v1915 = vpack.c.b16 %v1663, %v1654
        %v1916 = vpack.c.b16 %v1664, %v1655
        %v1917 = vpack.c.b16 %v1665, %v1656
        %v1918 = vpack.c.b16 %v1666, %v1657
        %v1919 = vpack.c.b16 %v1667, %v1658
        %v1920 = vpack.c.b16 %v1668, %v1659
        %v1921 = vpack.c.b16 %v1669, %v1660
        %v1922 = vpack.c.b16 %v1670, %v1661
        %v1923 = vpack.c.b16 %v1680, %v1671
        %v1924 = vpack.c.b16 %v1681, %v1672
        %v1925 = vpack.c.b16 %v1682, %v1673
        %v1926 = vpack.c.b16 %v1683, %v1674
        %v1927 = vpack.c.b16 %v1684, %v1675
        %v1928 = vpack.c.b16 %v1685, %v1676
        %v1929 = vpack.c.b16 %v1686, %v1677
        %v1930 = vpack.c.b16 %v1687, %v1678
        %v1931 = vpack.c.b16 %v1688, %v1679
        %v1932 = vpack.c.b16 %v1698, %v1689
        %v1933 = vpack.c.b16 %v1699, %v1690
        %v1934 = vpack.c.b16 %v1700, %v1691
        %v1935 = vpack.c.b16 %v1701, %v1692
        %v1936 = vpack.c.b16 %v1702, %v1693
        %v1937 = vpack.c.b16 %v1703, %v1694
        %v1938 = vpack.c.b16 %v1704, %v1695
        %v1939 = vpack.c.b16 %v1705, %v1696
        %v1940 = vpack.c.b16 %v1706, %v1697
        %v1941 = vpack.c.b16 %v1716, %v1707
        %v1942 = vpack.c.b16 %v1717, %v1708
        %v1943 = vpack.c.b16 %v1718, %v1709
        %v1944 = vpack.c.b16 %v1719, %v1710
        %v1945 = vpack.c.b16 %v1720, %v1711
        %v1946 = vpack.c.b16 %v1721, %v1712
        %v1947 = vpack.c.b16 %v1722, %v1713
        %v1948 = vpack.c.b16 %v1723, %v1714
        %v1949 = vpack.c.b16 %v1724, %v1715
        %v1950 = vpack.c.b16 %v1734, %v1725
        %v1951 = vpack.c.b16 %v1735, %v1726
        %v1952 = vpack.c.b16 %v1736, %v1727
        %v1953 = vpack.c.b16 %v1737, %v1728
        %v1954 = vpack.c.b16 %v1738, %v1729
        %v1955 = vpack.c.b16 %v1739, %v1730
        %v1956 = vpack.c.b16 %v1740, %v1731
        %v1957 = vpack.c.b16 %v1741, %v1732
        %v1958 = vpack.c.b16 %v1742, %v1733
        %v1959 = vpack.c.b16 %v1752, %v1743
        %v1960 = vpack.c.b16 %v1753, %v1744
        %v1961 = vpack.c.b16 %v1754, %v1745
        %v1962 = vpack.c.b16 %v1755, %v1746
        %v1963 = vpack.c.b16 %v1756, %v1747
        %v1964 = vpack.c.b16 %v1757, %v1748
        %v1965 = vpack.c.b16 %v1758, %v1749
        %v1966 = vpack.c.b16 %v1759, %v1750
        %v1967 = vpack.c.b16 %v1760, %v1751
        %v1968 = vpack.c.b16 %v1770, %v1761
        %v1969 = vpack.c.b16 %v1771, %v1762
        %v1970 = vpack.c.b16 %v1772, %v1763
        %v1971 = vpack.c.b16 %v1773, %v1764
        %v1972 = vpack.c.b16 %v1774, %v1765
        %v1973 = vpack.c.b16 %v1775, %v1766
        %v1974 = vpack.c.b16 %v1776, %v1767
        %v1975 = vpack.c.b16 %v1777, %v1768
        %v1976 = vpack.c.b16 %v1778, %v1769
        %v1977 = vpack.c.b16 %v1788, %v1779
        %v1978 = vpack.c.b16 %v1789, %v1780
        %v1979 = vpack.c.b16 %v1790, %v1781
        %v1980 = vpack.c.b16 %v1791, %v1782
        %v1981 = vpack.c.b16 %v1792, %v1783
        %v1982 = vpack.c.b16 %v1793, %v1784
        %v1983 = vpack.c.b16 %v1794, %v1785
        %v1984 = vpack.c.b16 %v1795, %v1786
        %v1985 = vpack.c.b16 %v1796, %v1787
        %v1986 = vpack.c.b16 %v1806, %v1797
        %v1987 = vpack.c.b16 %v1807, %v1798
        %v1988 = vpack.c.b16 %v1808, %v1799
        %v1989 = vpack.c.b16 %v1809, %v1800
        %v1990 = vpack.c.b16 %v1810, %v1801
        %v1991 = vpack.c.b16 %v1811, %v1802
        %v1992 = vpack.c.b16 %v1812, %v1803
        %v1993 = vpack.c.b16 %v1813, %v1804
        %v1994 = vpack.c.b16 %v1814, %v1805
        %v1995 = vpack.c.b16 %v1824, %v1815
        %v1996 = vpack.c.b16 %v1825, %v1816
        %v1997 = vpack.c.b16 %v1826, %v1817
        %v1998 = vpack.c.b16 %v1827, %v1818
        %v1999 = vpack.c.b16 %v1828, %v1819
        %v2000 = vpack.c.b16 %v1829, %v1820
        %v2001 = vpack.c.b16 %v1830, %v1821
        %v2002 = vpack.c.b16 %v1831, %v1822
        %v2003 = vpack.c.b16 %v1832, %v1823
        %v2004 = vpack.c.b16 %v1842, %v1833
        %v2005 = vpack.c.b16 %v1843, %v1834
        %v2006 = vpack.c.b16 %v1844, %v1835
        %v2007 = vpack.c.b16 %v1845, %v1836
        %v2008 = vpack.c.b16 %v1846, %v1837
        %v2009 = vpack.c.b16 %v1847, %v1838
        %v2010 = vpack.c.b16 %v1848, %v1839
        %v2011 = vpack.c.b16 %v1849, %v1840
        %v2012 = vpack.c.b16 %v1850, %v1841
        %v2013 = vpack.c.b16 %v1860, %v1851
        %v2014 = vpack.c.b16 %v1861, %v1852
        %v2015 = vpack.c.b16 %v1862, %v1853
        %v2016 = vpack.c.b16 %v1863, %v1854
        %v2017 = vpack.c.b16 %v1864, %v1855
        %v2018 = vpack.c.b16 %v1865, %v1856
        %v2019 = vpack.c.b16 %v1866, %v1857
        %v2020 = vpack.c.b16 %v1867, %v1858
        %v2021 = vpack.c.b16 %v1868, %v1859
        %v2022 = vpack.c.b16 %v1878, %v1869
        %v2023 = vpack.c.b16 %v1879, %v1870
        %v2024 = vpack.c.b16 %v1880, %v1871
        %v2025 = vpack.c.b16 %v1881, %v1872
        %v2026 = vpack.c.b16 %v1882, %v1873
        %v2027 = vpack.c.b16 %v1883, %v1874
        %v2028 = vpack.c.b16 %v1884, %v1875
        %v2029 = vpack.c.b16 %v1885, %v1876
        %v2030 = vpack.c.b16 %v1886, %v1877
        %2175 = vmatprep.subr.bf16.mxu0 %v1951
        %2176 = vmatpush1.bf16.msra.mxu0 %v1950
        %2177 = vmatprep.subr.bf16.mxu0 %v1942
        %2178 = vmatpush1.bf16.msra.mxu0 %v1941
        %2179 = vmatprep.subr.bf16.mxu0 %v1933
        %2180 = vmatpush1.bf16.msra.mxu0 %v1932
        %2181 = vmatprep.subr.bf16.mxu0 %v1924
        %2182 = vmatpush1.bf16.msra.mxu0 %v1923
        %2183 = vmatprep.subr.bf16.mxu0 %v1915
        %2184 = vmatpush1.bf16.msra.mxu0 %v1914
        %2185 = vmatprep.subr.bf16.mxu0 %v1906
        %2186 = vmatpush1.bf16.msra.mxu0 %v1905
        %2187 = vmatprep.subr.bf16.mxu0 %v1897
        %2188 = vmatpush1.bf16.msra.mxu0 %v1896
        %2189 = vmatprep.subr.bf16.mxu0 %v1888
        %2190 = vmatpush1.bf16.msra.mxu0 %v1887
        %2191 = vmatprep.subr.bf16.mxu0 %v2023
        %2192 = vmatpush2.bf16.msra.mxu0 %v2022
        %2193 = vmatprep.subr.bf16.mxu0 %v2014
        %2194 = vmatpush2.bf16.msra.mxu0 %v2013
        %2195 = vmatprep.subr.bf16.mxu0 %v2005
        %2196 = vmatpush2.bf16.msra.mxu0 %v2004
        %2197 = vmatprep.subr.bf16.mxu0 %v1996
        %2198 = vmatpush2.bf16.msra.mxu0 %v1995
        %2199 = vmatprep.subr.bf16.mxu0 %v1987
        %2200 = vmatpush2.bf16.msra.mxu0 %v1986
        %2201 = vmatprep.subr.bf16.mxu0 %v1978
        %2202 = vmatpush2.bf16.msra.mxu0 %v1977
        %2203 = vmatprep.subr.bf16.mxu0 %v1969
        %2204 = vmatpush2.bf16.msra.mxu0 %v1968
        %2205 = vmatprep.subr.bf16.mxu0 %v1960
        %2206 = vmatpush2.bf16.msra.mxu0 %v1959
        %2207 = vmatprep.mubr.bf16.mxu0 %v1260
        %2208 = vmatmul.mubr.bf16.gmra.mxu0 %v1259
        %v2209 = vpop.f32.mrf.mxu0
        %v2210 = vadd.f32 0.0, %v2209
        %v2211 = vpop.f32.mrf.mxu0
        %v2212 = vadd.f32 0.0, %v2211
        %v2213 = vpop.f32.mrf.mxu0
        %v2214 = vadd.f32 0.0, %v2213
        %v2215 = vpop.f32.mrf.mxu0
        %v2216 = vadd.f32 0.0, %v2215
        %2217 = vmatprep.mubr.bf16.mxu0 %v1262
        %2218 = vmatmul.mubr.bf16.gmra.mxu0 %v1261
        %v2219 = vpop.f32.mrf.mxu0
        %v2220 = vadd.f32 0.0, %v2219
        %v2221 = vpop.f32.mrf.mxu0
        %v2222 = vadd.f32 0.0, %v2221
        %v2223 = vpop.f32.mrf.mxu0
        %v2224 = vadd.f32 0.0, %v2223
        %v2225 = vpop.f32.mrf.mxu0
        %v2226 = vadd.f32 0.0, %v2225
        %2227 = vmatprep.mubr.bf16.mxu0 %v1264
        %2228 = vmatmul.mubr.bf16.gmra.mxu0 %v1263
        %v2229 = vpop.f32.mrf.mxu0
        %v2230 = vadd.f32 0.0, %v2229
        %v2231 = vpop.f32.mrf.mxu0
        %v2232 = vadd.f32 0.0, %v2231
        %v2233 = vpop.f32.mrf.mxu0
        %v2234 = vadd.f32 0.0, %v2233
        %v2235 = vpop.f32.mrf.mxu0
        %v2236 = vadd.f32 0.0, %v2235
        %2237 = vmatprep.mubr.bf16.mxu0 %v1266
        %2238 = vmatmul.mubr.bf16.gmra.mxu0 %v1265
        %v2239 = vpop.f32.mrf.mxu0
        %v2240 = vadd.f32 0.0, %v2239
        %v2241 = vpop.f32.mrf.mxu0
        %v2242 = vadd.f32 0.0, %v2241
        %v2243 = vpop.f32.mrf.mxu0
        %v2244 = vadd.f32 0.0, %v2243
        %v2245 = vpop.f32.mrf.mxu0
        %v2246 = vadd.f32 0.0, %v2245
        %2247 = vmatprep.mubr.bf16.mxu0 %v1268
        %2248 = vmatmul.mubr.bf16.gmra.mxu0 %v1267
        %v2249 = vpop.f32.mrf.mxu0
        %v2250 = vadd.f32 0.0, %v2249
        %v2251 = vpop.f32.mrf.mxu0
        %v2252 = vadd.f32 0.0, %v2251
        %v2253 = vpop.f32.mrf.mxu0
        %v2254 = vadd.f32 0.0, %v2253
        %v2255 = vpop.f32.mrf.mxu0
        %v2256 = vadd.f32 0.0, %v2255
        %2257 = vmatprep.mubr.bf16.mxu0 %v1270
        %2258 = vmatmul.mubr.bf16.gmra.mxu0 %v1269
        %v2259 = vpop.f32.mrf.mxu0
        %v2260 = vadd.f32 0.0, %v2259
        %v2261 = vpop.f32.mrf.mxu0
        %v2262 = vadd.f32 0.0, %v2261
        %v2263 = vpop.f32.mrf.mxu0
        %v2264 = vadd.f32 0.0, %v2263
        %v2265 = vpop.f32.mrf.mxu0
        %v2266 = vadd.f32 0.0, %v2265
        %2267 = vmatprep.mubr.bf16.mxu0 %v1272
        %2268 = vmatmul.mubr.bf16.gmra.mxu0 %v1271
        %v2269 = vpop.f32.mrf.mxu0
        %v2270 = vadd.f32 0.0, %v2269
        %v2271 = vpop.f32.mrf.mxu0
        %v2272 = vadd.f32 0.0, %v2271
        %v2273 = vpop.f32.mrf.mxu0
        %v2274 = vadd.f32 0.0, %v2273
        %v2275 = vpop.f32.mrf.mxu0
        %v2276 = vadd.f32 0.0, %v2275
        %2277 = vmatprep.mubr.bf16.mxu0 %v1274
        %2278 = vmatmul.mubr.bf16.gmra.mxu0 %v1273
        %v2279 = vpop.f32.mrf.mxu0
        %v2280 = vadd.f32 0.0, %v2279
        %v2281 = vpop.f32.mrf.mxu0
        %v2282 = vadd.f32 0.0, %v2281
        %v2283 = vpop.f32.mrf.mxu0
        %v2284 = vadd.f32 0.0, %v2283
        %v2285 = vpop.f32.mrf.mxu0
        %v2286 = vadd.f32 0.0, %v2285
        %2287 = vmatprep.mubr.bf16.mxu0 %v1276
        %2288 = vmatmul.mubr.bf16.gmra.mxu0 %v1275
        %v2289 = vpop.f32.mrf.mxu0
        %v2290 = vpop.f32.mrf.mxu0
        %v2291 = vpop.f32.mrf.mxu0
        %v2292 = vpop.f32.mrf.mxu0
        %2293 = vmatprep.mubr.bf16.mxu0 %v1278
        %2294 = vmatmul.mubr.bf16.gmra.mxu0 %v1277
        %v2295 = vpop.f32.mrf.mxu0
        %v2296 = vpop.f32.mrf.mxu0
        %v2297 = vpop.f32.mrf.mxu0
        %v2298 = vpop.f32.mrf.mxu0
        %2299 = vdwg.mxu0
        %2300 = vmatprep.subr.bf16.mxu0 %v1953
        %2301 = vmatpush1.bf16.msra.mxu0 %v1952
        %2302 = vmatprep.subr.bf16.mxu0 %v1944
        %2303 = vmatpush1.bf16.msra.mxu0 %v1943
        %2304 = vmatprep.subr.bf16.mxu0 %v1935
        %2305 = vmatpush1.bf16.msra.mxu0 %v1934
        %2306 = vmatprep.subr.bf16.mxu0 %v1926
        %2307 = vmatpush1.bf16.msra.mxu0 %v1925
        %2308 = vmatprep.subr.bf16.mxu0 %v1917
        %2309 = vmatpush1.bf16.msra.mxu0 %v1916
        %2310 = vmatprep.subr.bf16.mxu0 %v1908
        %2311 = vmatpush1.bf16.msra.mxu0 %v1907
        %2312 = vmatprep.subr.bf16.mxu0 %v1899
        %2313 = vmatpush1.bf16.msra.mxu0 %v1898
        %2314 = vmatprep.subr.bf16.mxu0 %v1890
        %2315 = vmatpush1.bf16.msra.mxu0 %v1889
        %2316 = vmatprep.subr.bf16.mxu0 %v2025
        %2317 = vmatpush2.bf16.msra.mxu0 %v2024
        %2318 = vmatprep.subr.bf16.mxu0 %v2016
        %2319 = vmatpush2.bf16.msra.mxu0 %v2015
        %2320 = vmatprep.subr.bf16.mxu0 %v2007
        %2321 = vmatpush2.bf16.msra.mxu0 %v2006
        %2322 = vmatprep.subr.bf16.mxu0 %v1998
        %2323 = vmatpush2.bf16.msra.mxu0 %v1997
        %2324 = vmatprep.subr.bf16.mxu0 %v1989
        %2325 = vmatpush2.bf16.msra.mxu0 %v1988
        %2326 = vmatprep.subr.bf16.mxu0 %v1980
        %2327 = vmatpush2.bf16.msra.mxu0 %v1979
        %2328 = vmatprep.subr.bf16.mxu0 %v1971
        %2329 = vmatpush2.bf16.msra.mxu0 %v1970
        %2330 = vmatprep.subr.bf16.mxu0 %v1962
        %2331 = vmatpush2.bf16.msra.mxu0 %v1961
        %2332 = vmatprep.mubr.bf16.mxu0 %v1260
        %2333 = vmatmul.mubr.bf16.gmra.mxu0 %v1259
        %v2334 = vpop.f32.mrf.mxu0
        %v2335 = vadd.f32 0.0, %v2334
        %v2336 = vpop.f32.mrf.mxu0
        %v2337 = vpop.f32.mrf.mxu0
        %v2338 = vadd.f32 0.0, %v2337
        %v2339 = vpop.f32.mrf.mxu0
        %2340 = vmatprep.mubr.bf16.mxu0 %v1262
        %2341 = vmatmul.mubr.bf16.gmra.mxu0 %v1261
        %v2342 = vpop.f32.mrf.mxu0
        %v2343 = vadd.f32 0.0, %v2342
        %v2344 = vpop.f32.mrf.mxu0
        %v2345 = vadd.f32 0.0, %v2344
        %v2346 = vpop.f32.mrf.mxu0
        %v2347 = vadd.f32 0.0, %v2346
        %v2348 = vpop.f32.mrf.mxu0
        %v2349 = vadd.f32 0.0, %v2348
        %2350 = vmatprep.mubr.bf16.mxu0 %v1264
        %2351 = vmatmul.mubr.bf16.gmra.mxu0 %v1263
        %v2352 = vpop.f32.mrf.mxu0
        %v2353 = vadd.f32 0.0, %v2352
        %v2354 = vpop.f32.mrf.mxu0
        %v2355 = vadd.f32 0.0, %v2354
        %v2356 = vpop.f32.mrf.mxu0
        %v2357 = vadd.f32 0.0, %v2356
        %v2358 = vpop.f32.mrf.mxu0
        %v2359 = vadd.f32 0.0, %v2358
        %2360 = vmatprep.mubr.bf16.mxu0 %v1266
        %2361 = vmatmul.mubr.bf16.gmra.mxu0 %v1265
        %v2362 = vpop.f32.mrf.mxu0
        %v2363 = vadd.f32 0.0, %v2362
        %v2364 = vpop.f32.mrf.mxu0
        %v2365 = vadd.f32 0.0, %v2364
        %v2366 = vpop.f32.mrf.mxu0
        %v2367 = vadd.f32 0.0, %v2366
        %v2368 = vpop.f32.mrf.mxu0
        %v2369 = vadd.f32 0.0, %v2368
        %2370 = vmatprep.mubr.bf16.mxu0 %v1268
        %2371 = vmatmul.mubr.bf16.gmra.mxu0 %v1267
        %v2372 = vpop.f32.mrf.mxu0
        %v2373 = vadd.f32 0.0, %v2372
        %v2374 = vpop.f32.mrf.mxu0
        %v2375 = vadd.f32 0.0, %v2374
        %v2376 = vpop.f32.mrf.mxu0
        %v2377 = vadd.f32 0.0, %v2376
        %v2378 = vpop.f32.mrf.mxu0
        %v2379 = vadd.f32 0.0, %v2378
        %2380 = vmatprep.mubr.bf16.mxu0 %v1270
        %2381 = vmatmul.mubr.bf16.gmra.mxu0 %v1269
        %v2382 = vpop.f32.mrf.mxu0
        %v2383 = vadd.f32 0.0, %v2382
        %v2384 = vpop.f32.mrf.mxu0
        %v2385 = vadd.f32 0.0, %v2384
        %v2386 = vpop.f32.mrf.mxu0
        %v2387 = vadd.f32 0.0, %v2386
        %v2388 = vpop.f32.mrf.mxu0
        %v2389 = vadd.f32 0.0, %v2388
        %2390 = vmatprep.mubr.bf16.mxu0 %v1272
        %2391 = vmatmul.mubr.bf16.gmra.mxu0 %v1271
        %v2392 = vpop.f32.mrf.mxu0
        %v2393 = vadd.f32 0.0, %v2392
        %v2394 = vpop.f32.mrf.mxu0
        %v2395 = vadd.f32 0.0, %v2394
        %v2396 = vpop.f32.mrf.mxu0
        %v2397 = vadd.f32 0.0, %v2396
        %v2398 = vpop.f32.mrf.mxu0
        %v2399 = vadd.f32 0.0, %v2398
        %2400 = vmatprep.mubr.bf16.mxu0 %v1274
        %2401 = vmatmul.mubr.bf16.gmra.mxu0 %v1273
        %v2402 = vpop.f32.mrf.mxu0
        %v2403 = vadd.f32 0.0, %v2402
        %v2404 = vpop.f32.mrf.mxu0
        %v2405 = vadd.f32 0.0, %v2404
        %v2406 = vpop.f32.mrf.mxu0
        %v2407 = vadd.f32 0.0, %v2406
        %v2408 = vpop.f32.mrf.mxu0
        %v2409 = vadd.f32 0.0, %v2408
        %2410 = vmatprep.mubr.bf16.mxu0 %v1276
        %2411 = vmatmul.mubr.bf16.gmra.mxu0 %v1275
        %v2412 = vpop.f32.mrf.mxu0
        %v2413 = vpop.f32.mrf.mxu0
        %v2414 = vadd.f32 0.0, %v2413
        %v2415 = vpop.f32.mrf.mxu0
        %v2416 = vpop.f32.mrf.mxu0
        %v2417 = vadd.f32 0.0, %v2416
        %2418 = vmatprep.mubr.bf16.mxu0 %v1278
        %2419 = vmatmul.mubr.bf16.gmra.mxu0 %v1277
        %v2420 = vpop.f32.mrf.mxu0
        %v2421 = vpop.f32.mrf.mxu0
        %v2422 = vpop.f32.mrf.mxu0
        %v2423 = vpop.f32.mrf.mxu0
        %2424 = vdwg.mxu0
        %2425 = vmatprep.subr.bf16.mxu0 %v1955
        %2426 = vmatpush1.bf16.msra.mxu0 %v1954
        %2427 = vmatprep.subr.bf16.mxu0 %v1946
        %2428 = vmatpush1.bf16.msra.mxu0 %v1945
        %2429 = vmatprep.subr.bf16.mxu0 %v1937
        %2430 = vmatpush1.bf16.msra.mxu0 %v1936
        %2431 = vmatprep.subr.bf16.mxu0 %v1928
        %2432 = vmatpush1.bf16.msra.mxu0 %v1927
        %2433 = vmatprep.subr.bf16.mxu0 %v1919
        %2434 = vmatpush1.bf16.msra.mxu0 %v1918
        %2435 = vmatprep.subr.bf16.mxu0 %v1910
        %2436 = vmatpush1.bf16.msra.mxu0 %v1909
        %2437 = vmatprep.subr.bf16.mxu0 %v1901
        %2438 = vmatpush1.bf16.msra.mxu0 %v1900
        %2439 = vmatprep.subr.bf16.mxu0 %v1892
        %2440 = vmatpush1.bf16.msra.mxu0 %v1891
        %2441 = vmatprep.subr.bf16.mxu0 %v2027
        %2442 = vmatpush2.bf16.msra.mxu0 %v2026
        %2443 = vmatprep.subr.bf16.mxu0 %v2018
        %2444 = vmatpush2.bf16.msra.mxu0 %v2017
        %2445 = vmatprep.subr.bf16.mxu0 %v2009
        %2446 = vmatpush2.bf16.msra.mxu0 %v2008
        %2447 = vmatprep.subr.bf16.mxu0 %v2000
        %2448 = vmatpush2.bf16.msra.mxu0 %v1999
        %2449 = vmatprep.subr.bf16.mxu0 %v1991
        %2450 = vmatpush2.bf16.msra.mxu0 %v1990
        %2451 = vmatprep.subr.bf16.mxu0 %v1982
        %2452 = vmatpush2.bf16.msra.mxu0 %v1981
        %2453 = vmatprep.subr.bf16.mxu0 %v1973
        %2454 = vmatpush2.bf16.msra.mxu0 %v1972
        %2455 = vmatprep.subr.bf16.mxu0 %v1964
        %2456 = vmatpush2.bf16.msra.mxu0 %v1963
        %2457 = vmatprep.mubr.bf16.mxu0 %v1260
        %2458 = vmatmul.mubr.bf16.gmra.mxu0 %v1259
        %v2459 = vpop.f32.mrf.mxu0
        %v2460 = vpop.f32.mrf.mxu0
        %v2461 = vpop.f32.mrf.mxu0
        %v2462 = vpop.f32.mrf.mxu0
        %2463 = vmatprep.mubr.bf16.mxu0 %v1262
        %2464 = vmatmul.mubr.bf16.gmra.mxu0 %v1261
        %v2465 = vpop.f32.mrf.mxu0
        %v2466 = vadd.f32 0.0, %v2465
        %v2467 = vpop.f32.mrf.mxu0
        %v2468 = vadd.f32 0.0, %v2467
        %v2469 = vpop.f32.mrf.mxu0
        %v2470 = vadd.f32 0.0, %v2469
        %v2471 = vpop.f32.mrf.mxu0
        %v2472 = vadd.f32 0.0, %v2471
        %2473 = vmatprep.mubr.bf16.mxu0 %v1264
        %2474 = vmatmul.mubr.bf16.gmra.mxu0 %v1263
        %v2475 = vpop.f32.mrf.mxu0
        %v2476 = vadd.f32 0.0, %v2475
        %v2477 = vpop.f32.mrf.mxu0
        %v2478 = vadd.f32 0.0, %v2477
        %v2479 = vpop.f32.mrf.mxu0
        %v2480 = vadd.f32 0.0, %v2479
        %v2481 = vpop.f32.mrf.mxu0
        %v2482 = vadd.f32 0.0, %v2481
        %2483 = vmatprep.mubr.bf16.mxu0 %v1266
        %2484 = vmatmul.mubr.bf16.gmra.mxu0 %v1265
        %v2485 = vpop.f32.mrf.mxu0
        %v2486 = vadd.f32 0.0, %v2485
        %v2487 = vpop.f32.mrf.mxu0
        %v2488 = vadd.f32 0.0, %v2487
        %v2489 = vpop.f32.mrf.mxu0
        %v2490 = vadd.f32 0.0, %v2489
        %v2491 = vpop.f32.mrf.mxu0
        %v2492 = vadd.f32 0.0, %v2491
        %2493 = vmatprep.mubr.bf16.mxu0 %v1268
        %2494 = vmatmul.mubr.bf16.gmra.mxu0 %v1267
        %v2495 = vpop.f32.mrf.mxu0
        %v2496 = vadd.f32 0.0, %v2495
        %v2497 = vpop.f32.mrf.mxu0
        %v2498 = vadd.f32 0.0, %v2497
        %v2499 = vpop.f32.mrf.mxu0
        %v2500 = vadd.f32 0.0, %v2499
        %v2501 = vpop.f32.mrf.mxu0
        %v2502 = vadd.f32 0.0, %v2501
        %2503 = vmatprep.mubr.bf16.mxu0 %v1270
        %2504 = vmatmul.mubr.bf16.gmra.mxu0 %v1269
        %v2505 = vpop.f32.mrf.mxu0
        %v2506 = vadd.f32 0.0, %v2505
        %v2507 = vpop.f32.mrf.mxu0
        %v2508 = vadd.f32 0.0, %v2507
        %v2509 = vpop.f32.mrf.mxu0
        %v2510 = vadd.f32 0.0, %v2509
        %v2511 = vpop.f32.mrf.mxu0
        %v2512 = vadd.f32 0.0, %v2511
        %2513 = vmatprep.mubr.bf16.mxu0 %v1272
        %2514 = vmatmul.mubr.bf16.gmra.mxu0 %v1271
        %v2515 = vpop.f32.mrf.mxu0
        %v2516 = vadd.f32 0.0, %v2515
        %v2517 = vpop.f32.mrf.mxu0
        %v2518 = vadd.f32 0.0, %v2517
        %v2519 = vpop.f32.mrf.mxu0
        %v2520 = vadd.f32 0.0, %v2519
        %v2521 = vpop.f32.mrf.mxu0
        %v2522 = vadd.f32 0.0, %v2521
        %2523 = vmatprep.mubr.bf16.mxu0 %v1274
        %2524 = vmatmul.mubr.bf16.gmra.mxu0 %v1273
        %v2525 = vpop.f32.mrf.mxu0
        %v2526 = vadd.f32 0.0, %v2525
        %v2527 = vpop.f32.mrf.mxu0
        %v2528 = vadd.f32 0.0, %v2527
        %v2529 = vpop.f32.mrf.mxu0
        %v2530 = vadd.f32 0.0, %v2529
        %v2531 = vpop.f32.mrf.mxu0
        %v2532 = vadd.f32 0.0, %v2531
        %2533 = vmatprep.mubr.bf16.mxu0 %v1276
        %2534 = vmatmul.mubr.bf16.gmra.mxu0 %v1275
        %v2535 = vpop.f32.mrf.mxu0
        %v2536 = vadd.f32 0.0, %v2535
        %v2537 = vpop.f32.mrf.mxu0
        %v2538 = vadd.f32 0.0, %v2537
        %v2539 = vpop.f32.mrf.mxu0
        %v2540 = vadd.f32 0.0, %v2539
        %v2541 = vpop.f32.mrf.mxu0
        %v2542 = vadd.f32 0.0, %v2541
        %2543 = vmatprep.mubr.bf16.mxu0 %v1278
        %2544 = vmatmul.mubr.bf16.gmra.mxu0 %v1277
        %v2545 = vpop.f32.mrf.mxu0
        %v2546 = vpop.f32.mrf.mxu0
        %v2547 = vpop.f32.mrf.mxu0
        %v2548 = vpop.f32.mrf.mxu0
        %2549 = vdwg.mxu0
        %2550 = vmatprep.subr.bf16.mxu0 %v1957
        %2551 = vmatpush1.bf16.msra.mxu0 %v1956
        %2552 = vmatprep.subr.bf16.mxu0 %v1948
        %2553 = vmatpush1.bf16.msra.mxu0 %v1947
        %2554 = vmatprep.subr.bf16.mxu0 %v1939
        %2555 = vmatpush1.bf16.msra.mxu0 %v1938
        %2556 = vmatprep.subr.bf16.mxu0 %v1930
        %2557 = vmatpush1.bf16.msra.mxu0 %v1929
        %2558 = vmatprep.subr.bf16.mxu0 %v1921
        %2559 = vmatpush1.bf16.msra.mxu0 %v1920
        %2560 = vmatprep.subr.bf16.mxu0 %v1912
        %2561 = vmatpush1.bf16.msra.mxu0 %v1911
        %2562 = vmatprep.subr.bf16.mxu0 %v1903
        %2563 = vmatpush1.bf16.msra.mxu0 %v1902
        %2564 = vmatprep.subr.bf16.mxu0 %v1894
        %2565 = vmatpush1.bf16.msra.mxu0 %v1893
        %2566 = vmatprep.subr.bf16.mxu0 %v2029
        %2567 = vmatpush2.bf16.msra.mxu0 %v2028
        %2568 = vmatprep.subr.bf16.mxu0 %v2020
        %2569 = vmatpush2.bf16.msra.mxu0 %v2019
        %2570 = vmatprep.subr.bf16.mxu0 %v2011
        %2571 = vmatpush2.bf16.msra.mxu0 %v2010
        %2572 = vmatprep.subr.bf16.mxu0 %v2002
        %2573 = vmatpush2.bf16.msra.mxu0 %v2001
        %2574 = vmatprep.subr.bf16.mxu0 %v1993
        %2575 = vmatpush2.bf16.msra.mxu0 %v1992
        %2576 = vmatprep.subr.bf16.mxu0 %v1984
        %2577 = vmatpush2.bf16.msra.mxu0 %v1983
        %2578 = vmatprep.subr.bf16.mxu0 %v1975
        %2579 = vmatpush2.bf16.msra.mxu0 %v1974
        %2580 = vmatprep.subr.bf16.mxu0 %v1966
        %2581 = vmatpush2.bf16.msra.mxu0 %v1965
        %2582 = vmatprep.mubr.bf16.mxu0 %v1260
        %2583 = vmatmul.mubr.bf16.gmra.mxu0 %v1259
        %v2584 = vpop.f32.mrf.mxu0
        %v2585 = vpop.f32.mrf.mxu0
        %v2586 = vpop.f32.mrf.mxu0
        %v2587 = vpop.f32.mrf.mxu0
        %2588 = vmatprep.mubr.bf16.mxu0 %v1262
        %2589 = vmatmul.mubr.bf16.gmra.mxu0 %v1261
        %v2590 = vpop.f32.mrf.mxu0
        %v2591 = vpop.f32.mrf.mxu0
        %v2592 = vpop.f32.mrf.mxu0
        %v2593 = vpop.f32.mrf.mxu0
        %2594 = vmatprep.mubr.bf16.mxu0 %v1264
        %2595 = vmatmul.mubr.bf16.gmra.mxu0 %v1263
        %v2596 = vpop.f32.mrf.mxu0
        %v2597 = vadd.f32 0.0, %v2596
        %v2598 = vpop.f32.mrf.mxu0
        %v2599 = vadd.f32 0.0, %v2598
        %v2600 = vpop.f32.mrf.mxu0
        %v2601 = vadd.f32 0.0, %v2600
        %v2602 = vpop.f32.mrf.mxu0
        %v2603 = vadd.f32 0.0, %v2602
        %2604 = vmatprep.mubr.bf16.mxu0 %v1266
        %2605 = vmatmul.mubr.bf16.gmra.mxu0 %v1265
        %v2606 = vpop.f32.mrf.mxu0
        %v2607 = vadd.f32 0.0, %v2606
        %v2608 = vpop.f32.mrf.mxu0
        %v2609 = vadd.f32 0.0, %v2608
        %v2610 = vpop.f32.mrf.mxu0
        %v2611 = vadd.f32 0.0, %v2610
        %v2612 = vpop.f32.mrf.mxu0
        %v2613 = vadd.f32 0.0, %v2612
        %2614 = vmatprep.mubr.bf16.mxu0 %v1268
        %2615 = vmatmul.mubr.bf16.gmra.mxu0 %v1267
        %v2616 = vpop.f32.mrf.mxu0
        %v2617 = vadd.f32 0.0, %v2616
        %v2618 = vpop.f32.mrf.mxu0
        %v2619 = vadd.f32 0.0, %v2618
        %v2620 = vpop.f32.mrf.mxu0
        %v2621 = vadd.f32 0.0, %v2620
        %v2622 = vpop.f32.mrf.mxu0
        %v2623 = vadd.f32 0.0, %v2622
        %2624 = vmatprep.mubr.bf16.mxu0 %v1270
        %2625 = vmatmul.mubr.bf16.gmra.mxu0 %v1269
        %v2626 = vpop.f32.mrf.mxu0
        %v2627 = vadd.f32 0.0, %v2626
        %v2628 = vpop.f32.mrf.mxu0
        %v2629 = vadd.f32 0.0, %v2628
        %v2630 = vpop.f32.mrf.mxu0
        %v2631 = vadd.f32 0.0, %v2630
        %v2632 = vpop.f32.mrf.mxu0
        %v2633 = vadd.f32 0.0, %v2632
        %2634 = vmatprep.mubr.bf16.mxu0 %v1272
        %2635 = vmatmul.mubr.bf16.gmra.mxu0 %v1271
        %v2636 = vpop.f32.mrf.mxu0
        %v2637 = vadd.f32 0.0, %v2636
        %v2638 = vpop.f32.mrf.mxu0
        %v2639 = vadd.f32 0.0, %v2638
        %v2640 = vpop.f32.mrf.mxu0
        %v2641 = vadd.f32 0.0, %v2640
        %v2642 = vpop.f32.mrf.mxu0
        %v2643 = vadd.f32 0.0, %v2642
        %2644 = vmatprep.mubr.bf16.mxu0 %v1274
        %2645 = vmatmul.mubr.bf16.gmra.mxu0 %v1273
        %v2646 = vpop.f32.mrf.mxu0
        %v2647 = vadd.f32 0.0, %v2646
        %v2648 = vpop.f32.mrf.mxu0
        %v2649 = vadd.f32 0.0, %v2648
        %v2650 = vpop.f32.mrf.mxu0
        %v2651 = vadd.f32 0.0, %v2650
        %v2652 = vpop.f32.mrf.mxu0
        %v2653 = vadd.f32 0.0, %v2652
        %2654 = vmatprep.mubr.bf16.mxu0 %v1276
        %2655 = vmatmul.mubr.bf16.gmra.mxu0 %v1275
        %v2656 = vpop.f32.mrf.mxu0
        %v2657 = vadd.f32 0.0, %v2656
        %v2658 = vpop.f32.mrf.mxu0
        %v2659 = vadd.f32 0.0, %v2658
        %v2660 = vpop.f32.mrf.mxu0
        %v2661 = vadd.f32 0.0, %v2660
        %v2662 = vpop.f32.mrf.mxu0
        %v2663 = vadd.f32 0.0, %v2662
        %2664 = vmatprep.mubr.bf16.mxu0 %v1278
        %2665 = vmatmul.mubr.bf16.gmra.mxu0 %v1277
        %v2666 = vpop.f32.mrf.mxu0
        %v2667 = vadd.f32 0.0, %v2666
        %v2668 = vpop.f32.mrf.mxu0
        %v2669 = vadd.f32 0.0, %v2668
        %v2670 = vpop.f32.mrf.mxu0
        %v2671 = vadd.f32 0.0, %v2670
        %v2672 = vpop.f32.mrf.mxu0
        %v2673 = vadd.f32 0.0, %v2672
        %2674 = vdwg.mxu0
        %2675 = vmatprep.subr.bf16.mxu0 0
        %2676 = vmatpush1.bf16.msra.mxu0 %v1958
        %2677 = vmatprep.subr.bf16.mxu0 0
        %2678 = vmatpush1.bf16.msra.mxu0 %v1949
        %2679 = vmatprep.subr.bf16.mxu0 0
        %2680 = vmatpush1.bf16.msra.mxu0 %v1940
        %2681 = vmatprep.subr.bf16.mxu0 0
        %2682 = vmatpush1.bf16.msra.mxu0 %v1931
        %2683 = vmatprep.subr.bf16.mxu0 0
        %2684 = vmatpush1.bf16.msra.mxu0 %v1922
        %2685 = vmatprep.subr.bf16.mxu0 0
        %2686 = vmatpush1.bf16.msra.mxu0 %v1913
        %2687 = vmatprep.subr.bf16.mxu0 0
        %2688 = vmatpush1.bf16.msra.mxu0 %v1904
        %2689 = vmatprep.subr.bf16.mxu0 0
        %2690 = vmatpush1.bf16.msra.mxu0 %v1895
        %2691 = vmatprep.subr.bf16.mxu0 0
        %2692 = vmatpush2.bf16.msra.mxu0 %v2030
        %2693 = vmatprep.subr.bf16.mxu0 0
        %2694 = vmatpush2.bf16.msra.mxu0 %v2021
        %2695 = vmatprep.subr.bf16.mxu0 0
        %2696 = vmatpush2.bf16.msra.mxu0 %v2012
        %2697 = vmatprep.subr.bf16.mxu0 0
        %2698 = vmatpush2.bf16.msra.mxu0 %v2003
        %2699 = vmatprep.subr.bf16.mxu0 0
        %2700 = vmatpush2.bf16.msra.mxu0 %v1994
        %2701 = vmatprep.subr.bf16.mxu0 0
        %2702 = vmatpush2.bf16.msra.mxu0 %v1985
        %2703 = vmatprep.subr.bf16.mxu0 0
        %2704 = vmatpush2.bf16.msra.mxu0 %v1976
        %2705 = vmatprep.subr.bf16.mxu0 0
        %2706 = vmatpush2.bf16.msra.mxu0 %v1967
        %2707 = vmatprep.mubr.bf16.mxu0 %v1260
        %2708 = vmatmul.mubr.bf16.gmra.mxu0 %v1259
        %v2709 = vpop.f32.mrf.mxu0
        %v2710 = vpop.f32.mrf.mxu0
        %v2711 = vpop.f32.mrf.mxu0
        %v2712 = vpop.f32.mrf.mxu0
        %2713 = vmatprep.mubr.bf16.mxu0 %v1262
        %2714 = vmatmul.mubr.bf16.gmra.mxu0 %v1261
        %v2715 = vpop.f32.mrf.mxu0
        %v2716 = vpop.f32.mrf.mxu0
        %v2717 = vpop.f32.mrf.mxu0
        %v2718 = vpop.f32.mrf.mxu0
        %2719 = vmatprep.mubr.bf16.mxu0 %v1264
        %2720 = vmatmul.mubr.bf16.gmra.mxu0 %v1263
        %v2721 = vpop.f32.mrf.mxu0
        %v2722 = vadd.f32 0.0, %v2721
        %v2723 = vpop.f32.mrf.mxu0
        %v2724 = vpop.f32.mrf.mxu0
        %v2725 = vadd.f32 0.0, %v2724
        %v2726 = vpop.f32.mrf.mxu0
        %2727 = vmatprep.mubr.bf16.mxu0 %v1266
        %2728 = vmatmul.mubr.bf16.gmra.mxu0 %v1265
        %v2729 = vpop.f32.mrf.mxu0
        %v2730 = vadd.f32 0.0, %v2729
        %v2731 = vpop.f32.mrf.mxu0
        %v2732 = vpop.f32.mrf.mxu0
        %v2733 = vadd.f32 0.0, %v2732
        %v2734 = vpop.f32.mrf.mxu0
        %2735 = vmatprep.mubr.bf16.mxu0 %v1268
        %2736 = vmatmul.mubr.bf16.gmra.mxu0 %v1267
        %v2737 = vpop.f32.mrf.mxu0
        %v2738 = vadd.f32 0.0, %v2737
        %v2739 = vpop.f32.mrf.mxu0
        %v2740 = vpop.f32.mrf.mxu0
        %v2741 = vadd.f32 0.0, %v2740
        %v2742 = vpop.f32.mrf.mxu0
        %2743 = vmatprep.mubr.bf16.mxu0 %v1270
        %2744 = vmatmul.mubr.bf16.gmra.mxu0 %v1269
        %v2745 = vpop.f32.mrf.mxu0
        %v2746 = vadd.f32 0.0, %v2745
        %v2747 = vpop.f32.mrf.mxu0
        %v2748 = vpop.f32.mrf.mxu0
        %v2749 = vadd.f32 0.0, %v2748
        %v2750 = vpop.f32.mrf.mxu0
        %2751 = vmatprep.mubr.bf16.mxu0 %v1272
        %2752 = vmatmul.mubr.bf16.gmra.mxu0 %v1271
        %v2753 = vpop.f32.mrf.mxu0
        %v2754 = vadd.f32 0.0, %v2753
        %v2755 = vpop.f32.mrf.mxu0
        %v2756 = vpop.f32.mrf.mxu0
        %v2757 = vadd.f32 0.0, %v2756
        %v2758 = vpop.f32.mrf.mxu0
        %2759 = vmatprep.mubr.bf16.mxu0 %v1274
        %2760 = vmatmul.mubr.bf16.gmra.mxu0 %v1273
        %v2761 = vpop.f32.mrf.mxu0
        %v2762 = vadd.f32 0.0, %v2761
        %v2763 = vpop.f32.mrf.mxu0
        %v2764 = vpop.f32.mrf.mxu0
        %v2765 = vadd.f32 0.0, %v2764
        %v2766 = vpop.f32.mrf.mxu0
        %2767 = vmatprep.mubr.bf16.mxu0 %v1276
        %2768 = vmatmul.mubr.bf16.gmra.mxu0 %v1275
        %v2769 = vpop.f32.mrf.mxu0
        %v2770 = vadd.f32 0.0, %v2769
        %v2771 = vpop.f32.mrf.mxu0
        %v2772 = vpop.f32.mrf.mxu0
        %v2773 = vadd.f32 0.0, %v2772
        %v2774 = vpop.f32.mrf.mxu0
        %2775 = vmatprep.mubr.bf16.mxu0 %v1278
        %2776 = vmatmul.mubr.bf16.gmra.mxu0 %v1277
        %v2777 = vpop.f32.mrf.mxu0
        %v2778 = vadd.f32 0.0, %v2777
        %v2779 = vpop.f32.mrf.mxu0
        %v2780 = vpop.f32.mrf.mxu0
        %v2781 = vadd.f32 0.0, %v2780
        %v2782 = vpop.f32.mrf.mxu0
        %2783 = vdwg.mxu0
        %v2784 = vcvt.s32.f32 %v1051
        %v2785 = vcvt.s32.f32 %v1052
        %v2786 = vcvt.s32.f32 %v1053
        %v2787 = vcvt.s32.f32 %v1054
        %v2788 = vcvt.s32.f32 %v1055
        %v2789 = vcvt.s32.f32 %v1056
        %v2790 = vcvt.s32.f32 %v1057
        %v2791 = vcvt.s32.f32 %v1058
        %v2792 = vcvt.s32.f32 %v1059
        %v2793 = vcvt.s32.f32 %v1060
        %v2794 = vcvt.s32.f32 %v1061
        %v2795 = vcvt.s32.f32 %v1062
        %v2796 = vcvt.s32.f32 %v1063
        %v2797 = vcvt.s32.f32 %v1064
        %v2798 = vcvt.s32.f32 %v1065
        %v2799 = vcvt.s32.f32 %v1066
        %v2800 = vadd.f32 %v2784, 0.5
        %v2801 = vadd.f32 %v2785, 0.5
        %v2802 = vadd.f32 %v2786, 0.5
        %v2803 = vadd.f32 %v2787, 0.5
        %v2804 = vadd.f32 %v2788, 0.5
        %v2805 = vadd.f32 %v2789, 0.5
        %v2806 = vadd.f32 %v2790, 0.5
        %v2807 = vadd.f32 %v2791, 0.5
        %v2808 = vadd.f32 %v2792, 0.5
        %v2809 = vadd.f32 %v2793, 0.5
        %v2810 = vadd.f32 %v2794, 0.5
        %v2811 = vadd.f32 %v2795, 0.5
        %v2812 = vadd.f32 %v2796, 0.5
        %v2813 = vadd.f32 %v2797, 0.5
        %v2814 = vadd.f32 %v2798, 0.5
        %v2815 = vadd.f32 %v2799, 0.5
        %v2816 = vrcp.pop 16.0
        %v2817 = vmul.f32 %v2800, %v2816
        %v2818 = vmul.f32 %v2801, %v2816
        %v2819 = vmul.f32 %v2802, %v2816
        %v2820 = vmul.f32 %v2803, %v2816
        %v2821 = vmul.f32 %v2804, %v2816
        %v2822 = vmul.f32 %v2805, %v2816
        %v2823 = vmul.f32 %v2806, %v2816
        %v2824 = vmul.f32 %v2807, %v2816
        %v2825 = vmul.f32 %v2808, %v2816
        %v2826 = vmul.f32 %v2809, %v2816
        %v2827 = vmul.f32 %v2810, %v2816
        %v2828 = vmul.f32 %v2811, %v2816
        %v2829 = vmul.f32 %v2812, %v2816
        %v2830 = vmul.f32 %v2813, %v2816
        %v2831 = vmul.f32 %v2814, %v2816
        %v2832 = vmul.f32 %v2815, %v2816
        %v2833 = vfloor.f32 %v2817
        %v2834 = vfloor.f32 %v2818
        %v2835 = vfloor.f32 %v2819
        %v2836 = vfloor.f32 %v2820
        %v2837 = vfloor.f32 %v2821
        %v2838 = vfloor.f32 %v2822
        %v2839 = vfloor.f32 %v2823
        %v2840 = vfloor.f32 %v2824
        %v2841 = vfloor.f32 %v2825
        %v2842 = vfloor.f32 %v2826
        %v2843 = vfloor.f32 %v2827
        %v2844 = vfloor.f32 %v2828
        %v2845 = vfloor.f32 %v2829
        %v2846 = vfloor.f32 %v2830
        %v2847 = vfloor.f32 %v2831
        %v2848 = vfloor.f32 %v2832
        %v2849 = vmul.f32 %v2833, 16.0
        %v2850 = vmul.f32 %v2834, 16.0
        %v2851 = vmul.f32 %v2835, 16.0
        %v2852 = vmul.f32 %v2836, 16.0
        %v2853 = vmul.f32 %v2837, 16.0
        %v2854 = vmul.f32 %v2838, 16.0
        %v2855 = vmul.f32 %v2839, 16.0
        %v2856 = vmul.f32 %v2840, 16.0
        %v2857 = vmul.f32 %v2841, 16.0
        %v2858 = vmul.f32 %v2842, 16.0
        %v2859 = vmul.f32 %v2843, 16.0
        %v2860 = vmul.f32 %v2844, 16.0
        %v2861 = vmul.f32 %v2845, 16.0
        %v2862 = vmul.f32 %v2846, 16.0
        %v2863 = vmul.f32 %v2847, 16.0
        %v2864 = vmul.f32 %v2848, 16.0
        %v2865 = vsub.f32 %v2784, %v2849
        %v2866 = vsub.f32 %v2785, %v2850
        %v2867 = vsub.f32 %v2786, %v2851
        %v2868 = vsub.f32 %v2787, %v2852
        %v2869 = vsub.f32 %v2788, %v2853
        %v2870 = vsub.f32 %v2789, %v2854
        %v2871 = vsub.f32 %v2790, %v2855
        %v2872 = vsub.f32 %v2791, %v2856
        %v2873 = vsub.f32 %v2792, %v2857
        %v2874 = vsub.f32 %v2793, %v2858
        %v2875 = vsub.f32 %v2794, %v2859
        %v2876 = vsub.f32 %v2795, %v2860
        %v2877 = vsub.f32 %v2796, %v2861
        %v2878 = vsub.f32 %v2797, %v2862
        %v2879 = vsub.f32 %v2798, %v2863
        %v2880 = vsub.f32 %v2799, %v2864
        %vm2881 = vcmp.ge.f32.partialorder %v2865, 0.5
        %vm2882 = vcmp.ge.f32.partialorder %v2866, 0.5
        %vm2883 = vcmp.ge.f32.partialorder %v2867, 0.5
        %vm2884 = vcmp.ge.f32.partialorder %v2868, 0.5
        %vm2885 = vcmp.ge.f32.partialorder %v2869, 0.5
        %vm2886 = vcmp.ge.f32.partialorder %v2870, 0.5
        %vm2887 = vcmp.ge.f32.partialorder %v2871, 0.5
        %vm2888 = vcmp.ge.f32.partialorder %v2872, 0.5
        %vm2889 = vcmp.ge.f32.partialorder %v2873, 0.5
        %vm2890 = vcmp.ge.f32.partialorder %v2874, 0.5
        %vm2891 = vcmp.ge.f32.partialorder %v2875, 0.5
        %vm2892 = vcmp.ge.f32.partialorder %v2876, 0.5
        %vm2893 = vcmp.ge.f32.partialorder %v2877, 0.5
        %vm2894 = vcmp.ge.f32.partialorder %v2878, 0.5
        %vm2895 = vcmp.ge.f32.partialorder %v2879, 0.5
        %vm2896 = vcmp.ge.f32.partialorder %v2880, 0.5
        %vm2897 = vcmp.le.f32.partialorder %v2865, 14.5
        %vm2898 = vcmp.le.f32.partialorder %v2866, 14.5
        %vm2899 = vcmp.le.f32.partialorder %v2867, 14.5
        %vm2900 = vcmp.le.f32.partialorder %v2868, 14.5
        %vm2901 = vcmp.le.f32.partialorder %v2869, 14.5
        %vm2902 = vcmp.le.f32.partialorder %v2870, 14.5
        %vm2903 = vcmp.le.f32.partialorder %v2871, 14.5
        %vm2904 = vcmp.le.f32.partialorder %v2872, 14.5
        %vm2905 = vcmp.le.f32.partialorder %v2873, 14.5
        %vm2906 = vcmp.le.f32.partialorder %v2874, 14.5
        %vm2907 = vcmp.le.f32.partialorder %v2875, 14.5
        %vm2908 = vcmp.le.f32.partialorder %v2876, 14.5
        %vm2909 = vcmp.le.f32.partialorder %v2877, 14.5
        %vm2910 = vcmp.le.f32.partialorder %v2878, 14.5
        %vm2911 = vcmp.le.f32.partialorder %v2879, 14.5
        %vm2912 = vcmp.le.f32.partialorder %v2880, 14.5
        %v2913 = vrot.slane %v2210, 7
        %v2914 = vrot.slane %v2214, 7
        %v2915 = vrot.slane %v2220, 7
        %v2916 = vrot.slane %v2224, 7
        %v2917 = vrot.slane %v2230, 7
        %v2918 = vrot.slane %v2234, 7
        %v2919 = vrot.slane %v2240, 7
        %v2920 = vrot.slane %v2244, 7
        %v2921 = vrot.slane %v2250, 7
        %v2922 = vrot.slane %v2254, 7
        %v2923 = vrot.slane %v2260, 7
        %v2924 = vrot.slane %v2264, 7
        %v2925 = vrot.slane %v2270, 7
        %v2926 = vrot.slane %v2274, 7
        %v2927 = vrot.slane %v2280, 7
        %v2928 = vrot.slane %v2284, 7
        %vm2929 = vcmp.lt.s32.totalorder %v1051, 1
        %v2930 = vsel %vm2929, %v2927, %v2928
        %v2931 = vsel %vm2929, %v2926, %v2927
        %v2932 = vsel %vm2929, %v2925, %v2926
        %v2933 = vsel %vm2929, %v2924, %v2925
        %v2934 = vsel %vm2929, %v2923, %v2924
        %v2935 = vsel %vm2929, %v2922, %v2923
        %v2936 = vsel %vm2929, %v2921, %v2922
        %v2937 = vsel %vm2929, %v2920, %v2921
        %v2938 = vsel %vm2929, %v2919, %v2920
        %v2939 = vsel %vm2929, %v2918, %v2919
        %v2940 = vsel %vm2929, %v2917, %v2918
        %v2941 = vsel %vm2929, %v2916, %v2917
        %v2942 = vsel %vm2929, %v2915, %v2916
        %v2943 = vsel %vm2929, %v2914, %v2915
        %v2944 = vsel %vm2929, %v2913, %v2914
        %v2945 = vsel %vm2929, %v2928, %v2913
        %v2946 = vsel %vm2881, 1, 0
        %v2947 = vsel %vm2882, 1, 0
        %v2948 = vsel %vm2883, 1, 0
        %v2949 = vsel %vm2884, 1, 0
        %v2950 = vsel %vm2885, 1, 0
        %v2951 = vsel %vm2886, 1, 0
        %v2952 = vsel %vm2887, 1, 0
        %v2953 = vsel %vm2888, 1, 0
        %v2954 = vsel %vm2889, 1, 0
        %v2955 = vsel %vm2890, 1, 0
        %v2956 = vsel %vm2891, 1, 0
        %v2957 = vsel %vm2892, 1, 0
        %v2958 = vsel %vm2893, 1, 0
        %v2959 = vsel %vm2894, 1, 0
        %v2960 = vsel %vm2895, 1, 0
        %v2961 = vsel %vm2896, 1, 0
        %vm2962 = vcmp.eq.s32.totalorder %v2946, 1
        %vm2963 = vcmp.eq.s32.totalorder %v2947, 1
        %vm2964 = vcmp.eq.s32.totalorder %v2948, 1
        %vm2965 = vcmp.eq.s32.totalorder %v2949, 1
        %vm2966 = vcmp.eq.s32.totalorder %v2950, 1
        %vm2967 = vcmp.eq.s32.totalorder %v2951, 1
        %vm2968 = vcmp.eq.s32.totalorder %v2952, 1
        %vm2969 = vcmp.eq.s32.totalorder %v2953, 1
        %vm2970 = vcmp.eq.s32.totalorder %v2954, 1
        %vm2971 = vcmp.eq.s32.totalorder %v2955, 1
        %vm2972 = vcmp.eq.s32.totalorder %v2956, 1
        %vm2973 = vcmp.eq.s32.totalorder %v2957, 1
        %vm2974 = vcmp.eq.s32.totalorder %v2958, 1
        %vm2975 = vcmp.eq.s32.totalorder %v2959, 1
        %vm2976 = vcmp.eq.s32.totalorder %v2960, 1
        %vm2977 = vcmp.eq.s32.totalorder %v2961, 1
        %v2978 = vsel %vm2962, %v2945, 0.0
        %v2979 = vsel %vm2963, %v2944, 0.0
        %v2980 = vsel %vm2964, %v2943, 0.0
        %v2981 = vsel %vm2965, %v2942, 0.0
        %v2982 = vsel %vm2966, %v2941, 0.0
        %v2983 = vsel %vm2967, %v2940, 0.0
        %v2984 = vsel %vm2968, %v2939, 0.0
        %v2985 = vsel %vm2969, %v2938, 0.0
        %v2986 = vsel %vm2970, %v2937, 0.0
        %v2987 = vsel %vm2971, %v2936, 0.0
        %v2988 = vsel %vm2972, %v2935, 0.0
        %v2989 = vsel %vm2973, %v2934, 0.0
        %v2990 = vsel %vm2974, %v2933, 0.0
        %v2991 = vsel %vm2975, %v2932, 0.0
        %v2992 = vsel %vm2976, %v2931, 0.0
        %v2993 = vsel %vm2977, %v2930, 0.0
        %v2994 = vrot.slane %v2335, 1
        %v2995 = vrot.slane %v2338, 1
        %v2996 = vrot.slane %v2343, 1
        %v2997 = vrot.slane %v2347, 1
        %v2998 = vrot.slane %v2353, 1
        %v2999 = vrot.slane %v2357, 1
        %v3000 = vrot.slane %v2363, 1
        %v3001 = vrot.slane %v2367, 1
        %v3002 = vrot.slane %v2373, 1
        %v3003 = vrot.slane %v2377, 1
        %v3004 = vrot.slane %v2383, 1
        %v3005 = vrot.slane %v2387, 1
        %v3006 = vrot.slane %v2393, 1
        %v3007 = vrot.slane %v2397, 1
        %v3008 = vrot.slane %v2403, 1
        %v3009 = vrot.slane %v2407, 1
        %vm3010 = vcmp.lt.s32.totalorder %v1051, 7
        %v3011 = vsel %vm3010, %v3008, %v3009
        %v3012 = vsel %vm3010, %v3007, %v3008
        %v3013 = vsel %vm3010, %v3006, %v3007
        %v3014 = vsel %vm3010, %v3005, %v3006
        %v3015 = vsel %vm3010, %v3004, %v3005
        %v3016 = vsel %vm3010, %v3003, %v3004
        %v3017 = vsel %vm3010, %v3002, %v3003
        %v3018 = vsel %vm3010, %v3001, %v3002
        %v3019 = vsel %vm3010, %v3000, %v3001
        %v3020 = vsel %vm3010, %v2999, %v3000
        %v3021 = vsel %vm3010, %v2998, %v2999
        %v3022 = vsel %vm3010, %v2997, %v2998
        %v3023 = vsel %vm3010, %v2996, %v2997
        %v3024 = vsel %vm3010, %v2995, %v2996
        %v3025 = vsel %vm3010, %v2994, %v2995
        %v3026 = vsel %vm3010, %v3009, %v2994
        %v3027 = vsel %vm2897, 1, 0
        %v3028 = vsel %vm2898, 1, 0
        %v3029 = vsel %vm2899, 1, 0
        %v3030 = vsel %vm2900, 1, 0
        %v3031 = vsel %vm2901, 1, 0
        %v3032 = vsel %vm2902, 1, 0
        %v3033 = vsel %vm2903, 1, 0
        %v3034 = vsel %vm2904, 1, 0
        %v3035 = vsel %vm2905, 1, 0
        %v3036 = vsel %vm2906, 1, 0
        %v3037 = vsel %vm2907, 1, 0
        %v3038 = vsel %vm2908, 1, 0
        %v3039 = vsel %vm2909, 1, 0
        %v3040 = vsel %vm2910, 1, 0
        %v3041 = vsel %vm2911, 1, 0
        %v3042 = vsel %vm2912, 1, 0
        %vm3043 = vcmp.eq.s32.totalorder %v3027, 1
        %vm3044 = vcmp.eq.s32.totalorder %v3028, 1
        %vm3045 = vcmp.eq.s32.totalorder %v3029, 1
        %vm3046 = vcmp.eq.s32.totalorder %v3030, 1
        %vm3047 = vcmp.eq.s32.totalorder %v3031, 1
        %vm3048 = vcmp.eq.s32.totalorder %v3032, 1
        %vm3049 = vcmp.eq.s32.totalorder %v3033, 1
        %vm3050 = vcmp.eq.s32.totalorder %v3034, 1
        %vm3051 = vcmp.eq.s32.totalorder %v3035, 1
        %vm3052 = vcmp.eq.s32.totalorder %v3036, 1
        %vm3053 = vcmp.eq.s32.totalorder %v3037, 1
        %vm3054 = vcmp.eq.s32.totalorder %v3038, 1
        %vm3055 = vcmp.eq.s32.totalorder %v3039, 1
        %vm3056 = vcmp.eq.s32.totalorder %v3040, 1
        %vm3057 = vcmp.eq.s32.totalorder %v3041, 1
        %vm3058 = vcmp.eq.s32.totalorder %v3042, 1
        %v3059 = vsel %vm3043, %v3025, 0.0
        %v3060 = vsel %vm3044, %v3024, 0.0
        %v3061 = vsel %vm3045, %v3023, 0.0
        %v3062 = vsel %vm3046, %v3022, 0.0
        %v3063 = vsel %vm3047, %v3021, 0.0
        %v3064 = vsel %vm3048, %v3020, 0.0
        %v3065 = vsel %vm3049, %v3019, 0.0
        %v3066 = vsel %vm3050, %v3018, 0.0
        %v3067 = vsel %vm3051, %v3017, 0.0
        %v3068 = vsel %vm3052, %v3016, 0.0
        %v3069 = vsel %vm3053, %v3015, 0.0
        %v3070 = vsel %vm3054, %v3014, 0.0
        %v3071 = vsel %vm3055, %v3013, 0.0
        %v3072 = vsel %vm3056, %v3012, 0.0
        %v3073 = vsel %vm3057, %v3011, 0.0
        %v3074 = vsel %vm3058, %v3026, 0.0
        %v3075 = vrot.slane %v2345, 7
        %v3076 = vrot.slane %v2349, 7
        %v3077 = vrot.slane %v2355, 7
        %v3078 = vrot.slane %v2359, 7
        %v3079 = vrot.slane %v2365, 7
        %v3080 = vrot.slane %v2369, 7
        %v3081 = vrot.slane %v2375, 7
        %v3082 = vrot.slane %v2379, 7
        %v3083 = vrot.slane %v2385, 7
        %v3084 = vrot.slane %v2389, 7
        %v3085 = vrot.slane %v2395, 7
        %v3086 = vrot.slane %v2399, 7
        %v3087 = vrot.slane %v2405, 7
        %v3088 = vrot.slane %v2409, 7
        %v3089 = vrot.slane %v2414, 7
        %v3090 = vrot.slane %v2417, 7
        %v3091 = vsel %vm2929, %v3089, %v3090
        %v3092 = vsel %vm2929, %v3088, %v3089
        %v3093 = vsel %vm2929, %v3087, %v3088
        %v3094 = vsel %vm2929, %v3086, %v3087
        %v3095 = vsel %vm2929, %v3085, %v3086
        %v3096 = vsel %vm2929, %v3084, %v3085
        %v3097 = vsel %vm2929, %v3083, %v3084
        %v3098 = vsel %vm2929, %v3082, %v3083
        %v3099 = vsel %vm2929, %v3081, %v3082
        %v3100 = vsel %vm2929, %v3080, %v3081
        %v3101 = vsel %vm2929, %v3079, %v3080
        %v3102 = vsel %vm2929, %v3078, %v3079
        %v3103 = vsel %vm2929, %v3077, %v3078
        %v3104 = vsel %vm2929, %v3076, %v3077
        %v3105 = vsel %vm2929, %v3075, %v3076
        %v3106 = vsel %vm2929, %v3090, %v3075
        %v3107 = vsel %vm2962, %v3106, 0.0
        %v3108 = vsel %vm2963, %v3105, 0.0
        %v3109 = vsel %vm2964, %v3104, 0.0
        %v3110 = vsel %vm2965, %v3103, 0.0
        %v3111 = vsel %vm2966, %v3102, 0.0
        %v3112 = vsel %vm2967, %v3101, 0.0
        %v3113 = vsel %vm2968, %v3100, 0.0
        %v3114 = vsel %vm2969, %v3099, 0.0
        %v3115 = vsel %vm2970, %v3098, 0.0
        %v3116 = vsel %vm2971, %v3097, 0.0
        %v3117 = vsel %vm2972, %v3096, 0.0
        %v3118 = vsel %vm2973, %v3095, 0.0
        %v3119 = vsel %vm2974, %v3094, 0.0
        %v3120 = vsel %vm2975, %v3093, 0.0
        %v3121 = vsel %vm2976, %v3092, 0.0
        %v3122 = vsel %vm2977, %v3091, 0.0
        %v3123 = vrot.slane %v2468, 1
        %v3124 = vrot.slane %v2472, 1
        %v3125 = vrot.slane %v2478, 1
        %v3126 = vrot.slane %v2482, 1
        %v3127 = vrot.slane %v2488, 1
        %v3128 = vrot.slane %v2492, 1
        %v3129 = vrot.slane %v2498, 1
        %v3130 = vrot.slane %v2502, 1
        %v3131 = vrot.slane %v2508, 1
        %v3132 = vrot.slane %v2512, 1
        %v3133 = vrot.slane %v2518, 1
        %v3134 = vrot.slane %v2522, 1
        %v3135 = vrot.slane %v2528, 1
        %v3136 = vrot.slane %v2532, 1
        %v3137 = vrot.slane %v2538, 1
        %v3138 = vrot.slane %v2542, 1
        %v3139 = vsel %vm3010, %v3137, %v3138
        %v3140 = vsel %vm3010, %v3136, %v3137
        %v3141 = vsel %vm3010, %v3135, %v3136
        %v3142 = vsel %vm3010, %v3134, %v3135
        %v3143 = vsel %vm3010, %v3133, %v3134
        %v3144 = vsel %vm3010, %v3132, %v3133
        %v3145 = vsel %vm3010, %v3131, %v3132
        %v3146 = vsel %vm3010, %v3130, %v3131
        %v3147 = vsel %vm3010, %v3129, %v3130
        %v3148 = vsel %vm3010, %v3128, %v3129
        %v3149 = vsel %vm3010, %v3127, %v3128
        %v3150 = vsel %vm3010, %v3126, %v3127
        %v3151 = vsel %vm3010, %v3125, %v3126
        %v3152 = vsel %vm3010, %v3124, %v3125
        %v3153 = vsel %vm3010, %v3123, %v3124
        %v3154 = vsel %vm3010, %v3138, %v3123
        %v3155 = vsel %vm3043, %v3153, 0.0
        %v3156 = vsel %vm3044, %v3152, 0.0
        %v3157 = vsel %vm3045, %v3151, 0.0
        %v3158 = vsel %vm3046, %v3150, 0.0
        %v3159 = vsel %vm3047, %v3149, 0.0
        %v3160 = vsel %vm3048, %v3148, 0.0
        %v3161 = vsel %vm3049, %v3147, 0.0
        %v3162 = vsel %vm3050, %v3146, 0.0
        %v3163 = vsel %vm3051, %v3145, 0.0
        %v3164 = vsel %vm3052, %v3144, 0.0
        %v3165 = vsel %vm3053, %v3143, 0.0
        %v3166 = vsel %vm3054, %v3142, 0.0
        %v3167 = vsel %vm3055, %v3141, 0.0
        %v3168 = vsel %vm3056, %v3140, 0.0
        %v3169 = vsel %vm3057, %v3139, 0.0
        %v3170 = vsel %vm3058, %v3154, 0.0
        %v3171 = vrot.slane %v2597, 7
        %v3172 = vrot.slane %v2601, 7
        %v3173 = vrot.slane %v2607, 7
        %v3174 = vrot.slane %v2611, 7
        %v3175 = vrot.slane %v2617, 7
        %v3176 = vrot.slane %v2621, 7
        %v3177 = vrot.slane %v2627, 7
        %v3178 = vrot.slane %v2631, 7
        %v3179 = vrot.slane %v2637, 7
        %v3180 = vrot.slane %v2641, 7
        %v3181 = vrot.slane %v2647, 7
        %v3182 = vrot.slane %v2651, 7
        %v3183 = vrot.slane %v2657, 7
        %v3184 = vrot.slane %v2661, 7
        %v3185 = vrot.slane %v2667, 7
        %v3186 = vrot.slane %v2671, 7
        %v3187 = vsel %vm2929, %v3185, %v3186
        %v3188 = vsel %vm2929, %v3184, %v3185
        %v3189 = vsel %vm2929, %v3183, %v3184
        %v3190 = vsel %vm2929, %v3182, %v3183
        %v3191 = vsel %vm2929, %v3181, %v3182
        %v3192 = vsel %vm2929, %v3180, %v3181
        %v3193 = vsel %vm2929, %v3179, %v3180
        %v3194 = vsel %vm2929, %v3178, %v3179
        %v3195 = vsel %vm2929, %v3177, %v3178
        %v3196 = vsel %vm2929, %v3176, %v3177
        %v3197 = vsel %vm2929, %v3175, %v3176
        %v3198 = vsel %vm2929, %v3174, %v3175
        %v3199 = vsel %vm2929, %v3173, %v3174
        %v3200 = vsel %vm2929, %v3172, %v3173
        %v3201 = vsel %vm2929, %v3171, %v3172
        %v3202 = vsel %vm2929, %v3186, %v3171
        %v3203 = vsel %vm2962, %v3202, 0.0
        %v3204 = vsel %vm2963, %v3201, 0.0
        %v3205 = vsel %vm2964, %v3200, 0.0
        %v3206 = vsel %vm2965, %v3199, 0.0
        %v3207 = vsel %vm2966, %v3198, 0.0
        %v3208 = vsel %vm2967, %v3197, 0.0
        %v3209 = vsel %vm2968, %v3196, 0.0
        %v3210 = vsel %vm2969, %v3195, 0.0
        %v3211 = vsel %vm2970, %v3194, 0.0
        %v3212 = vsel %vm2971, %v3193, 0.0
        %v3213 = vsel %vm2972, %v3192, 0.0
        %v3214 = vsel %vm2973, %v3191, 0.0
        %v3215 = vsel %vm2974, %v3190, 0.0
        %v3216 = vsel %vm2975, %v3189, 0.0
        %v3217 = vsel %vm2976, %v3188, 0.0
        %v3218 = vsel %vm2977, %v3187, 0.0
        %v3219 = vrot.slane %v2722, 1
        %v3220 = vrot.slane %v2725, 1
        %v3221 = vrot.slane %v2730, 1
        %v3222 = vrot.slane %v2733, 1
        %v3223 = vrot.slane %v2738, 1
        %v3224 = vrot.slane %v2741, 1
        %v3225 = vrot.slane %v2746, 1
        %v3226 = vrot.slane %v2749, 1
        %v3227 = vrot.slane %v2754, 1
        %v3228 = vrot.slane %v2757, 1
        %v3229 = vrot.slane %v2762, 1
        %v3230 = vrot.slane %v2765, 1
        %v3231 = vrot.slane %v2770, 1
        %v3232 = vrot.slane %v2773, 1
        %v3233 = vrot.slane %v2778, 1
        %v3234 = vrot.slane %v2781, 1
        %v3235 = vsel %vm3010, %v3233, %v3234
        %v3236 = vsel %vm3010, %v3232, %v3233
        %v3237 = vsel %vm3010, %v3231, %v3232
        %v3238 = vsel %vm3010, %v3230, %v3231
        %v3239 = vsel %vm3010, %v3229, %v3230
        %v3240 = vsel %vm3010, %v3228, %v3229
        %v3241 = vsel %vm3010, %v3227, %v3228
        %v3242 = vsel %vm3010, %v3226, %v3227
        %v3243 = vsel %vm3010, %v3225, %v3226
        %v3244 = vsel %vm3010, %v3224, %v3225
        %v3245 = vsel %vm3010, %v3223, %v3224
        %v3246 = vsel %vm3010, %v3222, %v3223
        %v3247 = vsel %vm3010, %v3221, %v3222
        %v3248 = vsel %vm3010, %v3220, %v3221
        %v3249 = vsel %vm3010, %v3219, %v3220
        %v3250 = vsel %vm3010, %v3234, %v3219
        %v3251 = vsel %vm3043, %v3249, 0.0
        %v3252 = vsel %vm3044, %v3248, 0.0
        %v3253 = vsel %vm3045, %v3247, 0.0
        %v3254 = vsel %vm3046, %v3246, 0.0
        %v3255 = vsel %vm3047, %v3245, 0.0
        %v3256 = vsel %vm3048, %v3244, 0.0
        %v3257 = vsel %vm3049, %v3243, 0.0
        %v3258 = vsel %vm3050, %v3242, 0.0
        %v3259 = vsel %vm3051, %v3241, 0.0
        %v3260 = vsel %vm3052, %v3240, 0.0
        %v3261 = vsel %vm3053, %v3239, 0.0
        %v3262 = vsel %vm3054, %v3238, 0.0
        %v3263 = vsel %vm3055, %v3237, 0.0
        %v3264 = vsel %vm3056, %v3236, 0.0
        %v3265 = vsel %vm3057, %v3235, 0.0
        %v3266 = vsel %vm3058, %v3250, 0.0
        %v3267 = vadd.f32 %v2978, %v2212
        %v3268 = vadd.f32 %v2979, %v2216
        %v3269 = vadd.f32 %v2980, %v2222
        %v3270 = vadd.f32 %v2981, %v2226
        %v3271 = vadd.f32 %v2982, %v2232
        %v3272 = vadd.f32 %v2983, %v2236
        %v3273 = vadd.f32 %v2984, %v2242
        %v3274 = vadd.f32 %v2985, %v2246
        %v3275 = vadd.f32 %v2986, %v2252
        %v3276 = vadd.f32 %v2987, %v2256
        %v3277 = vadd.f32 %v2988, %v2262
        %v3278 = vadd.f32 %v2989, %v2266
        %v3279 = vadd.f32 %v2990, %v2272
        %v3280 = vadd.f32 %v2991, %v2276
        %v3281 = vadd.f32 %v2992, %v2282
        %v3282 = vadd.f32 %v2993, %v2286
        %v3283 = vadd.f32 %v3059, %v3107
        %v3284 = vadd.f32 %v3060, %v3108
        %v3285 = vadd.f32 %v3061, %v3109
        %v3286 = vadd.f32 %v3062, %v3110
        %v3287 = vadd.f32 %v3063, %v3111
        %v3288 = vadd.f32 %v3064, %v3112
        %v3289 = vadd.f32 %v3065, %v3113
        %v3290 = vadd.f32 %v3066, %v3114
        %v3291 = vadd.f32 %v3067, %v3115
        %v3292 = vadd.f32 %v3068, %v3116
        %v3293 = vadd.f32 %v3069, %v3117
        %v3294 = vadd.f32 %v3070, %v3118
        %v3295 = vadd.f32 %v3071, %v3119
        %v3296 = vadd.f32 %v3072, %v3120
        %v3297 = vadd.f32 %v3073, %v3121
        %v3298 = vadd.f32 %v3074, %v3122
        %v3299 = vadd.f32 %v3155, %v3203
        %v3300 = vadd.f32 %v3156, %v3204
        %v3301 = vadd.f32 %v3157, %v3205
        %v3302 = vadd.f32 %v3158, %v3206
        %v3303 = vadd.f32 %v3159, %v3207
        %v3304 = vadd.f32 %v3160, %v3208
        %v3305 = vadd.f32 %v3161, %v3209
        %v3306 = vadd.f32 %v3162, %v3210
        %v3307 = vadd.f32 %v3163, %v3211
        %v3308 = vadd.f32 %v3164, %v3212
        %v3309 = vadd.f32 %v3165, %v3213
        %v3310 = vadd.f32 %v3166, %v3214
        %v3311 = vadd.f32 %v3167, %v3215
        %v3312 = vadd.f32 %v3168, %v3216
        %v3313 = vadd.f32 %v3169, %v3217
        %v3314 = vadd.f32 %v3170, %v3218
        %v3315 = vadd.f32 %v2599, %v3251
        %v3316 = vadd.f32 %v2603, %v3252
        %v3317 = vadd.f32 %v2609, %v3253
        %v3318 = vadd.f32 %v2613, %v3254
        %v3319 = vadd.f32 %v2619, %v3255
        %v3320 = vadd.f32 %v2623, %v3256
        %v3321 = vadd.f32 %v2629, %v3257
        %v3322 = vadd.f32 %v2633, %v3258
        %v3323 = vadd.f32 %v2639, %v3259
        %v3324 = vadd.f32 %v2643, %v3260
        %v3325 = vadd.f32 %v2649, %v3261
        %v3326 = vadd.f32 %v2653, %v3262
        %v3327 = vadd.f32 %v2659, %v3263
        %v3328 = vadd.f32 %v2663, %v3264
        %v3329 = vadd.f32 %v2669, %v3265
        %v3330 = vadd.f32 %v2673, %v3266
        %v3331 = vadd.f32 %v3267, %v3283
        %v3332 = vadd.f32 %v3268, %v3284
        %v3333 = vadd.f32 %v3269, %v3285
        %v3334 = vadd.f32 %v3270, %v3286
        %v3335 = vadd.f32 %v3271, %v3287
        %v3336 = vadd.f32 %v3272, %v3288
        %v3337 = vadd.f32 %v3273, %v3289
        %v3338 = vadd.f32 %v3274, %v3290
        %v3339 = vadd.f32 %v3275, %v3291
        %v3340 = vadd.f32 %v3276, %v3292
        %v3341 = vadd.f32 %v3277, %v3293
        %v3342 = vadd.f32 %v3278, %v3294
        %v3343 = vadd.f32 %v3279, %v3295
        %v3344 = vadd.f32 %v3280, %v3296
        %v3345 = vadd.f32 %v3281, %v3297
        %v3346 = vadd.f32 %v3282, %v3298
        %v3347 = vadd.f32 %v3299, %v3315
        %v3348 = vadd.f32 %v3300, %v3316
        %v3349 = vadd.f32 %v3301, %v3317
        %v3350 = vadd.f32 %v3302, %v3318
        %v3351 = vadd.f32 %v3303, %v3319
        %v3352 = vadd.f32 %v3304, %v3320
        %v3353 = vadd.f32 %v3305, %v3321
        %v3354 = vadd.f32 %v3306, %v3322
        %v3355 = vadd.f32 %v3307, %v3323
        %v3356 = vadd.f32 %v3308, %v3324
        %v3357 = vadd.f32 %v3309, %v3325
        %v3358 = vadd.f32 %v3310, %v3326
        %v3359 = vadd.f32 %v3311, %v3327
        %v3360 = vadd.f32 %v3312, %v3328
        %v3361 = vadd.f32 %v3313, %v3329
        %v3362 = vadd.f32 %v3314, %v3330
        %v3363 = vadd.f32 %v3331, %v3347
        %v3364 = vadd.f32 %v3332, %v3348
        %v3365 = vadd.f32 %v3333, %v3349
        %v3366 = vadd.f32 %v3334, %v3350
        %v3367 = vadd.f32 %v3335, %v3351
        %v3368 = vadd.f32 %v3336, %v3352
        %v3369 = vadd.f32 %v3337, %v3353
        %v3370 = vadd.f32 %v3338, %v3354
        %v3371 = vadd.f32 %v3339, %v3355
        %v3372 = vadd.f32 %v3340, %v3356
        %v3373 = vadd.f32 %v3341, %v3357
        %v3374 = vadd.f32 %v3342, %v3358
        %v3375 = vadd.f32 %v3343, %v3359
        %v3376 = vadd.f32 %v3344, %v3360
        %v3377 = vadd.f32 %v3345, %v3361
        %v3378 = vadd.f32 %v3346, %v3362
        %v3379 = vadd.f32 %v3363, %v2466
        %v3380 = vadd.f32 %v3364, %v2470
        %v3381 = vadd.f32 %v3365, %v2476
        %v3382 = vadd.f32 %v3366, %v2480
        %v3383 = vadd.f32 %v3367, %v2486
        %v3384 = vadd.f32 %v3368, %v2490
        %v3385 = vadd.f32 %v3369, %v2496
        %v3386 = vadd.f32 %v3370, %v2500
        %v3387 = vadd.f32 %v3371, %v2506
        %v3388 = vadd.f32 %v3372, %v2510
        %v3389 = vadd.f32 %v3373, %v2516
        %v3390 = vadd.f32 %v3374, %v2520
        %v3391 = vadd.f32 %v3375, %v2526
        %v3392 = vadd.f32 %v3376, %v2530
        %v3393 = vadd.f32 %v3377, %v2536
        %v3394 = vadd.f32 %v3378, %v2540
        %v3395 = vld [vmem:[%s4] sm:$0x1]
        %v3397 = vlaneseq
        %v3398 = vshrl.u32 %v3397, 7
        %v3399 = vsub.s32 0, %v3398
        %v3400 = vrot.slane %v3395, %v3399
        %v3402 = vadd.f32 %v3379, %v3400
        %v3403 = vadd.f32 %v3380, %v3400
        %v3404 = vadd.f32 %v3381, %v3400
        %v3405 = vadd.f32 %v3382, %v3400
        %v3406 = vadd.f32 %v3383, %v3400
        %v3407 = vadd.f32 %v3384, %v3400
        %v3408 = vadd.f32 %v3385, %v3400
        %v3409 = vadd.f32 %v3386, %v3400
        %v3410 = vadd.f32 %v3387, %v3400
        %v3411 = vadd.f32 %v3388, %v3400
        %v3412 = vadd.f32 %v3389, %v3400
        %v3413 = vadd.f32 %v3390, %v3400
        %v3414 = vadd.f32 %v3391, %v3400
        %v3415 = vadd.f32 %v3392, %v3400
        %v3416 = vadd.f32 %v3393, %v3400
        %v3417 = vadd.f32 %v3394, %v3400
        %v3418 = vmax.f32 %v3402, 0.0
        %v3419 = vmax.f32 %v3403, 0.0
        %v3420 = vmax.f32 %v3404, 0.0
        %v3421 = vmax.f32 %v3405, 0.0
        %v3422 = vmax.f32 %v3406, 0.0
        %v3423 = vmax.f32 %v3407, 0.0
        %v3424 = vmax.f32 %v3408, 0.0
        %v3425 = vmax.f32 %v3409, 0.0
        %v3426 = vmax.f32 %v3410, 0.0
        %v3427 = vmax.f32 %v3411, 0.0
        %v3428 = vmax.f32 %v3412, 0.0
        %v3429 = vmax.f32 %v3413, 0.0
        %v3430 = vmax.f32 %v3414, 0.0
        %v3431 = vmax.f32 %v3415, 0.0
        %v3432 = vmax.f32 %v3416, 0.0
        %v3433 = vmax.f32 %v3417, 0.0
        %3434 = vst [vmem:[%s256] sm:$0xff] %v3418
        %3435 = vst [vmem:[%s256 + $0x8] sm:$0xff] %v3419
        %3436 = vst [vmem:[%s256 + $0x10] sm:$0xff] %v3420
        %3437 = vst [vmem:[%s256 + $0x18] sm:$0xff] %v3421
        %3438 = vst [vmem:[%s256 + $0x20] sm:$0xff] %v3422
        %3439 = vst [vmem:[%s256 + $0x28] sm:$0xff] %v3423
        %3440 = vst [vmem:[%s256 + $0x30] sm:$0xff] %v3424
        %3441 = vst [vmem:[%s256 + $0x38] sm:$0xff] %v3425
        %3442 = vst [vmem:[%s256 + $0x40] sm:$0xff] %v3426
        %3443 = vst [vmem:[%s256 + $0x48] sm:$0xff] %v3427
        %3444 = vst [vmem:[%s256 + $0x50] sm:$0xff] %v3428
        %3445 = vst [vmem:[%s256 + $0x58] sm:$0xff] %v3429
        %3446 = vst [vmem:[%s256 + $0x60] sm:$0xff] %v3430
        %3447 = vst [vmem:[%s256 + $0x68] sm:$0xff] %v3431
        %3448 = vst [vmem:[%s256 + $0x70] sm:$0xff] %v3432
        %3449 = vst [vmem:[%s256 + $0x78] sm:$0xff] %v3433
        %s3450 = sand.u32 %s154, 1
        %s3451 = scalar_lea.sflag [#allocation4], %s3450
        %s3452 = sand.u32 %s154, 1
        %s3453 = smul.addr %s3452, 128
        %s3454 = scalar_lea.vmem [#allocation5], %s3453
        // Predicated region
        $region45: #{tpu_custom_call.1} parent=39 // pred_check
          %p3455 = pneg %p164
        $region46: #{tpu_custom_call.1} parent=39 // pred_check_branch
          %3457 = sbr.rel (%p3455) target = $region48
        $region47: #{tpu_custom_call.1} parent=39 // pred_region
          %s3459 = ssub.s32 2048, 2048
          %3460 = vsyncadd %s3451, %s3459
          %s3461 = smul.addr %s25, 16
          %s3462 = smul.addr %s24, 32
          %s3463 = sadd.s32 %s3461, %s3462
          %s3464 = smul.addr %s3463, 128
          %s3465 = scalar_lea.hbm %s5, %s3464
          %s3466 = sshll.u32 %s3454, 4
          %s3467 = int_to_ptr.vmem [resolvable:$true] %s3466
          %3472 = dma.vmem_to_hbm [thread:$0]  %s3467, 2048, %s3465, %s3451, 128, 128, 8
        $region48: #{tpu_custom_call.1} parent=39 // pred_fallthru
          _
      $region40: #{tpu_custom_call.1} parent=5 // pred_fallthru
        _
      %p3473 = scmp.le.s32.totalorder 2, %s15
      // Predicated region
      $region49: #{tpu_custom_call.1} parent=5 // pred_check
        %p3474 = pneg %p3473
      $region50: #{tpu_custom_call.1} parent=5 // pred_check_branch
        %3476 = sbr.rel (%p3474) target = $region52
      $region51: #{tpu_custom_call.1} parent=5 // pred_region
        %s3477 = ssub.s32 %s15, 2
        // Predicated region
        $region53: #{tpu_custom_call.1} parent=51 // pred_check
          %p3478 = pneg %p170
        $region54: #{tpu_custom_call.1} parent=51 // pred_check_branch
          %3480 = sbr.rel (%p3478) target = $region56
        $region55: #{tpu_custom_call.1} parent=51 // pred_region
          %s3481 = sand.u32 %s155, 1
          %s3482 = scalar_lea.sflag [#allocation4], %s3481
          %s3483 = sand.u32 %s155, 1
          %s3484 = smul.addr %s3483, 128
          %s3485 = scalar_lea.vmem [#allocation5], %s3484
          %3486 = dma.done %s3482, 2048
        $region56: #{tpu_custom_call.1} parent=51 // pred_fallthru
          _
      $region52: #{tpu_custom_call.1} parent=5 // pred_fallthru
        _
    $region6: #{tpu_custom_call.1} parent=1 // loop_footer
      %s19 = sadd.s32 1, %s15
    $region7: #{tpu_custom_call.1} parent=1 // loop_footer_branch
      %14 = sbr.rel target = $region3
    $region8: #{tpu_custom_call.1} parent=1 // loop_exit
      _
    %3487 = vsyncpa [#allocation3], 1
    %s3488 = scalar_lea.sflag [#allocation3], 1
    %3489 = vsyncpa %s3488, 1
    %3490 = vsyncpa [#allocation4], 1
    %s3491 = scalar_lea.sflag [#allocation4], 1
    %3492 = vsyncpa %s3491, 1

</llo_original>
